<compile_context>
chip_gen: v7x
topology: tpu7x:2x2x1
jax: 0.10.0
libtpu: 0.0.40
codegen_flags: <defaults>
</compile_context>

<pallas_src>
import functools

import jax
import jax.numpy as jnp
from jax.experimental import pallas as pl
from jax.experimental.pallas import tpu as pltpu


def _round_up(x, m):
    return (x + m - 1) // m * m


def cin_network_kernel(num_layers, x0_ref, *refs):
    """One batch tile of the full forward (CIN stack + linear head).

    x0_ref : (M, D*TB)   compute-dtype, lane index = d*TB + b
    refs   : W_0..W_{L-1}, head_0..head_{L-1}, bf, out
      W_l    : (Hpad_out, M*Hpad_in)  compute-dtype, col index = m*Hpad_in + h
      head_l : (1, M*Hpad_in)         compute-dtype  (= wf_l @ W_l, head fold)
      bf     : (1, 1) f32             final-linear bias (SMEM)
      out    : (1, TB) f32            lane-dense output tile
    """
    w_refs = refs[:num_layers]
    h_refs = refs[num_layers:2 * num_layers]
    bf_ref = refs[2 * num_layers]
    out_ref = refs[2 * num_layers + 1]

    n_fields, dtb = x0_ref.shape
    tb = out_ref.shape[1]
    n_embed = dtb // tb
    mxu_dtype = w_refs[0].dtype

    x0 = x0_ref[...].astype(jnp.float32)                     # (M, D*TB) f32

    # Layer-0 activation = X0, zero-padded to the row count the (column-padded)
    # layer-0 weight expects, so all reshapes below stay 8-sublane aligned.
    hpad0 = w_refs[0].shape[1] // n_fields
    if hpad0 > n_fields:
        xl = jnp.concatenate(
            [x0, jnp.zeros((hpad0 - n_fields, dtb), jnp.float32)], axis=0)
    else:
        xl = x0

    head_acc = jnp.zeros((1, dtb), jnp.float32)
    for li in range(num_layers):
        # z[m*Hpad_in + h, d*TB + b] = X0[m, d, b] * X_l[h, d, b]
        # xl.shape[0] is a multiple of 8 -> the reshape is layout-trivial.
        z = (x0[:, None, :] * xl[None, :, :]).reshape(
            n_fields * xl.shape[0], dtb)                      # f32 (H*M, D*TB)
        z_mxu = z.astype(mxu_dtype)                           # pack for the MXU
        # CIN layer: one 2-D MXU matmul with the original (padded) weights.
        xl = jnp.dot(w_refs[li][...], z_mxu,
                     preferred_element_type=jnp.float32)      # (Hpad_out, D*TB)
        # Head folded in: one extra 1-row dot on the already-staged z.
        head_acc = head_acc + jnp.dot(h_refs[li][...], z_mxu,
                                      preferred_element_type=jnp.float32)

    # out[b] = bf + sum_d head_acc[d*TB + b]   (D lane-chunk adds, once per tile)
    out_acc = jnp.zeros((1, tb), jnp.float32)
    for dd in range(n_embed):
        out_acc = out_acc + head_acc[:, dd * tb:(dd + 1) * tb]
    out_ref[...] = (out_acc + bf_ref[0, 0]).astype(out_ref.dtype)


def cin_network_forward(x_idx, embed_table, layer_ws, final_w, final_b,
                        *, block_b=256, compute_dtype=jnp.bfloat16):
    """x_idx (B, M) int32 -> (B, 1) f32, matching CIN_NetWork.forward.

    layer_ws[l]: (Hk, H_l*M), column index h*M+m (the module's stacked Linear
    weights).  x_idx is assumed to already carry the per-field vocab offsets,
    exactly as the PyTorch module's single nn.Embedding expects.
    """
    b, m = x_idx.shape
    _, d = embed_table.shape
    num_layers = len(layer_ws)
    hk = layer_ws[0].shape[0]
    assert b % block_b == 0 and block_b % 128 == 0

    # --- host-side (XLA) prep -------------------------------------------------
    # Embedding gather + lane-dense layout: block i holds
    #   x0_tiles[i, m, d*TB + bb] = table[x_idx[i*TB + bb, m], d]
    x0 = jnp.take(embed_table.astype(jnp.float32), x_idx, axis=0)   # (B, M, D)
    n_tiles = b // block_b
    x0_tiles = (x0.reshape(n_tiles, block_b, m, d)
                  .transpose(0, 2, 3, 1)
                  .reshape(n_tiles, m, d * block_b)
                  .astype(compute_dtype))

    # CIN weights: reorder columns h*M+m -> m*Hpad_in+h, zero-pad rows/cols to
    # multiples of 8 (layout-trivial kernel reshapes), and fold the final
    # Linear weight into one precomputed head row per layer.
    w_packed, head_rows = [], []
    h_in = m
    for li, w in enumerate(layer_ws):
        hpad_in = _round_up(h_in, 8)
        hpad_out = _round_up(hk, 8)
        w3 = w.astype(jnp.float32).reshape(hk, h_in, m).transpose(0, 2, 1)
        w3 = jnp.pad(w3, ((0, 0), (0, 0), (0, hpad_in - h_in)))
        w2 = w3.reshape(hk, m * hpad_in)                       # (Hk, M*Hpad_in)
        wf_l = final_w[:, li * hk:(li + 1) * hk].astype(jnp.float32)
        head_rows.append((wf_l @ w2).astype(compute_dtype))    # (1, M*Hpad_in)
        w_packed.append(jnp.pad(w2, ((0, hpad_out - hk), (0, 0)))
                        .astype(compute_dtype))                # (Hpad_out, M*Hpad_in)
        h_in = hk
    bf = final_b.reshape(1, 1).astype(jnp.float32)

    # --- pallas_call ------------------------------------------------------------
    grid = (n_tiles,)
    in_specs = [pl.BlockSpec((None, m, d * block_b), lambda i: (i, 0, 0))]
    for w2 in w_packed:          # tiny constant-index weights: VMEM resident
        in_specs.append(pl.BlockSpec(w2.shape, lambda i: (0, 0)))
    for hr in head_rows:
        in_specs.append(pl.BlockSpec(hr.shape, lambda i: (0, 0)))
    in_specs.append(pl.BlockSpec(memory_space=pltpu.MemorySpace.SMEM))   # bias

    kernel = functools.partial(cin_network_kernel, num_layers)
    out = pl.pallas_call(
        kernel,
        out_shape=jax.ShapeDtypeStruct((1, b), jnp.float32),
        grid=grid,
        in_specs=in_specs,
        out_specs=pl.BlockSpec((1, block_b), lambda i: (0, i)),
        compiler_params=pltpu.CompilerParams(
            dimension_semantics=("parallel",),
            vmem_limit_bytes=32 * 1024 * 1024),
    )(x0_tiles, *w_packed, *head_rows, bf)
    return out.T                                               # (B, 1)


def cin_network_reference(x_idx, embed_table, layer_ws, final_w, final_b):
    """Pure-JAX reference mirroring the PyTorch module exactly."""
    x0 = jnp.take(embed_table, x_idx, axis=0)                  # (B, M, D)
    b, m, _ = x0.shape
    xl = x0
    sums = []
    for w in layer_ws:
        h = xl.shape[1]
        z = (xl[:, :, None, :] * x0[:, None, :, :]).reshape(b, h * m, -1)
        xl = jnp.einsum("kp,bpd->bkd", w, z)
        sums.append(jnp.sum(xl, axis=-1))
    feat = jnp.concatenate(sums, axis=-1)
    return feat @ final_w.T + final_b


if __name__ == "__main__":
    field_dims = [5, 6, 7, 8]          # M = 4 fields, total vocab = 26
    M = len(field_dims)
    D = 16                             # embed_dims
    L = 3                              # CIN_layer_num
    Hk = 10                            # module default Hk (exercises padding)
    B = 1024
    block_b = 256                      # grid = 4 (>= 2 steps per v7x TC)
    vocab = sum(field_dims)

    key = jax.random.PRNGKey(0)
    keys = jax.random.split(key, 4 + L)
    k_emb, k_wf, k_bf, k_x = keys[:4]

    embed_table = jax.random.normal(k_emb, (vocab, D), dtype=jnp.float32)
    layer_ws = []
    h = M
    for li in range(L):
        layer_ws.append(
            jax.random.normal(keys[4 + li], (Hk, h * M), dtype=jnp.float32) * 0.1)
        h = Hk
    final_w = jax.random.normal(k_wf, (1, L * Hk), dtype=jnp.float32) * 0.1
    final_b = jax.random.normal(k_bf, (1,), dtype=jnp.float32)
    x_idx = jax.random.randint(k_x, (B, M), 0, vocab, dtype=jnp.int32)

    ref = cin_network_reference(x_idx, embed_table, layer_ws, final_w, final_b)

    # Exact-parity path (f32 MXU operands): tight tolerance.
    out_f32 = cin_network_forward(x_idx, embed_table, layer_ws, final_w, final_b,
                                  block_b=block_b, compute_dtype=jnp.float32)
    out_f32 = jax.block_until_ready(out_f32)
    assert out_f32.shape == (B, 1)
    assert jnp.allclose(out_f32, ref, rtol=1e-3, atol=1e-3), (
        float(jnp.max(jnp.abs(out_f32 - ref))))

    # Fast path (bf16 MXU operands, f32 accumulation): looser tolerance since
    # operands are rounded to bf16 (reference stays f32).
    out_bf16 = cin_network_forward(x_idx, embed_table, layer_ws, final_w, final_b,
                                   block_b=block_b, compute_dtype=jnp.bfloat16)
    out_bf16 = jax.block_until_ready(out_bf16)
    assert out_bf16.shape == (B, 1)
    assert jnp.allclose(out_bf16, ref, rtol=5e-2, atol=1e-1), (
        float(jnp.max(jnp.abs(out_bf16 - ref))))

    print("KERNEL_OK")
</pallas_src>

<mosaic_0001>
module attributes {stable_mosaic.version = 11 : i64} {
  func.func @cin_network_kernel(%arg0: i32, %arg1: memref<1x4x4096xf32, #tpu.memory_space<vmem>>, %arg2: memref<16x32xf32, #tpu.memory_space<vmem>>, %arg3: memref<16x64xf32, #tpu.memory_space<vmem>>, %arg4: memref<16x64xf32, #tpu.memory_space<vmem>>, %arg5: memref<1x32xf32, #tpu.memory_space<vmem>>, %arg6: memref<1x64xf32, #tpu.memory_space<vmem>>, %arg7: memref<1x64xf32, #tpu.memory_space<vmem>>, %arg8: memref<1x1xf32, #tpu.memory_space<smem>>, %arg9: memref<1x256xf32, #tpu.memory_space<vmem>>) attributes {dimension_semantics = [#tpu.dimension_semantics<parallel>], iteration_bounds = array<i64: 4>, scalar_prefetch = 0 : i64, scratch_operands = 0 : i64, tpu.core_type = #tpu.core_type<tc>, window_params = [{transform_indices = @transform_0, window_bounds = array<i64: 1, 4, 4096>}, {pipeline_mode = #tpu.pipeline_mode<synchronous>, transform_indices = @transform_1, window_bounds = array<i64: 16, 32>}, {pipeline_mode = #tpu.pipeline_mode<synchronous>, transform_indices = @transform_2, window_bounds = array<i64: 16, 64>}, {pipeline_mode = #tpu.pipeline_mode<synchronous>, transform_indices = @transform_3, window_bounds = array<i64: 16, 64>}, {pipeline_mode = #tpu.pipeline_mode<synchronous>, transform_indices = @transform_4, window_bounds = array<i64: 1, 32>}, {pipeline_mode = #tpu.pipeline_mode<synchronous>, transform_indices = @transform_5, window_bounds = array<i64: 1, 64>}, {pipeline_mode = #tpu.pipeline_mode<synchronous>, transform_indices = @transform_6, window_bounds = array<i64: 1, 64>}, {transform_indices = @transform_7, window_bounds = array<i64: 1, 1>}, {transform_indices = @transform_8, window_bounds = array<i64: 1, 256>}]} {
    %c0 = arith.constant 0 : index
    %c0_0 = arith.constant 0 : index
    %c0_1 = arith.constant 0 : index
    %0 = vector.load %arg1[%c0, %c0_0, %c0_1] : memref<1x4x4096xf32, #tpu.memory_space<vmem>>, vector<1x4x4096xf32>
    %1 = vector.shape_cast %0 : vector<1x4x4096xf32> to vector<4x4096xf32>
    %cst = arith.constant 0.000000e+00 : f32
    %2 = vector.broadcast %cst : f32 to vector<4x4096xf32>
    %3 = tpu.concatenate %1, %2 in 0 : vector<4x4096xf32>, vector<4x4096xf32> -> vector<8x4096xf32>
    %cst_2 = arith.constant 0.000000e+00 : f32
    %4 = vector.broadcast %cst_2 : f32 to vector<1x4096xf32>
    %5 = vector.shape_cast %1 : vector<4x4096xf32> to vector<4x1x4096xf32>
    %6 = vector.shape_cast %3 : vector<8x4096xf32> to vector<1x8x4096xf32>
    %7 = vector.broadcast %5 : vector<4x1x4096xf32> to vector<4x8x4096xf32>
    %8 = vector.broadcast %6 : vector<1x8x4096xf32> to vector<4x8x4096xf32>
    %9 = arith.mulf %7, %8 : vector<4x8x4096xf32>
    %10 = vector.shape_cast %9 : vector<4x8x4096xf32> to vector<32x4096xf32>
    %c0_3 = arith.constant 0 : index
    %c0_4 = arith.constant 0 : index
    %11 = vector.load %arg2[%c0_3, %c0_4] : memref<16x32xf32, #tpu.memory_space<vmem>>, vector<16x32xf32>
    %cst_5 = arith.constant dense<0.000000e+00> : vector<16x4096xf32>
    %12 = tpu.matmul %11, %10, %cst_5 {dimension_numbers = #tpu.dot_dimension_numbers<[1], [0], [0], [1], [0, 0, 1, 1], [], []>} : vector<16x32xf32>, vector<32x4096xf32>, vector<16x4096xf32> -> vector<16x4096xf32>
    %c0_6 = arith.constant 0 : index
    %c0_7 = arith.constant 0 : index
    %13 = vector.load %arg5[%c0_6, %c0_7] : memref<1x32xf32, #tpu.memory_space<vmem>>, vector<1x32xf32>
    %cst_8 = arith.constant dense<0.000000e+00> : vector<1x4096xf32>
    %14 = tpu.matmul %13, %10, %cst_8 {dimension_numbers = #tpu.dot_dimension_numbers<[1], [0], [0], [1], [0, 0, 1, 1], [], []>} : vector<1x32xf32>, vector<32x4096xf32>, vector<1x4096xf32> -> vector<1x4096xf32>
    %15 = arith.addf %4, %14 : vector<1x4096xf32>
    %16 = vector.shape_cast %1 : vector<4x4096xf32> to vector<4x1x4096xf32>
    %17 = vector.shape_cast %12 : vector<16x4096xf32> to vector<1x16x4096xf32>
    %18 = vector.broadcast %16 : vector<4x1x4096xf32> to vector<4x16x4096xf32>
    %19 = vector.broadcast %17 : vector<1x16x4096xf32> to vector<4x16x4096xf32>
    %20 = arith.mulf %18, %19 : vector<4x16x4096xf32>
    %21 = vector.shape_cast %20 : vector<4x16x4096xf32> to vector<64x4096xf32>
    %c0_9 = arith.constant 0 : index
    %c0_10 = arith.constant 0 : index
    %22 = vector.load %arg3[%c0_9, %c0_10] : memref<16x64xf32, #tpu.memory_space<vmem>>, vector<16x64xf32>
    %cst_11 = arith.constant dense<0.000000e+00> : vector<16x4096xf32>
    %23 = tpu.matmul %22, %21, %cst_11 {dimension_numbers = #tpu.dot_dimension_numbers<[1], [0], [0], [1], [0, 0, 1, 1], [], []>} : vector<16x64xf32>, vector<64x4096xf32>, vector<16x4096xf32> -> vector<16x4096xf32>
    %c0_12 = arith.constant 0 : index
    %c0_13 = arith.constant 0 : index
    %24 = vector.load %arg6[%c0_12, %c0_13] : memref<1x64xf32, #tpu.memory_space<vmem>>, vector<1x64xf32>
    %cst_14 = arith.constant dense<0.000000e+00> : vector<1x4096xf32>
    %25 = tpu.matmul %24, %21, %cst_14 {dimension_numbers = #tpu.dot_dimension_numbers<[1], [0], [0], [1], [0, 0, 1, 1], [], []>} : vector<1x64xf32>, vector<64x4096xf32>, vector<1x4096xf32> -> vector<1x4096xf32>
    %26 = arith.addf %15, %25 : vector<1x4096xf32>
    %27 = vector.shape_cast %1 : vector<4x4096xf32> to vector<4x1x4096xf32>
    %28 = vector.shape_cast %23 : vector<16x4096xf32> to vector<1x16x4096xf32>
    %29 = vector.broadcast %27 : vector<4x1x4096xf32> to vector<4x16x4096xf32>
    %30 = vector.broadcast %28 : vector<1x16x4096xf32> to vector<4x16x4096xf32>
    %31 = arith.mulf %29, %30 : vector<4x16x4096xf32>
    %32 = vector.shape_cast %31 : vector<4x16x4096xf32> to vector<64x4096xf32>
    %c0_15 = arith.constant 0 : index
    %c0_16 = arith.constant 0 : index
    %33 = vector.load %arg7[%c0_15, %c0_16] : memref<1x64xf32, #tpu.memory_space<vmem>>, vector<1x64xf32>
    %cst_17 = arith.constant dense<0.000000e+00> : vector<1x4096xf32>
    %34 = tpu.matmul %33, %32, %cst_17 {dimension_numbers = #tpu.dot_dimension_numbers<[1], [0], [0], [1], [0, 0, 1, 1], [], []>} : vector<1x64xf32>, vector<64x4096xf32>, vector<1x4096xf32> -> vector<1x4096xf32>
    %35 = arith.addf %26, %34 : vector<1x4096xf32>
    %cst_18 = arith.constant 0.000000e+00 : f32
    %36 = vector.broadcast %cst_18 : f32 to vector<1x256xf32>
    %37 = vector.extract_strided_slice %35 {offsets = [0, 0], sizes = [1, 256], strides = [1, 1]} : vector<1x4096xf32> to vector<1x256xf32>
    %38 = arith.addf %36, %37 : vector<1x256xf32>
    %39 = vector.extract_strided_slice %35 {offsets = [0, 256], sizes = [1, 256], strides = [1, 1]} : vector<1x4096xf32> to vector<1x256xf32>
    %40 = arith.addf %38, %39 : vector<1x256xf32>
    %41 = vector.extract_strided_slice %35 {offsets = [0, 512], sizes = [1, 256], strides = [1, 1]} : vector<1x4096xf32> to vector<1x256xf32>
    %42 = arith.addf %40, %41 : vector<1x256xf32>
    %43 = vector.extract_strided_slice %35 {offsets = [0, 768], sizes = [1, 256], strides = [1, 1]} : vector<1x4096xf32> to vector<1x256xf32>
    %44 = arith.addf %42, %43 : vector<1x256xf32>
    %45 = vector.extract_strided_slice %35 {offsets = [0, 1024], sizes = [1, 256], strides = [1, 1]} : vector<1x4096xf32> to vector<1x256xf32>
    %46 = arith.addf %44, %45 : vector<1x256xf32>
    %47 = vector.extract_strided_slice %35 {offsets = [0, 1280], sizes = [1, 256], strides = [1, 1]} : vector<1x4096xf32> to vector<1x256xf32>
    %48 = arith.addf %46, %47 : vector<1x256xf32>
    %49 = vector.extract_strided_slice %35 {offsets = [0, 1536], sizes = [1, 256], strides = [1, 1]} : vector<1x4096xf32> to vector<1x256xf32>
    %50 = arith.addf %48, %49 : vector<1x256xf32>
    %51 = vector.extract_strided_slice %35 {offsets = [0, 1792], sizes = [1, 256], strides = [1, 1]} : vector<1x4096xf32> to vector<1x256xf32>
    %52 = arith.addf %50, %51 : vector<1x256xf32>
    %53 = vector.extract_strided_slice %35 {offsets = [0, 2048], sizes = [1, 256], strides = [1, 1]} : vector<1x4096xf32> to vector<1x256xf32>
    %54 = arith.addf %52, %53 : vector<1x256xf32>
    %55 = vector.extract_strided_slice %35 {offsets = [0, 2304], sizes = [1, 256], strides = [1, 1]} : vector<1x4096xf32> to vector<1x256xf32>
    %56 = arith.addf %54, %55 : vector<1x256xf32>
    %57 = vector.extract_strided_slice %35 {offsets = [0, 2560], sizes = [1, 256], strides = [1, 1]} : vector<1x4096xf32> to vector<1x256xf32>
    %58 = arith.addf %56, %57 : vector<1x256xf32>
    %59 = vector.extract_strided_slice %35 {offsets = [0, 2816], sizes = [1, 256], strides = [1, 1]} : vector<1x4096xf32> to vector<1x256xf32>
    %60 = arith.addf %58, %59 : vector<1x256xf32>
    %61 = vector.extract_strided_slice %35 {offsets = [0, 3072], sizes = [1, 256], strides = [1, 1]} : vector<1x4096xf32> to vector<1x256xf32>
    %62 = arith.addf %60, %61 : vector<1x256xf32>
    %63 = vector.extract_strided_slice %35 {offsets = [0, 3328], sizes = [1, 256], strides = [1, 1]} : vector<1x4096xf32> to vector<1x256xf32>
    %64 = arith.addf %62, %63 : vector<1x256xf32>
    %65 = vector.extract_strided_slice %35 {offsets = [0, 3584], sizes = [1, 256], strides = [1, 1]} : vector<1x4096xf32> to vector<1x256xf32>
    %66 = arith.addf %64, %65 : vector<1x256xf32>
    %67 = vector.extract_strided_slice %35 {offsets = [0, 3840], sizes = [1, 256], strides = [1, 1]} : vector<1x4096xf32> to vector<1x256xf32>
    %68 = arith.addf %66, %67 : vector<1x256xf32>
    %c0_19 = arith.constant 0 : index
    %c0_20 = arith.constant 0 : index
    %69 = memref.load %arg8[%c0_19, %c0_20] : memref<1x1xf32, #tpu.memory_space<smem>>
    %70 = vector.broadcast %69 : f32 to vector<1x256xf32>
    %71 = arith.addf %68, %70 : vector<1x256xf32>
    %c0_21 = arith.constant 0 : index
    %c0_22 = arith.constant 0 : index
    %72 = vector.load %arg9[%c0_21, %c0_22] : memref<1x256xf32, #tpu.memory_space<vmem>>, vector<1x256xf32>
    tpu.vector_store %arg9[%c0_21, %c0_22], %71 {strides = array<i32>} : memref<1x256xf32, #tpu.memory_space<vmem>>, vector<1x256xf32>,
    return
  }
  func.func @transform_0(%arg0: i32) -> (i32, i32, i32) {
    %c0_i32 = arith.constant 0 : i32
    %c0_i32_0 = arith.constant 0 : i32
    %c0_i32_1 = arith.constant 0 : i32
    return %arg0, %c0_i32, %c0_i32_0 : i32, i32, i32
  }
  func.func @transform_1(%arg0: i32) -> (i32, i32) {
    %c0_i32 = arith.constant 0 : i32
    %c0_i32_0 = arith.constant 0 : i32
    %c0_i32_1 = arith.constant 0 : i32
    return %c0_i32, %c0_i32_0 : i32, i32
  }
  func.func @transform_2(%arg0: i32) -> (i32, i32) {
    %c0_i32 = arith.constant 0 : i32
    %c0_i32_0 = arith.constant 0 : i32
    %c0_i32_1 = arith.constant 0 : i32
    return %c0_i32, %c0_i32_0 : i32, i32
  }
  func.func @transform_3(%arg0: i32) -> (i32, i32) {
    %c0_i32 = arith.constant 0 : i32
    %c0_i32_0 = arith.constant 0 : i32
    %c0_i32_1 = arith.constant 0 : i32
    return %c0_i32, %c0_i32_0 : i32, i32
  }
  func.func @transform_4(%arg0: i32) -> (i32, i32) {
    %c0_i32 = arith.constant 0 : i32
    %c0_i32_0 = arith.constant 0 : i32
    %c0_i32_1 = arith.constant 0 : i32
    return %c0_i32, %c0_i32_0 : i32, i32
  }
  func.func @transform_5(%arg0: i32) -> (i32, i32) {
    %c0_i32 = arith.constant 0 : i32
    %c0_i32_0 = arith.constant 0 : i32
    %c0_i32_1 = arith.constant 0 : i32
    return %c0_i32, %c0_i32_0 : i32, i32
  }
  func.func @transform_6(%arg0: i32) -> (i32, i32) {
    %c0_i32 = arith.constant 0 : i32
    %c0_i32_0 = arith.constant 0 : i32
    %c0_i32_1 = arith.constant 0 : i32
    return %c0_i32, %c0_i32_0 : i32, i32
  }
  func.func @transform_7(%arg0: i32) -> (i32, i32) {
    %c0_i32 = arith.constant 0 : i32
    %c0_i32_0 = arith.constant 0 : i32
    %c0_i32_1 = arith.constant 0 : i32
    return %c0_i32, %c0_i32_0 : i32, i32
  }
  func.func @transform_8(%arg0: i32) -> (i32, i32) {
    %c0_i32 = arith.constant 0 : i32
    %c0_i32_0 = arith.constant 0 : i32
    return %c0_i32, %arg0 : i32, i32
  }
}

</mosaic_0001>

<llo_original>
// kernel: tpu_custom_call.1
$region0: #{tpu_custom_call.1}
  #allocation0 [shape = 'u32[]', space=smem, size = 0x4, offset = 0x4, fixed_abs, tag = 'smem constant byte address 0x4 - core index']
  #allocation1 [shape = 'u32[144,128]{1,0:T(1,128)}', space=vmem, size = 0x12000, scoped, tag = 'internal scratch']
  #allocation2 [shape = 'f32[1,1]{1,0:T(1,128)S(6)}', space=smem, size = 0x200, scoped, tag = 'scoped memory for tpu_custom_call.1']
  %s0 = inlined_call_operand.hbm [shape: f32[4,4,4096], index: 0, kind: input, shape index: {}]
  %s1 = inlined_call_operand.hbm [shape: f32[16,32], index: 1, kind: input, shape index: {}]
  %s2 = inlined_call_operand.hbm [shape: f32[16,64], index: 2, kind: input, shape index: {}]
  %s3 = inlined_call_operand.hbm [shape: f32[16,64], index: 3, kind: input, shape index: {}]
  %s4 = inlined_call_operand.vmem [shape: f32[1,32], index: 4, kind: input, shape index: {}]
  %s5 = inlined_call_operand.vmem [shape: f32[1,64], index: 5, kind: input, shape index: {}]
  %s6 = inlined_call_operand.vmem [shape: f32[1,64], index: 6, kind: input, shape index: {}]
  %s7 = inlined_call_operand.<no memory space> [shape: f32[1,1], index: 7, kind: input, shape index: {}]
  %s8 = inlined_call_operand.hbm [shape: f32[1,1024], index: 8, kind: output, shape index: {}]
  %s9 = sld [smem:[#allocation0]]
  $region81: #{tpu_custom_call.1} parent=0
    _
  %s11 = ssub.s32 1, %s9
  %s12 = scalar_select 0, %s11, %s9
  %13 = sst [smem:[#allocation2]] %s7
  $region1: #{tpu_custom_call.1} parent=0
    #allocation3 [shape = 'u8[131072]{0}', space=vmem, size = 0x20000, scoped, tag = 'input window, operand 0']
    #allocation4 [shape = 's32[2]{0}', space=sflag, size = 0x8, scoped, tag = 'scoped memory for tpu_custom_call.1']
    #allocation5 [shape = 's32[2]{0}', space=sflag, size = 0x8, scoped, tag = 'scoped memory for tpu_custom_call.1']
    #allocation6 [shape = 'u8[8192]{0}', space=vmem, size = 0x2000, scoped, tag = 'input window, operand 1, single buffered']
    #allocation7 [shape = 's32[1]{0}', space=sflag, size = 0x4, scoped, tag = 'scoped memory for tpu_custom_call.1']
    #allocation8 [shape = 'u8[8192]{0}', space=vmem, size = 0x2000, scoped, tag = 'input window, operand 2, single buffered']
    #allocation9 [shape = 'u8[8192]{0}', space=vmem, size = 0x2000, scoped, tag = 'input window, operand 3, single buffered']
    #allocation10 [shape = 's32[1]{0}', space=sflag, size = 0x4, scoped, tag = 'scoped memory for tpu_custom_call.1']
    #allocation11 [shape = 'u8[2048]{0}', space=vmem, size = 0x800, scoped, tag = 'output window, operand 0']
    %14 = vsyncpa [#allocation4], 0
    %s15 = scalar_lea.sflag [#allocation4], 1
    %16 = vsyncpa %s15, 0
    %17 = vsyncpa [#allocation7], 0
    %18 = vsyncpa [#allocation10], 0
    %19 = vsyncpa [#allocation5], 0
    %s20 = scalar_lea.sflag [#allocation5], 1
    %21 = vsyncpa %s20, 0
    loop: start=0, step=1, limit=6
    $region2: #{tpu_custom_call.1} parent=1 // loop_pre_header
      _
    $region3: #{tpu_custom_call.1} parent=1 // loop_header
      %s23 = sphi 0, %s27
      %p24 = scmp.ge.s32.totalorder %s23, 6
      %s33 = sphi 0, %s35
      %s36 = sphi 0, %s33
      %s37 = sphi 0, %s36
      %s53 = sphi 0, %s37
      %s57 = sphi 0, %s57
      %s59 = sphi 0, %s57
      %s60 = sphi 0, %s59
      %s74 = sphi 0, %s60
      %s78 = sphi 0, %s78
      %s80 = sphi 0, %s78
      %s81 = sphi 0, %s80
      %s95 = sphi 0, %s81
      %s99 = sphi 0, %s99
      %s101 = sphi 0, %s99
      %s102 = sphi 0, %s101
      %s116 = sphi 0, %s102
      %s120 = sphi 0, %s120
      %s122 = sphi 0, %s120
      %s123 = sphi 0, %s122
      %s137 = sphi 0, %s123
      %s141 = sphi 0, %s141
      %s143 = sphi 0, %s141
      %s144 = sphi 0, %s143
      %s158 = sphi 0, %s144
      %s162 = sphi 0, %s162
      %s164 = sphi 0, %s162
      %s165 = sphi 0, %s164
      %s179 = sphi 0, %s165
      %s183 = sphi 0, %s183
      %s185 = sphi 0, %s183
      %s186 = sphi 0, %s185
      %s200 = sphi 0, %s186
      %s206 = sphi 0, %s208
      %s209 = sphi 0, %s206
      %s210 = sphi 0, %s209
      %s226 = sphi 0, %s210
    $region4: #{tpu_custom_call.1} parent=1 // loop_header_branch
      %26 = sbr.rel (%p24) target = $region8
    $region5: #{tpu_custom_call.1} parent=1 // loop_body
      %s28 = ssub.s32 %s23, 1
      %s29 = ssub.s32 %s23, 2
      %s30 = sadd.s32 %s23, 1
      %s31 = ssub.s32 %s23, %s30
      %p32 = scmp.eq.s32.totalorder %s31, 0
      %s34 = sadd.s32 %s33, 1
      %s35 = scalar_select %p32, %s33, %s34
      %p38 = pneg %p32
      %p39 = scmp.eq.s32.totalorder %s23, 3
      %p40 = por %p38, %p39
      %p41 = scmp.ne.s32.totalorder %s33, %s36
      %p42 = scmp.eq.s32.totalorder %s23, 0
      %p43 = por %p41, %p42
      %p44 = scmp.ne.s32.totalorder %s33, %s36
      %p45 = scmp.eq.s32.totalorder %s28, 3
      %p46 = por %p44, %p45
      %p47 = scmp.ne.s32.totalorder %s36, %s37
      %p48 = scmp.eq.s32.totalorder %s28, 0
      %p49 = por %p47, %p48
      %p50 = scmp.ne.s32.totalorder %s36, %s37
      %p51 = scmp.eq.s32.totalorder %s29, 3
      %p52 = por %p50, %p51
      %p54 = scmp.ne.s32.totalorder %s37, %s53
      %p55 = scmp.eq.s32.totalorder %s29, 0
      %p56 = por %p54, %p55
      %s58 = sadd.s32 %s57, 1
      %p61 = scmp.eq.s32.totalorder %s23, 3
      %p62 = scmp.ne.s32.totalorder %s57, %s59
      %p63 = scmp.eq.s32.totalorder %s23, 0
      %p64 = por %p62, %p63
      %p65 = scmp.ne.s32.totalorder %s57, %s59
      %p66 = scmp.eq.s32.totalorder %s28, 3
      %p67 = por %p65, %p66
      %p68 = scmp.ne.s32.totalorder %s59, %s60
      %p69 = scmp.eq.s32.totalorder %s28, 0
      %p70 = por %p68, %p69
      %p71 = scmp.ne.s32.totalorder %s59, %s60
      %p72 = scmp.eq.s32.totalorder %s29, 3
      %p73 = por %p71, %p72
      %p75 = scmp.ne.s32.totalorder %s60, %s74
      %p76 = scmp.eq.s32.totalorder %s29, 0
      %p77 = por %p75, %p76
      %s79 = sadd.s32 %s78, 1
      %p82 = scmp.eq.s32.totalorder %s23, 3
      %p83 = scmp.ne.s32.totalorder %s78, %s80
      %p84 = scmp.eq.s32.totalorder %s23, 0
      %p85 = por %p83, %p84
      %p86 = scmp.ne.s32.totalorder %s78, %s80
      %p87 = scmp.eq.s32.totalorder %s28, 3
      %p88 = por %p86, %p87
      %p89 = scmp.ne.s32.totalorder %s80, %s81
      %p90 = scmp.eq.s32.totalorder %s28, 0
      %p91 = por %p89, %p90
      %p92 = scmp.ne.s32.totalorder %s80, %s81
      %p93 = scmp.eq.s32.totalorder %s29, 3
      %p94 = por %p92, %p93
      %p96 = scmp.ne.s32.totalorder %s81, %s95
      %p97 = scmp.eq.s32.totalorder %s29, 0
      %p98 = por %p96, %p97
      %s100 = sadd.s32 %s99, 1
      %p103 = scmp.eq.s32.totalorder %s23, 3
      %p104 = scmp.ne.s32.totalorder %s99, %s101
      %p105 = scmp.eq.s32.totalorder %s23, 0
      %p106 = por %p104, %p105
      %p107 = scmp.ne.s32.totalorder %s99, %s101
      %p108 = scmp.eq.s32.totalorder %s28, 3
      %p109 = por %p107, %p108
      %p110 = scmp.ne.s32.totalorder %s101, %s102
      %p111 = scmp.eq.s32.totalorder %s28, 0
      %p112 = por %p110, %p111
      %p113 = scmp.ne.s32.totalorder %s101, %s102
      %p114 = scmp.eq.s32.totalorder %s29, 3
      %p115 = por %p113, %p114
      %p117 = scmp.ne.s32.totalorder %s102, %s116
      %p118 = scmp.eq.s32.totalorder %s29, 0
      %p119 = por %p117, %p118
      %s121 = sadd.s32 %s120, 1
      %p124 = scmp.eq.s32.totalorder %s23, 3
      %p125 = scmp.ne.s32.totalorder %s120, %s122
      %p126 = scmp.eq.s32.totalorder %s23, 0
      %p127 = por %p125, %p126
      %p128 = scmp.ne.s32.totalorder %s120, %s122
      %p129 = scmp.eq.s32.totalorder %s28, 3
      %p130 = por %p128, %p129
      %p131 = scmp.ne.s32.totalorder %s122, %s123
      %p132 = scmp.eq.s32.totalorder %s28, 0
      %p133 = por %p131, %p132
      %p134 = scmp.ne.s32.totalorder %s122, %s123
      %p135 = scmp.eq.s32.totalorder %s29, 3
      %p136 = por %p134, %p135
      %p138 = scmp.ne.s32.totalorder %s123, %s137
      %p139 = scmp.eq.s32.totalorder %s29, 0
      %p140 = por %p138, %p139
      %s142 = sadd.s32 %s141, 1
      %p145 = scmp.eq.s32.totalorder %s23, 3
      %p146 = scmp.ne.s32.totalorder %s141, %s143
      %p147 = scmp.eq.s32.totalorder %s23, 0
      %p148 = por %p146, %p147
      %p149 = scmp.ne.s32.totalorder %s141, %s143
      %p150 = scmp.eq.s32.totalorder %s28, 3
      %p151 = por %p149, %p150
      %p152 = scmp.ne.s32.totalorder %s143, %s144
      %p153 = scmp.eq.s32.totalorder %s28, 0
      %p154 = por %p152, %p153
      %p155 = scmp.ne.s32.totalorder %s143, %s144
      %p156 = scmp.eq.s32.totalorder %s29, 3
      %p157 = por %p155, %p156
      %p159 = scmp.ne.s32.totalorder %s144, %s158
      %p160 = scmp.eq.s32.totalorder %s29, 0
      %p161 = por %p159, %p160
      %s163 = sadd.s32 %s162, 1
      %p166 = scmp.eq.s32.totalorder %s23, 3
      %p167 = scmp.ne.s32.totalorder %s162, %s164
      %p168 = scmp.eq.s32.totalorder %s23, 0
      %p169 = por %p167, %p168
      %p170 = scmp.ne.s32.totalorder %s162, %s164
      %p171 = scmp.eq.s32.totalorder %s28, 3
      %p172 = por %p170, %p171
      %p173 = scmp.ne.s32.totalorder %s164, %s165
      %p174 = scmp.eq.s32.totalorder %s28, 0
      %p175 = por %p173, %p174
      %p176 = scmp.ne.s32.totalorder %s164, %s165
      %p177 = scmp.eq.s32.totalorder %s29, 3
      %p178 = por %p176, %p177
      %p180 = scmp.ne.s32.totalorder %s165, %s179
      %p181 = scmp.eq.s32.totalorder %s29, 0
      %p182 = por %p180, %p181
      %s184 = sadd.s32 %s183, 1
      %p187 = scmp.eq.s32.totalorder %s23, 3
      %p188 = scmp.ne.s32.totalorder %s183, %s185
      %p189 = scmp.eq.s32.totalorder %s23, 0
      %p190 = por %p188, %p189
      %p191 = scmp.ne.s32.totalorder %s183, %s185
      %p192 = scmp.eq.s32.totalorder %s28, 3
      %p193 = por %p191, %p192
      %p194 = scmp.ne.s32.totalorder %s185, %s186
      %p195 = scmp.eq.s32.totalorder %s28, 0
      %p196 = por %p194, %p195
      %p197 = scmp.ne.s32.totalorder %s185, %s186
      %p198 = scmp.eq.s32.totalorder %s29, 3
      %p199 = por %p197, %p198
      %p201 = scmp.ne.s32.totalorder %s186, %s200
      %p202 = scmp.eq.s32.totalorder %s29, 0
      %p203 = por %p201, %p202
      %s204 = ssub.s32 %s23, %s30
      %p205 = scmp.eq.s32.totalorder %s204, 0
      %s207 = sadd.s32 %s206, 1
      %s208 = scalar_select %p205, %s206, %s207
      %p211 = pneg %p205
      %p212 = scmp.eq.s32.totalorder %s23, 3
      %p213 = por %p211, %p212
      %p214 = scmp.ne.s32.totalorder %s206, %s209
      %p215 = scmp.eq.s32.totalorder %s23, 0
      %p216 = por %p214, %p215
      %p217 = scmp.ne.s32.totalorder %s206, %s209
      %p218 = scmp.eq.s32.totalorder %s28, 3
      %p219 = por %p217, %p218
      %p220 = scmp.ne.s32.totalorder %s209, %s210
      %p221 = scmp.eq.s32.totalorder %s28, 0
      %p222 = por %p220, %p221
      %p223 = scmp.ne.s32.totalorder %s209, %s210
      %p224 = scmp.eq.s32.totalorder %s29, 3
      %p225 = por %p223, %p224
      %p227 = scmp.ne.s32.totalorder %s210, %s226
      %p228 = scmp.eq.s32.totalorder %s29, 0
      %p229 = por %p227, %p228
      %p230 = scmp.le.s32.totalorder 1, %s23
      %p231 = scmp.lt.s32.totalorder %s23, 5
      %p232 = pnand %p230, %p231
      %p233 = pneg %p232
      // Predicated region
      $region9: #{tpu_custom_call.1} parent=5 // pred_check
        _
      $region10: #{tpu_custom_call.1} parent=5 // pred_check_branch
        %235 = sbr.rel (%p232) target = $region12
      $region11: #{tpu_custom_call.1} parent=5 // pred_region
        %s236 = ssub.s32 %s23, 1
        // Predicated region
        $region13: #{tpu_custom_call.1} parent=11 // pred_check
          %p237 = pneg %p70
        $region14: #{tpu_custom_call.1} parent=11 // pred_check_branch
          %239 = sbr.rel (%p237) target = $region16
        $region15: #{tpu_custom_call.1} parent=11 // pred_region
          %s241 = ssub.s32 256, 256
          %242 = vsyncadd [#allocation7], %s241
          %s243 = sshll.u32 [#allocation6], 4
          %s244 = int_to_ptr.vmem [resolvable:$true] %s243
          %249 = dma.hbm_to_vmem [thread:$0]  %s1, 256, %s244, [#allocation7], 128, 128, 8
        $region16: #{tpu_custom_call.1} parent=11 // pred_fallthru
          _
        // Predicated region
        $region17: #{tpu_custom_call.1} parent=11 // pred_check
          %p250 = pneg %p91
        $region18: #{tpu_custom_call.1} parent=11 // pred_check_branch
          %252 = sbr.rel (%p250) target = $region20
        $region19: #{tpu_custom_call.1} parent=11 // pred_region
          %s254 = ssub.s32 256, 256
          %255 = vsyncadd [#allocation7], %s254
          %s256 = sshll.u32 [#allocation8], 4
          %s257 = int_to_ptr.vmem [resolvable:$true] %s256
          %262 = dma.hbm_to_vmem [thread:$0]  %s2, 256, %s257, [#allocation7], 128, 128, 8
        $region20: #{tpu_custom_call.1} parent=11 // pred_fallthru
          _
        // Predicated region
        $region21: #{tpu_custom_call.1} parent=11 // pred_check
          %p263 = pneg %p112
        $region22: #{tpu_custom_call.1} parent=11 // pred_check_branch
          %265 = sbr.rel (%p263) target = $region24
        $region23: #{tpu_custom_call.1} parent=11 // pred_region
          %s267 = ssub.s32 256, 256
          %268 = vsyncadd [#allocation10], %s267
          %s269 = sshll.u32 [#allocation9], 4
          %s270 = int_to_ptr.vmem [resolvable:$true] %s269
          %275 = dma.hbm_to_vmem [thread:$0]  %s3, 256, %s270, [#allocation10], 128, 128, 8
        $region24: #{tpu_custom_call.1} parent=11 // pred_fallthru
          _
        // Predicated region
        $region25: #{tpu_custom_call.1} parent=11 // pred_check
          %p276 = pneg %p133
        $region26: #{tpu_custom_call.1} parent=11 // pred_check_branch
          %278 = sbr.rel (%p276) target = $region28
        $region27: #{tpu_custom_call.1} parent=11 // pred_region
          _
        $region28: #{tpu_custom_call.1} parent=11 // pred_fallthru
          _
        // Predicated region
        $region29: #{tpu_custom_call.1} parent=11 // pred_check
          %p279 = pneg %p154
        $region30: #{tpu_custom_call.1} parent=11 // pred_check_branch
          %281 = sbr.rel (%p279) target = $region32
        $region31: #{tpu_custom_call.1} parent=11 // pred_region
          _
        $region32: #{tpu_custom_call.1} parent=11 // pred_fallthru
          _
        // Predicated region
        $region33: #{tpu_custom_call.1} parent=11 // pred_check
          %p282 = pneg %p175
        $region34: #{tpu_custom_call.1} parent=11 // pred_check_branch
          %284 = sbr.rel (%p282) target = $region36
        $region35: #{tpu_custom_call.1} parent=11 // pred_region
          _
        $region36: #{tpu_custom_call.1} parent=11 // pred_fallthru
          _
        // Predicated region
        $region37: #{tpu_custom_call.1} parent=11 // pred_check
          %p285 = pneg %p196
        $region38: #{tpu_custom_call.1} parent=11 // pred_check_branch
          %287 = sbr.rel (%p285) target = $region40
        $region39: #{tpu_custom_call.1} parent=11 // pred_region
          _
        $region40: #{tpu_custom_call.1} parent=11 // pred_fallthru
          _
      $region12: #{tpu_custom_call.1} parent=5 // pred_fallthru
        _
      %p288 = scmp.lt.s32.totalorder %s23, 4
      // Predicated region
      $region41: #{tpu_custom_call.1} parent=5 // pred_check
        %p289 = pneg %p288
      $region42: #{tpu_custom_call.1} parent=5 // pred_check_branch
        %291 = sbr.rel (%p289) target = $region44
      $region43: #{tpu_custom_call.1} parent=5 // pred_region
        // Predicated region
        $region45: #{tpu_custom_call.1} parent=43 // pred_check
          %p292 = pneg %p43
        $region46: #{tpu_custom_call.1} parent=43 // pred_check_branch
          %294 = sbr.rel (%p292) target = $region48
        $region47: #{tpu_custom_call.1} parent=43 // pred_region
          %s295 = sand.u32 %s33, 1
          %s296 = scalar_lea.sflag [#allocation4], %s295
          %s297 = sand.u32 %s33, 1
          %s298 = smul.addr %s297, 128
          %s299 = scalar_lea.vmem [#allocation3], %s298
          %s301 = ssub.s32 2048, 2048
          %302 = vsyncadd %s296, %s301
          %s303 = smul.addr %s23, 32
          %s304 = smul.addr %s303, 64
          %s305 = scalar_lea.hbm %s0, %s304
          %s307 = sshll.u32 %s299, 4
          %s308 = int_to_ptr.vmem [resolvable:$true] %s307
          %310 = dma.hbm_to_vmem [thread:$0]  %s305, 2048, %s308, %s296
        $region48: #{tpu_custom_call.1} parent=43 // pred_fallthru
          _
      $region44: #{tpu_custom_call.1} parent=5 // pred_fallthru
        _
      %p311 = scmp.le.s32.totalorder 1, %s23
      %p312 = scmp.lt.s32.totalorder %s23, 5
      %p313 = pnand %p311, %p312
      %p314 = pneg %p313
      // Predicated region
      $region49: #{tpu_custom_call.1} parent=5 // pred_check
        _
      $region50: #{tpu_custom_call.1} parent=5 // pred_check_branch
        %316 = sbr.rel (%p313) target = $region52
      $region51: #{tpu_custom_call.1} parent=5 // pred_region
        %s317 = ssub.s32 %s23, 1
        %s318 = sand.u32 %s36, 1
        %s319 = scalar_lea.sflag [#allocation4], %s318
        %s320 = sand.u32 %s36, 1
        %s321 = smul.addr %s320, 128
        %s322 = scalar_lea.vmem [#allocation3], %s321
        // Predicated region
        $region53: #{tpu_custom_call.1} parent=51 // pred_check
          %p323 = pneg %p49
        $region54: #{tpu_custom_call.1} parent=51 // pred_check_branch
          %325 = sbr.rel (%p323) target = $region56
        $region55: #{tpu_custom_call.1} parent=51 // pred_region
          %326 = dma.done %s319, 2048
        $region56: #{tpu_custom_call.1} parent=51 // pred_fallthru
          _
        // Predicated region
        $region57: #{tpu_custom_call.1} parent=51 // pred_check
          %p327 = pneg %p70
        $region58: #{tpu_custom_call.1} parent=51 // pred_check_branch
          %329 = sbr.rel (%p327) target = $region60
        $region59: #{tpu_custom_call.1} parent=51 // pred_region
          %330 = dma.done [#allocation7], 256
        $region60: #{tpu_custom_call.1} parent=51 // pred_fallthru
          _
        // Predicated region
        $region61: #{tpu_custom_call.1} parent=51 // pred_check
          %p331 = pneg %p91
        $region62: #{tpu_custom_call.1} parent=51 // pred_check_branch
          %333 = sbr.rel (%p331) target = $region64
        $region63: #{tpu_custom_call.1} parent=51 // pred_region
          %334 = dma.done [#allocation7], 256
        $region64: #{tpu_custom_call.1} parent=51 // pred_fallthru
          _
        // Predicated region
        $region65: #{tpu_custom_call.1} parent=51 // pred_check
          %p335 = pneg %p112
        $region66: #{tpu_custom_call.1} parent=51 // pred_check_branch
          %337 = sbr.rel (%p335) target = $region68
        $region67: #{tpu_custom_call.1} parent=51 // pred_region
          %338 = dma.done [#allocation10], 256
        $region68: #{tpu_custom_call.1} parent=51 // pred_fallthru
          _
        %s339 = sand.u32 %s36, 1
        %s340 = scalar_lea.sflag [#allocation4], %s339
        %s341 = sand.u32 %s36, 1
        %s342 = smul.addr %s341, 128
        %s343 = scalar_lea.vmem [#allocation3], %s342
        %p344 = pneg %p49
        %p345 = pneg %p46
        %p346 = pneg %p70
        %p347 = pneg %p67
        %p348 = pneg %p91
        %p349 = pneg %p88
        %p350 = pneg %p112
        %p351 = pneg %p109
        %p352 = pneg %p133
        %p353 = pneg %p130
        %p354 = pneg %p154
        %p355 = pneg %p151
        %p356 = pneg %p175
        %p357 = pneg %p172
        %p358 = pneg %p196
        %p359 = pneg %p193
        %p360 = pneg %p222
        %p361 = pneg %p219
        %s362 = sand.u32 %s209, 1
        %s363 = scalar_lea.sflag [#allocation5], %s362
        %s364 = sand.u32 %s209, 1
        %s365 = smul.addr %s364, 2
        %s366 = scalar_lea.vmem [#allocation11], %s365
        %s367 = smul.u32 2, %s28
        %v368 = vld [vmem:[%s322] sm:$0xff]
        %v369 = vld [vmem:[%s322 + $0x8] sm:$0xff]
        %v370 = vld [vmem:[%s322 + $0x10] sm:$0xff]
        %v371 = vld [vmem:[%s322 + $0x18] sm:$0xff]
        %v372 = vld [vmem:[%s322 + $0x20] sm:$0xff]
        %v373 = vld [vmem:[%s322 + $0x28] sm:$0xff]
        %v374 = vld [vmem:[%s322 + $0x30] sm:$0xff]
        %v375 = vld [vmem:[%s322 + $0x38] sm:$0xff]
        %v376 = vld [vmem:[%s322 + $0x40] sm:$0xff]
        %v377 = vld [vmem:[%s322 + $0x48] sm:$0xff]
        %v378 = vld [vmem:[%s322 + $0x50] sm:$0xff]
        %v379 = vld [vmem:[%s322 + $0x58] sm:$0xff]
        %v380 = vld [vmem:[%s322 + $0x60] sm:$0xff]
        %v381 = vld [vmem:[%s322 + $0x68] sm:$0xff]
        %v382 = vld [vmem:[%s322 + $0x70] sm:$0xff]
        %v383 = vld [vmem:[%s322 + $0x78] sm:$0xff]
        %v400 = vcombine.high %v368, %v368
        %v401 = vcombine.high %v369, %v369
        %v402 = vcombine.high %v370, %v370
        %v403 = vcombine.high %v371, %v371
        %v404 = vcombine.high %v372, %v372
        %v405 = vcombine.high %v373, %v373
        %v406 = vcombine.high %v374, %v374
        %v407 = vcombine.high %v375, %v375
        %v408 = vcombine.high %v376, %v376
        %v409 = vcombine.high %v377, %v377
        %v410 = vcombine.high %v378, %v378
        %v411 = vcombine.high %v379, %v379
        %v412 = vcombine.high %v380, %v380
        %v413 = vcombine.high %v381, %v381
        %v414 = vcombine.high %v382, %v382
        %v415 = vcombine.high %v383, %v383
        %vm432 = vcmask 1043456
        %v433 = vsel %vm432, %v368, 0.0
        %v434 = vsel %vm432, %v400, 0.0
        %v435 = vsel %vm432, %v369, 0.0
        %v436 = vsel %vm432, %v401, 0.0
        %v437 = vsel %vm432, %v370, 0.0
        %v438 = vsel %vm432, %v402, 0.0
        %v439 = vsel %vm432, %v371, 0.0
        %v440 = vsel %vm432, %v403, 0.0
        %v441 = vsel %vm432, %v372, 0.0
        %v442 = vsel %vm432, %v404, 0.0
        %v443 = vsel %vm432, %v373, 0.0
        %v444 = vsel %vm432, %v405, 0.0
        %v445 = vsel %vm432, %v374, 0.0
        %v446 = vsel %vm432, %v406, 0.0
        %v447 = vsel %vm432, %v375, 0.0
        %v448 = vsel %vm432, %v407, 0.0
        %v449 = vsel %vm432, %v376, 0.0
        %v450 = vsel %vm432, %v408, 0.0
        %v451 = vsel %vm432, %v377, 0.0
        %v452 = vsel %vm432, %v409, 0.0
        %v453 = vsel %vm432, %v378, 0.0
        %v454 = vsel %vm432, %v410, 0.0
        %v455 = vsel %vm432, %v379, 0.0
        %v456 = vsel %vm432, %v411, 0.0
        %v457 = vsel %vm432, %v380, 0.0
        %v458 = vsel %vm432, %v412, 0.0
        %v459 = vsel %vm432, %v381, 0.0
        %v460 = vsel %vm432, %v413, 0.0
        %v461 = vsel %vm432, %v382, 0.0
        %v462 = vsel %vm432, %v414, 0.0
        %v463 = vsel %vm432, %v383, 0.0
        %v464 = vsel %vm432, %v415, 0.0
        %v466 = vunpack.c.l.s4 1966171168
        %v467 = vunpack.c.0.s8 %v466
        %v468 = vlaneseq
        %v469 = vshrl.u32 %v468, 7
        %v470 = vsub.s32 %v467, %v469
        %v471 = vrot.slane %v368, %v470
        %v473 = vunpack.c.l.s4 1966171168
        %v474 = vunpack.c.0.s8 %v473
        %v475 = vlaneseq
        %v476 = vshrl.u32 %v475, 7
        %v477 = vsub.s32 %v474, %v476
        %v478 = vrot.slane %v369, %v477
        %v480 = vunpack.c.l.s4 1966171168
        %v481 = vunpack.c.0.s8 %v480
        %v482 = vlaneseq
        %v483 = vshrl.u32 %v482, 7
        %v484 = vsub.s32 %v481, %v483
        %v485 = vrot.slane %v370, %v484
        %v487 = vunpack.c.l.s4 1966171168
        %v488 = vunpack.c.0.s8 %v487
        %v489 = vlaneseq
        %v490 = vshrl.u32 %v489, 7
        %v491 = vsub.s32 %v488, %v490
        %v492 = vrot.slane %v371, %v491
        %v493 = vcombine.low %v471, %v478
        %v494 = vcombine.high %v471, %v478
        %v495 = vcombine.low %v485, %v492
        %v496 = vcombine.high %v485, %v492
        %v498 = vunpack.c.l.s4 1966171168
        %v499 = vunpack.c.0.s8 %v498
        %v500 = vlaneseq
        %v501 = vshrl.u32 %v500, 7
        %v502 = vsub.s32 %v499, %v501
        %v503 = vrot.slane %v493, %v502
        %v505 = vunpack.c.l.s4 1966171168
        %v506 = vunpack.c.0.s8 %v505
        %v507 = vlaneseq
        %v508 = vshrl.u32 %v507, 7
        %v509 = vsub.s32 %v506, %v508
        %v510 = vrot.slane %v494, %v509
        %v512 = vunpack.c.l.s4 1966171168
        %v513 = vunpack.c.0.s8 %v512
        %v514 = vlaneseq
        %v515 = vshrl.u32 %v514, 7
        %v516 = vsub.s32 %v513, %v515
        %v517 = vrot.slane %v495, %v516
        %v519 = vunpack.c.l.s4 1966171168
        %v520 = vunpack.c.0.s8 %v519
        %v521 = vlaneseq
        %v522 = vshrl.u32 %v521, 7
        %v523 = vsub.s32 %v520, %v522
        %v524 = vrot.slane %v496, %v523
        %v525 = vcombine.low %v503, %v517
        %v526 = vcombine.high %v503, %v517
        %v527 = vcombine.low %v510, %v524
        %v528 = vcombine.high %v510, %v524
        %v530 = vunpack.c.l.s4 1966171168
        %v531 = vunpack.c.0.s8 %v530
        %v532 = vlaneseq
        %v533 = vshrl.u32 %v532, 7
        %v534 = vsub.s32 %v531, %v533
        %v535 = vrot.slane %v372, %v534
        %v537 = vunpack.c.l.s4 1966171168
        %v538 = vunpack.c.0.s8 %v537
        %v539 = vlaneseq
        %v540 = vshrl.u32 %v539, 7
        %v541 = vsub.s32 %v538, %v540
        %v542 = vrot.slane %v373, %v541
        %v544 = vunpack.c.l.s4 1966171168
        %v545 = vunpack.c.0.s8 %v544
        %v546 = vlaneseq
        %v547 = vshrl.u32 %v546, 7
        %v548 = vsub.s32 %v545, %v547
        %v549 = vrot.slane %v374, %v548
        %v551 = vunpack.c.l.s4 1966171168
        %v552 = vunpack.c.0.s8 %v551
        %v553 = vlaneseq
        %v554 = vshrl.u32 %v553, 7
        %v555 = vsub.s32 %v552, %v554
        %v556 = vrot.slane %v375, %v555
        %v557 = vcombine.low %v535, %v542
        %v558 = vcombine.high %v535, %v542
        %v559 = vcombine.low %v549, %v556
        %v560 = vcombine.high %v549, %v556
        %v562 = vunpack.c.l.s4 1966171168
        %v563 = vunpack.c.0.s8 %v562
        %v564 = vlaneseq
        %v565 = vshrl.u32 %v564, 7
        %v566 = vsub.s32 %v563, %v565
        %v567 = vrot.slane %v557, %v566
        %v569 = vunpack.c.l.s4 1966171168
        %v570 = vunpack.c.0.s8 %v569
        %v571 = vlaneseq
        %v572 = vshrl.u32 %v571, 7
        %v573 = vsub.s32 %v570, %v572
        %v574 = vrot.slane %v558, %v573
        %v576 = vunpack.c.l.s4 1966171168
        %v577 = vunpack.c.0.s8 %v576
        %v578 = vlaneseq
        %v579 = vshrl.u32 %v578, 7
        %v580 = vsub.s32 %v577, %v579
        %v581 = vrot.slane %v559, %v580
        %v583 = vunpack.c.l.s4 1966171168
        %v584 = vunpack.c.0.s8 %v583
        %v585 = vlaneseq
        %v586 = vshrl.u32 %v585, 7
        %v587 = vsub.s32 %v584, %v586
        %v588 = vrot.slane %v560, %v587
        %v589 = vcombine.low %v567, %v581
        %v590 = vcombine.high %v567, %v581
        %v591 = vcombine.low %v574, %v588
        %v592 = vcombine.high %v574, %v588
        %v594 = vunpack.c.l.s4 1966171168
        %v595 = vunpack.c.0.s8 %v594
        %v596 = vlaneseq
        %v597 = vshrl.u32 %v596, 7
        %v598 = vsub.s32 %v595, %v597
        %v599 = vrot.slane %v376, %v598
        %v601 = vunpack.c.l.s4 1966171168
        %v602 = vunpack.c.0.s8 %v601
        %v603 = vlaneseq
        %v604 = vshrl.u32 %v603, 7
        %v605 = vsub.s32 %v602, %v604
        %v606 = vrot.slane %v377, %v605
        %v608 = vunpack.c.l.s4 1966171168
        %v609 = vunpack.c.0.s8 %v608
        %v610 = vlaneseq
        %v611 = vshrl.u32 %v610, 7
        %v612 = vsub.s32 %v609, %v611
        %v613 = vrot.slane %v378, %v612
        %v615 = vunpack.c.l.s4 1966171168
        %v616 = vunpack.c.0.s8 %v615
        %v617 = vlaneseq
        %v618 = vshrl.u32 %v617, 7
        %v619 = vsub.s32 %v616, %v618
        %v620 = vrot.slane %v379, %v619
        %v621 = vcombine.low %v599, %v606
        %v622 = vcombine.high %v599, %v606
        %v623 = vcombine.low %v613, %v620
        %v624 = vcombine.high %v613, %v620
        %v626 = vunpack.c.l.s4 1966171168
        %v627 = vunpack.c.0.s8 %v626
        %v628 = vlaneseq
        %v629 = vshrl.u32 %v628, 7
        %v630 = vsub.s32 %v627, %v629
        %v631 = vrot.slane %v621, %v630
        %v633 = vunpack.c.l.s4 1966171168
        %v634 = vunpack.c.0.s8 %v633
        %v635 = vlaneseq
        %v636 = vshrl.u32 %v635, 7
        %v637 = vsub.s32 %v634, %v636
        %v638 = vrot.slane %v622, %v637
        %v640 = vunpack.c.l.s4 1966171168
        %v641 = vunpack.c.0.s8 %v640
        %v642 = vlaneseq
        %v643 = vshrl.u32 %v642, 7
        %v644 = vsub.s32 %v641, %v643
        %v645 = vrot.slane %v623, %v644
        %v647 = vunpack.c.l.s4 1966171168
        %v648 = vunpack.c.0.s8 %v647
        %v649 = vlaneseq
        %v650 = vshrl.u32 %v649, 7
        %v651 = vsub.s32 %v648, %v650
        %v652 = vrot.slane %v624, %v651
        %v653 = vcombine.low %v631, %v645
        %v654 = vcombine.high %v631, %v645
        %v655 = vcombine.low %v638, %v652
        %v656 = vcombine.high %v638, %v652
        %v658 = vunpack.c.l.s4 1966171168
        %v659 = vunpack.c.0.s8 %v658
        %v660 = vlaneseq
        %v661 = vshrl.u32 %v660, 7
        %v662 = vsub.s32 %v659, %v661
        %v663 = vrot.slane %v380, %v662
        %v665 = vunpack.c.l.s4 1966171168
        %v666 = vunpack.c.0.s8 %v665
        %v667 = vlaneseq
        %v668 = vshrl.u32 %v667, 7
        %v669 = vsub.s32 %v666, %v668
        %v670 = vrot.slane %v381, %v669
        %v672 = vunpack.c.l.s4 1966171168
        %v673 = vunpack.c.0.s8 %v672
        %v674 = vlaneseq
        %v675 = vshrl.u32 %v674, 7
        %v676 = vsub.s32 %v673, %v675
        %v677 = vrot.slane %v382, %v676
        %v679 = vunpack.c.l.s4 1966171168
        %v680 = vunpack.c.0.s8 %v679
        %v681 = vlaneseq
        %v682 = vshrl.u32 %v681, 7
        %v683 = vsub.s32 %v680, %v682
        %v684 = vrot.slane %v383, %v683
        %v685 = vcombine.low %v663, %v670
        %v686 = vcombine.high %v663, %v670
        %v687 = vcombine.low %v677, %v684
        %v688 = vcombine.high %v677, %v684
        %v690 = vunpack.c.l.s4 1966171168
        %v691 = vunpack.c.0.s8 %v690
        %v692 = vlaneseq
        %v693 = vshrl.u32 %v692, 7
        %v694 = vsub.s32 %v691, %v693
        %v695 = vrot.slane %v685, %v694
        %v697 = vunpack.c.l.s4 1966171168
        %v698 = vunpack.c.0.s8 %v697
        %v699 = vlaneseq
        %v700 = vshrl.u32 %v699, 7
        %v701 = vsub.s32 %v698, %v700
        %v702 = vrot.slane %v686, %v701
        %v704 = vunpack.c.l.s4 1966171168
        %v705 = vunpack.c.0.s8 %v704
        %v706 = vlaneseq
        %v707 = vshrl.u32 %v706, 7
        %v708 = vsub.s32 %v705, %v707
        %v709 = vrot.slane %v687, %v708
        %v711 = vunpack.c.l.s4 1966171168
        %v712 = vunpack.c.0.s8 %v711
        %v713 = vlaneseq
        %v714 = vshrl.u32 %v713, 7
        %v715 = vsub.s32 %v712, %v714
        %v716 = vrot.slane %v688, %v715
        %v717 = vcombine.low %v695, %v709
        %v718 = vcombine.high %v695, %v709
        %v719 = vcombine.low %v702, %v716
        %v720 = vcombine.high %v702, %v716
        %v721 = vlaneseq
        %v722 = vshrl.u32 %v721, 7
        %v723 = vsub.s32 0, %v722
        %v724 = vrot.slane %v525, %v723
        %v725 = vlaneseq
        %v726 = vshrl.u32 %v725, 7
        %v727 = vsub.s32 1, %v726
        %v728 = vrot.slane %v525, %v727
        %v729 = vlaneseq
        %v730 = vshrl.u32 %v729, 7
        %v731 = vsub.s32 2, %v730
        %v732 = vrot.slane %v525, %v731
        %v733 = vlaneseq
        %v734 = vshrl.u32 %v733, 7
        %v735 = vsub.s32 3, %v734
        %v736 = vrot.slane %v525, %v735
        %v737 = vlaneseq
        %v738 = vshrl.u32 %v737, 7
        %v739 = vsub.s32 4, %v738
        %v740 = vrot.slane %v525, %v739
        %v741 = vlaneseq
        %v742 = vshrl.u32 %v741, 7
        %v743 = vsub.s32 5, %v742
        %v744 = vrot.slane %v525, %v743
        %v745 = vlaneseq
        %v746 = vshrl.u32 %v745, 7
        %v747 = vsub.s32 6, %v746
        %v748 = vrot.slane %v525, %v747
        %v749 = vlaneseq
        %v750 = vshrl.u32 %v749, 7
        %v751 = vsub.s32 7, %v750
        %v752 = vrot.slane %v525, %v751
        %v753 = vlaneseq
        %v754 = vshrl.u32 %v753, 7
        %v755 = vsub.s32 0, %v754
        %v756 = vrot.slane %v589, %v755
        %v757 = vlaneseq
        %v758 = vshrl.u32 %v757, 7
        %v759 = vsub.s32 1, %v758
        %v760 = vrot.slane %v589, %v759
        %v761 = vlaneseq
        %v762 = vshrl.u32 %v761, 7
        %v763 = vsub.s32 2, %v762
        %v764 = vrot.slane %v589, %v763
        %v765 = vlaneseq
        %v766 = vshrl.u32 %v765, 7
        %v767 = vsub.s32 3, %v766
        %v768 = vrot.slane %v589, %v767
        %v769 = vlaneseq
        %v770 = vshrl.u32 %v769, 7
        %v771 = vsub.s32 4, %v770
        %v772 = vrot.slane %v589, %v771
        %v773 = vlaneseq
        %v774 = vshrl.u32 %v773, 7
        %v775 = vsub.s32 5, %v774
        %v776 = vrot.slane %v589, %v775
        %v777 = vlaneseq
        %v778 = vshrl.u32 %v777, 7
        %v779 = vsub.s32 6, %v778
        %v780 = vrot.slane %v589, %v779
        %v781 = vlaneseq
        %v782 = vshrl.u32 %v781, 7
        %v783 = vsub.s32 7, %v782
        %v784 = vrot.slane %v589, %v783
        %v785 = vlaneseq
        %v786 = vshrl.u32 %v785, 7
        %v787 = vsub.s32 0, %v786
        %v788 = vrot.slane %v653, %v787
        %v789 = vlaneseq
        %v790 = vshrl.u32 %v789, 7
        %v791 = vsub.s32 1, %v790
        %v792 = vrot.slane %v653, %v791
        %v793 = vlaneseq
        %v794 = vshrl.u32 %v793, 7
        %v795 = vsub.s32 2, %v794
        %v796 = vrot.slane %v653, %v795
        %v797 = vlaneseq
        %v798 = vshrl.u32 %v797, 7
        %v799 = vsub.s32 3, %v798
        %v800 = vrot.slane %v653, %v799
        %v801 = vlaneseq
        %v802 = vshrl.u32 %v801, 7
        %v803 = vsub.s32 4, %v802
        %v804 = vrot.slane %v653, %v803
        %v805 = vlaneseq
        %v806 = vshrl.u32 %v805, 7
        %v807 = vsub.s32 5, %v806
        %v808 = vrot.slane %v653, %v807
        %v809 = vlaneseq
        %v810 = vshrl.u32 %v809, 7
        %v811 = vsub.s32 6, %v810
        %v812 = vrot.slane %v653, %v811
        %v813 = vlaneseq
        %v814 = vshrl.u32 %v813, 7
        %v815 = vsub.s32 7, %v814
        %v816 = vrot.slane %v653, %v815
        %v817 = vlaneseq
        %v818 = vshrl.u32 %v817, 7
        %v819 = vsub.s32 0, %v818
        %v820 = vrot.slane %v717, %v819
        %v821 = vlaneseq
        %v822 = vshrl.u32 %v821, 7
        %v823 = vsub.s32 1, %v822
        %v824 = vrot.slane %v717, %v823
        %v825 = vlaneseq
        %v826 = vshrl.u32 %v825, 7
        %v827 = vsub.s32 2, %v826
        %v828 = vrot.slane %v717, %v827
        %v829 = vlaneseq
        %v830 = vshrl.u32 %v829, 7
        %v831 = vsub.s32 3, %v830
        %v832 = vrot.slane %v717, %v831
        %v833 = vlaneseq
        %v834 = vshrl.u32 %v833, 7
        %v835 = vsub.s32 4, %v834
        %v836 = vrot.slane %v717, %v835
        %v837 = vlaneseq
        %v838 = vshrl.u32 %v837, 7
        %v839 = vsub.s32 5, %v838
        %v840 = vrot.slane %v717, %v839
        %v841 = vlaneseq
        %v842 = vshrl.u32 %v841, 7
        %v843 = vsub.s32 6, %v842
        %v844 = vrot.slane %v717, %v843
        %v845 = vlaneseq
        %v846 = vshrl.u32 %v845, 7
        %v847 = vsub.s32 7, %v846
        %v848 = vrot.slane %v717, %v847
        %v849 = vlaneseq
        %v850 = vshrl.u32 %v849, 7
        %v851 = vsub.s32 0, %v850
        %v852 = vrot.slane %v527, %v851
        %v853 = vlaneseq
        %v854 = vshrl.u32 %v853, 7
        %v855 = vsub.s32 1, %v854
        %v856 = vrot.slane %v527, %v855
        %v857 = vlaneseq
        %v858 = vshrl.u32 %v857, 7
        %v859 = vsub.s32 2, %v858
        %v860 = vrot.slane %v527, %v859
        %v861 = vlaneseq
        %v862 = vshrl.u32 %v861, 7
        %v863 = vsub.s32 3, %v862
        %v864 = vrot.slane %v527, %v863
        %v865 = vlaneseq
        %v866 = vshrl.u32 %v865, 7
        %v867 = vsub.s32 4, %v866
        %v868 = vrot.slane %v527, %v867
        %v869 = vlaneseq
        %v870 = vshrl.u32 %v869, 7
        %v871 = vsub.s32 5, %v870
        %v872 = vrot.slane %v527, %v871
        %v873 = vlaneseq
        %v874 = vshrl.u32 %v873, 7
        %v875 = vsub.s32 6, %v874
        %v876 = vrot.slane %v527, %v875
        %v877 = vlaneseq
        %v878 = vshrl.u32 %v877, 7
        %v879 = vsub.s32 7, %v878
        %v880 = vrot.slane %v527, %v879
        %v881 = vlaneseq
        %v882 = vshrl.u32 %v881, 7
        %v883 = vsub.s32 0, %v882
        %v884 = vrot.slane %v591, %v883
        %v885 = vlaneseq
        %v886 = vshrl.u32 %v885, 7
        %v887 = vsub.s32 1, %v886
        %v888 = vrot.slane %v591, %v887
        %v889 = vlaneseq
        %v890 = vshrl.u32 %v889, 7
        %v891 = vsub.s32 2, %v890
        %v892 = vrot.slane %v591, %v891
        %v893 = vlaneseq
        %v894 = vshrl.u32 %v893, 7
        %v895 = vsub.s32 3, %v894
        %v896 = vrot.slane %v591, %v895
        %v897 = vlaneseq
        %v898 = vshrl.u32 %v897, 7
        %v899 = vsub.s32 4, %v898
        %v900 = vrot.slane %v591, %v899
        %v901 = vlaneseq
        %v902 = vshrl.u32 %v901, 7
        %v903 = vsub.s32 5, %v902
        %v904 = vrot.slane %v591, %v903
        %v905 = vlaneseq
        %v906 = vshrl.u32 %v905, 7
        %v907 = vsub.s32 6, %v906
        %v908 = vrot.slane %v591, %v907
        %v909 = vlaneseq
        %v910 = vshrl.u32 %v909, 7
        %v911 = vsub.s32 7, %v910
        %v912 = vrot.slane %v591, %v911
        %v913 = vlaneseq
        %v914 = vshrl.u32 %v913, 7
        %v915 = vsub.s32 0, %v914
        %v916 = vrot.slane %v655, %v915
        %v917 = vlaneseq
        %v918 = vshrl.u32 %v917, 7
        %v919 = vsub.s32 1, %v918
        %v920 = vrot.slane %v655, %v919
        %v921 = vlaneseq
        %v922 = vshrl.u32 %v921, 7
        %v923 = vsub.s32 2, %v922
        %v924 = vrot.slane %v655, %v923
        %v925 = vlaneseq
        %v926 = vshrl.u32 %v925, 7
        %v927 = vsub.s32 3, %v926
        %v928 = vrot.slane %v655, %v927
        %v929 = vlaneseq
        %v930 = vshrl.u32 %v929, 7
        %v931 = vsub.s32 4, %v930
        %v932 = vrot.slane %v655, %v931
        %v933 = vlaneseq
        %v934 = vshrl.u32 %v933, 7
        %v935 = vsub.s32 5, %v934
        %v936 = vrot.slane %v655, %v935
        %v937 = vlaneseq
        %v938 = vshrl.u32 %v937, 7
        %v939 = vsub.s32 6, %v938
        %v940 = vrot.slane %v655, %v939
        %v941 = vlaneseq
        %v942 = vshrl.u32 %v941, 7
        %v943 = vsub.s32 7, %v942
        %v944 = vrot.slane %v655, %v943
        %v945 = vlaneseq
        %v946 = vshrl.u32 %v945, 7
        %v947 = vsub.s32 0, %v946
        %v948 = vrot.slane %v719, %v947
        %v949 = vlaneseq
        %v950 = vshrl.u32 %v949, 7
        %v951 = vsub.s32 1, %v950
        %v952 = vrot.slane %v719, %v951
        %v953 = vlaneseq
        %v954 = vshrl.u32 %v953, 7
        %v955 = vsub.s32 2, %v954
        %v956 = vrot.slane %v719, %v955
        %v957 = vlaneseq
        %v958 = vshrl.u32 %v957, 7
        %v959 = vsub.s32 3, %v958
        %v960 = vrot.slane %v719, %v959
        %v961 = vlaneseq
        %v962 = vshrl.u32 %v961, 7
        %v963 = vsub.s32 4, %v962
        %v964 = vrot.slane %v719, %v963
        %v965 = vlaneseq
        %v966 = vshrl.u32 %v965, 7
        %v967 = vsub.s32 5, %v966
        %v968 = vrot.slane %v719, %v967
        %v969 = vlaneseq
        %v970 = vshrl.u32 %v969, 7
        %v971 = vsub.s32 6, %v970
        %v972 = vrot.slane %v719, %v971
        %v973 = vlaneseq
        %v974 = vshrl.u32 %v973, 7
        %v975 = vsub.s32 7, %v974
        %v976 = vrot.slane %v719, %v975
        %v977 = vlaneseq
        %v978 = vshrl.u32 %v977, 7
        %v979 = vsub.s32 0, %v978
        %v980 = vrot.slane %v526, %v979
        %v981 = vlaneseq
        %v982 = vshrl.u32 %v981, 7
        %v983 = vsub.s32 1, %v982
        %v984 = vrot.slane %v526, %v983
        %v985 = vlaneseq
        %v986 = vshrl.u32 %v985, 7
        %v987 = vsub.s32 2, %v986
        %v988 = vrot.slane %v526, %v987
        %v989 = vlaneseq
        %v990 = vshrl.u32 %v989, 7
        %v991 = vsub.s32 3, %v990
        %v992 = vrot.slane %v526, %v991
        %v993 = vlaneseq
        %v994 = vshrl.u32 %v993, 7
        %v995 = vsub.s32 4, %v994
        %v996 = vrot.slane %v526, %v995
        %v997 = vlaneseq
        %v998 = vshrl.u32 %v997, 7
        %v999 = vsub.s32 5, %v998
        %v1000 = vrot.slane %v526, %v999
        %v1001 = vlaneseq
        %v1002 = vshrl.u32 %v1001, 7
        %v1003 = vsub.s32 6, %v1002
        %v1004 = vrot.slane %v526, %v1003
        %v1005 = vlaneseq
        %v1006 = vshrl.u32 %v1005, 7
        %v1007 = vsub.s32 7, %v1006
        %v1008 = vrot.slane %v526, %v1007
        %v1009 = vlaneseq
        %v1010 = vshrl.u32 %v1009, 7
        %v1011 = vsub.s32 0, %v1010
        %v1012 = vrot.slane %v590, %v1011
        %v1013 = vlaneseq
        %v1014 = vshrl.u32 %v1013, 7
        %v1015 = vsub.s32 1, %v1014
        %v1016 = vrot.slane %v590, %v1015
        %v1017 = vlaneseq
        %v1018 = vshrl.u32 %v1017, 7
        %v1019 = vsub.s32 2, %v1018
        %v1020 = vrot.slane %v590, %v1019
        %v1021 = vlaneseq
        %v1022 = vshrl.u32 %v1021, 7
        %v1023 = vsub.s32 3, %v1022
        %v1024 = vrot.slane %v590, %v1023
        %v1025 = vlaneseq
        %v1026 = vshrl.u32 %v1025, 7
        %v1027 = vsub.s32 4, %v1026
        %v1028 = vrot.slane %v590, %v1027
        %v1029 = vlaneseq
        %v1030 = vshrl.u32 %v1029, 7
        %v1031 = vsub.s32 5, %v1030
        %v1032 = vrot.slane %v590, %v1031
        %v1033 = vlaneseq
        %v1034 = vshrl.u32 %v1033, 7
        %v1035 = vsub.s32 6, %v1034
        %v1036 = vrot.slane %v590, %v1035
        %v1037 = vlaneseq
        %v1038 = vshrl.u32 %v1037, 7
        %v1039 = vsub.s32 7, %v1038
        %v1040 = vrot.slane %v590, %v1039
        %v1041 = vlaneseq
        %v1042 = vshrl.u32 %v1041, 7
        %v1043 = vsub.s32 0, %v1042
        %v1044 = vrot.slane %v654, %v1043
        %v1045 = vlaneseq
        %v1046 = vshrl.u32 %v1045, 7
        %v1047 = vsub.s32 1, %v1046
        %v1048 = vrot.slane %v654, %v1047
        %v1049 = vlaneseq
        %v1050 = vshrl.u32 %v1049, 7
        %v1051 = vsub.s32 2, %v1050
        %v1052 = vrot.slane %v654, %v1051
        %v1053 = vlaneseq
        %v1054 = vshrl.u32 %v1053, 7
        %v1055 = vsub.s32 3, %v1054
        %v1056 = vrot.slane %v654, %v1055
        %v1057 = vlaneseq
        %v1058 = vshrl.u32 %v1057, 7
        %v1059 = vsub.s32 4, %v1058
        %v1060 = vrot.slane %v654, %v1059
        %v1061 = vlaneseq
        %v1062 = vshrl.u32 %v1061, 7
        %v1063 = vsub.s32 5, %v1062
        %v1064 = vrot.slane %v654, %v1063
        %v1065 = vlaneseq
        %v1066 = vshrl.u32 %v1065, 7
        %v1067 = vsub.s32 6, %v1066
        %v1068 = vrot.slane %v654, %v1067
        %v1069 = vlaneseq
        %v1070 = vshrl.u32 %v1069, 7
        %v1071 = vsub.s32 7, %v1070
        %v1072 = vrot.slane %v654, %v1071
        %v1073 = vlaneseq
        %v1074 = vshrl.u32 %v1073, 7
        %v1075 = vsub.s32 0, %v1074
        %v1076 = vrot.slane %v718, %v1075
        %v1077 = vlaneseq
        %v1078 = vshrl.u32 %v1077, 7
        %v1079 = vsub.s32 1, %v1078
        %v1080 = vrot.slane %v718, %v1079
        %v1081 = vlaneseq
        %v1082 = vshrl.u32 %v1081, 7
        %v1083 = vsub.s32 2, %v1082
        %v1084 = vrot.slane %v718, %v1083
        %v1085 = vlaneseq
        %v1086 = vshrl.u32 %v1085, 7
        %v1087 = vsub.s32 3, %v1086
        %v1088 = vrot.slane %v718, %v1087
        %v1089 = vlaneseq
        %v1090 = vshrl.u32 %v1089, 7
        %v1091 = vsub.s32 4, %v1090
        %v1092 = vrot.slane %v718, %v1091
        %v1093 = vlaneseq
        %v1094 = vshrl.u32 %v1093, 7
        %v1095 = vsub.s32 5, %v1094
        %v1096 = vrot.slane %v718, %v1095
        %v1097 = vlaneseq
        %v1098 = vshrl.u32 %v1097, 7
        %v1099 = vsub.s32 6, %v1098
        %v1100 = vrot.slane %v718, %v1099
        %v1101 = vlaneseq
        %v1102 = vshrl.u32 %v1101, 7
        %v1103 = vsub.s32 7, %v1102
        %v1104 = vrot.slane %v718, %v1103
        %v1105 = vlaneseq
        %v1106 = vshrl.u32 %v1105, 7
        %v1107 = vsub.s32 0, %v1106
        %v1108 = vrot.slane %v528, %v1107
        %v1109 = vlaneseq
        %v1110 = vshrl.u32 %v1109, 7
        %v1111 = vsub.s32 1, %v1110
        %v1112 = vrot.slane %v528, %v1111
        %v1113 = vlaneseq
        %v1114 = vshrl.u32 %v1113, 7
        %v1115 = vsub.s32 2, %v1114
        %v1116 = vrot.slane %v528, %v1115
        %v1117 = vlaneseq
        %v1118 = vshrl.u32 %v1117, 7
        %v1119 = vsub.s32 3, %v1118
        %v1120 = vrot.slane %v528, %v1119
        %v1121 = vlaneseq
        %v1122 = vshrl.u32 %v1121, 7
        %v1123 = vsub.s32 4, %v1122
        %v1124 = vrot.slane %v528, %v1123
        %v1125 = vlaneseq
        %v1126 = vshrl.u32 %v1125, 7
        %v1127 = vsub.s32 5, %v1126
        %v1128 = vrot.slane %v528, %v1127
        %v1129 = vlaneseq
        %v1130 = vshrl.u32 %v1129, 7
        %v1131 = vsub.s32 6, %v1130
        %v1132 = vrot.slane %v528, %v1131
        %v1133 = vlaneseq
        %v1134 = vshrl.u32 %v1133, 7
        %v1135 = vsub.s32 7, %v1134
        %v1136 = vrot.slane %v528, %v1135
        %v1137 = vlaneseq
        %v1138 = vshrl.u32 %v1137, 7
        %v1139 = vsub.s32 0, %v1138
        %v1140 = vrot.slane %v592, %v1139
        %v1141 = vlaneseq
        %v1142 = vshrl.u32 %v1141, 7
        %v1143 = vsub.s32 1, %v1142
        %v1144 = vrot.slane %v592, %v1143
        %v1145 = vlaneseq
        %v1146 = vshrl.u32 %v1145, 7
        %v1147 = vsub.s32 2, %v1146
        %v1148 = vrot.slane %v592, %v1147
        %v1149 = vlaneseq
        %v1150 = vshrl.u32 %v1149, 7
        %v1151 = vsub.s32 3, %v1150
        %v1152 = vrot.slane %v592, %v1151
        %v1153 = vlaneseq
        %v1154 = vshrl.u32 %v1153, 7
        %v1155 = vsub.s32 4, %v1154
        %v1156 = vrot.slane %v592, %v1155
        %v1157 = vlaneseq
        %v1158 = vshrl.u32 %v1157, 7
        %v1159 = vsub.s32 5, %v1158
        %v1160 = vrot.slane %v592, %v1159
        %v1161 = vlaneseq
        %v1162 = vshrl.u32 %v1161, 7
        %v1163 = vsub.s32 6, %v1162
        %v1164 = vrot.slane %v592, %v1163
        %v1165 = vlaneseq
        %v1166 = vshrl.u32 %v1165, 7
        %v1167 = vsub.s32 7, %v1166
        %v1168 = vrot.slane %v592, %v1167
        %v1169 = vlaneseq
        %v1170 = vshrl.u32 %v1169, 7
        %v1171 = vsub.s32 0, %v1170
        %v1172 = vrot.slane %v656, %v1171
        %v1173 = vlaneseq
        %v1174 = vshrl.u32 %v1173, 7
        %v1175 = vsub.s32 1, %v1174
        %v1176 = vrot.slane %v656, %v1175
        %v1177 = vlaneseq
        %v1178 = vshrl.u32 %v1177, 7
        %v1179 = vsub.s32 2, %v1178
        %v1180 = vrot.slane %v656, %v1179
        %v1181 = vlaneseq
        %v1182 = vshrl.u32 %v1181, 7
        %v1183 = vsub.s32 3, %v1182
        %v1184 = vrot.slane %v656, %v1183
        %v1185 = vlaneseq
        %v1186 = vshrl.u32 %v1185, 7
        %v1187 = vsub.s32 4, %v1186
        %v1188 = vrot.slane %v656, %v1187
        %v1189 = vlaneseq
        %v1190 = vshrl.u32 %v1189, 7
        %v1191 = vsub.s32 5, %v1190
        %v1192 = vrot.slane %v656, %v1191
        %v1193 = vlaneseq
        %v1194 = vshrl.u32 %v1193, 7
        %v1195 = vsub.s32 6, %v1194
        %v1196 = vrot.slane %v656, %v1195
        %v1197 = vlaneseq
        %v1198 = vshrl.u32 %v1197, 7
        %v1199 = vsub.s32 7, %v1198
        %v1200 = vrot.slane %v656, %v1199
        %v1201 = vlaneseq
        %v1202 = vshrl.u32 %v1201, 7
        %v1203 = vsub.s32 0, %v1202
        %v1204 = vrot.slane %v720, %v1203
        %v1205 = vlaneseq
        %v1206 = vshrl.u32 %v1205, 7
        %v1207 = vsub.s32 1, %v1206
        %v1208 = vrot.slane %v720, %v1207
        %v1209 = vlaneseq
        %v1210 = vshrl.u32 %v1209, 7
        %v1211 = vsub.s32 2, %v1210
        %v1212 = vrot.slane %v720, %v1211
        %v1213 = vlaneseq
        %v1214 = vshrl.u32 %v1213, 7
        %v1215 = vsub.s32 3, %v1214
        %v1216 = vrot.slane %v720, %v1215
        %v1217 = vlaneseq
        %v1218 = vshrl.u32 %v1217, 7
        %v1219 = vsub.s32 4, %v1218
        %v1220 = vrot.slane %v720, %v1219
        %v1221 = vlaneseq
        %v1222 = vshrl.u32 %v1221, 7
        %v1223 = vsub.s32 5, %v1222
        %v1224 = vrot.slane %v720, %v1223
        %v1225 = vlaneseq
        %v1226 = vshrl.u32 %v1225, 7
        %v1227 = vsub.s32 6, %v1226
        %v1228 = vrot.slane %v720, %v1227
        %v1229 = vlaneseq
        %v1230 = vshrl.u32 %v1229, 7
        %v1231 = vsub.s32 7, %v1230
        %v1232 = vrot.slane %v720, %v1231
        %v1361 = vmul.f32 %v724, %v433
        %v1362 = vmul.f32 %v728, %v434
        %v1363 = vmul.f32 %v732, %v435
        %v1364 = vmul.f32 %v736, %v436
        %v1365 = vmul.f32 %v740, %v437
        %v1366 = vmul.f32 %v744, %v438
        %v1367 = vmul.f32 %v748, %v439
        %v1368 = vmul.f32 %v752, %v440
        %v1369 = vmul.f32 %v756, %v441
        %v1370 = vmul.f32 %v760, %v442
        %v1371 = vmul.f32 %v764, %v443
        %v1372 = vmul.f32 %v768, %v444
        %v1373 = vmul.f32 %v772, %v445
        %v1374 = vmul.f32 %v776, %v446
        %v1375 = vmul.f32 %v780, %v447
        %v1376 = vmul.f32 %v784, %v448
        %v1377 = vmul.f32 %v788, %v449
        %v1378 = vmul.f32 %v792, %v450
        %v1379 = vmul.f32 %v796, %v451
        %v1380 = vmul.f32 %v800, %v452
        %v1381 = vmul.f32 %v804, %v453
        %v1382 = vmul.f32 %v808, %v454
        %v1383 = vmul.f32 %v812, %v455
        %v1384 = vmul.f32 %v816, %v456
        %v1385 = vmul.f32 %v820, %v457
        %v1386 = vmul.f32 %v824, %v458
        %v1387 = vmul.f32 %v828, %v459
        %v1388 = vmul.f32 %v832, %v460
        %v1389 = vmul.f32 %v836, %v461
        %v1390 = vmul.f32 %v840, %v462
        %v1391 = vmul.f32 %v844, %v463
        %v1392 = vmul.f32 %v848, %v464
        %v1393 = vmul.f32 %v852, %v433
        %v1394 = vmul.f32 %v856, %v434
        %v1395 = vmul.f32 %v860, %v435
        %v1396 = vmul.f32 %v864, %v436
        %v1397 = vmul.f32 %v868, %v437
        %v1398 = vmul.f32 %v872, %v438
        %v1399 = vmul.f32 %v876, %v439
        %v1400 = vmul.f32 %v880, %v440
        %v1401 = vmul.f32 %v884, %v441
        %v1402 = vmul.f32 %v888, %v442
        %v1403 = vmul.f32 %v892, %v443
        %v1404 = vmul.f32 %v896, %v444
        %v1405 = vmul.f32 %v900, %v445
        %v1406 = vmul.f32 %v904, %v446
        %v1407 = vmul.f32 %v908, %v447
        %v1408 = vmul.f32 %v912, %v448
        %v1409 = vmul.f32 %v916, %v449
        %v1410 = vmul.f32 %v920, %v450
        %v1411 = vmul.f32 %v924, %v451
        %v1412 = vmul.f32 %v928, %v452
        %v1413 = vmul.f32 %v932, %v453
        %v1414 = vmul.f32 %v936, %v454
        %v1415 = vmul.f32 %v940, %v455
        %v1416 = vmul.f32 %v944, %v456
        %v1417 = vmul.f32 %v948, %v457
        %v1418 = vmul.f32 %v952, %v458
        %v1419 = vmul.f32 %v956, %v459
        %v1420 = vmul.f32 %v960, %v460
        %v1421 = vmul.f32 %v964, %v461
        %v1422 = vmul.f32 %v968, %v462
        %v1423 = vmul.f32 %v972, %v463
        %v1424 = vmul.f32 %v976, %v464
        %v1425 = vmul.f32 %v980, %v433
        %v1426 = vmul.f32 %v984, %v434
        %v1427 = vmul.f32 %v988, %v435
        %v1428 = vmul.f32 %v992, %v436
        %v1429 = vmul.f32 %v996, %v437
        %v1430 = vmul.f32 %v1000, %v438
        %v1431 = vmul.f32 %v1004, %v439
        %v1432 = vmul.f32 %v1008, %v440
        %v1433 = vmul.f32 %v1012, %v441
        %v1434 = vmul.f32 %v1016, %v442
        %v1435 = vmul.f32 %v1020, %v443
        %v1436 = vmul.f32 %v1024, %v444
        %v1437 = vmul.f32 %v1028, %v445
        %v1438 = vmul.f32 %v1032, %v446
        %v1439 = vmul.f32 %v1036, %v447
        %v1440 = vmul.f32 %v1040, %v448
        %v1441 = vmul.f32 %v1044, %v449
        %v1442 = vmul.f32 %v1048, %v450
        %v1443 = vmul.f32 %v1052, %v451
        %v1444 = vmul.f32 %v1056, %v452
        %v1445 = vmul.f32 %v1060, %v453
        %v1446 = vmul.f32 %v1064, %v454
        %v1447 = vmul.f32 %v1068, %v455
        %v1448 = vmul.f32 %v1072, %v456
        %v1449 = vmul.f32 %v1076, %v457
        %v1450 = vmul.f32 %v1080, %v458
        %v1451 = vmul.f32 %v1084, %v459
        %v1452 = vmul.f32 %v1088, %v460
        %v1453 = vmul.f32 %v1092, %v461
        %v1454 = vmul.f32 %v1096, %v462
        %v1455 = vmul.f32 %v1100, %v463
        %v1456 = vmul.f32 %v1104, %v464
        %v1457 = vmul.f32 %v1108, %v433
        %v1458 = vmul.f32 %v1112, %v434
        %v1459 = vmul.f32 %v1116, %v435
        %v1460 = vmul.f32 %v1120, %v436
        %v1461 = vmul.f32 %v1124, %v437
        %v1462 = vmul.f32 %v1128, %v438
        %v1463 = vmul.f32 %v1132, %v439
        %v1464 = vmul.f32 %v1136, %v440
        %v1465 = vmul.f32 %v1140, %v441
        %v1466 = vmul.f32 %v1144, %v442
        %v1467 = vmul.f32 %v1148, %v443
        %v1468 = vmul.f32 %v1152, %v444
        %v1469 = vmul.f32 %v1156, %v445
        %v1470 = vmul.f32 %v1160, %v446
        %v1471 = vmul.f32 %v1164, %v447
        %v1472 = vmul.f32 %v1168, %v448
        %v1473 = vmul.f32 %v1172, %v449
        %v1474 = vmul.f32 %v1176, %v450
        %v1475 = vmul.f32 %v1180, %v451
        %v1476 = vmul.f32 %v1184, %v452
        %v1477 = vmul.f32 %v1188, %v453
        %v1478 = vmul.f32 %v1192, %v454
        %v1479 = vmul.f32 %v1196, %v455
        %v1480 = vmul.f32 %v1200, %v456
        %v1481 = vmul.f32 %v1204, %v457
        %v1482 = vmul.f32 %v1208, %v458
        %v1483 = vmul.f32 %v1212, %v459
        %v1484 = vmul.f32 %v1216, %v460
        %v1485 = vmul.f32 %v1220, %v461
        %v1486 = vmul.f32 %v1224, %v462
        %v1487 = vmul.f32 %v1228, %v463
        %v1488 = vmul.f32 %v1232, %v464
        %v1489 = vld [vmem:[#allocation6] sm:$0xff]
        %v1490 = vld [vmem:[#allocation6 + $0x8] sm:$0xff]
        %vm1491 = vcmask 261120
        %v1493 = vsel %vm1491, %v1489, 0
        %v1496 = vsel %vm1491, %v1490, 0
        %1498 = vmatprep.subr.mxu0 %v1362
        %1499 = vmatpush1.msra.mxu0 %v1361
        %1500 = vmatprep.subr.mxu0 %v1394
        %1501 = vmatpush1.msra.mxu0 %v1393
        %1502 = vmatprep.subr.mxu0 %v1426
        %1503 = vmatpush1.msra.mxu0 %v1425
        %1504 = vmatprep.subr.mxu0 %v1458
        %1505 = vmatpush1.msra.mxu0 %v1457
        %1506 = vmatprep.subr.mxu0 0.0
        %1507 = vmatpush1.msra.mxu0 0.0
        %1508 = vmatprep.subr.mxu0 0.0
        %1509 = vmatpush1.msra.mxu0 0.0
        %1510 = vmatprep.subr.mxu0 0.0
        %1511 = vmatpush1.msra.mxu0 0.0
        %1512 = vmatprep.subr.mxu0 0.0
        %1513 = vmatpush1.msra.mxu0 0.0
        %1514 = vmatprep.subr.mxu0 0.0
        %1515 = vmatpush1.msra.mxu0 0.0
        %1516 = vmatprep.subr.mxu0 0.0
        %1517 = vmatpush1.msra.mxu0 0.0
        %1518 = vmatprep.subr.mxu0 0.0
        %1519 = vmatpush1.msra.mxu0 0.0
        %1520 = vmatprep.subr.mxu0 0.0
        %1521 = vmatpush1.msra.mxu0 0.0
        %1522 = vmatprep.subr.mxu0 0.0
        %1523 = vmatpush1.msra.mxu0 0.0
        %1524 = vmatprep.subr.mxu0 0.0
        %1525 = vmatpush1.msra.mxu0 0.0
        %1526 = vmatprep.subr.mxu0 0.0
        %1527 = vmatpush1.msra.mxu0 0.0
        %1528 = vmatprep.subr.mxu0 0.0
        %1529 = vmatpush1.msra.mxu0 0.0
        %1530 = vmatprep.subr.mxu0 0.0
        %1531 = vmatpush1.msra.mxu0 0.0
        %1532 = vmatprep.subr.mxu0 0.0
        %1533 = vmatpush1.msra.mxu0 0.0
        %1534 = vmatprep.subr.mxu0 0.0
        %1535 = vmatpush1.msra.mxu0 0.0
        %1536 = vmatprep.subr.mxu0 0.0
        %1537 = vmatpush1.msra.mxu0 0.0
        %1538 = vmatprep.subr.mxu0 0.0
        %1539 = vmatpush1.msra.mxu0 0.0
        %1540 = vmatprep.subr.mxu0 0.0
        %1541 = vmatpush1.msra.mxu0 0.0
        %1542 = vmatprep.subr.mxu0 0.0
        %1543 = vmatpush1.msra.mxu0 0.0
        %1544 = vmatprep.subr.mxu0 0.0
        %1545 = vmatpush1.msra.mxu0 0.0
        %1546 = vmatprep.subr.mxu0 0.0
        %1547 = vmatpush1.msra.mxu0 0.0
        %1548 = vmatprep.subr.mxu0 0.0
        %1549 = vmatpush1.msra.mxu0 0.0
        %1550 = vmatprep.subr.mxu0 0.0
        %1551 = vmatpush1.msra.mxu0 0.0
        %1552 = vmatprep.subr.mxu0 0.0
        %1553 = vmatpush1.msra.mxu0 0.0
        %1554 = vmatprep.subr.mxu0 0.0
        %1555 = vmatpush1.msra.mxu0 0.0
        %1556 = vmatprep.subr.mxu0 0.0
        %1557 = vmatpush1.msra.mxu0 0.0
        %1558 = vmatprep.subr.mxu0 0.0
        %1559 = vmatpush1.msra.mxu0 0.0
        %1560 = vmatprep.subr.mxu0 0.0
        %1561 = vmatpush1.msra.mxu0 0.0
        %1562 = vmatprep.mubr.f32.mxu0 0.0
        %1563 = vmatmul.mubr.f32.gmra.mrb[0].mxu0 %v1493
        %v1564 = vpop.f32.mrb[0].mxu0
        %v1565 = vadd.f32 0.0, %v1564
        %v1566 = vpop.f32.mrb[0].mxu0
        %v1567 = vadd.f32 0.0, %v1566
        %1568 = vmatprep.mubr.f32.mxu0 0.0
        %1569 = vmatmul.mubr.f32.gmra.mrb[0].mxu0 %v1496
        %v1570 = vpop.f32.mrb[0].mxu0
        %v1571 = vadd.f32 0.0, %v1570
        %v1572 = vpop.f32.mrb[0].mxu0
        %v1573 = vadd.f32 0.0, %v1572
        %1574 = vdwg.mxu0
        %1575 = vmatprep.subr.mxu0 %v1364
        %1576 = vmatpush1.msra.mxu0 %v1363
        %1577 = vmatprep.subr.mxu0 %v1396
        %1578 = vmatpush1.msra.mxu0 %v1395
        %1579 = vmatprep.subr.mxu0 %v1428
        %1580 = vmatpush1.msra.mxu0 %v1427
        %1581 = vmatprep.subr.mxu0 %v1460
        %1582 = vmatpush1.msra.mxu0 %v1459
        %1583 = vmatprep.subr.mxu0 0.0
        %1584 = vmatpush1.msra.mxu0 0.0
        %1585 = vmatprep.subr.mxu0 0.0
        %1586 = vmatpush1.msra.mxu0 0.0
        %1587 = vmatprep.subr.mxu0 0.0
        %1588 = vmatpush1.msra.mxu0 0.0
        %1589 = vmatprep.subr.mxu0 0.0
        %1590 = vmatpush1.msra.mxu0 0.0
        %1591 = vmatprep.subr.mxu0 0.0
        %1592 = vmatpush1.msra.mxu0 0.0
        %1593 = vmatprep.subr.mxu0 0.0
        %1594 = vmatpush1.msra.mxu0 0.0
        %1595 = vmatprep.subr.mxu0 0.0
        %1596 = vmatpush1.msra.mxu0 0.0
        %1597 = vmatprep.subr.mxu0 0.0
        %1598 = vmatpush1.msra.mxu0 0.0
        %1599 = vmatprep.subr.mxu0 0.0
        %1600 = vmatpush1.msra.mxu0 0.0
        %1601 = vmatprep.subr.mxu0 0.0
        %1602 = vmatpush1.msra.mxu0 0.0
        %1603 = vmatprep.subr.mxu0 0.0
        %1604 = vmatpush1.msra.mxu0 0.0
        %1605 = vmatprep.subr.mxu0 0.0
        %1606 = vmatpush1.msra.mxu0 0.0
        %1607 = vmatprep.subr.mxu0 0.0
        %1608 = vmatpush1.msra.mxu0 0.0
        %1609 = vmatprep.subr.mxu0 0.0
        %1610 = vmatpush1.msra.mxu0 0.0
        %1611 = vmatprep.subr.mxu0 0.0
        %1612 = vmatpush1.msra.mxu0 0.0
        %1613 = vmatprep.subr.mxu0 0.0
        %1614 = vmatpush1.msra.mxu0 0.0
        %1615 = vmatprep.subr.mxu0 0.0
        %1616 = vmatpush1.msra.mxu0 0.0
        %1617 = vmatprep.subr.mxu0 0.0
        %1618 = vmatpush1.msra.mxu0 0.0
        %1619 = vmatprep.subr.mxu0 0.0
        %1620 = vmatpush1.msra.mxu0 0.0
        %1621 = vmatprep.subr.mxu0 0.0
        %1622 = vmatpush1.msra.mxu0 0.0
        %1623 = vmatprep.subr.mxu0 0.0
        %1624 = vmatpush1.msra.mxu0 0.0
        %1625 = vmatprep.subr.mxu0 0.0
        %1626 = vmatpush1.msra.mxu0 0.0
        %1627 = vmatprep.subr.mxu0 0.0
        %1628 = vmatpush1.msra.mxu0 0.0
        %1629 = vmatprep.subr.mxu0 0.0
        %1630 = vmatpush1.msra.mxu0 0.0
        %1631 = vmatprep.subr.mxu0 0.0
        %1632 = vmatpush1.msra.mxu0 0.0
        %1633 = vmatprep.subr.mxu0 0.0
        %1634 = vmatpush1.msra.mxu0 0.0
        %1635 = vmatprep.subr.mxu0 0.0
        %1636 = vmatpush1.msra.mxu0 0.0
        %1637 = vmatprep.subr.mxu0 0.0
        %1638 = vmatpush1.msra.mxu0 0.0
        %1639 = vmatprep.mubr.f32.mxu0 0.0
        %1640 = vmatmul.mubr.f32.gmra.mrb[0].mxu0 %v1493
        %v1641 = vpop.f32.mrb[0].mxu0
        %v1642 = vadd.f32 0.0, %v1641
        %v1643 = vpop.f32.mrb[0].mxu0
        %v1644 = vadd.f32 0.0, %v1643
        %1645 = vmatprep.mubr.f32.mxu0 0.0
        %1646 = vmatmul.mubr.f32.gmra.mrb[0].mxu0 %v1496
        %v1647 = vpop.f32.mrb[0].mxu0
        %v1648 = vadd.f32 0.0, %v1647
        %v1649 = vpop.f32.mrb[0].mxu0
        %v1650 = vadd.f32 0.0, %v1649
        %1651 = vdwg.mxu0
        %1652 = vmatprep.subr.mxu0 %v1366
        %1653 = vmatpush1.msra.mxu0 %v1365
        %1654 = vmatprep.subr.mxu0 %v1398
        %1655 = vmatpush1.msra.mxu0 %v1397
        %1656 = vmatprep.subr.mxu0 %v1430
        %1657 = vmatpush1.msra.mxu0 %v1429
        %1658 = vmatprep.subr.mxu0 %v1462
        %1659 = vmatpush1.msra.mxu0 %v1461
        %1660 = vmatprep.subr.mxu0 0.0
        %1661 = vmatpush1.msra.mxu0 0.0
        %1662 = vmatprep.subr.mxu0 0.0
        %1663 = vmatpush1.msra.mxu0 0.0
        %1664 = vmatprep.subr.mxu0 0.0
        %1665 = vmatpush1.msra.mxu0 0.0
        %1666 = vmatprep.subr.mxu0 0.0
        %1667 = vmatpush1.msra.mxu0 0.0
        %1668 = vmatprep.subr.mxu0 0.0
        %1669 = vmatpush1.msra.mxu0 0.0
        %1670 = vmatprep.subr.mxu0 0.0
        %1671 = vmatpush1.msra.mxu0 0.0
        %1672 = vmatprep.subr.mxu0 0.0
        %1673 = vmatpush1.msra.mxu0 0.0
        %1674 = vmatprep.subr.mxu0 0.0
        %1675 = vmatpush1.msra.mxu0 0.0
        %1676 = vmatprep.subr.mxu0 0.0
        %1677 = vmatpush1.msra.mxu0 0.0
        %1678 = vmatprep.subr.mxu0 0.0
        %1679 = vmatpush1.msra.mxu0 0.0
        %1680 = vmatprep.subr.mxu0 0.0
        %1681 = vmatpush1.msra.mxu0 0.0
        %1682 = vmatprep.subr.mxu0 0.0
        %1683 = vmatpush1.msra.mxu0 0.0
        %1684 = vmatprep.subr.mxu0 0.0
        %1685 = vmatpush1.msra.mxu0 0.0
        %1686 = vmatprep.subr.mxu0 0.0
        %1687 = vmatpush1.msra.mxu0 0.0
        %1688 = vmatprep.subr.mxu0 0.0
        %1689 = vmatpush1.msra.mxu0 0.0
        %1690 = vmatprep.subr.mxu0 0.0
        %1691 = vmatpush1.msra.mxu0 0.0
        %1692 = vmatprep.subr.mxu0 0.0
        %1693 = vmatpush1.msra.mxu0 0.0
        %1694 = vmatprep.subr.mxu0 0.0
        %1695 = vmatpush1.msra.mxu0 0.0
        %1696 = vmatprep.subr.mxu0 0.0
        %1697 = vmatpush1.msra.mxu0 0.0
        %1698 = vmatprep.subr.mxu0 0.0
        %1699 = vmatpush1.msra.mxu0 0.0
        %1700 = vmatprep.subr.mxu0 0.0
        %1701 = vmatpush1.msra.mxu0 0.0
        %1702 = vmatprep.subr.mxu0 0.0
        %1703 = vmatpush1.msra.mxu0 0.0
        %1704 = vmatprep.subr.mxu0 0.0
        %1705 = vmatpush1.msra.mxu0 0.0
        %1706 = vmatprep.subr.mxu0 0.0
        %1707 = vmatpush1.msra.mxu0 0.0
        %1708 = vmatprep.subr.mxu0 0.0
        %1709 = vmatpush1.msra.mxu0 0.0
        %1710 = vmatprep.subr.mxu0 0.0
        %1711 = vmatpush1.msra.mxu0 0.0
        %1712 = vmatprep.subr.mxu0 0.0
        %1713 = vmatpush1.msra.mxu0 0.0
        %1714 = vmatprep.subr.mxu0 0.0
        %1715 = vmatpush1.msra.mxu0 0.0
        %1716 = vmatprep.mubr.f32.mxu0 0.0
        %1717 = vmatmul.mubr.f32.gmra.mrb[0].mxu0 %v1493
        %v1718 = vpop.f32.mrb[0].mxu0
        %v1719 = vadd.f32 0.0, %v1718
        %v1720 = vpop.f32.mrb[0].mxu0
        %v1721 = vadd.f32 0.0, %v1720
        %1722 = vmatprep.mubr.f32.mxu0 0.0
        %1723 = vmatmul.mubr.f32.gmra.mrb[0].mxu0 %v1496
        %v1724 = vpop.f32.mrb[0].mxu0
        %v1725 = vadd.f32 0.0, %v1724
        %v1726 = vpop.f32.mrb[0].mxu0
        %v1727 = vadd.f32 0.0, %v1726
        %1728 = vdwg.mxu0
        %1729 = vmatprep.subr.mxu0 %v1368
        %1730 = vmatpush1.msra.mxu0 %v1367
        %1731 = vmatprep.subr.mxu0 %v1400
        %1732 = vmatpush1.msra.mxu0 %v1399
        %1733 = vmatprep.subr.mxu0 %v1432
        %1734 = vmatpush1.msra.mxu0 %v1431
        %1735 = vmatprep.subr.mxu0 %v1464
        %1736 = vmatpush1.msra.mxu0 %v1463
        %1737 = vmatprep.subr.mxu0 0.0
        %1738 = vmatpush1.msra.mxu0 0.0
        %1739 = vmatprep.subr.mxu0 0.0
        %1740 = vmatpush1.msra.mxu0 0.0
        %1741 = vmatprep.subr.mxu0 0.0
        %1742 = vmatpush1.msra.mxu0 0.0
        %1743 = vmatprep.subr.mxu0 0.0
        %1744 = vmatpush1.msra.mxu0 0.0
        %1745 = vmatprep.subr.mxu0 0.0
        %1746 = vmatpush1.msra.mxu0 0.0
        %1747 = vmatprep.subr.mxu0 0.0
        %1748 = vmatpush1.msra.mxu0 0.0
        %1749 = vmatprep.subr.mxu0 0.0
        %1750 = vmatpush1.msra.mxu0 0.0
        %1751 = vmatprep.subr.mxu0 0.0
        %1752 = vmatpush1.msra.mxu0 0.0
        %1753 = vmatprep.subr.mxu0 0.0
        %1754 = vmatpush1.msra.mxu0 0.0
        %1755 = vmatprep.subr.mxu0 0.0
        %1756 = vmatpush1.msra.mxu0 0.0
        %1757 = vmatprep.subr.mxu0 0.0
        %1758 = vmatpush1.msra.mxu0 0.0
        %1759 = vmatprep.subr.mxu0 0.0
        %1760 = vmatpush1.msra.mxu0 0.0
        %1761 = vmatprep.subr.mxu0 0.0
        %1762 = vmatpush1.msra.mxu0 0.0
        %1763 = vmatprep.subr.mxu0 0.0
        %1764 = vmatpush1.msra.mxu0 0.0
        %1765 = vmatprep.subr.mxu0 0.0
        %1766 = vmatpush1.msra.mxu0 0.0
        %1767 = vmatprep.subr.mxu0 0.0
        %1768 = vmatpush1.msra.mxu0 0.0
        %1769 = vmatprep.subr.mxu0 0.0
        %1770 = vmatpush1.msra.mxu0 0.0
        %1771 = vmatprep.subr.mxu0 0.0
        %1772 = vmatpush1.msra.mxu0 0.0
        %1773 = vmatprep.subr.mxu0 0.0
        %1774 = vmatpush1.msra.mxu0 0.0
        %1775 = vmatprep.subr.mxu0 0.0
        %1776 = vmatpush1.msra.mxu0 0.0
        %1777 = vmatprep.subr.mxu0 0.0
        %1778 = vmatpush1.msra.mxu0 0.0
        %1779 = vmatprep.subr.mxu0 0.0
        %1780 = vmatpush1.msra.mxu0 0.0
        %1781 = vmatprep.subr.mxu0 0.0
        %1782 = vmatpush1.msra.mxu0 0.0
        %1783 = vmatprep.subr.mxu0 0.0
        %1784 = vmatpush1.msra.mxu0 0.0
        %1785 = vmatprep.subr.mxu0 0.0
        %1786 = vmatpush1.msra.mxu0 0.0
        %1787 = vmatprep.subr.mxu0 0.0
        %1788 = vmatpush1.msra.mxu0 0.0
        %1789 = vmatprep.subr.mxu0 0.0
        %1790 = vmatpush1.msra.mxu0 0.0
        %1791 = vmatprep.subr.mxu0 0.0
        %1792 = vmatpush1.msra.mxu0 0.0
        %1793 = vmatprep.mubr.f32.mxu0 0.0
        %1794 = vmatmul.mubr.f32.gmra.mrb[0].mxu0 %v1493
        %v1795 = vpop.f32.mrb[0].mxu0
        %v1796 = vadd.f32 0.0, %v1795
        %v1797 = vpop.f32.mrb[0].mxu0
        %v1798 = vadd.f32 0.0, %v1797
        %1799 = vmatprep.mubr.f32.mxu0 0.0
        %1800 = vmatmul.mubr.f32.gmra.mrb[0].mxu0 %v1496
        %v1801 = vpop.f32.mrb[0].mxu0
        %v1802 = vadd.f32 0.0, %v1801
        %v1803 = vpop.f32.mrb[0].mxu0
        %v1804 = vadd.f32 0.0, %v1803
        %1805 = vdwg.mxu0
        %1806 = vmatprep.subr.mxu0 %v1370
        %1807 = vmatpush1.msra.mxu0 %v1369
        %1808 = vmatprep.subr.mxu0 %v1402
        %1809 = vmatpush1.msra.mxu0 %v1401
        %1810 = vmatprep.subr.mxu0 %v1434
        %1811 = vmatpush1.msra.mxu0 %v1433
        %1812 = vmatprep.subr.mxu0 %v1466
        %1813 = vmatpush1.msra.mxu0 %v1465
        %1814 = vmatprep.subr.mxu0 0.0
        %1815 = vmatpush1.msra.mxu0 0.0
        %1816 = vmatprep.subr.mxu0 0.0
        %1817 = vmatpush1.msra.mxu0 0.0
        %1818 = vmatprep.subr.mxu0 0.0
        %1819 = vmatpush1.msra.mxu0 0.0
        %1820 = vmatprep.subr.mxu0 0.0
        %1821 = vmatpush1.msra.mxu0 0.0
        %1822 = vmatprep.subr.mxu0 0.0
        %1823 = vmatpush1.msra.mxu0 0.0
        %1824 = vmatprep.subr.mxu0 0.0
        %1825 = vmatpush1.msra.mxu0 0.0
        %1826 = vmatprep.subr.mxu0 0.0
        %1827 = vmatpush1.msra.mxu0 0.0
        %1828 = vmatprep.subr.mxu0 0.0
        %1829 = vmatpush1.msra.mxu0 0.0
        %1830 = vmatprep.subr.mxu0 0.0
        %1831 = vmatpush1.msra.mxu0 0.0
        %1832 = vmatprep.subr.mxu0 0.0
        %1833 = vmatpush1.msra.mxu0 0.0
        %1834 = vmatprep.subr.mxu0 0.0
        %1835 = vmatpush1.msra.mxu0 0.0
        %1836 = vmatprep.subr.mxu0 0.0
        %1837 = vmatpush1.msra.mxu0 0.0
        %1838 = vmatprep.subr.mxu0 0.0
        %1839 = vmatpush1.msra.mxu0 0.0
        %1840 = vmatprep.subr.mxu0 0.0
        %1841 = vmatpush1.msra.mxu0 0.0
        %1842 = vmatprep.subr.mxu0 0.0
        %1843 = vmatpush1.msra.mxu0 0.0
        %1844 = vmatprep.subr.mxu0 0.0
        %1845 = vmatpush1.msra.mxu0 0.0
        %1846 = vmatprep.subr.mxu0 0.0
        %1847 = vmatpush1.msra.mxu0 0.0
        %1848 = vmatprep.subr.mxu0 0.0
        %1849 = vmatpush1.msra.mxu0 0.0
        %1850 = vmatprep.subr.mxu0 0.0
        %1851 = vmatpush1.msra.mxu0 0.0
        %1852 = vmatprep.subr.mxu0 0.0
        %1853 = vmatpush1.msra.mxu0 0.0
        %1854 = vmatprep.subr.mxu0 0.0
        %1855 = vmatpush1.msra.mxu0 0.0
        %1856 = vmatprep.subr.mxu0 0.0
        %1857 = vmatpush1.msra.mxu0 0.0
        %1858 = vmatprep.subr.mxu0 0.0
        %1859 = vmatpush1.msra.mxu0 0.0
        %1860 = vmatprep.subr.mxu0 0.0
        %1861 = vmatpush1.msra.mxu0 0.0
        %1862 = vmatprep.subr.mxu0 0.0
        %1863 = vmatpush1.msra.mxu0 0.0
        %1864 = vmatprep.subr.mxu0 0.0
        %1865 = vmatpush1.msra.mxu0 0.0
        %1866 = vmatprep.subr.mxu0 0.0
        %1867 = vmatpush1.msra.mxu0 0.0
        %1868 = vmatprep.subr.mxu0 0.0
        %1869 = vmatpush1.msra.mxu0 0.0
        %1870 = vmatprep.mubr.f32.mxu0 0.0
        %1871 = vmatmul.mubr.f32.gmra.mrb[0].mxu0 %v1493
        %v1872 = vpop.f32.mrb[0].mxu0
        %v1873 = vadd.f32 0.0, %v1872
        %v1874 = vpop.f32.mrb[0].mxu0
        %v1875 = vadd.f32 0.0, %v1874
        %1876 = vmatprep.mubr.f32.mxu0 0.0
        %1877 = vmatmul.mubr.f32.gmra.mrb[0].mxu0 %v1496
        %v1878 = vpop.f32.mrb[0].mxu0
        %v1879 = vadd.f32 0.0, %v1878
        %v1880 = vpop.f32.mrb[0].mxu0
        %v1881 = vadd.f32 0.0, %v1880
        %1882 = vdwg.mxu0
        %1883 = vmatprep.subr.mxu0 %v1372
        %1884 = vmatpush1.msra.mxu0 %v1371
        %1885 = vmatprep.subr.mxu0 %v1404
        %1886 = vmatpush1.msra.mxu0 %v1403
        %1887 = vmatprep.subr.mxu0 %v1436
        %1888 = vmatpush1.msra.mxu0 %v1435
        %1889 = vmatprep.subr.mxu0 %v1468
        %1890 = vmatpush1.msra.mxu0 %v1467
        %1891 = vmatprep.subr.mxu0 0.0
        %1892 = vmatpush1.msra.mxu0 0.0
        %1893 = vmatprep.subr.mxu0 0.0
        %1894 = vmatpush1.msra.mxu0 0.0
        %1895 = vmatprep.subr.mxu0 0.0
        %1896 = vmatpush1.msra.mxu0 0.0
        %1897 = vmatprep.subr.mxu0 0.0
        %1898 = vmatpush1.msra.mxu0 0.0
        %1899 = vmatprep.subr.mxu0 0.0
        %1900 = vmatpush1.msra.mxu0 0.0
        %1901 = vmatprep.subr.mxu0 0.0
        %1902 = vmatpush1.msra.mxu0 0.0
        %1903 = vmatprep.subr.mxu0 0.0
        %1904 = vmatpush1.msra.mxu0 0.0
        %1905 = vmatprep.subr.mxu0 0.0
        %1906 = vmatpush1.msra.mxu0 0.0
        %1907 = vmatprep.subr.mxu0 0.0
        %1908 = vmatpush1.msra.mxu0 0.0
        %1909 = vmatprep.subr.mxu0 0.0
        %1910 = vmatpush1.msra.mxu0 0.0
        %1911 = vmatprep.subr.mxu0 0.0
        %1912 = vmatpush1.msra.mxu0 0.0
        %1913 = vmatprep.subr.mxu0 0.0
        %1914 = vmatpush1.msra.mxu0 0.0
        %1915 = vmatprep.subr.mxu0 0.0
        %1916 = vmatpush1.msra.mxu0 0.0
        %1917 = vmatprep.subr.mxu0 0.0
        %1918 = vmatpush1.msra.mxu0 0.0
        %1919 = vmatprep.subr.mxu0 0.0
        %1920 = vmatpush1.msra.mxu0 0.0
        %1921 = vmatprep.subr.mxu0 0.0
        %1922 = vmatpush1.msra.mxu0 0.0
        %1923 = vmatprep.subr.mxu0 0.0
        %1924 = vmatpush1.msra.mxu0 0.0
        %1925 = vmatprep.subr.mxu0 0.0
        %1926 = vmatpush1.msra.mxu0 0.0
        %1927 = vmatprep.subr.mxu0 0.0
        %1928 = vmatpush1.msra.mxu0 0.0
        %1929 = vmatprep.subr.mxu0 0.0
        %1930 = vmatpush1.msra.mxu0 0.0
        %1931 = vmatprep.subr.mxu0 0.0
        %1932 = vmatpush1.msra.mxu0 0.0
        %1933 = vmatprep.subr.mxu0 0.0
        %1934 = vmatpush1.msra.mxu0 0.0
        %1935 = vmatprep.subr.mxu0 0.0
        %1936 = vmatpush1.msra.mxu0 0.0
        %1937 = vmatprep.subr.mxu0 0.0
        %1938 = vmatpush1.msra.mxu0 0.0
        %1939 = vmatprep.subr.mxu0 0.0
        %1940 = vmatpush1.msra.mxu0 0.0
        %1941 = vmatprep.subr.mxu0 0.0
        %1942 = vmatpush1.msra.mxu0 0.0
        %1943 = vmatprep.subr.mxu0 0.0
        %1944 = vmatpush1.msra.mxu0 0.0
        %1945 = vmatprep.subr.mxu0 0.0
        %1946 = vmatpush1.msra.mxu0 0.0
        %1947 = vmatprep.mubr.f32.mxu0 0.0
        %1948 = vmatmul.mubr.f32.gmra.mrb[0].mxu0 %v1493
        %v1949 = vpop.f32.mrb[0].mxu0
        %v1950 = vadd.f32 0.0, %v1949
        %v1951 = vpop.f32.mrb[0].mxu0
        %v1952 = vadd.f32 0.0, %v1951
        %1953 = vmatprep.mubr.f32.mxu0 0.0
        %1954 = vmatmul.mubr.f32.gmra.mrb[0].mxu0 %v1496
        %v1955 = vpop.f32.mrb[0].mxu0
        %v1956 = vadd.f32 0.0, %v1955
        %v1957 = vpop.f32.mrb[0].mxu0
        %v1958 = vadd.f32 0.0, %v1957
        %1959 = vdwg.mxu0
        %1960 = vmatprep.subr.mxu0 %v1374
        %1961 = vmatpush1.msra.mxu0 %v1373
        %1962 = vmatprep.subr.mxu0 %v1406
        %1963 = vmatpush1.msra.mxu0 %v1405
        %1964 = vmatprep.subr.mxu0 %v1438
        %1965 = vmatpush1.msra.mxu0 %v1437
        %1966 = vmatprep.subr.mxu0 %v1470
        %1967 = vmatpush1.msra.mxu0 %v1469
        %1968 = vmatprep.subr.mxu0 0.0
        %1969 = vmatpush1.msra.mxu0 0.0
        %1970 = vmatprep.subr.mxu0 0.0
        %1971 = vmatpush1.msra.mxu0 0.0
        %1972 = vmatprep.subr.mxu0 0.0
        %1973 = vmatpush1.msra.mxu0 0.0
        %1974 = vmatprep.subr.mxu0 0.0
        %1975 = vmatpush1.msra.mxu0 0.0
        %1976 = vmatprep.subr.mxu0 0.0
        %1977 = vmatpush1.msra.mxu0 0.0
        %1978 = vmatprep.subr.mxu0 0.0
        %1979 = vmatpush1.msra.mxu0 0.0
        %1980 = vmatprep.subr.mxu0 0.0
        %1981 = vmatpush1.msra.mxu0 0.0
        %1982 = vmatprep.subr.mxu0 0.0
        %1983 = vmatpush1.msra.mxu0 0.0
        %1984 = vmatprep.subr.mxu0 0.0
        %1985 = vmatpush1.msra.mxu0 0.0
        %1986 = vmatprep.subr.mxu0 0.0
        %1987 = vmatpush1.msra.mxu0 0.0
        %1988 = vmatprep.subr.mxu0 0.0
        %1989 = vmatpush1.msra.mxu0 0.0
        %1990 = vmatprep.subr.mxu0 0.0
        %1991 = vmatpush1.msra.mxu0 0.0
        %1992 = vmatprep.subr.mxu0 0.0
        %1993 = vmatpush1.msra.mxu0 0.0
        %1994 = vmatprep.subr.mxu0 0.0
        %1995 = vmatpush1.msra.mxu0 0.0
        %1996 = vmatprep.subr.mxu0 0.0
        %1997 = vmatpush1.msra.mxu0 0.0
        %1998 = vmatprep.subr.mxu0 0.0
        %1999 = vmatpush1.msra.mxu0 0.0
        %2000 = vmatprep.subr.mxu0 0.0
        %2001 = vmatpush1.msra.mxu0 0.0
        %2002 = vmatprep.subr.mxu0 0.0
        %2003 = vmatpush1.msra.mxu0 0.0
        %2004 = vmatprep.subr.mxu0 0.0
        %2005 = vmatpush1.msra.mxu0 0.0
        %2006 = vmatprep.subr.mxu0 0.0
        %2007 = vmatpush1.msra.mxu0 0.0
        %2008 = vmatprep.subr.mxu0 0.0
        %2009 = vmatpush1.msra.mxu0 0.0
        %2010 = vmatprep.subr.mxu0 0.0
        %2011 = vmatpush1.msra.mxu0 0.0
        %2012 = vmatprep.subr.mxu0 0.0
        %2013 = vmatpush1.msra.mxu0 0.0
        %2014 = vmatprep.subr.mxu0 0.0
        %2015 = vmatpush1.msra.mxu0 0.0
        %2016 = vmatprep.subr.mxu0 0.0
        %2017 = vmatpush1.msra.mxu0 0.0
        %2018 = vmatprep.subr.mxu0 0.0
        %2019 = vmatpush1.msra.mxu0 0.0
        %2020 = vmatprep.subr.mxu0 0.0
        %2021 = vmatpush1.msra.mxu0 0.0
        %2022 = vmatprep.subr.mxu0 0.0
        %2023 = vmatpush1.msra.mxu0 0.0
        %2024 = vmatprep.mubr.f32.mxu0 0.0
        %2025 = vmatmul.mubr.f32.gmra.mrb[0].mxu0 %v1493
        %v2026 = vpop.f32.mrb[0].mxu0
        %v2027 = vadd.f32 0.0, %v2026
        %v2028 = vpop.f32.mrb[0].mxu0
        %v2029 = vadd.f32 0.0, %v2028
        %2030 = vmatprep.mubr.f32.mxu0 0.0
        %2031 = vmatmul.mubr.f32.gmra.mrb[0].mxu0 %v1496
        %v2032 = vpop.f32.mrb[0].mxu0
        %v2033 = vadd.f32 0.0, %v2032
        %v2034 = vpop.f32.mrb[0].mxu0
        %v2035 = vadd.f32 0.0, %v2034
        %2036 = vdwg.mxu0
        %2037 = vmatprep.subr.mxu0 %v1376
        %2038 = vmatpush1.msra.mxu0 %v1375
        %2039 = vmatprep.subr.mxu0 %v1408
        %2040 = vmatpush1.msra.mxu0 %v1407
        %2041 = vmatprep.subr.mxu0 %v1440
        %2042 = vmatpush1.msra.mxu0 %v1439
        %2043 = vmatprep.subr.mxu0 %v1472
        %2044 = vmatpush1.msra.mxu0 %v1471
        %2045 = vmatprep.subr.mxu0 0.0
        %2046 = vmatpush1.msra.mxu0 0.0
        %2047 = vmatprep.subr.mxu0 0.0
        %2048 = vmatpush1.msra.mxu0 0.0
        %2049 = vmatprep.subr.mxu0 0.0
        %2050 = vmatpush1.msra.mxu0 0.0
        %2051 = vmatprep.subr.mxu0 0.0
        %2052 = vmatpush1.msra.mxu0 0.0
        %2053 = vmatprep.subr.mxu0 0.0
        %2054 = vmatpush1.msra.mxu0 0.0
        %2055 = vmatprep.subr.mxu0 0.0
        %2056 = vmatpush1.msra.mxu0 0.0
        %2057 = vmatprep.subr.mxu0 0.0
        %2058 = vmatpush1.msra.mxu0 0.0
        %2059 = vmatprep.subr.mxu0 0.0
        %2060 = vmatpush1.msra.mxu0 0.0
        %2061 = vmatprep.subr.mxu0 0.0
        %2062 = vmatpush1.msra.mxu0 0.0
        %2063 = vmatprep.subr.mxu0 0.0
        %2064 = vmatpush1.msra.mxu0 0.0
        %2065 = vmatprep.subr.mxu0 0.0
        %2066 = vmatpush1.msra.mxu0 0.0
        %2067 = vmatprep.subr.mxu0 0.0
        %2068 = vmatpush1.msra.mxu0 0.0
        %2069 = vmatprep.subr.mxu0 0.0
        %2070 = vmatpush1.msra.mxu0 0.0
        %2071 = vmatprep.subr.mxu0 0.0
        %2072 = vmatpush1.msra.mxu0 0.0
        %2073 = vmatprep.subr.mxu0 0.0
        %2074 = vmatpush1.msra.mxu0 0.0
        %2075 = vmatprep.subr.mxu0 0.0
        %2076 = vmatpush1.msra.mxu0 0.0
        %2077 = vmatprep.subr.mxu0 0.0
        %2078 = vmatpush1.msra.mxu0 0.0
        %2079 = vmatprep.subr.mxu0 0.0
        %2080 = vmatpush1.msra.mxu0 0.0
        %2081 = vmatprep.subr.mxu0 0.0
        %2082 = vmatpush1.msra.mxu0 0.0
        %2083 = vmatprep.subr.mxu0 0.0
        %2084 = vmatpush1.msra.mxu0 0.0
        %2085 = vmatprep.subr.mxu0 0.0
        %2086 = vmatpush1.msra.mxu0 0.0
        %2087 = vmatprep.subr.mxu0 0.0
        %2088 = vmatpush1.msra.mxu0 0.0
        %2089 = vmatprep.subr.mxu0 0.0
        %2090 = vmatpush1.msra.mxu0 0.0
        %2091 = vmatprep.subr.mxu0 0.0
        %2092 = vmatpush1.msra.mxu0 0.0
        %2093 = vmatprep.subr.mxu0 0.0
        %2094 = vmatpush1.msra.mxu0 0.0
        %2095 = vmatprep.subr.mxu0 0.0
        %2096 = vmatpush1.msra.mxu0 0.0
        %2097 = vmatprep.subr.mxu0 0.0
        %2098 = vmatpush1.msra.mxu0 0.0
        %2099 = vmatprep.subr.mxu0 0.0
        %2100 = vmatpush1.msra.mxu0 0.0
        %2101 = vmatprep.mubr.f32.mxu0 0.0
        %2102 = vmatmul.mubr.f32.gmra.mrb[0].mxu0 %v1493
        %v2103 = vpop.f32.mrb[0].mxu0
        %v2104 = vadd.f32 0.0, %v2103
        %v2105 = vpop.f32.mrb[0].mxu0
        %v2106 = vadd.f32 0.0, %v2105
        %2107 = vmatprep.mubr.f32.mxu0 0.0
        %2108 = vmatmul.mubr.f32.gmra.mrb[0].mxu0 %v1496
        %v2109 = vpop.f32.mrb[0].mxu0
        %v2110 = vadd.f32 0.0, %v2109
        %v2111 = vpop.f32.mrb[0].mxu0
        %v2112 = vadd.f32 0.0, %v2111
        %2113 = vdwg.mxu0
        %2114 = vmatprep.subr.mxu0 %v1378
        %2115 = vmatpush1.msra.mxu0 %v1377
        %2116 = vmatprep.subr.mxu0 %v1410
        %2117 = vmatpush1.msra.mxu0 %v1409
        %2118 = vmatprep.subr.mxu0 %v1442
        %2119 = vmatpush1.msra.mxu0 %v1441
        %2120 = vmatprep.subr.mxu0 %v1474
        %2121 = vmatpush1.msra.mxu0 %v1473
        %2122 = vmatprep.subr.mxu0 0.0
        %2123 = vmatpush1.msra.mxu0 0.0
        %2124 = vmatprep.subr.mxu0 0.0
        %2125 = vmatpush1.msra.mxu0 0.0
        %2126 = vmatprep.subr.mxu0 0.0
        %2127 = vmatpush1.msra.mxu0 0.0
        %2128 = vmatprep.subr.mxu0 0.0
        %2129 = vmatpush1.msra.mxu0 0.0
        %2130 = vmatprep.subr.mxu0 0.0
        %2131 = vmatpush1.msra.mxu0 0.0
        %2132 = vmatprep.subr.mxu0 0.0
        %2133 = vmatpush1.msra.mxu0 0.0
        %2134 = vmatprep.subr.mxu0 0.0
        %2135 = vmatpush1.msra.mxu0 0.0
        %2136 = vmatprep.subr.mxu0 0.0
        %2137 = vmatpush1.msra.mxu0 0.0
        %2138 = vmatprep.subr.mxu0 0.0
        %2139 = vmatpush1.msra.mxu0 0.0
        %2140 = vmatprep.subr.mxu0 0.0
        %2141 = vmatpush1.msra.mxu0 0.0
        %2142 = vmatprep.subr.mxu0 0.0
        %2143 = vmatpush1.msra.mxu0 0.0
        %2144 = vmatprep.subr.mxu0 0.0
        %2145 = vmatpush1.msra.mxu0 0.0
        %2146 = vmatprep.subr.mxu0 0.0
        %2147 = vmatpush1.msra.mxu0 0.0
        %2148 = vmatprep.subr.mxu0 0.0
        %2149 = vmatpush1.msra.mxu0 0.0
        %2150 = vmatprep.subr.mxu0 0.0
        %2151 = vmatpush1.msra.mxu0 0.0
        %2152 = vmatprep.subr.mxu0 0.0
        %2153 = vmatpush1.msra.mxu0 0.0
        %2154 = vmatprep.subr.mxu0 0.0
        %2155 = vmatpush1.msra.mxu0 0.0
        %2156 = vmatprep.subr.mxu0 0.0
        %2157 = vmatpush1.msra.mxu0 0.0
        %2158 = vmatprep.subr.mxu0 0.0
        %2159 = vmatpush1.msra.mxu0 0.0
        %2160 = vmatprep.subr.mxu0 0.0
        %2161 = vmatpush1.msra.mxu0 0.0
        %2162 = vmatprep.subr.mxu0 0.0
        %2163 = vmatpush1.msra.mxu0 0.0
        %2164 = vmatprep.subr.mxu0 0.0
        %2165 = vmatpush1.msra.mxu0 0.0
        %2166 = vmatprep.subr.mxu0 0.0
        %2167 = vmatpush1.msra.mxu0 0.0
        %2168 = vmatprep.subr.mxu0 0.0
        %2169 = vmatpush1.msra.mxu0 0.0
        %2170 = vmatprep.subr.mxu0 0.0
        %2171 = vmatpush1.msra.mxu0 0.0
        %2172 = vmatprep.subr.mxu0 0.0
        %2173 = vmatpush1.msra.mxu0 0.0
        %2174 = vmatprep.subr.mxu0 0.0
        %2175 = vmatpush1.msra.mxu0 0.0
        %2176 = vmatprep.subr.mxu0 0.0
        %2177 = vmatpush1.msra.mxu0 0.0
        %2178 = vmatprep.mubr.f32.mxu0 0.0
        %2179 = vmatmul.mubr.f32.gmra.mrb[0].mxu0 %v1493
        %v2180 = vpop.f32.mrb[0].mxu0
        %v2181 = vadd.f32 0.0, %v2180
        %v2182 = vpop.f32.mrb[0].mxu0
        %v2183 = vadd.f32 0.0, %v2182
        %2184 = vmatprep.mubr.f32.mxu0 0.0
        %2185 = vmatmul.mubr.f32.gmra.mrb[0].mxu0 %v1496
        %v2186 = vpop.f32.mrb[0].mxu0
        %v2187 = vadd.f32 0.0, %v2186
        %v2188 = vpop.f32.mrb[0].mxu0
        %v2189 = vadd.f32 0.0, %v2188
        %2190 = vdwg.mxu0
        %2191 = vmatprep.subr.mxu0 %v1380
        %2192 = vmatpush1.msra.mxu0 %v1379
        %2193 = vmatprep.subr.mxu0 %v1412
        %2194 = vmatpush1.msra.mxu0 %v1411
        %2195 = vmatprep.subr.mxu0 %v1444
        %2196 = vmatpush1.msra.mxu0 %v1443
        %2197 = vmatprep.subr.mxu0 %v1476
        %2198 = vmatpush1.msra.mxu0 %v1475
        %2199 = vmatprep.subr.mxu0 0.0
        %2200 = vmatpush1.msra.mxu0 0.0
        %2201 = vmatprep.subr.mxu0 0.0
        %2202 = vmatpush1.msra.mxu0 0.0
        %2203 = vmatprep.subr.mxu0 0.0
        %2204 = vmatpush1.msra.mxu0 0.0
        %2205 = vmatprep.subr.mxu0 0.0
        %2206 = vmatpush1.msra.mxu0 0.0
        %2207 = vmatprep.subr.mxu0 0.0
        %2208 = vmatpush1.msra.mxu0 0.0
        %2209 = vmatprep.subr.mxu0 0.0
        %2210 = vmatpush1.msra.mxu0 0.0
        %2211 = vmatprep.subr.mxu0 0.0
        %2212 = vmatpush1.msra.mxu0 0.0
        %2213 = vmatprep.subr.mxu0 0.0
        %2214 = vmatpush1.msra.mxu0 0.0
        %2215 = vmatprep.subr.mxu0 0.0
        %2216 = vmatpush1.msra.mxu0 0.0
        %2217 = vmatprep.subr.mxu0 0.0
        %2218 = vmatpush1.msra.mxu0 0.0
        %2219 = vmatprep.subr.mxu0 0.0
        %2220 = vmatpush1.msra.mxu0 0.0
        %2221 = vmatprep.subr.mxu0 0.0
        %2222 = vmatpush1.msra.mxu0 0.0
        %2223 = vmatprep.subr.mxu0 0.0
        %2224 = vmatpush1.msra.mxu0 0.0
        %2225 = vmatprep.subr.mxu0 0.0
        %2226 = vmatpush1.msra.mxu0 0.0
        %2227 = vmatprep.subr.mxu0 0.0
        %2228 = vmatpush1.msra.mxu0 0.0
        %2229 = vmatprep.subr.mxu0 0.0
        %2230 = vmatpush1.msra.mxu0 0.0
        %2231 = vmatprep.subr.mxu0 0.0
        %2232 = vmatpush1.msra.mxu0 0.0
        %2233 = vmatprep.subr.mxu0 0.0
        %2234 = vmatpush1.msra.mxu0 0.0
        %2235 = vmatprep.subr.mxu0 0.0
        %2236 = vmatpush1.msra.mxu0 0.0
        %2237 = vmatprep.subr.mxu0 0.0
        %2238 = vmatpush1.msra.mxu0 0.0
        %2239 = vmatprep.subr.mxu0 0.0
        %2240 = vmatpush1.msra.mxu0 0.0
        %2241 = vmatprep.subr.mxu0 0.0
        %2242 = vmatpush1.msra.mxu0 0.0
        %2243 = vmatprep.subr.mxu0 0.0
        %2244 = vmatpush1.msra.mxu0 0.0
        %2245 = vmatprep.subr.mxu0 0.0
        %2246 = vmatpush1.msra.mxu0 0.0
        %2247 = vmatprep.subr.mxu0 0.0
        %2248 = vmatpush1.msra.mxu0 0.0
        %2249 = vmatprep.subr.mxu0 0.0
        %2250 = vmatpush1.msra.mxu0 0.0
        %2251 = vmatprep.subr.mxu0 0.0
        %2252 = vmatpush1.msra.mxu0 0.0
        %2253 = vmatprep.subr.mxu0 0.0
        %2254 = vmatpush1.msra.mxu0 0.0
        %2255 = vmatprep.mubr.f32.mxu0 0.0
        %2256 = vmatmul.mubr.f32.gmra.mrb[0].mxu0 %v1493
        %v2257 = vpop.f32.mrb[0].mxu0
        %v2258 = vadd.f32 0.0, %v2257
        %v2259 = vpop.f32.mrb[0].mxu0
        %v2260 = vadd.f32 0.0, %v2259
        %2261 = vmatprep.mubr.f32.mxu0 0.0
        %2262 = vmatmul.mubr.f32.gmra.mrb[0].mxu0 %v1496
        %v2263 = vpop.f32.mrb[0].mxu0
        %v2264 = vadd.f32 0.0, %v2263
        %v2265 = vpop.f32.mrb[0].mxu0
        %v2266 = vadd.f32 0.0, %v2265
        %2267 = vdwg.mxu0
        %2268 = vmatprep.subr.mxu0 %v1382
        %2269 = vmatpush1.msra.mxu0 %v1381
        %2270 = vmatprep.subr.mxu0 %v1414
        %2271 = vmatpush1.msra.mxu0 %v1413
        %2272 = vmatprep.subr.mxu0 %v1446
        %2273 = vmatpush1.msra.mxu0 %v1445
        %2274 = vmatprep.subr.mxu0 %v1478
        %2275 = vmatpush1.msra.mxu0 %v1477
        %2276 = vmatprep.subr.mxu0 0.0
        %2277 = vmatpush1.msra.mxu0 0.0
        %2278 = vmatprep.subr.mxu0 0.0
        %2279 = vmatpush1.msra.mxu0 0.0
        %2280 = vmatprep.subr.mxu0 0.0
        %2281 = vmatpush1.msra.mxu0 0.0
        %2282 = vmatprep.subr.mxu0 0.0
        %2283 = vmatpush1.msra.mxu0 0.0
        %2284 = vmatprep.subr.mxu0 0.0
        %2285 = vmatpush1.msra.mxu0 0.0
        %2286 = vmatprep.subr.mxu0 0.0
        %2287 = vmatpush1.msra.mxu0 0.0
        %2288 = vmatprep.subr.mxu0 0.0
        %2289 = vmatpush1.msra.mxu0 0.0
        %2290 = vmatprep.subr.mxu0 0.0
        %2291 = vmatpush1.msra.mxu0 0.0
        %2292 = vmatprep.subr.mxu0 0.0
        %2293 = vmatpush1.msra.mxu0 0.0
        %2294 = vmatprep.subr.mxu0 0.0
        %2295 = vmatpush1.msra.mxu0 0.0
        %2296 = vmatprep.subr.mxu0 0.0
        %2297 = vmatpush1.msra.mxu0 0.0
        %2298 = vmatprep.subr.mxu0 0.0
        %2299 = vmatpush1.msra.mxu0 0.0
        %2300 = vmatprep.subr.mxu0 0.0
        %2301 = vmatpush1.msra.mxu0 0.0
        %2302 = vmatprep.subr.mxu0 0.0
        %2303 = vmatpush1.msra.mxu0 0.0
        %2304 = vmatprep.subr.mxu0 0.0
        %2305 = vmatpush1.msra.mxu0 0.0
        %2306 = vmatprep.subr.mxu0 0.0
        %2307 = vmatpush1.msra.mxu0 0.0
        %2308 = vmatprep.subr.mxu0 0.0
        %2309 = vmatpush1.msra.mxu0 0.0
        %2310 = vmatprep.subr.mxu0 0.0
        %2311 = vmatpush1.msra.mxu0 0.0
        %2312 = vmatprep.subr.mxu0 0.0
        %2313 = vmatpush1.msra.mxu0 0.0
        %2314 = vmatprep.subr.mxu0 0.0
        %2315 = vmatpush1.msra.mxu0 0.0
        %2316 = vmatprep.subr.mxu0 0.0
        %2317 = vmatpush1.msra.mxu0 0.0
        %2318 = vmatprep.subr.mxu0 0.0
        %2319 = vmatpush1.msra.mxu0 0.0
        %2320 = vmatprep.subr.mxu0 0.0
        %2321 = vmatpush1.msra.mxu0 0.0
        %2322 = vmatprep.subr.mxu0 0.0
        %2323 = vmatpush1.msra.mxu0 0.0
        %2324 = vmatprep.subr.mxu0 0.0
        %2325 = vmatpush1.msra.mxu0 0.0
        %2326 = vmatprep.subr.mxu0 0.0
        %2327 = vmatpush1.msra.mxu0 0.0
        %2328 = vmatprep.subr.mxu0 0.0
        %2329 = vmatpush1.msra.mxu0 0.0
        %2330 = vmatprep.subr.mxu0 0.0
        %2331 = vmatpush1.msra.mxu0 0.0
        %2332 = vmatprep.mubr.f32.mxu0 0.0
        %2333 = vmatmul.mubr.f32.gmra.mrb[0].mxu0 %v1493
        %v2334 = vpop.f32.mrb[0].mxu0
        %v2335 = vadd.f32 0.0, %v2334
        %v2336 = vpop.f32.mrb[0].mxu0
        %v2337 = vadd.f32 0.0, %v2336
        %2338 = vmatprep.mubr.f32.mxu0 0.0
        %2339 = vmatmul.mubr.f32.gmra.mrb[0].mxu0 %v1496
        %v2340 = vpop.f32.mrb[0].mxu0
        %v2341 = vadd.f32 0.0, %v2340
        %v2342 = vpop.f32.mrb[0].mxu0
        %v2343 = vadd.f32 0.0, %v2342
        %2344 = vdwg.mxu0
        %2345 = vmatprep.subr.mxu0 %v1384
        %2346 = vmatpush1.msra.mxu0 %v1383
        %2347 = vmatprep.subr.mxu0 %v1416
        %2348 = vmatpush1.msra.mxu0 %v1415
        %2349 = vmatprep.subr.mxu0 %v1448
        %2350 = vmatpush1.msra.mxu0 %v1447
        %2351 = vmatprep.subr.mxu0 %v1480
        %2352 = vmatpush1.msra.mxu0 %v1479
        %2353 = vmatprep.subr.mxu0 0.0
        %2354 = vmatpush1.msra.mxu0 0.0
        %2355 = vmatprep.subr.mxu0 0.0
        %2356 = vmatpush1.msra.mxu0 0.0
        %2357 = vmatprep.subr.mxu0 0.0
        %2358 = vmatpush1.msra.mxu0 0.0
        %2359 = vmatprep.subr.mxu0 0.0
        %2360 = vmatpush1.msra.mxu0 0.0
        %2361 = vmatprep.subr.mxu0 0.0
        %2362 = vmatpush1.msra.mxu0 0.0
        %2363 = vmatprep.subr.mxu0 0.0
        %2364 = vmatpush1.msra.mxu0 0.0
        %2365 = vmatprep.subr.mxu0 0.0
        %2366 = vmatpush1.msra.mxu0 0.0
        %2367 = vmatprep.subr.mxu0 0.0
        %2368 = vmatpush1.msra.mxu0 0.0
        %2369 = vmatprep.subr.mxu0 0.0
        %2370 = vmatpush1.msra.mxu0 0.0
        %2371 = vmatprep.subr.mxu0 0.0
        %2372 = vmatpush1.msra.mxu0 0.0
        %2373 = vmatprep.subr.mxu0 0.0
        %2374 = vmatpush1.msra.mxu0 0.0
        %2375 = vmatprep.subr.mxu0 0.0
        %2376 = vmatpush1.msra.mxu0 0.0
        %2377 = vmatprep.subr.mxu0 0.0
        %2378 = vmatpush1.msra.mxu0 0.0
        %2379 = vmatprep.subr.mxu0 0.0
        %2380 = vmatpush1.msra.mxu0 0.0
        %2381 = vmatprep.subr.mxu0 0.0
        %2382 = vmatpush1.msra.mxu0 0.0
        %2383 = vmatprep.subr.mxu0 0.0
        %2384 = vmatpush1.msra.mxu0 0.0
        %2385 = vmatprep.subr.mxu0 0.0
        %2386 = vmatpush1.msra.mxu0 0.0
        %2387 = vmatprep.subr.mxu0 0.0
        %2388 = vmatpush1.msra.mxu0 0.0
        %2389 = vmatprep.subr.mxu0 0.0
        %2390 = vmatpush1.msra.mxu0 0.0
        %2391 = vmatprep.subr.mxu0 0.0
        %2392 = vmatpush1.msra.mxu0 0.0
        %2393 = vmatprep.subr.mxu0 0.0
        %2394 = vmatpush1.msra.mxu0 0.0
        %2395 = vmatprep.subr.mxu0 0.0
        %2396 = vmatpush1.msra.mxu0 0.0
        %2397 = vmatprep.subr.mxu0 0.0
        %2398 = vmatpush1.msra.mxu0 0.0
        %2399 = vmatprep.subr.mxu0 0.0
        %2400 = vmatpush1.msra.mxu0 0.0
        %2401 = vmatprep.subr.mxu0 0.0
        %2402 = vmatpush1.msra.mxu0 0.0
        %2403 = vmatprep.subr.mxu0 0.0
        %2404 = vmatpush1.msra.mxu0 0.0
        %2405 = vmatprep.subr.mxu0 0.0
        %2406 = vmatpush1.msra.mxu0 0.0
        %2407 = vmatprep.subr.mxu0 0.0
        %2408 = vmatpush1.msra.mxu0 0.0
        %2409 = vmatprep.mubr.f32.mxu0 0.0
        %2410 = vmatmul.mubr.f32.gmra.mrb[0].mxu0 %v1493
        %v2411 = vpop.f32.mrb[0].mxu0
        %v2412 = vadd.f32 0.0, %v2411
        %v2413 = vpop.f32.mrb[0].mxu0
        %v2414 = vadd.f32 0.0, %v2413
        %2415 = vmatprep.mubr.f32.mxu0 0.0
        %2416 = vmatmul.mubr.f32.gmra.mrb[0].mxu0 %v1496
        %v2417 = vpop.f32.mrb[0].mxu0
        %v2418 = vadd.f32 0.0, %v2417
        %v2419 = vpop.f32.mrb[0].mxu0
        %v2420 = vadd.f32 0.0, %v2419
        %2421 = vdwg.mxu0
        %2422 = vmatprep.subr.mxu0 %v1386
        %2423 = vmatpush1.msra.mxu0 %v1385
        %2424 = vmatprep.subr.mxu0 %v1418
        %2425 = vmatpush1.msra.mxu0 %v1417
        %2426 = vmatprep.subr.mxu0 %v1450
        %2427 = vmatpush1.msra.mxu0 %v1449
        %2428 = vmatprep.subr.mxu0 %v1482
        %2429 = vmatpush1.msra.mxu0 %v1481
        %2430 = vmatprep.subr.mxu0 0.0
        %2431 = vmatpush1.msra.mxu0 0.0
        %2432 = vmatprep.subr.mxu0 0.0
        %2433 = vmatpush1.msra.mxu0 0.0
        %2434 = vmatprep.subr.mxu0 0.0
        %2435 = vmatpush1.msra.mxu0 0.0
        %2436 = vmatprep.subr.mxu0 0.0
        %2437 = vmatpush1.msra.mxu0 0.0
        %2438 = vmatprep.subr.mxu0 0.0
        %2439 = vmatpush1.msra.mxu0 0.0
        %2440 = vmatprep.subr.mxu0 0.0
        %2441 = vmatpush1.msra.mxu0 0.0
        %2442 = vmatprep.subr.mxu0 0.0
        %2443 = vmatpush1.msra.mxu0 0.0
        %2444 = vmatprep.subr.mxu0 0.0
        %2445 = vmatpush1.msra.mxu0 0.0
        %2446 = vmatprep.subr.mxu0 0.0
        %2447 = vmatpush1.msra.mxu0 0.0
        %2448 = vmatprep.subr.mxu0 0.0
        %2449 = vmatpush1.msra.mxu0 0.0
        %2450 = vmatprep.subr.mxu0 0.0
        %2451 = vmatpush1.msra.mxu0 0.0
        %2452 = vmatprep.subr.mxu0 0.0
        %2453 = vmatpush1.msra.mxu0 0.0
        %2454 = vmatprep.subr.mxu0 0.0
        %2455 = vmatpush1.msra.mxu0 0.0
        %2456 = vmatprep.subr.mxu0 0.0
        %2457 = vmatpush1.msra.mxu0 0.0
        %2458 = vmatprep.subr.mxu0 0.0
        %2459 = vmatpush1.msra.mxu0 0.0
        %2460 = vmatprep.subr.mxu0 0.0
        %2461 = vmatpush1.msra.mxu0 0.0
        %2462 = vmatprep.subr.mxu0 0.0
        %2463 = vmatpush1.msra.mxu0 0.0
        %2464 = vmatprep.subr.mxu0 0.0
        %2465 = vmatpush1.msra.mxu0 0.0
        %2466 = vmatprep.subr.mxu0 0.0
        %2467 = vmatpush1.msra.mxu0 0.0
        %2468 = vmatprep.subr.mxu0 0.0
        %2469 = vmatpush1.msra.mxu0 0.0
        %2470 = vmatprep.subr.mxu0 0.0
        %2471 = vmatpush1.msra.mxu0 0.0
        %2472 = vmatprep.subr.mxu0 0.0
        %2473 = vmatpush1.msra.mxu0 0.0
        %2474 = vmatprep.subr.mxu0 0.0
        %2475 = vmatpush1.msra.mxu0 0.0
        %2476 = vmatprep.subr.mxu0 0.0
        %2477 = vmatpush1.msra.mxu0 0.0
        %2478 = vmatprep.subr.mxu0 0.0
        %2479 = vmatpush1.msra.mxu0 0.0
        %2480 = vmatprep.subr.mxu0 0.0
        %2481 = vmatpush1.msra.mxu0 0.0
        %2482 = vmatprep.subr.mxu0 0.0
        %2483 = vmatpush1.msra.mxu0 0.0
        %2484 = vmatprep.subr.mxu0 0.0
        %2485 = vmatpush1.msra.mxu0 0.0
        %2486 = vmatprep.mubr.f32.mxu0 0.0
        %2487 = vmatmul.mubr.f32.gmra.mrb[0].mxu0 %v1493
        %v2488 = vpop.f32.mrb[0].mxu0
        %v2489 = vadd.f32 0.0, %v2488
        %v2490 = vpop.f32.mrb[0].mxu0
        %v2491 = vadd.f32 0.0, %v2490
        %2492 = vmatprep.mubr.f32.mxu0 0.0
        %2493 = vmatmul.mubr.f32.gmra.mrb[0].mxu0 %v1496
        %v2494 = vpop.f32.mrb[0].mxu0
        %v2495 = vadd.f32 0.0, %v2494
        %v2496 = vpop.f32.mrb[0].mxu0
        %v2497 = vadd.f32 0.0, %v2496
        %2498 = vdwg.mxu0
        %2499 = vmatprep.subr.mxu0 %v1388
        %2500 = vmatpush1.msra.mxu0 %v1387
        %2501 = vmatprep.subr.mxu0 %v1420
        %2502 = vmatpush1.msra.mxu0 %v1419
        %2503 = vmatprep.subr.mxu0 %v1452
        %2504 = vmatpush1.msra.mxu0 %v1451
        %2505 = vmatprep.subr.mxu0 %v1484
        %2506 = vmatpush1.msra.mxu0 %v1483
        %2507 = vmatprep.subr.mxu0 0.0
        %2508 = vmatpush1.msra.mxu0 0.0
        %2509 = vmatprep.subr.mxu0 0.0
        %2510 = vmatpush1.msra.mxu0 0.0
        %2511 = vmatprep.subr.mxu0 0.0
        %2512 = vmatpush1.msra.mxu0 0.0
        %2513 = vmatprep.subr.mxu0 0.0
        %2514 = vmatpush1.msra.mxu0 0.0
        %2515 = vmatprep.subr.mxu0 0.0
        %2516 = vmatpush1.msra.mxu0 0.0
        %2517 = vmatprep.subr.mxu0 0.0
        %2518 = vmatpush1.msra.mxu0 0.0
        %2519 = vmatprep.subr.mxu0 0.0
        %2520 = vmatpush1.msra.mxu0 0.0
        %2521 = vmatprep.subr.mxu0 0.0
        %2522 = vmatpush1.msra.mxu0 0.0
        %2523 = vmatprep.subr.mxu0 0.0
        %2524 = vmatpush1.msra.mxu0 0.0
        %2525 = vmatprep.subr.mxu0 0.0
        %2526 = vmatpush1.msra.mxu0 0.0
        %2527 = vmatprep.subr.mxu0 0.0
        %2528 = vmatpush1.msra.mxu0 0.0
        %2529 = vmatprep.subr.mxu0 0.0
        %2530 = vmatpush1.msra.mxu0 0.0
        %2531 = vmatprep.subr.mxu0 0.0
        %2532 = vmatpush1.msra.mxu0 0.0
        %2533 = vmatprep.subr.mxu0 0.0
        %2534 = vmatpush1.msra.mxu0 0.0
        %2535 = vmatprep.subr.mxu0 0.0
        %2536 = vmatpush1.msra.mxu0 0.0
        %2537 = vmatprep.subr.mxu0 0.0
        %2538 = vmatpush1.msra.mxu0 0.0
        %2539 = vmatprep.subr.mxu0 0.0
        %2540 = vmatpush1.msra.mxu0 0.0
        %2541 = vmatprep.subr.mxu0 0.0
        %2542 = vmatpush1.msra.mxu0 0.0
        %2543 = vmatprep.subr.mxu0 0.0
        %2544 = vmatpush1.msra.mxu0 0.0
        %2545 = vmatprep.subr.mxu0 0.0
        %2546 = vmatpush1.msra.mxu0 0.0
        %2547 = vmatprep.subr.mxu0 0.0
        %2548 = vmatpush1.msra.mxu0 0.0
        %2549 = vmatprep.subr.mxu0 0.0
        %2550 = vmatpush1.msra.mxu0 0.0
        %2551 = vmatprep.subr.mxu0 0.0
        %2552 = vmatpush1.msra.mxu0 0.0
        %2553 = vmatprep.subr.mxu0 0.0
        %2554 = vmatpush1.msra.mxu0 0.0
        %2555 = vmatprep.subr.mxu0 0.0
        %2556 = vmatpush1.msra.mxu0 0.0
        %2557 = vmatprep.subr.mxu0 0.0
        %2558 = vmatpush1.msra.mxu0 0.0
        %2559 = vmatprep.subr.mxu0 0.0
        %2560 = vmatpush1.msra.mxu0 0.0
        %2561 = vmatprep.subr.mxu0 0.0
        %2562 = vmatpush1.msra.mxu0 0.0
        %2563 = vmatprep.mubr.f32.mxu0 0.0
        %2564 = vmatmul.mubr.f32.gmra.mrb[0].mxu0 %v1493
        %v2565 = vpop.f32.mrb[0].mxu0
        %v2566 = vadd.f32 0.0, %v2565
        %v2567 = vpop.f32.mrb[0].mxu0
        %v2568 = vadd.f32 0.0, %v2567
        %2569 = vmatprep.mubr.f32.mxu0 0.0
        %2570 = vmatmul.mubr.f32.gmra.mrb[0].mxu0 %v1496
        %v2571 = vpop.f32.mrb[0].mxu0
        %v2572 = vadd.f32 0.0, %v2571
        %v2573 = vpop.f32.mrb[0].mxu0
        %v2574 = vadd.f32 0.0, %v2573
        %2575 = vdwg.mxu0
        %2576 = vmatprep.subr.mxu0 %v1390
        %2577 = vmatpush1.msra.mxu0 %v1389
        %2578 = vmatprep.subr.mxu0 %v1422
        %2579 = vmatpush1.msra.mxu0 %v1421
        %2580 = vmatprep.subr.mxu0 %v1454
        %2581 = vmatpush1.msra.mxu0 %v1453
        %2582 = vmatprep.subr.mxu0 %v1486
        %2583 = vmatpush1.msra.mxu0 %v1485
        %2584 = vmatprep.subr.mxu0 0.0
        %2585 = vmatpush1.msra.mxu0 0.0
        %2586 = vmatprep.subr.mxu0 0.0
        %2587 = vmatpush1.msra.mxu0 0.0
        %2588 = vmatprep.subr.mxu0 0.0
        %2589 = vmatpush1.msra.mxu0 0.0
        %2590 = vmatprep.subr.mxu0 0.0
        %2591 = vmatpush1.msra.mxu0 0.0
        %2592 = vmatprep.subr.mxu0 0.0
        %2593 = vmatpush1.msra.mxu0 0.0
        %2594 = vmatprep.subr.mxu0 0.0
        %2595 = vmatpush1.msra.mxu0 0.0
        %2596 = vmatprep.subr.mxu0 0.0
        %2597 = vmatpush1.msra.mxu0 0.0
        %2598 = vmatprep.subr.mxu0 0.0
        %2599 = vmatpush1.msra.mxu0 0.0
        %2600 = vmatprep.subr.mxu0 0.0
        %2601 = vmatpush1.msra.mxu0 0.0
        %2602 = vmatprep.subr.mxu0 0.0
        %2603 = vmatpush1.msra.mxu0 0.0
        %2604 = vmatprep.subr.mxu0 0.0
        %2605 = vmatpush1.msra.mxu0 0.0
        %2606 = vmatprep.subr.mxu0 0.0
        %2607 = vmatpush1.msra.mxu0 0.0
        %2608 = vmatprep.subr.mxu0 0.0
        %2609 = vmatpush1.msra.mxu0 0.0
        %2610 = vmatprep.subr.mxu0 0.0
        %2611 = vmatpush1.msra.mxu0 0.0
        %2612 = vmatprep.subr.mxu0 0.0
        %2613 = vmatpush1.msra.mxu0 0.0
        %2614 = vmatprep.subr.mxu0 0.0
        %2615 = vmatpush1.msra.mxu0 0.0
        %2616 = vmatprep.subr.mxu0 0.0
        %2617 = vmatpush1.msra.mxu0 0.0
        %2618 = vmatprep.subr.mxu0 0.0
        %2619 = vmatpush1.msra.mxu0 0.0
        %2620 = vmatprep.subr.mxu0 0.0
        %2621 = vmatpush1.msra.mxu0 0.0
        %2622 = vmatprep.subr.mxu0 0.0
        %2623 = vmatpush1.msra.mxu0 0.0
        %2624 = vmatprep.subr.mxu0 0.0
        %2625 = vmatpush1.msra.mxu0 0.0
        %2626 = vmatprep.subr.mxu0 0.0
        %2627 = vmatpush1.msra.mxu0 0.0
        %2628 = vmatprep.subr.mxu0 0.0
        %2629 = vmatpush1.msra.mxu0 0.0
        %2630 = vmatprep.subr.mxu0 0.0
        %2631 = vmatpush1.msra.mxu0 0.0
        %2632 = vmatprep.subr.mxu0 0.0
        %2633 = vmatpush1.msra.mxu0 0.0
        %2634 = vmatprep.subr.mxu0 0.0
        %2635 = vmatpush1.msra.mxu0 0.0
        %2636 = vmatprep.subr.mxu0 0.0
        %2637 = vmatpush1.msra.mxu0 0.0
        %2638 = vmatprep.subr.mxu0 0.0
        %2639 = vmatpush1.msra.mxu0 0.0
        %2640 = vmatprep.mubr.f32.mxu0 0.0
        %2641 = vmatmul.mubr.f32.gmra.mrb[0].mxu0 %v1493
        %v2642 = vpop.f32.mrb[0].mxu0
        %v2643 = vadd.f32 0.0, %v2642
        %v2644 = vpop.f32.mrb[0].mxu0
        %v2645 = vadd.f32 0.0, %v2644
        %2646 = vmatprep.mubr.f32.mxu0 0.0
        %2647 = vmatmul.mubr.f32.gmra.mrb[0].mxu0 %v1496
        %v2648 = vpop.f32.mrb[0].mxu0
        %v2649 = vadd.f32 0.0, %v2648
        %v2650 = vpop.f32.mrb[0].mxu0
        %v2651 = vadd.f32 0.0, %v2650
        %2652 = vdwg.mxu0
        %2653 = vmatprep.subr.mxu0 %v1392
        %2654 = vmatpush1.msra.mxu0 %v1391
        %2655 = vmatprep.subr.mxu0 %v1424
        %2656 = vmatpush1.msra.mxu0 %v1423
        %2657 = vmatprep.subr.mxu0 %v1456
        %2658 = vmatpush1.msra.mxu0 %v1455
        %2659 = vmatprep.subr.mxu0 %v1488
        %2660 = vmatpush1.msra.mxu0 %v1487
        %2661 = vmatprep.subr.mxu0 0.0
        %2662 = vmatpush1.msra.mxu0 0.0
        %2663 = vmatprep.subr.mxu0 0.0
        %2664 = vmatpush1.msra.mxu0 0.0
        %2665 = vmatprep.subr.mxu0 0.0
        %2666 = vmatpush1.msra.mxu0 0.0
        %2667 = vmatprep.subr.mxu0 0.0
        %2668 = vmatpush1.msra.mxu0 0.0
        %2669 = vmatprep.subr.mxu0 0.0
        %2670 = vmatpush1.msra.mxu0 0.0
        %2671 = vmatprep.subr.mxu0 0.0
        %2672 = vmatpush1.msra.mxu0 0.0
        %2673 = vmatprep.subr.mxu0 0.0
        %2674 = vmatpush1.msra.mxu0 0.0
        %2675 = vmatprep.subr.mxu0 0.0
        %2676 = vmatpush1.msra.mxu0 0.0
        %2677 = vmatprep.subr.mxu0 0.0
        %2678 = vmatpush1.msra.mxu0 0.0
        %2679 = vmatprep.subr.mxu0 0.0
        %2680 = vmatpush1.msra.mxu0 0.0
        %2681 = vmatprep.subr.mxu0 0.0
        %2682 = vmatpush1.msra.mxu0 0.0
        %2683 = vmatprep.subr.mxu0 0.0
        %2684 = vmatpush1.msra.mxu0 0.0
        %2685 = vmatprep.subr.mxu0 0.0
        %2686 = vmatpush1.msra.mxu0 0.0
        %2687 = vmatprep.subr.mxu0 0.0
        %2688 = vmatpush1.msra.mxu0 0.0
        %2689 = vmatprep.subr.mxu0 0.0
        %2690 = vmatpush1.msra.mxu0 0.0
        %2691 = vmatprep.subr.mxu0 0.0
        %2692 = vmatpush1.msra.mxu0 0.0
        %2693 = vmatprep.subr.mxu0 0.0
        %2694 = vmatpush1.msra.mxu0 0.0
        %2695 = vmatprep.subr.mxu0 0.0
        %2696 = vmatpush1.msra.mxu0 0.0
        %2697 = vmatprep.subr.mxu0 0.0
        %2698 = vmatpush1.msra.mxu0 0.0
        %2699 = vmatprep.subr.mxu0 0.0
        %2700 = vmatpush1.msra.mxu0 0.0
        %2701 = vmatprep.subr.mxu0 0.0
        %2702 = vmatpush1.msra.mxu0 0.0
        %2703 = vmatprep.subr.mxu0 0.0
        %2704 = vmatpush1.msra.mxu0 0.0
        %2705 = vmatprep.subr.mxu0 0.0
        %2706 = vmatpush1.msra.mxu0 0.0
        %2707 = vmatprep.subr.mxu0 0.0
        %2708 = vmatpush1.msra.mxu0 0.0
        %2709 = vmatprep.subr.mxu0 0.0
        %2710 = vmatpush1.msra.mxu0 0.0
        %2711 = vmatprep.subr.mxu0 0.0
        %2712 = vmatpush1.msra.mxu0 0.0
        %2713 = vmatprep.subr.mxu0 0.0
        %2714 = vmatpush1.msra.mxu0 0.0
        %2715 = vmatprep.subr.mxu0 0.0
        %2716 = vmatpush1.msra.mxu0 0.0
        %2717 = vmatprep.mubr.f32.mxu0 0.0
        %2718 = vmatmul.mubr.f32.gmra.mrb[0].mxu0 %v1493
        %v2719 = vpop.f32.mrb[0].mxu0
        %v2720 = vadd.f32 0.0, %v2719
        %v2721 = vpop.f32.mrb[0].mxu0
        %v2722 = vadd.f32 0.0, %v2721
        %2723 = vmatprep.mubr.f32.mxu0 0.0
        %2724 = vmatmul.mubr.f32.gmra.mrb[0].mxu0 %v1496
        %v2725 = vpop.f32.mrb[0].mxu0
        %v2726 = vadd.f32 0.0, %v2725
        %v2727 = vpop.f32.mrb[0].mxu0
        %v2728 = vadd.f32 0.0, %v2727
        %2729 = vdwg.mxu0
        %v2730 = vld [vmem:[%s4] sm:$0x1]
        %v2731 = vmul.f32 %v724, %v1565
        %v2732 = vmul.f32 %v728, %v1567
        %v2733 = vmul.f32 %v732, %v1642
        %v2734 = vmul.f32 %v736, %v1644
        %v2735 = vmul.f32 %v740, %v1719
        %v2736 = vmul.f32 %v744, %v1721
        %v2737 = vmul.f32 %v748, %v1796
        %v2738 = vmul.f32 %v752, %v1798
        %v2739 = vmul.f32 %v756, %v1873
        %v2740 = vmul.f32 %v760, %v1875
        %v2741 = vmul.f32 %v764, %v1950
        %v2742 = vmul.f32 %v768, %v1952
        %v2743 = vmul.f32 %v772, %v2027
        %v2744 = vmul.f32 %v776, %v2029
        %v2745 = vmul.f32 %v780, %v2104
        %v2746 = vmul.f32 %v784, %v2106
        %v2747 = vmul.f32 %v788, %v2181
        %v2748 = vmul.f32 %v792, %v2183
        %v2749 = vmul.f32 %v796, %v2258
        %v2750 = vmul.f32 %v800, %v2260
        %v2751 = vmul.f32 %v804, %v2335
        %v2752 = vmul.f32 %v808, %v2337
        %v2753 = vmul.f32 %v812, %v2412
        %v2754 = vmul.f32 %v816, %v2414
        %v2755 = vmul.f32 %v820, %v2489
        %v2756 = vmul.f32 %v824, %v2491
        %v2757 = vmul.f32 %v828, %v2566
        %v2758 = vmul.f32 %v832, %v2568
        %v2759 = vmul.f32 %v836, %v2643
        %v2760 = vmul.f32 %v840, %v2645
        %v2761 = vmul.f32 %v844, %v2720
        %v2762 = vmul.f32 %v848, %v2722
        %v2763 = vmul.f32 %v724, %v1571
        %v2764 = vmul.f32 %v728, %v1573
        %v2765 = vmul.f32 %v732, %v1648
        %v2766 = vmul.f32 %v736, %v1650
        %v2767 = vmul.f32 %v740, %v1725
        %v2768 = vmul.f32 %v744, %v1727
        %v2769 = vmul.f32 %v748, %v1802
        %v2770 = vmul.f32 %v752, %v1804
        %v2771 = vmul.f32 %v756, %v1879
        %v2772 = vmul.f32 %v760, %v1881
        %v2773 = vmul.f32 %v764, %v1956
        %v2774 = vmul.f32 %v768, %v1958
        %v2775 = vmul.f32 %v772, %v2033
        %v2776 = vmul.f32 %v776, %v2035
        %v2777 = vmul.f32 %v780, %v2110
        %v2778 = vmul.f32 %v784, %v2112
        %v2779 = vmul.f32 %v788, %v2187
        %v2780 = vmul.f32 %v792, %v2189
        %v2781 = vmul.f32 %v796, %v2264
        %v2782 = vmul.f32 %v800, %v2266
        %v2783 = vmul.f32 %v804, %v2341
        %v2784 = vmul.f32 %v808, %v2343
        %v2785 = vmul.f32 %v812, %v2418
        %v2786 = vmul.f32 %v816, %v2420
        %v2787 = vmul.f32 %v820, %v2495
        %v2788 = vmul.f32 %v824, %v2497
        %v2789 = vmul.f32 %v828, %v2572
        %v2790 = vmul.f32 %v832, %v2574
        %v2791 = vmul.f32 %v836, %v2649
        %v2792 = vmul.f32 %v840, %v2651
        %v2793 = vmul.f32 %v844, %v2726
        %v2794 = vmul.f32 %v848, %v2728
        %v2795 = vmul.f32 %v852, %v1565
        %v2796 = vmul.f32 %v856, %v1567
        %v2797 = vmul.f32 %v860, %v1642
        %v2798 = vmul.f32 %v864, %v1644
        %v2799 = vmul.f32 %v868, %v1719
        %v2800 = vmul.f32 %v872, %v1721
        %v2801 = vmul.f32 %v876, %v1796
        %v2802 = vmul.f32 %v880, %v1798
        %v2803 = vmul.f32 %v884, %v1873
        %v2804 = vmul.f32 %v888, %v1875
        %v2805 = vmul.f32 %v892, %v1950
        %v2806 = vmul.f32 %v896, %v1952
        %v2807 = vmul.f32 %v900, %v2027
        %v2808 = vmul.f32 %v904, %v2029
        %v2809 = vmul.f32 %v908, %v2104
        %v2810 = vmul.f32 %v912, %v2106
        %v2811 = vmul.f32 %v916, %v2181
        %v2812 = vmul.f32 %v920, %v2183
        %v2813 = vmul.f32 %v924, %v2258
        %v2814 = vmul.f32 %v928, %v2260
        %v2815 = vmul.f32 %v932, %v2335
        %v2816 = vmul.f32 %v936, %v2337
        %v2817 = vmul.f32 %v940, %v2412
        %v2818 = vmul.f32 %v944, %v2414
        %v2819 = vmul.f32 %v948, %v2489
        %v2820 = vmul.f32 %v952, %v2491
        %v2821 = vmul.f32 %v956, %v2566
        %v2822 = vmul.f32 %v960, %v2568
        %v2823 = vmul.f32 %v964, %v2643
        %v2824 = vmul.f32 %v968, %v2645
        %v2825 = vmul.f32 %v972, %v2720
        %v2826 = vmul.f32 %v976, %v2722
        %v2827 = vmul.f32 %v852, %v1571
        %v2828 = vmul.f32 %v856, %v1573
        %v2829 = vmul.f32 %v860, %v1648
        %v2830 = vmul.f32 %v864, %v1650
        %v2831 = vmul.f32 %v868, %v1725
        %v2832 = vmul.f32 %v872, %v1727
        %v2833 = vmul.f32 %v876, %v1802
        %v2834 = vmul.f32 %v880, %v1804
        %v2835 = vmul.f32 %v884, %v1879
        %v2836 = vmul.f32 %v888, %v1881
        %v2837 = vmul.f32 %v892, %v1956
        %v2838 = vmul.f32 %v896, %v1958
        %v2839 = vmul.f32 %v900, %v2033
        %v2840 = vmul.f32 %v904, %v2035
        %v2841 = vmul.f32 %v908, %v2110
        %v2842 = vmul.f32 %v912, %v2112
        %v2843 = vmul.f32 %v916, %v2187
        %v2844 = vmul.f32 %v920, %v2189
        %v2845 = vmul.f32 %v924, %v2264
        %v2846 = vmul.f32 %v928, %v2266
        %v2847 = vmul.f32 %v932, %v2341
        %v2848 = vmul.f32 %v936, %v2343
        %v2849 = vmul.f32 %v940, %v2418
        %v2850 = vmul.f32 %v944, %v2420
        %v2851 = vmul.f32 %v948, %v2495
        %v2852 = vmul.f32 %v952, %v2497
        %v2853 = vmul.f32 %v956, %v2572
        %v2854 = vmul.f32 %v960, %v2574
        %v2855 = vmul.f32 %v964, %v2649
        %v2856 = vmul.f32 %v968, %v2651
        %v2857 = vmul.f32 %v972, %v2726
        %v2858 = vmul.f32 %v976, %v2728
        %v2859 = vmul.f32 %v980, %v1565
        %v2860 = vmul.f32 %v984, %v1567
        %v2861 = vmul.f32 %v988, %v1642
        %v2862 = vmul.f32 %v992, %v1644
        %v2863 = vmul.f32 %v996, %v1719
        %v2864 = vmul.f32 %v1000, %v1721
        %v2865 = vmul.f32 %v1004, %v1796
        %v2866 = vmul.f32 %v1008, %v1798
        %v2867 = vmul.f32 %v1012, %v1873
        %v2868 = vmul.f32 %v1016, %v1875
        %v2869 = vmul.f32 %v1020, %v1950
        %v2870 = vmul.f32 %v1024, %v1952
        %v2871 = vmul.f32 %v1028, %v2027
        %v2872 = vmul.f32 %v1032, %v2029
        %v2873 = vmul.f32 %v1036, %v2104
        %v2874 = vmul.f32 %v1040, %v2106
        %v2875 = vmul.f32 %v1044, %v2181
        %v2876 = vmul.f32 %v1048, %v2183
        %v2877 = vmul.f32 %v1052, %v2258
        %v2878 = vmul.f32 %v1056, %v2260
        %v2879 = vmul.f32 %v1060, %v2335
        %v2880 = vmul.f32 %v1064, %v2337
        %v2881 = vmul.f32 %v1068, %v2412
        %v2882 = vmul.f32 %v1072, %v2414
        %v2883 = vmul.f32 %v1076, %v2489
        %v2884 = vmul.f32 %v1080, %v2491
        %v2885 = vmul.f32 %v1084, %v2566
        %v2886 = vmul.f32 %v1088, %v2568
        %v2887 = vmul.f32 %v1092, %v2643
        %v2888 = vmul.f32 %v1096, %v2645
        %v2889 = vmul.f32 %v1100, %v2720
        %v2890 = vmul.f32 %v1104, %v2722
        %v2891 = vmul.f32 %v980, %v1571
        %v2892 = vmul.f32 %v984, %v1573
        %v2893 = vmul.f32 %v988, %v1648
        %v2894 = vmul.f32 %v992, %v1650
        %v2895 = vmul.f32 %v996, %v1725
        %v2896 = vmul.f32 %v1000, %v1727
        %v2897 = vmul.f32 %v1004, %v1802
        %v2898 = vmul.f32 %v1008, %v1804
        %v2899 = vmul.f32 %v1012, %v1879
        %v2900 = vmul.f32 %v1016, %v1881
        %v2901 = vmul.f32 %v1020, %v1956
        %v2902 = vmul.f32 %v1024, %v1958
        %v2903 = vmul.f32 %v1028, %v2033
        %v2904 = vmul.f32 %v1032, %v2035
        %v2905 = vmul.f32 %v1036, %v2110
        %v2906 = vmul.f32 %v1040, %v2112
        %v2907 = vmul.f32 %v1044, %v2187
        %v2908 = vmul.f32 %v1048, %v2189
        %v2909 = vmul.f32 %v1052, %v2264
        %v2910 = vmul.f32 %v1056, %v2266
        %v2911 = vmul.f32 %v1060, %v2341
        %v2912 = vmul.f32 %v1064, %v2343
        %v2913 = vmul.f32 %v1068, %v2418
        %v2914 = vmul.f32 %v1072, %v2420
        %v2915 = vmul.f32 %v1076, %v2495
        %v2916 = vmul.f32 %v1080, %v2497
        %v2917 = vmul.f32 %v1084, %v2572
        %v2918 = vmul.f32 %v1088, %v2574
        %v2919 = vmul.f32 %v1092, %v2649
        %v2920 = vmul.f32 %v1096, %v2651
        %v2921 = vmul.f32 %v1100, %v2726
        %v2922 = vmul.f32 %v1104, %v2728
        %v2923 = vmul.f32 %v1108, %v1565
        %v2924 = vmul.f32 %v1112, %v1567
        %v2925 = vmul.f32 %v1116, %v1642
        %v2926 = vmul.f32 %v1120, %v1644
        %v2927 = vmul.f32 %v1124, %v1719
        %v2928 = vmul.f32 %v1128, %v1721
        %v2929 = vmul.f32 %v1132, %v1796
        %v2930 = vmul.f32 %v1136, %v1798
        %v2931 = vmul.f32 %v1140, %v1873
        %v2932 = vmul.f32 %v1144, %v1875
        %v2933 = vmul.f32 %v1148, %v1950
        %v2934 = vmul.f32 %v1152, %v1952
        %v2935 = vmul.f32 %v1156, %v2027
        %v2936 = vmul.f32 %v1160, %v2029
        %v2937 = vmul.f32 %v1164, %v2104
        %v2938 = vmul.f32 %v1168, %v2106
        %v2939 = vmul.f32 %v1172, %v2181
        %v2940 = vmul.f32 %v1176, %v2183
        %v2941 = vmul.f32 %v1180, %v2258
        %v2942 = vmul.f32 %v1184, %v2260
        %v2943 = vmul.f32 %v1188, %v2335
        %v2944 = vmul.f32 %v1192, %v2337
        %v2945 = vmul.f32 %v1196, %v2412
        %v2946 = vmul.f32 %v1200, %v2414
        %v2947 = vmul.f32 %v1204, %v2489
        %v2948 = vmul.f32 %v1208, %v2491
        %v2949 = vmul.f32 %v1212, %v2566
        %v2950 = vmul.f32 %v1216, %v2568
        %v2951 = vmul.f32 %v1220, %v2643
        %v2952 = vmul.f32 %v1224, %v2645
        %v2953 = vmul.f32 %v1228, %v2720
        %v2954 = vmul.f32 %v1232, %v2722
        %v2955 = vmul.f32 %v1108, %v1571
        %v2956 = vmul.f32 %v1112, %v1573
        %v2957 = vmul.f32 %v1116, %v1648
        %v2958 = vmul.f32 %v1120, %v1650
        %v2959 = vmul.f32 %v1124, %v1725
        %v2960 = vmul.f32 %v1128, %v1727
        %v2961 = vmul.f32 %v1132, %v1802
        %v2962 = vmul.f32 %v1136, %v1804
        %v2963 = vmul.f32 %v1140, %v1879
        %v2964 = vmul.f32 %v1144, %v1881
        %v2965 = vmul.f32 %v1148, %v1956
        %v2966 = vmul.f32 %v1152, %v1958
        %v2967 = vmul.f32 %v1156, %v2033
        %v2968 = vmul.f32 %v1160, %v2035
        %v2969 = vmul.f32 %v1164, %v2110
        %v2970 = vmul.f32 %v1168, %v2112
        %v2971 = vmul.f32 %v1172, %v2187
        %v2972 = vmul.f32 %v1176, %v2189
        %v2973 = vmul.f32 %v1180, %v2264
        %v2974 = vmul.f32 %v1184, %v2266
        %v2975 = vmul.f32 %v1188, %v2341
        %v2976 = vmul.f32 %v1192, %v2343
        %v2977 = vmul.f32 %v1196, %v2418
        %v2978 = vmul.f32 %v1200, %v2420
        %v2979 = vmul.f32 %v1204, %v2495
        %v2980 = vmul.f32 %v1208, %v2497
        %v2981 = vmul.f32 %v1212, %v2572
        %v2982 = vmul.f32 %v1216, %v2574
        %v2983 = vmul.f32 %v1220, %v2649
        %v2984 = vmul.f32 %v1224, %v2651
        %v2985 = vmul.f32 %v1228, %v2726
        %v2986 = vmul.f32 %v1232, %v2728
        %v2987 = vld [vmem:[#allocation8] sm:$0xff]
        %v2988 = vld [vmem:[#allocation8 + $0x8] sm:$0xff]
        %vm2989 = vcmask 523264
        %v2991 = vsel %vm2989, %v2987, 0
        %v2994 = vsel %vm2989, %v2988, 0
        %2996 = vmatprep.subr.mxu0 %v2732
        %2997 = vmatpush1.msra.mxu0 %v2731
        %2998 = vmatprep.subr.mxu0 %v2764
        %2999 = vmatpush1.msra.mxu0 %v2763
        %3000 = vmatprep.subr.mxu0 %v2796
        %3001 = vmatpush1.msra.mxu0 %v2795
        %3002 = vmatprep.subr.mxu0 %v2828
        %3003 = vmatpush1.msra.mxu0 %v2827
        %3004 = vmatprep.subr.mxu0 %v2860
        %3005 = vmatpush1.msra.mxu0 %v2859
        %3006 = vmatprep.subr.mxu0 %v2892
        %3007 = vmatpush1.msra.mxu0 %v2891
        %3008 = vmatprep.subr.mxu0 %v2924
        %3009 = vmatpush1.msra.mxu0 %v2923
        %3010 = vmatprep.subr.mxu0 %v2956
        %3011 = vmatpush1.msra.mxu0 %v2955
        %3012 = vmatprep.subr.mxu0 0.0
        %3013 = vmatpush1.msra.mxu0 0.0
        %3014 = vmatprep.subr.mxu0 0.0
        %3015 = vmatpush1.msra.mxu0 0.0
        %3016 = vmatprep.subr.mxu0 0.0
        %3017 = vmatpush1.msra.mxu0 0.0
        %3018 = vmatprep.subr.mxu0 0.0
        %3019 = vmatpush1.msra.mxu0 0.0
        %3020 = vmatprep.subr.mxu0 0.0
        %3021 = vmatpush1.msra.mxu0 0.0
        %3022 = vmatprep.subr.mxu0 0.0
        %3023 = vmatpush1.msra.mxu0 0.0
        %3024 = vmatprep.subr.mxu0 0.0
        %3025 = vmatpush1.msra.mxu0 0.0
        %3026 = vmatprep.subr.mxu0 0.0
        %3027 = vmatpush1.msra.mxu0 0.0
        %3028 = vmatprep.subr.mxu0 0.0
        %3029 = vmatpush1.msra.mxu0 0.0
        %3030 = vmatprep.subr.mxu0 0.0
        %3031 = vmatpush1.msra.mxu0 0.0
        %3032 = vmatprep.subr.mxu0 0.0
        %3033 = vmatpush1.msra.mxu0 0.0
        %3034 = vmatprep.subr.mxu0 0.0
        %3035 = vmatpush1.msra.mxu0 0.0
        %3036 = vmatprep.subr.mxu0 0.0
        %3037 = vmatpush1.msra.mxu0 0.0
        %3038 = vmatprep.subr.mxu0 0.0
        %3039 = vmatpush1.msra.mxu0 0.0
        %3040 = vmatprep.subr.mxu0 0.0
        %3041 = vmatpush1.msra.mxu0 0.0
        %3042 = vmatprep.subr.mxu0 0.0
        %3043 = vmatpush1.msra.mxu0 0.0
        %3044 = vmatprep.subr.mxu0 0.0
        %3045 = vmatpush1.msra.mxu0 0.0
        %3046 = vmatprep.subr.mxu0 0.0
        %3047 = vmatpush1.msra.mxu0 0.0
        %3048 = vmatprep.subr.mxu0 0.0
        %3049 = vmatpush1.msra.mxu0 0.0
        %3050 = vmatprep.subr.mxu0 0.0
        %3051 = vmatpush1.msra.mxu0 0.0
        %3052 = vmatprep.subr.mxu0 0.0
        %3053 = vmatpush1.msra.mxu0 0.0
        %3054 = vmatprep.subr.mxu0 0.0
        %3055 = vmatpush1.msra.mxu0 0.0
        %3056 = vmatprep.subr.mxu0 0.0
        %3057 = vmatpush1.msra.mxu0 0.0
        %3058 = vmatprep.subr.mxu0 0.0
        %3059 = vmatpush1.msra.mxu0 0.0
        %3060 = vmatprep.mubr.f32.mxu0 0.0
        %3061 = vmatmul.mubr.f32.gmra.mrb[0].mxu0 %v2991
        %v3062 = vpop.f32.mrb[0].mxu0
        %v3063 = vadd.f32 0.0, %v3062
        %v3064 = vpop.f32.mrb[0].mxu0
        %v3065 = vadd.f32 0.0, %v3064
        %3066 = vmatprep.mubr.f32.mxu0 0.0
        %3067 = vmatmul.mubr.f32.gmra.mrb[0].mxu0 %v2994
        %v3068 = vpop.f32.mrb[0].mxu0
        %v3069 = vadd.f32 0.0, %v3068
        %v3070 = vpop.f32.mrb[0].mxu0
        %v3071 = vadd.f32 0.0, %v3070
        %3072 = vdwg.mxu0
        %3073 = vmatprep.subr.mxu0 %v2734
        %3074 = vmatpush1.msra.mxu0 %v2733
        %3075 = vmatprep.subr.mxu0 %v2766
        %3076 = vmatpush1.msra.mxu0 %v2765
        %3077 = vmatprep.subr.mxu0 %v2798
        %3078 = vmatpush1.msra.mxu0 %v2797
        %3079 = vmatprep.subr.mxu0 %v2830
        %3080 = vmatpush1.msra.mxu0 %v2829
        %3081 = vmatprep.subr.mxu0 %v2862
        %3082 = vmatpush1.msra.mxu0 %v2861
        %3083 = vmatprep.subr.mxu0 %v2894
        %3084 = vmatpush1.msra.mxu0 %v2893
        %3085 = vmatprep.subr.mxu0 %v2926
        %3086 = vmatpush1.msra.mxu0 %v2925
        %3087 = vmatprep.subr.mxu0 %v2958
        %3088 = vmatpush1.msra.mxu0 %v2957
        %3089 = vmatprep.subr.mxu0 0.0
        %3090 = vmatpush1.msra.mxu0 0.0
        %3091 = vmatprep.subr.mxu0 0.0
        %3092 = vmatpush1.msra.mxu0 0.0
        %3093 = vmatprep.subr.mxu0 0.0
        %3094 = vmatpush1.msra.mxu0 0.0
        %3095 = vmatprep.subr.mxu0 0.0
        %3096 = vmatpush1.msra.mxu0 0.0
        %3097 = vmatprep.subr.mxu0 0.0
        %3098 = vmatpush1.msra.mxu0 0.0
        %3099 = vmatprep.subr.mxu0 0.0
        %3100 = vmatpush1.msra.mxu0 0.0
        %3101 = vmatprep.subr.mxu0 0.0
        %3102 = vmatpush1.msra.mxu0 0.0
        %3103 = vmatprep.subr.mxu0 0.0
        %3104 = vmatpush1.msra.mxu0 0.0
        %3105 = vmatprep.subr.mxu0 0.0
        %3106 = vmatpush1.msra.mxu0 0.0
        %3107 = vmatprep.subr.mxu0 0.0
        %3108 = vmatpush1.msra.mxu0 0.0
        %3109 = vmatprep.subr.mxu0 0.0
        %3110 = vmatpush1.msra.mxu0 0.0
        %3111 = vmatprep.subr.mxu0 0.0
        %3112 = vmatpush1.msra.mxu0 0.0
        %3113 = vmatprep.subr.mxu0 0.0
        %3114 = vmatpush1.msra.mxu0 0.0
        %3115 = vmatprep.subr.mxu0 0.0
        %3116 = vmatpush1.msra.mxu0 0.0
        %3117 = vmatprep.subr.mxu0 0.0
        %3118 = vmatpush1.msra.mxu0 0.0
        %3119 = vmatprep.subr.mxu0 0.0
        %3120 = vmatpush1.msra.mxu0 0.0
        %3121 = vmatprep.subr.mxu0 0.0
        %3122 = vmatpush1.msra.mxu0 0.0
        %3123 = vmatprep.subr.mxu0 0.0
        %3124 = vmatpush1.msra.mxu0 0.0
        %3125 = vmatprep.subr.mxu0 0.0
        %3126 = vmatpush1.msra.mxu0 0.0
        %3127 = vmatprep.subr.mxu0 0.0
        %3128 = vmatpush1.msra.mxu0 0.0
        %3129 = vmatprep.subr.mxu0 0.0
        %3130 = vmatpush1.msra.mxu0 0.0
        %3131 = vmatprep.subr.mxu0 0.0
        %3132 = vmatpush1.msra.mxu0 0.0
        %3133 = vmatprep.subr.mxu0 0.0
        %3134 = vmatpush1.msra.mxu0 0.0
        %3135 = vmatprep.subr.mxu0 0.0
        %3136 = vmatpush1.msra.mxu0 0.0
        %3137 = vmatprep.mubr.f32.mxu0 0.0
        %3138 = vmatmul.mubr.f32.gmra.mrb[0].mxu0 %v2991
        %v3139 = vpop.f32.mrb[0].mxu0
        %v3140 = vadd.f32 0.0, %v3139
        %v3141 = vpop.f32.mrb[0].mxu0
        %v3142 = vadd.f32 0.0, %v3141
        %3143 = vmatprep.mubr.f32.mxu0 0.0
        %3144 = vmatmul.mubr.f32.gmra.mrb[0].mxu0 %v2994
        %v3145 = vpop.f32.mrb[0].mxu0
        %v3146 = vadd.f32 0.0, %v3145
        %v3147 = vpop.f32.mrb[0].mxu0
        %v3148 = vadd.f32 0.0, %v3147
        %3149 = vdwg.mxu0
        %3150 = vmatprep.subr.mxu0 %v2736
        %3151 = vmatpush1.msra.mxu0 %v2735
        %3152 = vmatprep.subr.mxu0 %v2768
        %3153 = vmatpush1.msra.mxu0 %v2767
        %3154 = vmatprep.subr.mxu0 %v2800
        %3155 = vmatpush1.msra.mxu0 %v2799
        %3156 = vmatprep.subr.mxu0 %v2832
        %3157 = vmatpush1.msra.mxu0 %v2831
        %3158 = vmatprep.subr.mxu0 %v2864
        %3159 = vmatpush1.msra.mxu0 %v2863
        %3160 = vmatprep.subr.mxu0 %v2896
        %3161 = vmatpush1.msra.mxu0 %v2895
        %3162 = vmatprep.subr.mxu0 %v2928
        %3163 = vmatpush1.msra.mxu0 %v2927
        %3164 = vmatprep.subr.mxu0 %v2960
        %3165 = vmatpush1.msra.mxu0 %v2959
        %3166 = vmatprep.subr.mxu0 0.0
        %3167 = vmatpush1.msra.mxu0 0.0
        %3168 = vmatprep.subr.mxu0 0.0
        %3169 = vmatpush1.msra.mxu0 0.0
        %3170 = vmatprep.subr.mxu0 0.0
        %3171 = vmatpush1.msra.mxu0 0.0
        %3172 = vmatprep.subr.mxu0 0.0
        %3173 = vmatpush1.msra.mxu0 0.0
        %3174 = vmatprep.subr.mxu0 0.0
        %3175 = vmatpush1.msra.mxu0 0.0
        %3176 = vmatprep.subr.mxu0 0.0
        %3177 = vmatpush1.msra.mxu0 0.0
        %3178 = vmatprep.subr.mxu0 0.0
        %3179 = vmatpush1.msra.mxu0 0.0
        %3180 = vmatprep.subr.mxu0 0.0
        %3181 = vmatpush1.msra.mxu0 0.0
        %3182 = vmatprep.subr.mxu0 0.0
        %3183 = vmatpush1.msra.mxu0 0.0
        %3184 = vmatprep.subr.mxu0 0.0
        %3185 = vmatpush1.msra.mxu0 0.0
        %3186 = vmatprep.subr.mxu0 0.0
        %3187 = vmatpush1.msra.mxu0 0.0
        %3188 = vmatprep.subr.mxu0 0.0
        %3189 = vmatpush1.msra.mxu0 0.0
        %3190 = vmatprep.subr.mxu0 0.0
        %3191 = vmatpush1.msra.mxu0 0.0
        %3192 = vmatprep.subr.mxu0 0.0
        %3193 = vmatpush1.msra.mxu0 0.0
        %3194 = vmatprep.subr.mxu0 0.0
        %3195 = vmatpush1.msra.mxu0 0.0
        %3196 = vmatprep.subr.mxu0 0.0
        %3197 = vmatpush1.msra.mxu0 0.0
        %3198 = vmatprep.subr.mxu0 0.0
        %3199 = vmatpush1.msra.mxu0 0.0
        %3200 = vmatprep.subr.mxu0 0.0
        %3201 = vmatpush1.msra.mxu0 0.0
        %3202 = vmatprep.subr.mxu0 0.0
        %3203 = vmatpush1.msra.mxu0 0.0
        %3204 = vmatprep.subr.mxu0 0.0
        %3205 = vmatpush1.msra.mxu0 0.0
        %3206 = vmatprep.subr.mxu0 0.0
        %3207 = vmatpush1.msra.mxu0 0.0
        %3208 = vmatprep.subr.mxu0 0.0
        %3209 = vmatpush1.msra.mxu0 0.0
        %3210 = vmatprep.subr.mxu0 0.0
        %3211 = vmatpush1.msra.mxu0 0.0
        %3212 = vmatprep.subr.mxu0 0.0
        %3213 = vmatpush1.msra.mxu0 0.0
        %3214 = vmatprep.mubr.f32.mxu0 0.0
        %3215 = vmatmul.mubr.f32.gmra.mrb[0].mxu0 %v2991
        %v3216 = vpop.f32.mrb[0].mxu0
        %v3217 = vadd.f32 0.0, %v3216
        %v3218 = vpop.f32.mrb[0].mxu0
        %v3219 = vadd.f32 0.0, %v3218
        %3220 = vmatprep.mubr.f32.mxu0 0.0
        %3221 = vmatmul.mubr.f32.gmra.mrb[0].mxu0 %v2994
        %v3222 = vpop.f32.mrb[0].mxu0
        %v3223 = vadd.f32 0.0, %v3222
        %v3224 = vpop.f32.mrb[0].mxu0
        %v3225 = vadd.f32 0.0, %v3224
        %3226 = vdwg.mxu0
        %3227 = vmatprep.subr.mxu0 %v2738
        %3228 = vmatpush1.msra.mxu0 %v2737
        %3229 = vmatprep.subr.mxu0 %v2770
        %3230 = vmatpush1.msra.mxu0 %v2769
        %3231 = vmatprep.subr.mxu0 %v2802
        %3232 = vmatpush1.msra.mxu0 %v2801
        %3233 = vmatprep.subr.mxu0 %v2834
        %3234 = vmatpush1.msra.mxu0 %v2833
        %3235 = vmatprep.subr.mxu0 %v2866
        %3236 = vmatpush1.msra.mxu0 %v2865
        %3237 = vmatprep.subr.mxu0 %v2898
        %3238 = vmatpush1.msra.mxu0 %v2897
        %3239 = vmatprep.subr.mxu0 %v2930
        %3240 = vmatpush1.msra.mxu0 %v2929
        %3241 = vmatprep.subr.mxu0 %v2962
        %3242 = vmatpush1.msra.mxu0 %v2961
        %3243 = vmatprep.subr.mxu0 0.0
        %3244 = vmatpush1.msra.mxu0 0.0
        %3245 = vmatprep.subr.mxu0 0.0
        %3246 = vmatpush1.msra.mxu0 0.0
        %3247 = vmatprep.subr.mxu0 0.0
        %3248 = vmatpush1.msra.mxu0 0.0
        %3249 = vmatprep.subr.mxu0 0.0
        %3250 = vmatpush1.msra.mxu0 0.0
        %3251 = vmatprep.subr.mxu0 0.0
        %3252 = vmatpush1.msra.mxu0 0.0
        %3253 = vmatprep.subr.mxu0 0.0
        %3254 = vmatpush1.msra.mxu0 0.0
        %3255 = vmatprep.subr.mxu0 0.0
        %3256 = vmatpush1.msra.mxu0 0.0
        %3257 = vmatprep.subr.mxu0 0.0
        %3258 = vmatpush1.msra.mxu0 0.0
        %3259 = vmatprep.subr.mxu0 0.0
        %3260 = vmatpush1.msra.mxu0 0.0
        %3261 = vmatprep.subr.mxu0 0.0
        %3262 = vmatpush1.msra.mxu0 0.0
        %3263 = vmatprep.subr.mxu0 0.0
        %3264 = vmatpush1.msra.mxu0 0.0
        %3265 = vmatprep.subr.mxu0 0.0
        %3266 = vmatpush1.msra.mxu0 0.0
        %3267 = vmatprep.subr.mxu0 0.0
        %3268 = vmatpush1.msra.mxu0 0.0
        %3269 = vmatprep.subr.mxu0 0.0
        %3270 = vmatpush1.msra.mxu0 0.0
        %3271 = vmatprep.subr.mxu0 0.0
        %3272 = vmatpush1.msra.mxu0 0.0
        %3273 = vmatprep.subr.mxu0 0.0
        %3274 = vmatpush1.msra.mxu0 0.0
        %3275 = vmatprep.subr.mxu0 0.0
        %3276 = vmatpush1.msra.mxu0 0.0
        %3277 = vmatprep.subr.mxu0 0.0
        %3278 = vmatpush1.msra.mxu0 0.0
        %3279 = vmatprep.subr.mxu0 0.0
        %3280 = vmatpush1.msra.mxu0 0.0
        %3281 = vmatprep.subr.mxu0 0.0
        %3282 = vmatpush1.msra.mxu0 0.0
        %3283 = vmatprep.subr.mxu0 0.0
        %3284 = vmatpush1.msra.mxu0 0.0
        %3285 = vmatprep.subr.mxu0 0.0
        %3286 = vmatpush1.msra.mxu0 0.0
        %3287 = vmatprep.subr.mxu0 0.0
        %3288 = vmatpush1.msra.mxu0 0.0
        %3289 = vmatprep.subr.mxu0 0.0
        %3290 = vmatpush1.msra.mxu0 0.0
        %3291 = vmatprep.mubr.f32.mxu0 0.0
        %3292 = vmatmul.mubr.f32.gmra.mrb[0].mxu0 %v2991
        %v3293 = vpop.f32.mrb[0].mxu0
        %v3294 = vadd.f32 0.0, %v3293
        %v3295 = vpop.f32.mrb[0].mxu0
        %v3296 = vadd.f32 0.0, %v3295
        %3297 = vmatprep.mubr.f32.mxu0 0.0
        %3298 = vmatmul.mubr.f32.gmra.mrb[0].mxu0 %v2994
        %v3299 = vpop.f32.mrb[0].mxu0
        %v3300 = vadd.f32 0.0, %v3299
        %v3301 = vpop.f32.mrb[0].mxu0
        %v3302 = vadd.f32 0.0, %v3301
        %3303 = vdwg.mxu0
        %3304 = vmatprep.subr.mxu0 %v2740
        %3305 = vmatpush1.msra.mxu0 %v2739
        %3306 = vmatprep.subr.mxu0 %v2772
        %3307 = vmatpush1.msra.mxu0 %v2771
        %3308 = vmatprep.subr.mxu0 %v2804
        %3309 = vmatpush1.msra.mxu0 %v2803
        %3310 = vmatprep.subr.mxu0 %v2836
        %3311 = vmatpush1.msra.mxu0 %v2835
        %3312 = vmatprep.subr.mxu0 %v2868
        %3313 = vmatpush1.msra.mxu0 %v2867
        %3314 = vmatprep.subr.mxu0 %v2900
        %3315 = vmatpush1.msra.mxu0 %v2899
        %3316 = vmatprep.subr.mxu0 %v2932
        %3317 = vmatpush1.msra.mxu0 %v2931
        %3318 = vmatprep.subr.mxu0 %v2964
        %3319 = vmatpush1.msra.mxu0 %v2963
        %3320 = vmatprep.subr.mxu0 0.0
        %3321 = vmatpush1.msra.mxu0 0.0
        %3322 = vmatprep.subr.mxu0 0.0
        %3323 = vmatpush1.msra.mxu0 0.0
        %3324 = vmatprep.subr.mxu0 0.0
        %3325 = vmatpush1.msra.mxu0 0.0
        %3326 = vmatprep.subr.mxu0 0.0
        %3327 = vmatpush1.msra.mxu0 0.0
        %3328 = vmatprep.subr.mxu0 0.0
        %3329 = vmatpush1.msra.mxu0 0.0
        %3330 = vmatprep.subr.mxu0 0.0
        %3331 = vmatpush1.msra.mxu0 0.0
        %3332 = vmatprep.subr.mxu0 0.0
        %3333 = vmatpush1.msra.mxu0 0.0
        %3334 = vmatprep.subr.mxu0 0.0
        %3335 = vmatpush1.msra.mxu0 0.0
        %3336 = vmatprep.subr.mxu0 0.0
        %3337 = vmatpush1.msra.mxu0 0.0
        %3338 = vmatprep.subr.mxu0 0.0
        %3339 = vmatpush1.msra.mxu0 0.0
        %3340 = vmatprep.subr.mxu0 0.0
        %3341 = vmatpush1.msra.mxu0 0.0
        %3342 = vmatprep.subr.mxu0 0.0
        %3343 = vmatpush1.msra.mxu0 0.0
        %3344 = vmatprep.subr.mxu0 0.0
        %3345 = vmatpush1.msra.mxu0 0.0
        %3346 = vmatprep.subr.mxu0 0.0
        %3347 = vmatpush1.msra.mxu0 0.0
        %3348 = vmatprep.subr.mxu0 0.0
        %3349 = vmatpush1.msra.mxu0 0.0
        %3350 = vmatprep.subr.mxu0 0.0
        %3351 = vmatpush1.msra.mxu0 0.0
        %3352 = vmatprep.subr.mxu0 0.0
        %3353 = vmatpush1.msra.mxu0 0.0
        %3354 = vmatprep.subr.mxu0 0.0
        %3355 = vmatpush1.msra.mxu0 0.0
        %3356 = vmatprep.subr.mxu0 0.0
        %3357 = vmatpush1.msra.mxu0 0.0
        %3358 = vmatprep.subr.mxu0 0.0
        %3359 = vmatpush1.msra.mxu0 0.0
        %3360 = vmatprep.subr.mxu0 0.0
        %3361 = vmatpush1.msra.mxu0 0.0
        %3362 = vmatprep.subr.mxu0 0.0
        %3363 = vmatpush1.msra.mxu0 0.0
        %3364 = vmatprep.subr.mxu0 0.0
        %3365 = vmatpush1.msra.mxu0 0.0
        %3366 = vmatprep.subr.mxu0 0.0
        %3367 = vmatpush1.msra.mxu0 0.0
        %3368 = vmatprep.mubr.f32.mxu0 0.0
        %3369 = vmatmul.mubr.f32.gmra.mrb[0].mxu0 %v2991
        %v3370 = vpop.f32.mrb[0].mxu0
        %v3371 = vadd.f32 0.0, %v3370
        %v3372 = vpop.f32.mrb[0].mxu0
        %v3373 = vadd.f32 0.0, %v3372
        %3374 = vmatprep.mubr.f32.mxu0 0.0
        %3375 = vmatmul.mubr.f32.gmra.mrb[0].mxu0 %v2994
        %v3376 = vpop.f32.mrb[0].mxu0
        %v3377 = vadd.f32 0.0, %v3376
        %v3378 = vpop.f32.mrb[0].mxu0
        %v3379 = vadd.f32 0.0, %v3378
        %3380 = vdwg.mxu0
        %3381 = vmatprep.subr.mxu0 %v2742
        %3382 = vmatpush1.msra.mxu0 %v2741
        %3383 = vmatprep.subr.mxu0 %v2774
        %3384 = vmatpush1.msra.mxu0 %v2773
        %3385 = vmatprep.subr.mxu0 %v2806
        %3386 = vmatpush1.msra.mxu0 %v2805
        %3387 = vmatprep.subr.mxu0 %v2838
        %3388 = vmatpush1.msra.mxu0 %v2837
        %3389 = vmatprep.subr.mxu0 %v2870
        %3390 = vmatpush1.msra.mxu0 %v2869
        %3391 = vmatprep.subr.mxu0 %v2902
        %3392 = vmatpush1.msra.mxu0 %v2901
        %3393 = vmatprep.subr.mxu0 %v2934
        %3394 = vmatpush1.msra.mxu0 %v2933
        %3395 = vmatprep.subr.mxu0 %v2966
        %3396 = vmatpush1.msra.mxu0 %v2965
        %3397 = vmatprep.subr.mxu0 0.0
        %3398 = vmatpush1.msra.mxu0 0.0
        %3399 = vmatprep.subr.mxu0 0.0
        %3400 = vmatpush1.msra.mxu0 0.0
        %3401 = vmatprep.subr.mxu0 0.0
        %3402 = vmatpush1.msra.mxu0 0.0
        %3403 = vmatprep.subr.mxu0 0.0
        %3404 = vmatpush1.msra.mxu0 0.0
        %3405 = vmatprep.subr.mxu0 0.0
        %3406 = vmatpush1.msra.mxu0 0.0
        %3407 = vmatprep.subr.mxu0 0.0
        %3408 = vmatpush1.msra.mxu0 0.0
        %3409 = vmatprep.subr.mxu0 0.0
        %3410 = vmatpush1.msra.mxu0 0.0
        %3411 = vmatprep.subr.mxu0 0.0
        %3412 = vmatpush1.msra.mxu0 0.0
        %3413 = vmatprep.subr.mxu0 0.0
        %3414 = vmatpush1.msra.mxu0 0.0
        %3415 = vmatprep.subr.mxu0 0.0
        %3416 = vmatpush1.msra.mxu0 0.0
        %3417 = vmatprep.subr.mxu0 0.0
        %3418 = vmatpush1.msra.mxu0 0.0
        %3419 = vmatprep.subr.mxu0 0.0
        %3420 = vmatpush1.msra.mxu0 0.0
        %3421 = vmatprep.subr.mxu0 0.0
        %3422 = vmatpush1.msra.mxu0 0.0
        %3423 = vmatprep.subr.mxu0 0.0
        %3424 = vmatpush1.msra.mxu0 0.0
        %3425 = vmatprep.subr.mxu0 0.0
        %3426 = vmatpush1.msra.mxu0 0.0
        %3427 = vmatprep.subr.mxu0 0.0
        %3428 = vmatpush1.msra.mxu0 0.0
        %3429 = vmatprep.subr.mxu0 0.0
        %3430 = vmatpush1.msra.mxu0 0.0
        %3431 = vmatprep.subr.mxu0 0.0
        %3432 = vmatpush1.msra.mxu0 0.0
        %3433 = vmatprep.subr.mxu0 0.0
        %3434 = vmatpush1.msra.mxu0 0.0
        %3435 = vmatprep.subr.mxu0 0.0
        %3436 = vmatpush1.msra.mxu0 0.0
        %3437 = vmatprep.subr.mxu0 0.0
        %3438 = vmatpush1.msra.mxu0 0.0
        %3439 = vmatprep.subr.mxu0 0.0
        %3440 = vmatpush1.msra.mxu0 0.0
        %3441 = vmatprep.subr.mxu0 0.0
        %3442 = vmatpush1.msra.mxu0 0.0
        %3443 = vmatprep.subr.mxu0 0.0
        %3444 = vmatpush1.msra.mxu0 0.0
        %3445 = vmatprep.mubr.f32.mxu0 0.0
        %3446 = vmatmul.mubr.f32.gmra.mrb[0].mxu0 %v2991
        %v3447 = vpop.f32.mrb[0].mxu0
        %v3448 = vadd.f32 0.0, %v3447
        %v3449 = vpop.f32.mrb[0].mxu0
        %v3450 = vadd.f32 0.0, %v3449
        %3451 = vmatprep.mubr.f32.mxu0 0.0
        %3452 = vmatmul.mubr.f32.gmra.mrb[0].mxu0 %v2994
        %v3453 = vpop.f32.mrb[0].mxu0
        %v3454 = vadd.f32 0.0, %v3453
        %v3455 = vpop.f32.mrb[0].mxu0
        %v3456 = vadd.f32 0.0, %v3455
        %3457 = vdwg.mxu0
        %3458 = vmatprep.subr.mxu0 %v2744
        %3459 = vmatpush1.msra.mxu0 %v2743
        %3460 = vmatprep.subr.mxu0 %v2776
        %3461 = vmatpush1.msra.mxu0 %v2775
        %3462 = vmatprep.subr.mxu0 %v2808
        %3463 = vmatpush1.msra.mxu0 %v2807
        %3464 = vmatprep.subr.mxu0 %v2840
        %3465 = vmatpush1.msra.mxu0 %v2839
        %3466 = vmatprep.subr.mxu0 %v2872
        %3467 = vmatpush1.msra.mxu0 %v2871
        %3468 = vmatprep.subr.mxu0 %v2904
        %3469 = vmatpush1.msra.mxu0 %v2903
        %3470 = vmatprep.subr.mxu0 %v2936
        %3471 = vmatpush1.msra.mxu0 %v2935
        %3472 = vmatprep.subr.mxu0 %v2968
        %3473 = vmatpush1.msra.mxu0 %v2967
        %3474 = vmatprep.subr.mxu0 0.0
        %3475 = vmatpush1.msra.mxu0 0.0
        %3476 = vmatprep.subr.mxu0 0.0
        %3477 = vmatpush1.msra.mxu0 0.0
        %3478 = vmatprep.subr.mxu0 0.0
        %3479 = vmatpush1.msra.mxu0 0.0
        %3480 = vmatprep.subr.mxu0 0.0
        %3481 = vmatpush1.msra.mxu0 0.0
        %3482 = vmatprep.subr.mxu0 0.0
        %3483 = vmatpush1.msra.mxu0 0.0
        %3484 = vmatprep.subr.mxu0 0.0
        %3485 = vmatpush1.msra.mxu0 0.0
        %3486 = vmatprep.subr.mxu0 0.0
        %3487 = vmatpush1.msra.mxu0 0.0
        %3488 = vmatprep.subr.mxu0 0.0
        %3489 = vmatpush1.msra.mxu0 0.0
        %3490 = vmatprep.subr.mxu0 0.0
        %3491 = vmatpush1.msra.mxu0 0.0
        %3492 = vmatprep.subr.mxu0 0.0
        %3493 = vmatpush1.msra.mxu0 0.0
        %3494 = vmatprep.subr.mxu0 0.0
        %3495 = vmatpush1.msra.mxu0 0.0
        %3496 = vmatprep.subr.mxu0 0.0
        %3497 = vmatpush1.msra.mxu0 0.0
        %3498 = vmatprep.subr.mxu0 0.0
        %3499 = vmatpush1.msra.mxu0 0.0
        %3500 = vmatprep.subr.mxu0 0.0
        %3501 = vmatpush1.msra.mxu0 0.0
        %3502 = vmatprep.subr.mxu0 0.0
        %3503 = vmatpush1.msra.mxu0 0.0
        %3504 = vmatprep.subr.mxu0 0.0
        %3505 = vmatpush1.msra.mxu0 0.0
        %3506 = vmatprep.subr.mxu0 0.0
        %3507 = vmatpush1.msra.mxu0 0.0
        %3508 = vmatprep.subr.mxu0 0.0
        %3509 = vmatpush1.msra.mxu0 0.0
        %3510 = vmatprep.subr.mxu0 0.0
        %3511 = vmatpush1.msra.mxu0 0.0
        %3512 = vmatprep.subr.mxu0 0.0
        %3513 = vmatpush1.msra.mxu0 0.0
        %3514 = vmatprep.subr.mxu0 0.0
        %3515 = vmatpush1.msra.mxu0 0.0
        %3516 = vmatprep.subr.mxu0 0.0
        %3517 = vmatpush1.msra.mxu0 0.0
        %3518 = vmatprep.subr.mxu0 0.0
        %3519 = vmatpush1.msra.mxu0 0.0
        %3520 = vmatprep.subr.mxu0 0.0
        %3521 = vmatpush1.msra.mxu0 0.0
        %3522 = vmatprep.mubr.f32.mxu0 0.0
        %3523 = vmatmul.mubr.f32.gmra.mrb[0].mxu0 %v2991
        %v3524 = vpop.f32.mrb[0].mxu0
        %v3525 = vadd.f32 0.0, %v3524
        %v3526 = vpop.f32.mrb[0].mxu0
        %v3527 = vadd.f32 0.0, %v3526
        %3528 = vmatprep.mubr.f32.mxu0 0.0
        %3529 = vmatmul.mubr.f32.gmra.mrb[0].mxu0 %v2994
        %v3530 = vpop.f32.mrb[0].mxu0
        %v3531 = vadd.f32 0.0, %v3530
        %v3532 = vpop.f32.mrb[0].mxu0
        %v3533 = vadd.f32 0.0, %v3532
        %3534 = vdwg.mxu0
        %3535 = vmatprep.subr.mxu0 %v2746
        %3536 = vmatpush1.msra.mxu0 %v2745
        %3537 = vmatprep.subr.mxu0 %v2778
        %3538 = vmatpush1.msra.mxu0 %v2777
        %3539 = vmatprep.subr.mxu0 %v2810
        %3540 = vmatpush1.msra.mxu0 %v2809
        %3541 = vmatprep.subr.mxu0 %v2842
        %3542 = vmatpush1.msra.mxu0 %v2841
        %3543 = vmatprep.subr.mxu0 %v2874
        %3544 = vmatpush1.msra.mxu0 %v2873
        %3545 = vmatprep.subr.mxu0 %v2906
        %3546 = vmatpush1.msra.mxu0 %v2905
        %3547 = vmatprep.subr.mxu0 %v2938
        %3548 = vmatpush1.msra.mxu0 %v2937
        %3549 = vmatprep.subr.mxu0 %v2970
        %3550 = vmatpush1.msra.mxu0 %v2969
        %3551 = vmatprep.subr.mxu0 0.0
        %3552 = vmatpush1.msra.mxu0 0.0
        %3553 = vmatprep.subr.mxu0 0.0
        %3554 = vmatpush1.msra.mxu0 0.0
        %3555 = vmatprep.subr.mxu0 0.0
        %3556 = vmatpush1.msra.mxu0 0.0
        %3557 = vmatprep.subr.mxu0 0.0
        %3558 = vmatpush1.msra.mxu0 0.0
        %3559 = vmatprep.subr.mxu0 0.0
        %3560 = vmatpush1.msra.mxu0 0.0
        %3561 = vmatprep.subr.mxu0 0.0
        %3562 = vmatpush1.msra.mxu0 0.0
        %3563 = vmatprep.subr.mxu0 0.0
        %3564 = vmatpush1.msra.mxu0 0.0
        %3565 = vmatprep.subr.mxu0 0.0
        %3566 = vmatpush1.msra.mxu0 0.0
        %3567 = vmatprep.subr.mxu0 0.0
        %3568 = vmatpush1.msra.mxu0 0.0
        %3569 = vmatprep.subr.mxu0 0.0
        %3570 = vmatpush1.msra.mxu0 0.0
        %3571 = vmatprep.subr.mxu0 0.0
        %3572 = vmatpush1.msra.mxu0 0.0
        %3573 = vmatprep.subr.mxu0 0.0
        %3574 = vmatpush1.msra.mxu0 0.0
        %3575 = vmatprep.subr.mxu0 0.0
        %3576 = vmatpush1.msra.mxu0 0.0
        %3577 = vmatprep.subr.mxu0 0.0
        %3578 = vmatpush1.msra.mxu0 0.0
        %3579 = vmatprep.subr.mxu0 0.0
        %3580 = vmatpush1.msra.mxu0 0.0
        %3581 = vmatprep.subr.mxu0 0.0
        %3582 = vmatpush1.msra.mxu0 0.0
        %3583 = vmatprep.subr.mxu0 0.0
        %3584 = vmatpush1.msra.mxu0 0.0
        %3585 = vmatprep.subr.mxu0 0.0
        %3586 = vmatpush1.msra.mxu0 0.0
        %3587 = vmatprep.subr.mxu0 0.0
        %3588 = vmatpush1.msra.mxu0 0.0
        %3589 = vmatprep.subr.mxu0 0.0
        %3590 = vmatpush1.msra.mxu0 0.0
        %3591 = vmatprep.subr.mxu0 0.0
        %3592 = vmatpush1.msra.mxu0 0.0
        %3593 = vmatprep.subr.mxu0 0.0
        %3594 = vmatpush1.msra.mxu0 0.0
        %3595 = vmatprep.subr.mxu0 0.0
        %3596 = vmatpush1.msra.mxu0 0.0
        %3597 = vmatprep.subr.mxu0 0.0
        %3598 = vmatpush1.msra.mxu0 0.0
        %3599 = vmatprep.mubr.f32.mxu0 0.0
        %3600 = vmatmul.mubr.f32.gmra.mrb[0].mxu0 %v2991
        %v3601 = vpop.f32.mrb[0].mxu0
        %v3602 = vadd.f32 0.0, %v3601
        %v3603 = vpop.f32.mrb[0].mxu0
        %v3604 = vadd.f32 0.0, %v3603
        %3605 = vmatprep.mubr.f32.mxu0 0.0
        %3606 = vmatmul.mubr.f32.gmra.mrb[0].mxu0 %v2994
        %v3607 = vpop.f32.mrb[0].mxu0
        %v3608 = vadd.f32 0.0, %v3607
        %v3609 = vpop.f32.mrb[0].mxu0
        %v3610 = vadd.f32 0.0, %v3609
        %3611 = vdwg.mxu0
        %3612 = vmatprep.subr.mxu0 %v2748
        %3613 = vmatpush1.msra.mxu0 %v2747
        %3614 = vmatprep.subr.mxu0 %v2780
        %3615 = vmatpush1.msra.mxu0 %v2779
        %3616 = vmatprep.subr.mxu0 %v2812
        %3617 = vmatpush1.msra.mxu0 %v2811
        %3618 = vmatprep.subr.mxu0 %v2844
        %3619 = vmatpush1.msra.mxu0 %v2843
        %3620 = vmatprep.subr.mxu0 %v2876
        %3621 = vmatpush1.msra.mxu0 %v2875
        %3622 = vmatprep.subr.mxu0 %v2908
        %3623 = vmatpush1.msra.mxu0 %v2907
        %3624 = vmatprep.subr.mxu0 %v2940
        %3625 = vmatpush1.msra.mxu0 %v2939
        %3626 = vmatprep.subr.mxu0 %v2972
        %3627 = vmatpush1.msra.mxu0 %v2971
        %3628 = vmatprep.subr.mxu0 0.0
        %3629 = vmatpush1.msra.mxu0 0.0
        %3630 = vmatprep.subr.mxu0 0.0
        %3631 = vmatpush1.msra.mxu0 0.0
        %3632 = vmatprep.subr.mxu0 0.0
        %3633 = vmatpush1.msra.mxu0 0.0
        %3634 = vmatprep.subr.mxu0 0.0
        %3635 = vmatpush1.msra.mxu0 0.0
        %3636 = vmatprep.subr.mxu0 0.0
        %3637 = vmatpush1.msra.mxu0 0.0
        %3638 = vmatprep.subr.mxu0 0.0
        %3639 = vmatpush1.msra.mxu0 0.0
        %3640 = vmatprep.subr.mxu0 0.0
        %3641 = vmatpush1.msra.mxu0 0.0
        %3642 = vmatprep.subr.mxu0 0.0
        %3643 = vmatpush1.msra.mxu0 0.0
        %3644 = vmatprep.subr.mxu0 0.0
        %3645 = vmatpush1.msra.mxu0 0.0
        %3646 = vmatprep.subr.mxu0 0.0
        %3647 = vmatpush1.msra.mxu0 0.0
        %3648 = vmatprep.subr.mxu0 0.0
        %3649 = vmatpush1.msra.mxu0 0.0
        %3650 = vmatprep.subr.mxu0 0.0
        %3651 = vmatpush1.msra.mxu0 0.0
        %3652 = vmatprep.subr.mxu0 0.0
        %3653 = vmatpush1.msra.mxu0 0.0
        %3654 = vmatprep.subr.mxu0 0.0
        %3655 = vmatpush1.msra.mxu0 0.0
        %3656 = vmatprep.subr.mxu0 0.0
        %3657 = vmatpush1.msra.mxu0 0.0
        %3658 = vmatprep.subr.mxu0 0.0
        %3659 = vmatpush1.msra.mxu0 0.0
        %3660 = vmatprep.subr.mxu0 0.0
        %3661 = vmatpush1.msra.mxu0 0.0
        %3662 = vmatprep.subr.mxu0 0.0
        %3663 = vmatpush1.msra.mxu0 0.0
        %3664 = vmatprep.subr.mxu0 0.0
        %3665 = vmatpush1.msra.mxu0 0.0
        %3666 = vmatprep.subr.mxu0 0.0
        %3667 = vmatpush1.msra.mxu0 0.0
        %3668 = vmatprep.subr.mxu0 0.0
        %3669 = vmatpush1.msra.mxu0 0.0
        %3670 = vmatprep.subr.mxu0 0.0
        %3671 = vmatpush1.msra.mxu0 0.0
        %3672 = vmatprep.subr.mxu0 0.0
        %3673 = vmatpush1.msra.mxu0 0.0
        %3674 = vmatprep.subr.mxu0 0.0
        %3675 = vmatpush1.msra.mxu0 0.0
        %3676 = vmatprep.mubr.f32.mxu0 0.0
        %3677 = vmatmul.mubr.f32.gmra.mrb[0].mxu0 %v2991
        %v3678 = vpop.f32.mrb[0].mxu0
        %v3679 = vadd.f32 0.0, %v3678
        %v3680 = vpop.f32.mrb[0].mxu0
        %v3681 = vadd.f32 0.0, %v3680
        %3682 = vmatprep.mubr.f32.mxu0 0.0
        %3683 = vmatmul.mubr.f32.gmra.mrb[0].mxu0 %v2994
        %v3684 = vpop.f32.mrb[0].mxu0
        %v3685 = vadd.f32 0.0, %v3684
        %v3686 = vpop.f32.mrb[0].mxu0
        %v3687 = vadd.f32 0.0, %v3686
        %3688 = vdwg.mxu0
        %3689 = vmatprep.subr.mxu0 %v2750
        %3690 = vmatpush1.msra.mxu0 %v2749
        %3691 = vmatprep.subr.mxu0 %v2782
        %3692 = vmatpush1.msra.mxu0 %v2781
        %3693 = vmatprep.subr.mxu0 %v2814
        %3694 = vmatpush1.msra.mxu0 %v2813
        %3695 = vmatprep.subr.mxu0 %v2846
        %3696 = vmatpush1.msra.mxu0 %v2845
        %3697 = vmatprep.subr.mxu0 %v2878
        %3698 = vmatpush1.msra.mxu0 %v2877
        %3699 = vmatprep.subr.mxu0 %v2910
        %3700 = vmatpush1.msra.mxu0 %v2909
        %3701 = vmatprep.subr.mxu0 %v2942
        %3702 = vmatpush1.msra.mxu0 %v2941
        %3703 = vmatprep.subr.mxu0 %v2974
        %3704 = vmatpush1.msra.mxu0 %v2973
        %3705 = vmatprep.subr.mxu0 0.0
        %3706 = vmatpush1.msra.mxu0 0.0
        %3707 = vmatprep.subr.mxu0 0.0
        %3708 = vmatpush1.msra.mxu0 0.0
        %3709 = vmatprep.subr.mxu0 0.0
        %3710 = vmatpush1.msra.mxu0 0.0
        %3711 = vmatprep.subr.mxu0 0.0
        %3712 = vmatpush1.msra.mxu0 0.0
        %3713 = vmatprep.subr.mxu0 0.0
        %3714 = vmatpush1.msra.mxu0 0.0
        %3715 = vmatprep.subr.mxu0 0.0
        %3716 = vmatpush1.msra.mxu0 0.0
        %3717 = vmatprep.subr.mxu0 0.0
        %3718 = vmatpush1.msra.mxu0 0.0
        %3719 = vmatprep.subr.mxu0 0.0
        %3720 = vmatpush1.msra.mxu0 0.0
        %3721 = vmatprep.subr.mxu0 0.0
        %3722 = vmatpush1.msra.mxu0 0.0
        %3723 = vmatprep.subr.mxu0 0.0
        %3724 = vmatpush1.msra.mxu0 0.0
        %3725 = vmatprep.subr.mxu0 0.0
        %3726 = vmatpush1.msra.mxu0 0.0
        %3727 = vmatprep.subr.mxu0 0.0
        %3728 = vmatpush1.msra.mxu0 0.0
        %3729 = vmatprep.subr.mxu0 0.0
        %3730 = vmatpush1.msra.mxu0 0.0
        %3731 = vmatprep.subr.mxu0 0.0
        %3732 = vmatpush1.msra.mxu0 0.0
        %3733 = vmatprep.subr.mxu0 0.0
        %3734 = vmatpush1.msra.mxu0 0.0
        %3735 = vmatprep.subr.mxu0 0.0
        %3736 = vmatpush1.msra.mxu0 0.0
        %3737 = vmatprep.subr.mxu0 0.0
        %3738 = vmatpush1.msra.mxu0 0.0
        %3739 = vmatprep.subr.mxu0 0.0
        %3740 = vmatpush1.msra.mxu0 0.0
        %3741 = vmatprep.subr.mxu0 0.0
        %3742 = vmatpush1.msra.mxu0 0.0
        %3743 = vmatprep.subr.mxu0 0.0
        %3744 = vmatpush1.msra.mxu0 0.0
        %3745 = vmatprep.subr.mxu0 0.0
        %3746 = vmatpush1.msra.mxu0 0.0
        %3747 = vmatprep.subr.mxu0 0.0
        %3748 = vmatpush1.msra.mxu0 0.0
        %3749 = vmatprep.subr.mxu0 0.0
        %3750 = vmatpush1.msra.mxu0 0.0
        %3751 = vmatprep.subr.mxu0 0.0
        %3752 = vmatpush1.msra.mxu0 0.0
        %3753 = vmatprep.mubr.f32.mxu0 0.0
        %3754 = vmatmul.mubr.f32.gmra.mrb[0].mxu0 %v2991
        %v3755 = vpop.f32.mrb[0].mxu0
        %v3756 = vadd.f32 0.0, %v3755
        %v3757 = vpop.f32.mrb[0].mxu0
        %v3758 = vadd.f32 0.0, %v3757
        %3759 = vmatprep.mubr.f32.mxu0 0.0
        %3760 = vmatmul.mubr.f32.gmra.mrb[0].mxu0 %v2994
        %v3761 = vpop.f32.mrb[0].mxu0
        %v3762 = vadd.f32 0.0, %v3761
        %v3763 = vpop.f32.mrb[0].mxu0
        %v3764 = vadd.f32 0.0, %v3763
        %3765 = vdwg.mxu0
        %3766 = vmatprep.subr.mxu0 %v2752
        %3767 = vmatpush1.msra.mxu0 %v2751
        %3768 = vmatprep.subr.mxu0 %v2784
        %3769 = vmatpush1.msra.mxu0 %v2783
        %3770 = vmatprep.subr.mxu0 %v2816
        %3771 = vmatpush1.msra.mxu0 %v2815
        %3772 = vmatprep.subr.mxu0 %v2848
        %3773 = vmatpush1.msra.mxu0 %v2847
        %3774 = vmatprep.subr.mxu0 %v2880
        %3775 = vmatpush1.msra.mxu0 %v2879
        %3776 = vmatprep.subr.mxu0 %v2912
        %3777 = vmatpush1.msra.mxu0 %v2911
        %3778 = vmatprep.subr.mxu0 %v2944
        %3779 = vmatpush1.msra.mxu0 %v2943
        %3780 = vmatprep.subr.mxu0 %v2976
        %3781 = vmatpush1.msra.mxu0 %v2975
        %3782 = vmatprep.subr.mxu0 0.0
        %3783 = vmatpush1.msra.mxu0 0.0
        %3784 = vmatprep.subr.mxu0 0.0
        %3785 = vmatpush1.msra.mxu0 0.0
        %3786 = vmatprep.subr.mxu0 0.0
        %3787 = vmatpush1.msra.mxu0 0.0
        %3788 = vmatprep.subr.mxu0 0.0
        %3789 = vmatpush1.msra.mxu0 0.0
        %3790 = vmatprep.subr.mxu0 0.0
        %3791 = vmatpush1.msra.mxu0 0.0
        %3792 = vmatprep.subr.mxu0 0.0
        %3793 = vmatpush1.msra.mxu0 0.0
        %3794 = vmatprep.subr.mxu0 0.0
        %3795 = vmatpush1.msra.mxu0 0.0
        %3796 = vmatprep.subr.mxu0 0.0
        %3797 = vmatpush1.msra.mxu0 0.0
        %3798 = vmatprep.subr.mxu0 0.0
        %3799 = vmatpush1.msra.mxu0 0.0
        %3800 = vmatprep.subr.mxu0 0.0
        %3801 = vmatpush1.msra.mxu0 0.0
        %3802 = vmatprep.subr.mxu0 0.0
        %3803 = vmatpush1.msra.mxu0 0.0
        %3804 = vmatprep.subr.mxu0 0.0
        %3805 = vmatpush1.msra.mxu0 0.0
        %3806 = vmatprep.subr.mxu0 0.0
        %3807 = vmatpush1.msra.mxu0 0.0
        %3808 = vmatprep.subr.mxu0 0.0
        %3809 = vmatpush1.msra.mxu0 0.0
        %3810 = vmatprep.subr.mxu0 0.0
        %3811 = vmatpush1.msra.mxu0 0.0
        %3812 = vmatprep.subr.mxu0 0.0
        %3813 = vmatpush1.msra.mxu0 0.0
        %3814 = vmatprep.subr.mxu0 0.0
        %3815 = vmatpush1.msra.mxu0 0.0
        %3816 = vmatprep.subr.mxu0 0.0
        %3817 = vmatpush1.msra.mxu0 0.0
        %3818 = vmatprep.subr.mxu0 0.0
        %3819 = vmatpush1.msra.mxu0 0.0
        %3820 = vmatprep.subr.mxu0 0.0
        %3821 = vmatpush1.msra.mxu0 0.0
        %3822 = vmatprep.subr.mxu0 0.0
        %3823 = vmatpush1.msra.mxu0 0.0
        %3824 = vmatprep.subr.mxu0 0.0
        %3825 = vmatpush1.msra.mxu0 0.0
        %3826 = vmatprep.subr.mxu0 0.0
        %3827 = vmatpush1.msra.mxu0 0.0
        %3828 = vmatprep.subr.mxu0 0.0
        %3829 = vmatpush1.msra.mxu0 0.0
        %3830 = vmatprep.mubr.f32.mxu0 0.0
        %3831 = vmatmul.mubr.f32.gmra.mrb[0].mxu0 %v2991
        %v3832 = vpop.f32.mrb[0].mxu0
        %v3833 = vadd.f32 0.0, %v3832
        %v3834 = vpop.f32.mrb[0].mxu0
        %v3835 = vadd.f32 0.0, %v3834
        %3836 = vmatprep.mubr.f32.mxu0 0.0
        %3837 = vmatmul.mubr.f32.gmra.mrb[0].mxu0 %v2994
        %v3838 = vpop.f32.mrb[0].mxu0
        %v3839 = vadd.f32 0.0, %v3838
        %v3840 = vpop.f32.mrb[0].mxu0
        %v3841 = vadd.f32 0.0, %v3840
        %3842 = vdwg.mxu0
        %3843 = vmatprep.subr.mxu0 %v2754
        %3844 = vmatpush1.msra.mxu0 %v2753
        %3845 = vmatprep.subr.mxu0 %v2786
        %3846 = vmatpush1.msra.mxu0 %v2785
        %3847 = vmatprep.subr.mxu0 %v2818
        %3848 = vmatpush1.msra.mxu0 %v2817
        %3849 = vmatprep.subr.mxu0 %v2850
        %3850 = vmatpush1.msra.mxu0 %v2849
        %3851 = vmatprep.subr.mxu0 %v2882
        %3852 = vmatpush1.msra.mxu0 %v2881
        %3853 = vmatprep.subr.mxu0 %v2914
        %3854 = vmatpush1.msra.mxu0 %v2913
        %3855 = vmatprep.subr.mxu0 %v2946
        %3856 = vmatpush1.msra.mxu0 %v2945
        %3857 = vmatprep.subr.mxu0 %v2978
        %3858 = vmatpush1.msra.mxu0 %v2977
        %3859 = vmatprep.subr.mxu0 0.0
        %3860 = vmatpush1.msra.mxu0 0.0
        %3861 = vmatprep.subr.mxu0 0.0
        %3862 = vmatpush1.msra.mxu0 0.0
        %3863 = vmatprep.subr.mxu0 0.0
        %3864 = vmatpush1.msra.mxu0 0.0
        %3865 = vmatprep.subr.mxu0 0.0
        %3866 = vmatpush1.msra.mxu0 0.0
        %3867 = vmatprep.subr.mxu0 0.0
        %3868 = vmatpush1.msra.mxu0 0.0
        %3869 = vmatprep.subr.mxu0 0.0
        %3870 = vmatpush1.msra.mxu0 0.0
        %3871 = vmatprep.subr.mxu0 0.0
        %3872 = vmatpush1.msra.mxu0 0.0
        %3873 = vmatprep.subr.mxu0 0.0
        %3874 = vmatpush1.msra.mxu0 0.0
        %3875 = vmatprep.subr.mxu0 0.0
        %3876 = vmatpush1.msra.mxu0 0.0
        %3877 = vmatprep.subr.mxu0 0.0
        %3878 = vmatpush1.msra.mxu0 0.0
        %3879 = vmatprep.subr.mxu0 0.0
        %3880 = vmatpush1.msra.mxu0 0.0
        %3881 = vmatprep.subr.mxu0 0.0
        %3882 = vmatpush1.msra.mxu0 0.0
        %3883 = vmatprep.subr.mxu0 0.0
        %3884 = vmatpush1.msra.mxu0 0.0
        %3885 = vmatprep.subr.mxu0 0.0
        %3886 = vmatpush1.msra.mxu0 0.0
        %3887 = vmatprep.subr.mxu0 0.0
        %3888 = vmatpush1.msra.mxu0 0.0
        %3889 = vmatprep.subr.mxu0 0.0
        %3890 = vmatpush1.msra.mxu0 0.0
        %3891 = vmatprep.subr.mxu0 0.0
        %3892 = vmatpush1.msra.mxu0 0.0
        %3893 = vmatprep.subr.mxu0 0.0
        %3894 = vmatpush1.msra.mxu0 0.0
        %3895 = vmatprep.subr.mxu0 0.0
        %3896 = vmatpush1.msra.mxu0 0.0
        %3897 = vmatprep.subr.mxu0 0.0
        %3898 = vmatpush1.msra.mxu0 0.0
        %3899 = vmatprep.subr.mxu0 0.0
        %3900 = vmatpush1.msra.mxu0 0.0
        %3901 = vmatprep.subr.mxu0 0.0
        %3902 = vmatpush1.msra.mxu0 0.0
        %3903 = vmatprep.subr.mxu0 0.0
        %3904 = vmatpush1.msra.mxu0 0.0
        %3905 = vmatprep.subr.mxu0 0.0
        %3906 = vmatpush1.msra.mxu0 0.0
        %3907 = vmatprep.mubr.f32.mxu0 0.0
        %3908 = vmatmul.mubr.f32.gmra.mrb[0].mxu0 %v2991
        %v3909 = vpop.f32.mrb[0].mxu0
        %v3910 = vadd.f32 0.0, %v3909
        %v3911 = vpop.f32.mrb[0].mxu0
        %v3912 = vadd.f32 0.0, %v3911
        %3913 = vmatprep.mubr.f32.mxu0 0.0
        %3914 = vmatmul.mubr.f32.gmra.mrb[0].mxu0 %v2994
        %v3915 = vpop.f32.mrb[0].mxu0
        %v3916 = vadd.f32 0.0, %v3915
        %v3917 = vpop.f32.mrb[0].mxu0
        %v3918 = vadd.f32 0.0, %v3917
        %3919 = vdwg.mxu0
        %3920 = vmatprep.subr.mxu0 %v2756
        %3921 = vmatpush1.msra.mxu0 %v2755
        %3922 = vmatprep.subr.mxu0 %v2788
        %3923 = vmatpush1.msra.mxu0 %v2787
        %3924 = vmatprep.subr.mxu0 %v2820
        %3925 = vmatpush1.msra.mxu0 %v2819
        %3926 = vmatprep.subr.mxu0 %v2852
        %3927 = vmatpush1.msra.mxu0 %v2851
        %3928 = vmatprep.subr.mxu0 %v2884
        %3929 = vmatpush1.msra.mxu0 %v2883
        %3930 = vmatprep.subr.mxu0 %v2916
        %3931 = vmatpush1.msra.mxu0 %v2915
        %3932 = vmatprep.subr.mxu0 %v2948
        %3933 = vmatpush1.msra.mxu0 %v2947
        %3934 = vmatprep.subr.mxu0 %v2980
        %3935 = vmatpush1.msra.mxu0 %v2979
        %3936 = vmatprep.subr.mxu0 0.0
        %3937 = vmatpush1.msra.mxu0 0.0
        %3938 = vmatprep.subr.mxu0 0.0
        %3939 = vmatpush1.msra.mxu0 0.0
        %3940 = vmatprep.subr.mxu0 0.0
        %3941 = vmatpush1.msra.mxu0 0.0
        %3942 = vmatprep.subr.mxu0 0.0
        %3943 = vmatpush1.msra.mxu0 0.0
        %3944 = vmatprep.subr.mxu0 0.0
        %3945 = vmatpush1.msra.mxu0 0.0
        %3946 = vmatprep.subr.mxu0 0.0
        %3947 = vmatpush1.msra.mxu0 0.0
        %3948 = vmatprep.subr.mxu0 0.0
        %3949 = vmatpush1.msra.mxu0 0.0
        %3950 = vmatprep.subr.mxu0 0.0
        %3951 = vmatpush1.msra.mxu0 0.0
        %3952 = vmatprep.subr.mxu0 0.0
        %3953 = vmatpush1.msra.mxu0 0.0
        %3954 = vmatprep.subr.mxu0 0.0
        %3955 = vmatpush1.msra.mxu0 0.0
        %3956 = vmatprep.subr.mxu0 0.0
        %3957 = vmatpush1.msra.mxu0 0.0
        %3958 = vmatprep.subr.mxu0 0.0
        %3959 = vmatpush1.msra.mxu0 0.0
        %3960 = vmatprep.subr.mxu0 0.0
        %3961 = vmatpush1.msra.mxu0 0.0
        %3962 = vmatprep.subr.mxu0 0.0
        %3963 = vmatpush1.msra.mxu0 0.0
        %3964 = vmatprep.subr.mxu0 0.0
        %3965 = vmatpush1.msra.mxu0 0.0
        %3966 = vmatprep.subr.mxu0 0.0
        %3967 = vmatpush1.msra.mxu0 0.0
        %3968 = vmatprep.subr.mxu0 0.0
        %3969 = vmatpush1.msra.mxu0 0.0
        %3970 = vmatprep.subr.mxu0 0.0
        %3971 = vmatpush1.msra.mxu0 0.0
        %3972 = vmatprep.subr.mxu0 0.0
        %3973 = vmatpush1.msra.mxu0 0.0
        %3974 = vmatprep.subr.mxu0 0.0
        %3975 = vmatpush1.msra.mxu0 0.0
        %3976 = vmatprep.subr.mxu0 0.0
        %3977 = vmatpush1.msra.mxu0 0.0
        %3978 = vmatprep.subr.mxu0 0.0
        %3979 = vmatpush1.msra.mxu0 0.0
        %3980 = vmatprep.subr.mxu0 0.0
        %3981 = vmatpush1.msra.mxu0 0.0
        %3982 = vmatprep.subr.mxu0 0.0
        %3983 = vmatpush1.msra.mxu0 0.0
        %3984 = vmatprep.mubr.f32.mxu0 0.0
        %3985 = vmatmul.mubr.f32.gmra.mrb[0].mxu0 %v2991
        %v3986 = vpop.f32.mrb[0].mxu0
        %v3987 = vadd.f32 0.0, %v3986
        %v3988 = vpop.f32.mrb[0].mxu0
        %v3989 = vadd.f32 0.0, %v3988
        %3990 = vmatprep.mubr.f32.mxu0 0.0
        %3991 = vmatmul.mubr.f32.gmra.mrb[0].mxu0 %v2994
        %v3992 = vpop.f32.mrb[0].mxu0
        %v3993 = vadd.f32 0.0, %v3992
        %v3994 = vpop.f32.mrb[0].mxu0
        %v3995 = vadd.f32 0.0, %v3994
        %3996 = vdwg.mxu0
        %3997 = vmatprep.subr.mxu0 %v2758
        %3998 = vmatpush1.msra.mxu0 %v2757
        %3999 = vmatprep.subr.mxu0 %v2790
        %4000 = vmatpush1.msra.mxu0 %v2789
        %4001 = vmatprep.subr.mxu0 %v2822
        %4002 = vmatpush1.msra.mxu0 %v2821
        %4003 = vmatprep.subr.mxu0 %v2854
        %4004 = vmatpush1.msra.mxu0 %v2853
        %4005 = vmatprep.subr.mxu0 %v2886
        %4006 = vmatpush1.msra.mxu0 %v2885
        %4007 = vmatprep.subr.mxu0 %v2918
        %4008 = vmatpush1.msra.mxu0 %v2917
        %4009 = vmatprep.subr.mxu0 %v2950
        %4010 = vmatpush1.msra.mxu0 %v2949
        %4011 = vmatprep.subr.mxu0 %v2982
        %4012 = vmatpush1.msra.mxu0 %v2981
        %4013 = vmatprep.subr.mxu0 0.0
        %4014 = vmatpush1.msra.mxu0 0.0
        %4015 = vmatprep.subr.mxu0 0.0
        %4016 = vmatpush1.msra.mxu0 0.0
        %4017 = vmatprep.subr.mxu0 0.0
        %4018 = vmatpush1.msra.mxu0 0.0
        %4019 = vmatprep.subr.mxu0 0.0
        %4020 = vmatpush1.msra.mxu0 0.0
        %4021 = vmatprep.subr.mxu0 0.0
        %4022 = vmatpush1.msra.mxu0 0.0
        %4023 = vmatprep.subr.mxu0 0.0
        %4024 = vmatpush1.msra.mxu0 0.0
        %4025 = vmatprep.subr.mxu0 0.0
        %4026 = vmatpush1.msra.mxu0 0.0
        %4027 = vmatprep.subr.mxu0 0.0
        %4028 = vmatpush1.msra.mxu0 0.0
        %4029 = vmatprep.subr.mxu0 0.0
        %4030 = vmatpush1.msra.mxu0 0.0
        %4031 = vmatprep.subr.mxu0 0.0
        %4032 = vmatpush1.msra.mxu0 0.0
        %4033 = vmatprep.subr.mxu0 0.0
        %4034 = vmatpush1.msra.mxu0 0.0
        %4035 = vmatprep.subr.mxu0 0.0
        %4036 = vmatpush1.msra.mxu0 0.0
        %4037 = vmatprep.subr.mxu0 0.0
        %4038 = vmatpush1.msra.mxu0 0.0
        %4039 = vmatprep.subr.mxu0 0.0
        %4040 = vmatpush1.msra.mxu0 0.0
        %4041 = vmatprep.subr.mxu0 0.0
        %4042 = vmatpush1.msra.mxu0 0.0
        %4043 = vmatprep.subr.mxu0 0.0
        %4044 = vmatpush1.msra.mxu0 0.0
        %4045 = vmatprep.subr.mxu0 0.0
        %4046 = vmatpush1.msra.mxu0 0.0
        %4047 = vmatprep.subr.mxu0 0.0
        %4048 = vmatpush1.msra.mxu0 0.0
        %4049 = vmatprep.subr.mxu0 0.0
        %4050 = vmatpush1.msra.mxu0 0.0
        %4051 = vmatprep.subr.mxu0 0.0
        %4052 = vmatpush1.msra.mxu0 0.0
        %4053 = vmatprep.subr.mxu0 0.0
        %4054 = vmatpush1.msra.mxu0 0.0
        %4055 = vmatprep.subr.mxu0 0.0
        %4056 = vmatpush1.msra.mxu0 0.0
        %4057 = vmatprep.subr.mxu0 0.0
        %4058 = vmatpush1.msra.mxu0 0.0
        %4059 = vmatprep.subr.mxu0 0.0
        %4060 = vmatpush1.msra.mxu0 0.0
        %4061 = vmatprep.mubr.f32.mxu0 0.0
        %4062 = vmatmul.mubr.f32.gmra.mrb[0].mxu0 %v2991
        %v4063 = vpop.f32.mrb[0].mxu0
        %v4064 = vadd.f32 0.0, %v4063
        %v4065 = vpop.f32.mrb[0].mxu0
        %v4066 = vadd.f32 0.0, %v4065
        %4067 = vmatprep.mubr.f32.mxu0 0.0
        %4068 = vmatmul.mubr.f32.gmra.mrb[0].mxu0 %v2994
        %v4069 = vpop.f32.mrb[0].mxu0
        %v4070 = vadd.f32 0.0, %v4069
        %v4071 = vpop.f32.mrb[0].mxu0
        %v4072 = vadd.f32 0.0, %v4071
        %4073 = vdwg.mxu0
        %4074 = vmatprep.subr.mxu0 %v2760
        %4075 = vmatpush1.msra.mxu0 %v2759
        %4076 = vmatprep.subr.mxu0 %v2792
        %4077 = vmatpush1.msra.mxu0 %v2791
        %4078 = vmatprep.subr.mxu0 %v2824
        %4079 = vmatpush1.msra.mxu0 %v2823
        %4080 = vmatprep.subr.mxu0 %v2856
        %4081 = vmatpush1.msra.mxu0 %v2855
        %4082 = vmatprep.subr.mxu0 %v2888
        %4083 = vmatpush1.msra.mxu0 %v2887
        %4084 = vmatprep.subr.mxu0 %v2920
        %4085 = vmatpush1.msra.mxu0 %v2919
        %4086 = vmatprep.subr.mxu0 %v2952
        %4087 = vmatpush1.msra.mxu0 %v2951
        %4088 = vmatprep.subr.mxu0 %v2984
        %4089 = vmatpush1.msra.mxu0 %v2983
        %4090 = vmatprep.subr.mxu0 0.0
        %4091 = vmatpush1.msra.mxu0 0.0
        %4092 = vmatprep.subr.mxu0 0.0
        %4093 = vmatpush1.msra.mxu0 0.0
        %4094 = vmatprep.subr.mxu0 0.0
        %4095 = vmatpush1.msra.mxu0 0.0
        %4096 = vmatprep.subr.mxu0 0.0
        %4097 = vmatpush1.msra.mxu0 0.0
        %4098 = vmatprep.subr.mxu0 0.0
        %4099 = vmatpush1.msra.mxu0 0.0
        %4100 = vmatprep.subr.mxu0 0.0
        %4101 = vmatpush1.msra.mxu0 0.0
        %4102 = vmatprep.subr.mxu0 0.0
        %4103 = vmatpush1.msra.mxu0 0.0
        %4104 = vmatprep.subr.mxu0 0.0
        %4105 = vmatpush1.msra.mxu0 0.0
        %4106 = vmatprep.subr.mxu0 0.0
        %4107 = vmatpush1.msra.mxu0 0.0
        %4108 = vmatprep.subr.mxu0 0.0
        %4109 = vmatpush1.msra.mxu0 0.0
        %4110 = vmatprep.subr.mxu0 0.0
        %4111 = vmatpush1.msra.mxu0 0.0
        %4112 = vmatprep.subr.mxu0 0.0
        %4113 = vmatpush1.msra.mxu0 0.0
        %4114 = vmatprep.subr.mxu0 0.0
        %4115 = vmatpush1.msra.mxu0 0.0
        %4116 = vmatprep.subr.mxu0 0.0
        %4117 = vmatpush1.msra.mxu0 0.0
        %4118 = vmatprep.subr.mxu0 0.0
        %4119 = vmatpush1.msra.mxu0 0.0
        %4120 = vmatprep.subr.mxu0 0.0
        %4121 = vmatpush1.msra.mxu0 0.0
        %4122 = vmatprep.subr.mxu0 0.0
        %4123 = vmatpush1.msra.mxu0 0.0
        %4124 = vmatprep.subr.mxu0 0.0
        %4125 = vmatpush1.msra.mxu0 0.0
        %4126 = vmatprep.subr.mxu0 0.0
        %4127 = vmatpush1.msra.mxu0 0.0
        %4128 = vmatprep.subr.mxu0 0.0
        %4129 = vmatpush1.msra.mxu0 0.0
        %4130 = vmatprep.subr.mxu0 0.0
        %4131 = vmatpush1.msra.mxu0 0.0
        %4132 = vmatprep.subr.mxu0 0.0
        %4133 = vmatpush1.msra.mxu0 0.0
        %4134 = vmatprep.subr.mxu0 0.0
        %4135 = vmatpush1.msra.mxu0 0.0
        %4136 = vmatprep.subr.mxu0 0.0
        %4137 = vmatpush1.msra.mxu0 0.0
        %4138 = vmatprep.mubr.f32.mxu0 0.0
        %4139 = vmatmul.mubr.f32.gmra.mrb[0].mxu0 %v2991
        %v4140 = vpop.f32.mrb[0].mxu0
        %v4141 = vadd.f32 0.0, %v4140
        %v4142 = vpop.f32.mrb[0].mxu0
        %v4143 = vadd.f32 0.0, %v4142
        %4144 = vmatprep.mubr.f32.mxu0 0.0
        %4145 = vmatmul.mubr.f32.gmra.mrb[0].mxu0 %v2994
        %v4146 = vpop.f32.mrb[0].mxu0
        %v4147 = vadd.f32 0.0, %v4146
        %v4148 = vpop.f32.mrb[0].mxu0
        %v4149 = vadd.f32 0.0, %v4148
        %4150 = vdwg.mxu0
        %4151 = vmatprep.subr.mxu0 %v2762
        %4152 = vmatpush1.msra.mxu0 %v2761
        %4153 = vmatprep.subr.mxu0 %v2794
        %4154 = vmatpush1.msra.mxu0 %v2793
        %4155 = vmatprep.subr.mxu0 %v2826
        %4156 = vmatpush1.msra.mxu0 %v2825
        %4157 = vmatprep.subr.mxu0 %v2858
        %4158 = vmatpush1.msra.mxu0 %v2857
        %4159 = vmatprep.subr.mxu0 %v2890
        %4160 = vmatpush1.msra.mxu0 %v2889
        %4161 = vmatprep.subr.mxu0 %v2922
        %4162 = vmatpush1.msra.mxu0 %v2921
        %4163 = vmatprep.subr.mxu0 %v2954
        %4164 = vmatpush1.msra.mxu0 %v2953
        %4165 = vmatprep.subr.mxu0 %v2986
        %4166 = vmatpush1.msra.mxu0 %v2985
        %4167 = vmatprep.subr.mxu0 0.0
        %4168 = vmatpush1.msra.mxu0 0.0
        %4169 = vmatprep.subr.mxu0 0.0
        %4170 = vmatpush1.msra.mxu0 0.0
        %4171 = vmatprep.subr.mxu0 0.0
        %4172 = vmatpush1.msra.mxu0 0.0
        %4173 = vmatprep.subr.mxu0 0.0
        %4174 = vmatpush1.msra.mxu0 0.0
        %4175 = vmatprep.subr.mxu0 0.0
        %4176 = vmatpush1.msra.mxu0 0.0
        %4177 = vmatprep.subr.mxu0 0.0
        %4178 = vmatpush1.msra.mxu0 0.0
        %4179 = vmatprep.subr.mxu0 0.0
        %4180 = vmatpush1.msra.mxu0 0.0
        %4181 = vmatprep.subr.mxu0 0.0
        %4182 = vmatpush1.msra.mxu0 0.0
        %4183 = vmatprep.subr.mxu0 0.0
        %4184 = vmatpush1.msra.mxu0 0.0
        %4185 = vmatprep.subr.mxu0 0.0
        %4186 = vmatpush1.msra.mxu0 0.0
        %4187 = vmatprep.subr.mxu0 0.0
        %4188 = vmatpush1.msra.mxu0 0.0
        %4189 = vmatprep.subr.mxu0 0.0
        %4190 = vmatpush1.msra.mxu0 0.0
        %4191 = vmatprep.subr.mxu0 0.0
        %4192 = vmatpush1.msra.mxu0 0.0
        %4193 = vmatprep.subr.mxu0 0.0
        %4194 = vmatpush1.msra.mxu0 0.0
        %4195 = vmatprep.subr.mxu0 0.0
        %4196 = vmatpush1.msra.mxu0 0.0
        %4197 = vmatprep.subr.mxu0 0.0
        %4198 = vmatpush1.msra.mxu0 0.0
        %4199 = vmatprep.subr.mxu0 0.0
        %4200 = vmatpush1.msra.mxu0 0.0
        %4201 = vmatprep.subr.mxu0 0.0
        %4202 = vmatpush1.msra.mxu0 0.0
        %4203 = vmatprep.subr.mxu0 0.0
        %4204 = vmatpush1.msra.mxu0 0.0
        %4205 = vmatprep.subr.mxu0 0.0
        %4206 = vmatpush1.msra.mxu0 0.0
        %4207 = vmatprep.subr.mxu0 0.0
        %4208 = vmatpush1.msra.mxu0 0.0
        %4209 = vmatprep.subr.mxu0 0.0
        %4210 = vmatpush1.msra.mxu0 0.0
        %4211 = vmatprep.subr.mxu0 0.0
        %4212 = vmatpush1.msra.mxu0 0.0
        %4213 = vmatprep.subr.mxu0 0.0
        %4214 = vmatpush1.msra.mxu0 0.0
        %4215 = vmatprep.mubr.f32.mxu0 0.0
        %4216 = vmatmul.mubr.f32.gmra.mrb[0].mxu0 %v2991
        %v4217 = vpop.f32.mrb[0].mxu0
        %v4218 = vadd.f32 0.0, %v4217
        %v4219 = vpop.f32.mrb[0].mxu0
        %v4220 = vadd.f32 0.0, %v4219
        %4221 = vmatprep.mubr.f32.mxu0 0.0
        %4222 = vmatmul.mubr.f32.gmra.mrb[0].mxu0 %v2994
        %v4223 = vpop.f32.mrb[0].mxu0
        %v4224 = vadd.f32 0.0, %v4223
        %v4225 = vpop.f32.mrb[0].mxu0
        %v4226 = vadd.f32 0.0, %v4225
        %4227 = vdwg.mxu0
        %v4228 = vld [vmem:[%s5] sm:$0x1]
        %v4230 = vsel %vm2989, %v4228, 0
        %4232 = vmatprep.subr.mxu0 %v2732
        %4233 = vmatpush1.msra.mxu0 %v2731
        %4234 = vmatprep.subr.mxu0 %v2764
        %4235 = vmatpush1.msra.mxu0 %v2763
        %4236 = vmatprep.subr.mxu0 %v2796
        %4237 = vmatpush1.msra.mxu0 %v2795
        %4238 = vmatprep.subr.mxu0 %v2828
        %4239 = vmatpush1.msra.mxu0 %v2827
        %4240 = vmatprep.subr.mxu0 %v2860
        %4241 = vmatpush1.msra.mxu0 %v2859
        %4242 = vmatprep.subr.mxu0 %v2892
        %4243 = vmatpush1.msra.mxu0 %v2891
        %4244 = vmatprep.subr.mxu0 %v2924
        %4245 = vmatpush1.msra.mxu0 %v2923
        %4246 = vmatprep.subr.mxu0 %v2956
        %4247 = vmatpush1.msra.mxu0 %v2955
        %4248 = vmatprep.subr.mxu0 0.0
        %4249 = vmatpush1.msra.mxu0 0.0
        %4250 = vmatprep.subr.mxu0 0.0
        %4251 = vmatpush1.msra.mxu0 0.0
        %4252 = vmatprep.subr.mxu0 0.0
        %4253 = vmatpush1.msra.mxu0 0.0
        %4254 = vmatprep.subr.mxu0 0.0
        %4255 = vmatpush1.msra.mxu0 0.0
        %4256 = vmatprep.subr.mxu0 0.0
        %4257 = vmatpush1.msra.mxu0 0.0
        %4258 = vmatprep.subr.mxu0 0.0
        %4259 = vmatpush1.msra.mxu0 0.0
        %4260 = vmatprep.subr.mxu0 0.0
        %4261 = vmatpush1.msra.mxu0 0.0
        %4262 = vmatprep.subr.mxu0 0.0
        %4263 = vmatpush1.msra.mxu0 0.0
        %4264 = vmatprep.subr.mxu0 0.0
        %4265 = vmatpush1.msra.mxu0 0.0
        %4266 = vmatprep.subr.mxu0 0.0
        %4267 = vmatpush1.msra.mxu0 0.0
        %4268 = vmatprep.subr.mxu0 0.0
        %4269 = vmatpush1.msra.mxu0 0.0
        %4270 = vmatprep.subr.mxu0 0.0
        %4271 = vmatpush1.msra.mxu0 0.0
        %4272 = vmatprep.subr.mxu0 0.0
        %4273 = vmatpush1.msra.mxu0 0.0
        %4274 = vmatprep.subr.mxu0 0.0
        %4275 = vmatpush1.msra.mxu0 0.0
        %4276 = vmatprep.subr.mxu0 0.0
        %4277 = vmatpush1.msra.mxu0 0.0
        %4278 = vmatprep.subr.mxu0 0.0
        %4279 = vmatpush1.msra.mxu0 0.0
        %4280 = vmatprep.subr.mxu0 0.0
        %4281 = vmatpush1.msra.mxu0 0.0
        %4282 = vmatprep.subr.mxu0 0.0
        %4283 = vmatpush1.msra.mxu0 0.0
        %4284 = vmatprep.subr.mxu0 0.0
        %4285 = vmatpush1.msra.mxu0 0.0
        %4286 = vmatprep.subr.mxu0 0.0
        %4287 = vmatpush1.msra.mxu0 0.0
        %4288 = vmatprep.subr.mxu0 0.0
        %4289 = vmatpush1.msra.mxu0 0.0
        %4290 = vmatprep.subr.mxu0 0.0
        %4291 = vmatpush1.msra.mxu0 0.0
        %4292 = vmatprep.subr.mxu0 0.0
        %4293 = vmatpush1.msra.mxu0 0.0
        %4294 = vmatprep.subr.mxu0 0.0
        %4295 = vmatpush1.msra.mxu0 0.0
        %4296 = vmatprep.mubr.f32.mxu0 0.0
        %4297 = vmatmul.mubr.f32.gmra.mrb[0].mxu0 %v4230
        %v4298 = vpop.f32.mrb[0].mxu0
        %v4299 = vadd.f32 0.0, %v4298
        %v4300 = vpop.f32.mrb[0].mxu0
        %v4301 = vadd.f32 0.0, %v4300
        %4302 = vdwg.mxu0
        %4303 = vmatprep.subr.mxu0 %v2734
        %4304 = vmatpush1.msra.mxu0 %v2733
        %4305 = vmatprep.subr.mxu0 %v2766
        %4306 = vmatpush1.msra.mxu0 %v2765
        %4307 = vmatprep.subr.mxu0 %v2798
        %4308 = vmatpush1.msra.mxu0 %v2797
        %4309 = vmatprep.subr.mxu0 %v2830
        %4310 = vmatpush1.msra.mxu0 %v2829
        %4311 = vmatprep.subr.mxu0 %v2862
        %4312 = vmatpush1.msra.mxu0 %v2861
        %4313 = vmatprep.subr.mxu0 %v2894
        %4314 = vmatpush1.msra.mxu0 %v2893
        %4315 = vmatprep.subr.mxu0 %v2926
        %4316 = vmatpush1.msra.mxu0 %v2925
        %4317 = vmatprep.subr.mxu0 %v2958
        %4318 = vmatpush1.msra.mxu0 %v2957
        %4319 = vmatprep.subr.mxu0 0.0
        %4320 = vmatpush1.msra.mxu0 0.0
        %4321 = vmatprep.subr.mxu0 0.0
        %4322 = vmatpush1.msra.mxu0 0.0
        %4323 = vmatprep.subr.mxu0 0.0
        %4324 = vmatpush1.msra.mxu0 0.0
        %4325 = vmatprep.subr.mxu0 0.0
        %4326 = vmatpush1.msra.mxu0 0.0
        %4327 = vmatprep.subr.mxu0 0.0
        %4328 = vmatpush1.msra.mxu0 0.0
        %4329 = vmatprep.subr.mxu0 0.0
        %4330 = vmatpush1.msra.mxu0 0.0
        %4331 = vmatprep.subr.mxu0 0.0
        %4332 = vmatpush1.msra.mxu0 0.0
        %4333 = vmatprep.subr.mxu0 0.0
        %4334 = vmatpush1.msra.mxu0 0.0
        %4335 = vmatprep.subr.mxu0 0.0
        %4336 = vmatpush1.msra.mxu0 0.0
        %4337 = vmatprep.subr.mxu0 0.0
        %4338 = vmatpush1.msra.mxu0 0.0
        %4339 = vmatprep.subr.mxu0 0.0
        %4340 = vmatpush1.msra.mxu0 0.0
        %4341 = vmatprep.subr.mxu0 0.0
        %4342 = vmatpush1.msra.mxu0 0.0
        %4343 = vmatprep.subr.mxu0 0.0
        %4344 = vmatpush1.msra.mxu0 0.0
        %4345 = vmatprep.subr.mxu0 0.0
        %4346 = vmatpush1.msra.mxu0 0.0
        %4347 = vmatprep.subr.mxu0 0.0
        %4348 = vmatpush1.msra.mxu0 0.0
        %4349 = vmatprep.subr.mxu0 0.0
        %4350 = vmatpush1.msra.mxu0 0.0
        %4351 = vmatprep.subr.mxu0 0.0
        %4352 = vmatpush1.msra.mxu0 0.0
        %4353 = vmatprep.subr.mxu0 0.0
        %4354 = vmatpush1.msra.mxu0 0.0
        %4355 = vmatprep.subr.mxu0 0.0
        %4356 = vmatpush1.msra.mxu0 0.0
        %4357 = vmatprep.subr.mxu0 0.0
        %4358 = vmatpush1.msra.mxu0 0.0
        %4359 = vmatprep.subr.mxu0 0.0
        %4360 = vmatpush1.msra.mxu0 0.0
        %4361 = vmatprep.subr.mxu0 0.0
        %4362 = vmatpush1.msra.mxu0 0.0
        %4363 = vmatprep.subr.mxu0 0.0
        %4364 = vmatpush1.msra.mxu0 0.0
        %4365 = vmatprep.subr.mxu0 0.0
        %4366 = vmatpush1.msra.mxu0 0.0
        %4367 = vmatprep.mubr.f32.mxu0 0.0
        %4368 = vmatmul.mubr.f32.gmra.mrb[0].mxu0 %v4230
        %v4369 = vpop.f32.mrb[0].mxu0
        %v4370 = vadd.f32 0.0, %v4369
        %v4371 = vpop.f32.mrb[0].mxu0
        %v4372 = vadd.f32 0.0, %v4371
        %4373 = vdwg.mxu0
        %4374 = vmatprep.subr.mxu0 %v2736
        %4375 = vmatpush1.msra.mxu0 %v2735
        %4376 = vmatprep.subr.mxu0 %v2768
        %4377 = vmatpush1.msra.mxu0 %v2767
        %4378 = vmatprep.subr.mxu0 %v2800
        %4379 = vmatpush1.msra.mxu0 %v2799
        %4380 = vmatprep.subr.mxu0 %v2832
        %4381 = vmatpush1.msra.mxu0 %v2831
        %4382 = vmatprep.subr.mxu0 %v2864
        %4383 = vmatpush1.msra.mxu0 %v2863
        %4384 = vmatprep.subr.mxu0 %v2896
        %4385 = vmatpush1.msra.mxu0 %v2895
        %4386 = vmatprep.subr.mxu0 %v2928
        %4387 = vmatpush1.msra.mxu0 %v2927
        %4388 = vmatprep.subr.mxu0 %v2960
        %4389 = vmatpush1.msra.mxu0 %v2959
        %4390 = vmatprep.subr.mxu0 0.0
        %4391 = vmatpush1.msra.mxu0 0.0
        %4392 = vmatprep.subr.mxu0 0.0
        %4393 = vmatpush1.msra.mxu0 0.0
        %4394 = vmatprep.subr.mxu0 0.0
        %4395 = vmatpush1.msra.mxu0 0.0
        %4396 = vmatprep.subr.mxu0 0.0
        %4397 = vmatpush1.msra.mxu0 0.0
        %4398 = vmatprep.subr.mxu0 0.0
        %4399 = vmatpush1.msra.mxu0 0.0
        %4400 = vmatprep.subr.mxu0 0.0
        %4401 = vmatpush1.msra.mxu0 0.0
        %4402 = vmatprep.subr.mxu0 0.0
        %4403 = vmatpush1.msra.mxu0 0.0
        %4404 = vmatprep.subr.mxu0 0.0
        %4405 = vmatpush1.msra.mxu0 0.0
        %4406 = vmatprep.subr.mxu0 0.0
        %4407 = vmatpush1.msra.mxu0 0.0
        %4408 = vmatprep.subr.mxu0 0.0
        %4409 = vmatpush1.msra.mxu0 0.0
        %4410 = vmatprep.subr.mxu0 0.0
        %4411 = vmatpush1.msra.mxu0 0.0
        %4412 = vmatprep.subr.mxu0 0.0
        %4413 = vmatpush1.msra.mxu0 0.0
        %4414 = vmatprep.subr.mxu0 0.0
        %4415 = vmatpush1.msra.mxu0 0.0
        %4416 = vmatprep.subr.mxu0 0.0
        %4417 = vmatpush1.msra.mxu0 0.0
        %4418 = vmatprep.subr.mxu0 0.0
        %4419 = vmatpush1.msra.mxu0 0.0
        %4420 = vmatprep.subr.mxu0 0.0
        %4421 = vmatpush1.msra.mxu0 0.0
        %4422 = vmatprep.subr.mxu0 0.0
        %4423 = vmatpush1.msra.mxu0 0.0
        %4424 = vmatprep.subr.mxu0 0.0
        %4425 = vmatpush1.msra.mxu0 0.0
        %4426 = vmatprep.subr.mxu0 0.0
        %4427 = vmatpush1.msra.mxu0 0.0
        %4428 = vmatprep.subr.mxu0 0.0
        %4429 = vmatpush1.msra.mxu0 0.0
        %4430 = vmatprep.subr.mxu0 0.0
        %4431 = vmatpush1.msra.mxu0 0.0
        %4432 = vmatprep.subr.mxu0 0.0
        %4433 = vmatpush1.msra.mxu0 0.0
        %4434 = vmatprep.subr.mxu0 0.0
        %4435 = vmatpush1.msra.mxu0 0.0
        %4436 = vmatprep.subr.mxu0 0.0
        %4437 = vmatpush1.msra.mxu0 0.0
        %4438 = vmatprep.mubr.f32.mxu0 0.0
        %4439 = vmatmul.mubr.f32.gmra.mrb[0].mxu0 %v4230
        %v4440 = vpop.f32.mrb[0].mxu0
        %v4441 = vadd.f32 0.0, %v4440
        %v4442 = vpop.f32.mrb[0].mxu0
        %v4443 = vadd.f32 0.0, %v4442
        %4444 = vdwg.mxu0
        %4445 = vmatprep.subr.mxu0 %v2738
        %4446 = vmatpush1.msra.mxu0 %v2737
        %4447 = vmatprep.subr.mxu0 %v2770
        %4448 = vmatpush1.msra.mxu0 %v2769
        %4449 = vmatprep.subr.mxu0 %v2802
        %4450 = vmatpush1.msra.mxu0 %v2801
        %4451 = vmatprep.subr.mxu0 %v2834
        %4452 = vmatpush1.msra.mxu0 %v2833
        %4453 = vmatprep.subr.mxu0 %v2866
        %4454 = vmatpush1.msra.mxu0 %v2865
        %4455 = vmatprep.subr.mxu0 %v2898
        %4456 = vmatpush1.msra.mxu0 %v2897
        %4457 = vmatprep.subr.mxu0 %v2930
        %4458 = vmatpush1.msra.mxu0 %v2929
        %4459 = vmatprep.subr.mxu0 %v2962
        %4460 = vmatpush1.msra.mxu0 %v2961
        %4461 = vmatprep.subr.mxu0 0.0
        %4462 = vmatpush1.msra.mxu0 0.0
        %4463 = vmatprep.subr.mxu0 0.0
        %4464 = vmatpush1.msra.mxu0 0.0
        %4465 = vmatprep.subr.mxu0 0.0
        %4466 = vmatpush1.msra.mxu0 0.0
        %4467 = vmatprep.subr.mxu0 0.0
        %4468 = vmatpush1.msra.mxu0 0.0
        %4469 = vmatprep.subr.mxu0 0.0
        %4470 = vmatpush1.msra.mxu0 0.0
        %4471 = vmatprep.subr.mxu0 0.0
        %4472 = vmatpush1.msra.mxu0 0.0
        %4473 = vmatprep.subr.mxu0 0.0
        %4474 = vmatpush1.msra.mxu0 0.0
        %4475 = vmatprep.subr.mxu0 0.0
        %4476 = vmatpush1.msra.mxu0 0.0
        %4477 = vmatprep.subr.mxu0 0.0
        %4478 = vmatpush1.msra.mxu0 0.0
        %4479 = vmatprep.subr.mxu0 0.0
        %4480 = vmatpush1.msra.mxu0 0.0
        %4481 = vmatprep.subr.mxu0 0.0
        %4482 = vmatpush1.msra.mxu0 0.0
        %4483 = vmatprep.subr.mxu0 0.0
        %4484 = vmatpush1.msra.mxu0 0.0
        %4485 = vmatprep.subr.mxu0 0.0
        %4486 = vmatpush1.msra.mxu0 0.0
        %4487 = vmatprep.subr.mxu0 0.0
        %4488 = vmatpush1.msra.mxu0 0.0
        %4489 = vmatprep.subr.mxu0 0.0
        %4490 = vmatpush1.msra.mxu0 0.0
        %4491 = vmatprep.subr.mxu0 0.0
        %4492 = vmatpush1.msra.mxu0 0.0
        %4493 = vmatprep.subr.mxu0 0.0
        %4494 = vmatpush1.msra.mxu0 0.0
        %4495 = vmatprep.subr.mxu0 0.0
        %4496 = vmatpush1.msra.mxu0 0.0
        %4497 = vmatprep.subr.mxu0 0.0
        %4498 = vmatpush1.msra.mxu0 0.0
        %4499 = vmatprep.subr.mxu0 0.0
        %4500 = vmatpush1.msra.mxu0 0.0
        %4501 = vmatprep.subr.mxu0 0.0
        %4502 = vmatpush1.msra.mxu0 0.0
        %4503 = vmatprep.subr.mxu0 0.0
        %4504 = vmatpush1.msra.mxu0 0.0
        %4505 = vmatprep.subr.mxu0 0.0
        %4506 = vmatpush1.msra.mxu0 0.0
        %4507 = vmatprep.subr.mxu0 0.0
        %4508 = vmatpush1.msra.mxu0 0.0
        %4509 = vmatprep.mubr.f32.mxu0 0.0
        %4510 = vmatmul.mubr.f32.gmra.mrb[0].mxu0 %v4230
        %v4511 = vpop.f32.mrb[0].mxu0
        %v4512 = vadd.f32 0.0, %v4511
        %v4513 = vpop.f32.mrb[0].mxu0
        %v4514 = vadd.f32 0.0, %v4513
        %4515 = vdwg.mxu0
        %4516 = vmatprep.subr.mxu0 %v2740
        %4517 = vmatpush1.msra.mxu0 %v2739
        %4518 = vmatprep.subr.mxu0 %v2772
        %4519 = vmatpush1.msra.mxu0 %v2771
        %4520 = vmatprep.subr.mxu0 %v2804
        %4521 = vmatpush1.msra.mxu0 %v2803
        %4522 = vmatprep.subr.mxu0 %v2836
        %4523 = vmatpush1.msra.mxu0 %v2835
        %4524 = vmatprep.subr.mxu0 %v2868
        %4525 = vmatpush1.msra.mxu0 %v2867
        %4526 = vmatprep.subr.mxu0 %v2900
        %4527 = vmatpush1.msra.mxu0 %v2899
        %4528 = vmatprep.subr.mxu0 %v2932
        %4529 = vmatpush1.msra.mxu0 %v2931
        %4530 = vmatprep.subr.mxu0 %v2964
        %4531 = vmatpush1.msra.mxu0 %v2963
        %4532 = vmatprep.subr.mxu0 0.0
        %4533 = vmatpush1.msra.mxu0 0.0
        %4534 = vmatprep.subr.mxu0 0.0
        %4535 = vmatpush1.msra.mxu0 0.0
        %4536 = vmatprep.subr.mxu0 0.0
        %4537 = vmatpush1.msra.mxu0 0.0
        %4538 = vmatprep.subr.mxu0 0.0
        %4539 = vmatpush1.msra.mxu0 0.0
        %4540 = vmatprep.subr.mxu0 0.0
        %4541 = vmatpush1.msra.mxu0 0.0
        %4542 = vmatprep.subr.mxu0 0.0
        %4543 = vmatpush1.msra.mxu0 0.0
        %4544 = vmatprep.subr.mxu0 0.0
        %4545 = vmatpush1.msra.mxu0 0.0
        %4546 = vmatprep.subr.mxu0 0.0
        %4547 = vmatpush1.msra.mxu0 0.0
        %4548 = vmatprep.subr.mxu0 0.0
        %4549 = vmatpush1.msra.mxu0 0.0
        %4550 = vmatprep.subr.mxu0 0.0
        %4551 = vmatpush1.msra.mxu0 0.0
        %4552 = vmatprep.subr.mxu0 0.0
        %4553 = vmatpush1.msra.mxu0 0.0
        %4554 = vmatprep.subr.mxu0 0.0
        %4555 = vmatpush1.msra.mxu0 0.0
        %4556 = vmatprep.subr.mxu0 0.0
        %4557 = vmatpush1.msra.mxu0 0.0
        %4558 = vmatprep.subr.mxu0 0.0
        %4559 = vmatpush1.msra.mxu0 0.0
        %4560 = vmatprep.subr.mxu0 0.0
        %4561 = vmatpush1.msra.mxu0 0.0
        %4562 = vmatprep.subr.mxu0 0.0
        %4563 = vmatpush1.msra.mxu0 0.0
        %4564 = vmatprep.subr.mxu0 0.0
        %4565 = vmatpush1.msra.mxu0 0.0
        %4566 = vmatprep.subr.mxu0 0.0
        %4567 = vmatpush1.msra.mxu0 0.0
        %4568 = vmatprep.subr.mxu0 0.0
        %4569 = vmatpush1.msra.mxu0 0.0
        %4570 = vmatprep.subr.mxu0 0.0
        %4571 = vmatpush1.msra.mxu0 0.0
        %4572 = vmatprep.subr.mxu0 0.0
        %4573 = vmatpush1.msra.mxu0 0.0
        %4574 = vmatprep.subr.mxu0 0.0
        %4575 = vmatpush1.msra.mxu0 0.0
        %4576 = vmatprep.subr.mxu0 0.0
        %4577 = vmatpush1.msra.mxu0 0.0
        %4578 = vmatprep.subr.mxu0 0.0
        %4579 = vmatpush1.msra.mxu0 0.0
        %4580 = vmatprep.mubr.f32.mxu0 0.0
        %4581 = vmatmul.mubr.f32.gmra.mrb[0].mxu0 %v4230
        %v4582 = vpop.f32.mrb[0].mxu0
        %v4583 = vadd.f32 0.0, %v4582
        %v4584 = vpop.f32.mrb[0].mxu0
        %v4585 = vadd.f32 0.0, %v4584
        %4586 = vdwg.mxu0
        %4587 = vmatprep.subr.mxu0 %v2742
        %4588 = vmatpush1.msra.mxu0 %v2741
        %4589 = vmatprep.subr.mxu0 %v2774
        %4590 = vmatpush1.msra.mxu0 %v2773
        %4591 = vmatprep.subr.mxu0 %v2806
        %4592 = vmatpush1.msra.mxu0 %v2805
        %4593 = vmatprep.subr.mxu0 %v2838
        %4594 = vmatpush1.msra.mxu0 %v2837
        %4595 = vmatprep.subr.mxu0 %v2870
        %4596 = vmatpush1.msra.mxu0 %v2869
        %4597 = vmatprep.subr.mxu0 %v2902
        %4598 = vmatpush1.msra.mxu0 %v2901
        %4599 = vmatprep.subr.mxu0 %v2934
        %4600 = vmatpush1.msra.mxu0 %v2933
        %4601 = vmatprep.subr.mxu0 %v2966
        %4602 = vmatpush1.msra.mxu0 %v2965
        %4603 = vmatprep.subr.mxu0 0.0
        %4604 = vmatpush1.msra.mxu0 0.0
        %4605 = vmatprep.subr.mxu0 0.0
        %4606 = vmatpush1.msra.mxu0 0.0
        %4607 = vmatprep.subr.mxu0 0.0
        %4608 = vmatpush1.msra.mxu0 0.0
        %4609 = vmatprep.subr.mxu0 0.0
        %4610 = vmatpush1.msra.mxu0 0.0
        %4611 = vmatprep.subr.mxu0 0.0
        %4612 = vmatpush1.msra.mxu0 0.0
        %4613 = vmatprep.subr.mxu0 0.0
        %4614 = vmatpush1.msra.mxu0 0.0
        %4615 = vmatprep.subr.mxu0 0.0
        %4616 = vmatpush1.msra.mxu0 0.0
        %4617 = vmatprep.subr.mxu0 0.0
        %4618 = vmatpush1.msra.mxu0 0.0
        %4619 = vmatprep.subr.mxu0 0.0
        %4620 = vmatpush1.msra.mxu0 0.0
        %4621 = vmatprep.subr.mxu0 0.0
        %4622 = vmatpush1.msra.mxu0 0.0
        %4623 = vmatprep.subr.mxu0 0.0
        %4624 = vmatpush1.msra.mxu0 0.0
        %4625 = vmatprep.subr.mxu0 0.0
        %4626 = vmatpush1.msra.mxu0 0.0
        %4627 = vmatprep.subr.mxu0 0.0
        %4628 = vmatpush1.msra.mxu0 0.0
        %4629 = vmatprep.subr.mxu0 0.0
        %4630 = vmatpush1.msra.mxu0 0.0
        %4631 = vmatprep.subr.mxu0 0.0
        %4632 = vmatpush1.msra.mxu0 0.0
        %4633 = vmatprep.subr.mxu0 0.0
        %4634 = vmatpush1.msra.mxu0 0.0
        %4635 = vmatprep.subr.mxu0 0.0
        %4636 = vmatpush1.msra.mxu0 0.0
        %4637 = vmatprep.subr.mxu0 0.0
        %4638 = vmatpush1.msra.mxu0 0.0
        %4639 = vmatprep.subr.mxu0 0.0
        %4640 = vmatpush1.msra.mxu0 0.0
        %4641 = vmatprep.subr.mxu0 0.0
        %4642 = vmatpush1.msra.mxu0 0.0
        %4643 = vmatprep.subr.mxu0 0.0
        %4644 = vmatpush1.msra.mxu0 0.0
        %4645 = vmatprep.subr.mxu0 0.0
        %4646 = vmatpush1.msra.mxu0 0.0
        %4647 = vmatprep.subr.mxu0 0.0
        %4648 = vmatpush1.msra.mxu0 0.0
        %4649 = vmatprep.subr.mxu0 0.0
        %4650 = vmatpush1.msra.mxu0 0.0
        %4651 = vmatprep.mubr.f32.mxu0 0.0
        %4652 = vmatmul.mubr.f32.gmra.mrb[0].mxu0 %v4230
        %v4653 = vpop.f32.mrb[0].mxu0
        %v4654 = vadd.f32 0.0, %v4653
        %v4655 = vpop.f32.mrb[0].mxu0
        %v4656 = vadd.f32 0.0, %v4655
        %4657 = vdwg.mxu0
        %4658 = vmatprep.subr.mxu0 %v2744
        %4659 = vmatpush1.msra.mxu0 %v2743
        %4660 = vmatprep.subr.mxu0 %v2776
        %4661 = vmatpush1.msra.mxu0 %v2775
        %4662 = vmatprep.subr.mxu0 %v2808
        %4663 = vmatpush1.msra.mxu0 %v2807
        %4664 = vmatprep.subr.mxu0 %v2840
        %4665 = vmatpush1.msra.mxu0 %v2839
        %4666 = vmatprep.subr.mxu0 %v2872
        %4667 = vmatpush1.msra.mxu0 %v2871
        %4668 = vmatprep.subr.mxu0 %v2904
        %4669 = vmatpush1.msra.mxu0 %v2903
        %4670 = vmatprep.subr.mxu0 %v2936
        %4671 = vmatpush1.msra.mxu0 %v2935
        %4672 = vmatprep.subr.mxu0 %v2968
        %4673 = vmatpush1.msra.mxu0 %v2967
        %4674 = vmatprep.subr.mxu0 0.0
        %4675 = vmatpush1.msra.mxu0 0.0
        %4676 = vmatprep.subr.mxu0 0.0
        %4677 = vmatpush1.msra.mxu0 0.0
        %4678 = vmatprep.subr.mxu0 0.0
        %4679 = vmatpush1.msra.mxu0 0.0
        %4680 = vmatprep.subr.mxu0 0.0
        %4681 = vmatpush1.msra.mxu0 0.0
        %4682 = vmatprep.subr.mxu0 0.0
        %4683 = vmatpush1.msra.mxu0 0.0
        %4684 = vmatprep.subr.mxu0 0.0
        %4685 = vmatpush1.msra.mxu0 0.0
        %4686 = vmatprep.subr.mxu0 0.0
        %4687 = vmatpush1.msra.mxu0 0.0
        %4688 = vmatprep.subr.mxu0 0.0
        %4689 = vmatpush1.msra.mxu0 0.0
        %4690 = vmatprep.subr.mxu0 0.0
        %4691 = vmatpush1.msra.mxu0 0.0
        %4692 = vmatprep.subr.mxu0 0.0
        %4693 = vmatpush1.msra.mxu0 0.0
        %4694 = vmatprep.subr.mxu0 0.0
        %4695 = vmatpush1.msra.mxu0 0.0
        %4696 = vmatprep.subr.mxu0 0.0
        %4697 = vmatpush1.msra.mxu0 0.0
        %4698 = vmatprep.subr.mxu0 0.0
        %4699 = vmatpush1.msra.mxu0 0.0
        %4700 = vmatprep.subr.mxu0 0.0
        %4701 = vmatpush1.msra.mxu0 0.0
        %4702 = vmatprep.subr.mxu0 0.0
        %4703 = vmatpush1.msra.mxu0 0.0
        %4704 = vmatprep.subr.mxu0 0.0
        %4705 = vmatpush1.msra.mxu0 0.0
        %4706 = vmatprep.subr.mxu0 0.0
        %4707 = vmatpush1.msra.mxu0 0.0
        %4708 = vmatprep.subr.mxu0 0.0
        %4709 = vmatpush1.msra.mxu0 0.0
        %4710 = vmatprep.subr.mxu0 0.0
        %4711 = vmatpush1.msra.mxu0 0.0
        %4712 = vmatprep.subr.mxu0 0.0
        %4713 = vmatpush1.msra.mxu0 0.0
        %4714 = vmatprep.subr.mxu0 0.0
        %4715 = vmatpush1.msra.mxu0 0.0
        %4716 = vmatprep.subr.mxu0 0.0
        %4717 = vmatpush1.msra.mxu0 0.0
        %4718 = vmatprep.subr.mxu0 0.0
        %4719 = vmatpush1.msra.mxu0 0.0
        %4720 = vmatprep.subr.mxu0 0.0
        %4721 = vmatpush1.msra.mxu0 0.0
        %4722 = vmatprep.mubr.f32.mxu0 0.0
        %4723 = vmatmul.mubr.f32.gmra.mrb[0].mxu0 %v4230
        %v4724 = vpop.f32.mrb[0].mxu0
        %v4725 = vadd.f32 0.0, %v4724
        %v4726 = vpop.f32.mrb[0].mxu0
        %v4727 = vadd.f32 0.0, %v4726
        %4728 = vdwg.mxu0
        %4729 = vmatprep.subr.mxu0 %v2746
        %4730 = vmatpush1.msra.mxu0 %v2745
        %4731 = vmatprep.subr.mxu0 %v2778
        %4732 = vmatpush1.msra.mxu0 %v2777
        %4733 = vmatprep.subr.mxu0 %v2810
        %4734 = vmatpush1.msra.mxu0 %v2809
        %4735 = vmatprep.subr.mxu0 %v2842
        %4736 = vmatpush1.msra.mxu0 %v2841
        %4737 = vmatprep.subr.mxu0 %v2874
        %4738 = vmatpush1.msra.mxu0 %v2873
        %4739 = vmatprep.subr.mxu0 %v2906
        %4740 = vmatpush1.msra.mxu0 %v2905
        %4741 = vmatprep.subr.mxu0 %v2938
        %4742 = vmatpush1.msra.mxu0 %v2937
        %4743 = vmatprep.subr.mxu0 %v2970
        %4744 = vmatpush1.msra.mxu0 %v2969
        %4745 = vmatprep.subr.mxu0 0.0
        %4746 = vmatpush1.msra.mxu0 0.0
        %4747 = vmatprep.subr.mxu0 0.0
        %4748 = vmatpush1.msra.mxu0 0.0
        %4749 = vmatprep.subr.mxu0 0.0
        %4750 = vmatpush1.msra.mxu0 0.0
        %4751 = vmatprep.subr.mxu0 0.0
        %4752 = vmatpush1.msra.mxu0 0.0
        %4753 = vmatprep.subr.mxu0 0.0
        %4754 = vmatpush1.msra.mxu0 0.0
        %4755 = vmatprep.subr.mxu0 0.0
        %4756 = vmatpush1.msra.mxu0 0.0
        %4757 = vmatprep.subr.mxu0 0.0
        %4758 = vmatpush1.msra.mxu0 0.0
        %4759 = vmatprep.subr.mxu0 0.0
        %4760 = vmatpush1.msra.mxu0 0.0
        %4761 = vmatprep.subr.mxu0 0.0
        %4762 = vmatpush1.msra.mxu0 0.0
        %4763 = vmatprep.subr.mxu0 0.0
        %4764 = vmatpush1.msra.mxu0 0.0
        %4765 = vmatprep.subr.mxu0 0.0
        %4766 = vmatpush1.msra.mxu0 0.0
        %4767 = vmatprep.subr.mxu0 0.0
        %4768 = vmatpush1.msra.mxu0 0.0
        %4769 = vmatprep.subr.mxu0 0.0
        %4770 = vmatpush1.msra.mxu0 0.0
        %4771 = vmatprep.subr.mxu0 0.0
        %4772 = vmatpush1.msra.mxu0 0.0
        %4773 = vmatprep.subr.mxu0 0.0
        %4774 = vmatpush1.msra.mxu0 0.0
        %4775 = vmatprep.subr.mxu0 0.0
        %4776 = vmatpush1.msra.mxu0 0.0
        %4777 = vmatprep.subr.mxu0 0.0
        %4778 = vmatpush1.msra.mxu0 0.0
        %4779 = vmatprep.subr.mxu0 0.0
        %4780 = vmatpush1.msra.mxu0 0.0
        %4781 = vmatprep.subr.mxu0 0.0
        %4782 = vmatpush1.msra.mxu0 0.0
        %4783 = vmatprep.subr.mxu0 0.0
        %4784 = vmatpush1.msra.mxu0 0.0
        %4785 = vmatprep.subr.mxu0 0.0
        %4786 = vmatpush1.msra.mxu0 0.0
        %4787 = vmatprep.subr.mxu0 0.0
        %4788 = vmatpush1.msra.mxu0 0.0
        %4789 = vmatprep.subr.mxu0 0.0
        %4790 = vmatpush1.msra.mxu0 0.0
        %4791 = vmatprep.subr.mxu0 0.0
        %4792 = vmatpush1.msra.mxu0 0.0
        %4793 = vmatprep.mubr.f32.mxu0 0.0
        %4794 = vmatmul.mubr.f32.gmra.mrb[0].mxu0 %v4230
        %v4795 = vpop.f32.mrb[0].mxu0
        %v4796 = vadd.f32 0.0, %v4795
        %v4797 = vpop.f32.mrb[0].mxu0
        %v4798 = vadd.f32 0.0, %v4797
        %4799 = vdwg.mxu0
        %4800 = vmatprep.subr.mxu0 %v2748
        %4801 = vmatpush1.msra.mxu0 %v2747
        %4802 = vmatprep.subr.mxu0 %v2780
        %4803 = vmatpush1.msra.mxu0 %v2779
        %4804 = vmatprep.subr.mxu0 %v2812
        %4805 = vmatpush1.msra.mxu0 %v2811
        %4806 = vmatprep.subr.mxu0 %v2844
        %4807 = vmatpush1.msra.mxu0 %v2843
        %4808 = vmatprep.subr.mxu0 %v2876
        %4809 = vmatpush1.msra.mxu0 %v2875
        %4810 = vmatprep.subr.mxu0 %v2908
        %4811 = vmatpush1.msra.mxu0 %v2907
        %4812 = vmatprep.subr.mxu0 %v2940
        %4813 = vmatpush1.msra.mxu0 %v2939
        %4814 = vmatprep.subr.mxu0 %v2972
        %4815 = vmatpush1.msra.mxu0 %v2971
        %4816 = vmatprep.subr.mxu0 0.0
        %4817 = vmatpush1.msra.mxu0 0.0
        %4818 = vmatprep.subr.mxu0 0.0
        %4819 = vmatpush1.msra.mxu0 0.0
        %4820 = vmatprep.subr.mxu0 0.0
        %4821 = vmatpush1.msra.mxu0 0.0
        %4822 = vmatprep.subr.mxu0 0.0
        %4823 = vmatpush1.msra.mxu0 0.0
        %4824 = vmatprep.subr.mxu0 0.0
        %4825 = vmatpush1.msra.mxu0 0.0
        %4826 = vmatprep.subr.mxu0 0.0
        %4827 = vmatpush1.msra.mxu0 0.0
        %4828 = vmatprep.subr.mxu0 0.0
        %4829 = vmatpush1.msra.mxu0 0.0
        %4830 = vmatprep.subr.mxu0 0.0
        %4831 = vmatpush1.msra.mxu0 0.0
        %4832 = vmatprep.subr.mxu0 0.0
        %4833 = vmatpush1.msra.mxu0 0.0
        %4834 = vmatprep.subr.mxu0 0.0
        %4835 = vmatpush1.msra.mxu0 0.0
        %4836 = vmatprep.subr.mxu0 0.0
        %4837 = vmatpush1.msra.mxu0 0.0
        %4838 = vmatprep.subr.mxu0 0.0
        %4839 = vmatpush1.msra.mxu0 0.0
        %4840 = vmatprep.subr.mxu0 0.0
        %4841 = vmatpush1.msra.mxu0 0.0
        %4842 = vmatprep.subr.mxu0 0.0
        %4843 = vmatpush1.msra.mxu0 0.0
        %4844 = vmatprep.subr.mxu0 0.0
        %4845 = vmatpush1.msra.mxu0 0.0
        %4846 = vmatprep.subr.mxu0 0.0
        %4847 = vmatpush1.msra.mxu0 0.0
        %4848 = vmatprep.subr.mxu0 0.0
        %4849 = vmatpush1.msra.mxu0 0.0
        %4850 = vmatprep.subr.mxu0 0.0
        %4851 = vmatpush1.msra.mxu0 0.0
        %4852 = vmatprep.subr.mxu0 0.0
        %4853 = vmatpush1.msra.mxu0 0.0
        %4854 = vmatprep.subr.mxu0 0.0
        %4855 = vmatpush1.msra.mxu0 0.0
        %4856 = vmatprep.subr.mxu0 0.0
        %4857 = vmatpush1.msra.mxu0 0.0
        %4858 = vmatprep.subr.mxu0 0.0
        %4859 = vmatpush1.msra.mxu0 0.0
        %4860 = vmatprep.subr.mxu0 0.0
        %4861 = vmatpush1.msra.mxu0 0.0
        %4862 = vmatprep.subr.mxu0 0.0
        %4863 = vmatpush1.msra.mxu0 0.0
        %4864 = vmatprep.mubr.f32.mxu0 0.0
        %4865 = vmatmul.mubr.f32.gmra.mrb[0].mxu0 %v4230
        %v4866 = vpop.f32.mrb[0].mxu0
        %v4867 = vadd.f32 0.0, %v4866
        %v4868 = vpop.f32.mrb[0].mxu0
        %v4869 = vadd.f32 0.0, %v4868
        %4870 = vdwg.mxu0
        %4871 = vmatprep.subr.mxu0 %v2750
        %4872 = vmatpush1.msra.mxu0 %v2749
        %4873 = vmatprep.subr.mxu0 %v2782
        %4874 = vmatpush1.msra.mxu0 %v2781
        %4875 = vmatprep.subr.mxu0 %v2814
        %4876 = vmatpush1.msra.mxu0 %v2813
        %4877 = vmatprep.subr.mxu0 %v2846
        %4878 = vmatpush1.msra.mxu0 %v2845
        %4879 = vmatprep.subr.mxu0 %v2878
        %4880 = vmatpush1.msra.mxu0 %v2877
        %4881 = vmatprep.subr.mxu0 %v2910
        %4882 = vmatpush1.msra.mxu0 %v2909
        %4883 = vmatprep.subr.mxu0 %v2942
        %4884 = vmatpush1.msra.mxu0 %v2941
        %4885 = vmatprep.subr.mxu0 %v2974
        %4886 = vmatpush1.msra.mxu0 %v2973
        %4887 = vmatprep.subr.mxu0 0.0
        %4888 = vmatpush1.msra.mxu0 0.0
        %4889 = vmatprep.subr.mxu0 0.0
        %4890 = vmatpush1.msra.mxu0 0.0
        %4891 = vmatprep.subr.mxu0 0.0
        %4892 = vmatpush1.msra.mxu0 0.0
        %4893 = vmatprep.subr.mxu0 0.0
        %4894 = vmatpush1.msra.mxu0 0.0
        %4895 = vmatprep.subr.mxu0 0.0
        %4896 = vmatpush1.msra.mxu0 0.0
        %4897 = vmatprep.subr.mxu0 0.0
        %4898 = vmatpush1.msra.mxu0 0.0
        %4899 = vmatprep.subr.mxu0 0.0
        %4900 = vmatpush1.msra.mxu0 0.0
        %4901 = vmatprep.subr.mxu0 0.0
        %4902 = vmatpush1.msra.mxu0 0.0
        %4903 = vmatprep.subr.mxu0 0.0
        %4904 = vmatpush1.msra.mxu0 0.0
        %4905 = vmatprep.subr.mxu0 0.0
        %4906 = vmatpush1.msra.mxu0 0.0
        %4907 = vmatprep.subr.mxu0 0.0
        %4908 = vmatpush1.msra.mxu0 0.0
        %4909 = vmatprep.subr.mxu0 0.0
        %4910 = vmatpush1.msra.mxu0 0.0
        %4911 = vmatprep.subr.mxu0 0.0
        %4912 = vmatpush1.msra.mxu0 0.0
        %4913 = vmatprep.subr.mxu0 0.0
        %4914 = vmatpush1.msra.mxu0 0.0
        %4915 = vmatprep.subr.mxu0 0.0
        %4916 = vmatpush1.msra.mxu0 0.0
        %4917 = vmatprep.subr.mxu0 0.0
        %4918 = vmatpush1.msra.mxu0 0.0
        %4919 = vmatprep.subr.mxu0 0.0
        %4920 = vmatpush1.msra.mxu0 0.0
        %4921 = vmatprep.subr.mxu0 0.0
        %4922 = vmatpush1.msra.mxu0 0.0
        %4923 = vmatprep.subr.mxu0 0.0
        %4924 = vmatpush1.msra.mxu0 0.0
        %4925 = vmatprep.subr.mxu0 0.0
        %4926 = vmatpush1.msra.mxu0 0.0
        %4927 = vmatprep.subr.mxu0 0.0
        %4928 = vmatpush1.msra.mxu0 0.0
        %4929 = vmatprep.subr.mxu0 0.0
        %4930 = vmatpush1.msra.mxu0 0.0
        %4931 = vmatprep.subr.mxu0 0.0
        %4932 = vmatpush1.msra.mxu0 0.0
        %4933 = vmatprep.subr.mxu0 0.0
        %4934 = vmatpush1.msra.mxu0 0.0
        %4935 = vmatprep.mubr.f32.mxu0 0.0
        %4936 = vmatmul.mubr.f32.gmra.mrb[0].mxu0 %v4230
        %v4937 = vpop.f32.mrb[0].mxu0
        %v4938 = vadd.f32 0.0, %v4937
        %v4939 = vpop.f32.mrb[0].mxu0
        %v4940 = vadd.f32 0.0, %v4939
        %4941 = vdwg.mxu0
        %4942 = vmatprep.subr.mxu0 %v2752
        %4943 = vmatpush1.msra.mxu0 %v2751
        %4944 = vmatprep.subr.mxu0 %v2784
        %4945 = vmatpush1.msra.mxu0 %v2783
        %4946 = vmatprep.subr.mxu0 %v2816
        %4947 = vmatpush1.msra.mxu0 %v2815
        %4948 = vmatprep.subr.mxu0 %v2848
        %4949 = vmatpush1.msra.mxu0 %v2847
        %4950 = vmatprep.subr.mxu0 %v2880
        %4951 = vmatpush1.msra.mxu0 %v2879
        %4952 = vmatprep.subr.mxu0 %v2912
        %4953 = vmatpush1.msra.mxu0 %v2911
        %4954 = vmatprep.subr.mxu0 %v2944
        %4955 = vmatpush1.msra.mxu0 %v2943
        %4956 = vmatprep.subr.mxu0 %v2976
        %4957 = vmatpush1.msra.mxu0 %v2975
        %4958 = vmatprep.subr.mxu0 0.0
        %4959 = vmatpush1.msra.mxu0 0.0
        %4960 = vmatprep.subr.mxu0 0.0
        %4961 = vmatpush1.msra.mxu0 0.0
        %4962 = vmatprep.subr.mxu0 0.0
        %4963 = vmatpush1.msra.mxu0 0.0
        %4964 = vmatprep.subr.mxu0 0.0
        %4965 = vmatpush1.msra.mxu0 0.0
        %4966 = vmatprep.subr.mxu0 0.0
        %4967 = vmatpush1.msra.mxu0 0.0
        %4968 = vmatprep.subr.mxu0 0.0
        %4969 = vmatpush1.msra.mxu0 0.0
        %4970 = vmatprep.subr.mxu0 0.0
        %4971 = vmatpush1.msra.mxu0 0.0
        %4972 = vmatprep.subr.mxu0 0.0
        %4973 = vmatpush1.msra.mxu0 0.0
        %4974 = vmatprep.subr.mxu0 0.0
        %4975 = vmatpush1.msra.mxu0 0.0
        %4976 = vmatprep.subr.mxu0 0.0
        %4977 = vmatpush1.msra.mxu0 0.0
        %4978 = vmatprep.subr.mxu0 0.0
        %4979 = vmatpush1.msra.mxu0 0.0
        %4980 = vmatprep.subr.mxu0 0.0
        %4981 = vmatpush1.msra.mxu0 0.0
        %4982 = vmatprep.subr.mxu0 0.0
        %4983 = vmatpush1.msra.mxu0 0.0
        %4984 = vmatprep.subr.mxu0 0.0
        %4985 = vmatpush1.msra.mxu0 0.0
        %4986 = vmatprep.subr.mxu0 0.0
        %4987 = vmatpush1.msra.mxu0 0.0
        %4988 = vmatprep.subr.mxu0 0.0
        %4989 = vmatpush1.msra.mxu0 0.0
        %4990 = vmatprep.subr.mxu0 0.0
        %4991 = vmatpush1.msra.mxu0 0.0
        %4992 = vmatprep.subr.mxu0 0.0
        %4993 = vmatpush1.msra.mxu0 0.0
        %4994 = vmatprep.subr.mxu0 0.0
        %4995 = vmatpush1.msra.mxu0 0.0
        %4996 = vmatprep.subr.mxu0 0.0
        %4997 = vmatpush1.msra.mxu0 0.0
        %4998 = vmatprep.subr.mxu0 0.0
        %4999 = vmatpush1.msra.mxu0 0.0
        %5000 = vmatprep.subr.mxu0 0.0
        %5001 = vmatpush1.msra.mxu0 0.0
        %5002 = vmatprep.subr.mxu0 0.0
        %5003 = vmatpush1.msra.mxu0 0.0
        %5004 = vmatprep.subr.mxu0 0.0
        %5005 = vmatpush1.msra.mxu0 0.0
        %5006 = vmatprep.mubr.f32.mxu0 0.0
        %5007 = vmatmul.mubr.f32.gmra.mrb[0].mxu0 %v4230
        %v5008 = vpop.f32.mrb[0].mxu0
        %v5009 = vadd.f32 0.0, %v5008
        %v5010 = vpop.f32.mrb[0].mxu0
        %v5011 = vadd.f32 0.0, %v5010
        %5012 = vdwg.mxu0
        %5013 = vmatprep.subr.mxu0 %v2754
        %5014 = vmatpush1.msra.mxu0 %v2753
        %5015 = vmatprep.subr.mxu0 %v2786
        %5016 = vmatpush1.msra.mxu0 %v2785
        %5017 = vmatprep.subr.mxu0 %v2818
        %5018 = vmatpush1.msra.mxu0 %v2817
        %5019 = vmatprep.subr.mxu0 %v2850
        %5020 = vmatpush1.msra.mxu0 %v2849
        %5021 = vmatprep.subr.mxu0 %v2882
        %5022 = vmatpush1.msra.mxu0 %v2881
        %5023 = vmatprep.subr.mxu0 %v2914
        %5024 = vmatpush1.msra.mxu0 %v2913
        %5025 = vmatprep.subr.mxu0 %v2946
        %5026 = vmatpush1.msra.mxu0 %v2945
        %5027 = vmatprep.subr.mxu0 %v2978
        %5028 = vmatpush1.msra.mxu0 %v2977
        %5029 = vmatprep.subr.mxu0 0.0
        %5030 = vmatpush1.msra.mxu0 0.0
        %5031 = vmatprep.subr.mxu0 0.0
        %5032 = vmatpush1.msra.mxu0 0.0
        %5033 = vmatprep.subr.mxu0 0.0
        %5034 = vmatpush1.msra.mxu0 0.0
        %5035 = vmatprep.subr.mxu0 0.0
        %5036 = vmatpush1.msra.mxu0 0.0
        %5037 = vmatprep.subr.mxu0 0.0
        %5038 = vmatpush1.msra.mxu0 0.0
        %5039 = vmatprep.subr.mxu0 0.0
        %5040 = vmatpush1.msra.mxu0 0.0
        %5041 = vmatprep.subr.mxu0 0.0
        %5042 = vmatpush1.msra.mxu0 0.0
        %5043 = vmatprep.subr.mxu0 0.0
        %5044 = vmatpush1.msra.mxu0 0.0
        %5045 = vmatprep.subr.mxu0 0.0
        %5046 = vmatpush1.msra.mxu0 0.0
        %5047 = vmatprep.subr.mxu0 0.0
        %5048 = vmatpush1.msra.mxu0 0.0
        %5049 = vmatprep.subr.mxu0 0.0
        %5050 = vmatpush1.msra.mxu0 0.0
        %5051 = vmatprep.subr.mxu0 0.0
        %5052 = vmatpush1.msra.mxu0 0.0
        %5053 = vmatprep.subr.mxu0 0.0
        %5054 = vmatpush1.msra.mxu0 0.0
        %5055 = vmatprep.subr.mxu0 0.0
        %5056 = vmatpush1.msra.mxu0 0.0
        %5057 = vmatprep.subr.mxu0 0.0
        %5058 = vmatpush1.msra.mxu0 0.0
        %5059 = vmatprep.subr.mxu0 0.0
        %5060 = vmatpush1.msra.mxu0 0.0
        %5061 = vmatprep.subr.mxu0 0.0
        %5062 = vmatpush1.msra.mxu0 0.0
        %5063 = vmatprep.subr.mxu0 0.0
        %5064 = vmatpush1.msra.mxu0 0.0
        %5065 = vmatprep.subr.mxu0 0.0
        %5066 = vmatpush1.msra.mxu0 0.0
        %5067 = vmatprep.subr.mxu0 0.0
        %5068 = vmatpush1.msra.mxu0 0.0
        %5069 = vmatprep.subr.mxu0 0.0
        %5070 = vmatpush1.msra.mxu0 0.0
        %5071 = vmatprep.subr.mxu0 0.0
        %5072 = vmatpush1.msra.mxu0 0.0
        %5073 = vmatprep.subr.mxu0 0.0
        %5074 = vmatpush1.msra.mxu0 0.0
        %5075 = vmatprep.subr.mxu0 0.0
        %5076 = vmatpush1.msra.mxu0 0.0
        %5077 = vmatprep.mubr.f32.mxu0 0.0
        %5078 = vmatmul.mubr.f32.gmra.mrb[0].mxu0 %v4230
        %v5079 = vpop.f32.mrb[0].mxu0
        %v5080 = vadd.f32 0.0, %v5079
        %v5081 = vpop.f32.mrb[0].mxu0
        %v5082 = vadd.f32 0.0, %v5081
        %5083 = vdwg.mxu0
        %5084 = vmatprep.subr.mxu0 %v2756
        %5085 = vmatpush1.msra.mxu0 %v2755
        %5086 = vmatprep.subr.mxu0 %v2788
        %5087 = vmatpush1.msra.mxu0 %v2787
        %5088 = vmatprep.subr.mxu0 %v2820
        %5089 = vmatpush1.msra.mxu0 %v2819
        %5090 = vmatprep.subr.mxu0 %v2852
        %5091 = vmatpush1.msra.mxu0 %v2851
        %5092 = vmatprep.subr.mxu0 %v2884
        %5093 = vmatpush1.msra.mxu0 %v2883
        %5094 = vmatprep.subr.mxu0 %v2916
        %5095 = vmatpush1.msra.mxu0 %v2915
        %5096 = vmatprep.subr.mxu0 %v2948
        %5097 = vmatpush1.msra.mxu0 %v2947
        %5098 = vmatprep.subr.mxu0 %v2980
        %5099 = vmatpush1.msra.mxu0 %v2979
        %5100 = vmatprep.subr.mxu0 0.0
        %5101 = vmatpush1.msra.mxu0 0.0
        %5102 = vmatprep.subr.mxu0 0.0
        %5103 = vmatpush1.msra.mxu0 0.0
        %5104 = vmatprep.subr.mxu0 0.0
        %5105 = vmatpush1.msra.mxu0 0.0
        %5106 = vmatprep.subr.mxu0 0.0
        %5107 = vmatpush1.msra.mxu0 0.0
        %5108 = vmatprep.subr.mxu0 0.0
        %5109 = vmatpush1.msra.mxu0 0.0
        %5110 = vmatprep.subr.mxu0 0.0
        %5111 = vmatpush1.msra.mxu0 0.0
        %5112 = vmatprep.subr.mxu0 0.0
        %5113 = vmatpush1.msra.mxu0 0.0
        %5114 = vmatprep.subr.mxu0 0.0
        %5115 = vmatpush1.msra.mxu0 0.0
        %5116 = vmatprep.subr.mxu0 0.0
        %5117 = vmatpush1.msra.mxu0 0.0
        %5118 = vmatprep.subr.mxu0 0.0
        %5119 = vmatpush1.msra.mxu0 0.0
        %5120 = vmatprep.subr.mxu0 0.0
        %5121 = vmatpush1.msra.mxu0 0.0
        %5122 = vmatprep.subr.mxu0 0.0
        %5123 = vmatpush1.msra.mxu0 0.0
        %5124 = vmatprep.subr.mxu0 0.0
        %5125 = vmatpush1.msra.mxu0 0.0
        %5126 = vmatprep.subr.mxu0 0.0
        %5127 = vmatpush1.msra.mxu0 0.0
        %5128 = vmatprep.subr.mxu0 0.0
        %5129 = vmatpush1.msra.mxu0 0.0
        %5130 = vmatprep.subr.mxu0 0.0
        %5131 = vmatpush1.msra.mxu0 0.0
        %5132 = vmatprep.subr.mxu0 0.0
        %5133 = vmatpush1.msra.mxu0 0.0
        %5134 = vmatprep.subr.mxu0 0.0
        %5135 = vmatpush1.msra.mxu0 0.0
        %5136 = vmatprep.subr.mxu0 0.0
        %5137 = vmatpush1.msra.mxu0 0.0
        %5138 = vmatprep.subr.mxu0 0.0
        %5139 = vmatpush1.msra.mxu0 0.0
        %5140 = vmatprep.subr.mxu0 0.0
        %5141 = vmatpush1.msra.mxu0 0.0
        %5142 = vmatprep.subr.mxu0 0.0
        %5143 = vmatpush1.msra.mxu0 0.0
        %5144 = vmatprep.subr.mxu0 0.0
        %5145 = vmatpush1.msra.mxu0 0.0
        %5146 = vmatprep.subr.mxu0 0.0
        %5147 = vmatpush1.msra.mxu0 0.0
        %5148 = vmatprep.mubr.f32.mxu0 0.0
        %5149 = vmatmul.mubr.f32.gmra.mrb[0].mxu0 %v4230
        %v5150 = vpop.f32.mrb[0].mxu0
        %v5151 = vadd.f32 0.0, %v5150
        %v5152 = vpop.f32.mrb[0].mxu0
        %v5153 = vadd.f32 0.0, %v5152
        %5154 = vdwg.mxu0
        %5155 = vmatprep.subr.mxu0 %v2758
        %5156 = vmatpush1.msra.mxu0 %v2757
        %5157 = vmatprep.subr.mxu0 %v2790
        %5158 = vmatpush1.msra.mxu0 %v2789
        %5159 = vmatprep.subr.mxu0 %v2822
        %5160 = vmatpush1.msra.mxu0 %v2821
        %5161 = vmatprep.subr.mxu0 %v2854
        %5162 = vmatpush1.msra.mxu0 %v2853
        %5163 = vmatprep.subr.mxu0 %v2886
        %5164 = vmatpush1.msra.mxu0 %v2885
        %5165 = vmatprep.subr.mxu0 %v2918
        %5166 = vmatpush1.msra.mxu0 %v2917
        %5167 = vmatprep.subr.mxu0 %v2950
        %5168 = vmatpush1.msra.mxu0 %v2949
        %5169 = vmatprep.subr.mxu0 %v2982
        %5170 = vmatpush1.msra.mxu0 %v2981
        %5171 = vmatprep.subr.mxu0 0.0
        %5172 = vmatpush1.msra.mxu0 0.0
        %5173 = vmatprep.subr.mxu0 0.0
        %5174 = vmatpush1.msra.mxu0 0.0
        %5175 = vmatprep.subr.mxu0 0.0
        %5176 = vmatpush1.msra.mxu0 0.0
        %5177 = vmatprep.subr.mxu0 0.0
        %5178 = vmatpush1.msra.mxu0 0.0
        %5179 = vmatprep.subr.mxu0 0.0
        %5180 = vmatpush1.msra.mxu0 0.0
        %5181 = vmatprep.subr.mxu0 0.0
        %5182 = vmatpush1.msra.mxu0 0.0
        %5183 = vmatprep.subr.mxu0 0.0
        %5184 = vmatpush1.msra.mxu0 0.0
        %5185 = vmatprep.subr.mxu0 0.0
        %5186 = vmatpush1.msra.mxu0 0.0
        %5187 = vmatprep.subr.mxu0 0.0
        %5188 = vmatpush1.msra.mxu0 0.0
        %5189 = vmatprep.subr.mxu0 0.0
        %5190 = vmatpush1.msra.mxu0 0.0
        %5191 = vmatprep.subr.mxu0 0.0
        %5192 = vmatpush1.msra.mxu0 0.0
        %5193 = vmatprep.subr.mxu0 0.0
        %5194 = vmatpush1.msra.mxu0 0.0
        %5195 = vmatprep.subr.mxu0 0.0
        %5196 = vmatpush1.msra.mxu0 0.0
        %5197 = vmatprep.subr.mxu0 0.0
        %5198 = vmatpush1.msra.mxu0 0.0
        %5199 = vmatprep.subr.mxu0 0.0
        %5200 = vmatpush1.msra.mxu0 0.0
        %5201 = vmatprep.subr.mxu0 0.0
        %5202 = vmatpush1.msra.mxu0 0.0
        %5203 = vmatprep.subr.mxu0 0.0
        %5204 = vmatpush1.msra.mxu0 0.0
        %5205 = vmatprep.subr.mxu0 0.0
        %5206 = vmatpush1.msra.mxu0 0.0
        %5207 = vmatprep.subr.mxu0 0.0
        %5208 = vmatpush1.msra.mxu0 0.0
        %5209 = vmatprep.subr.mxu0 0.0
        %5210 = vmatpush1.msra.mxu0 0.0
        %5211 = vmatprep.subr.mxu0 0.0
        %5212 = vmatpush1.msra.mxu0 0.0
        %5213 = vmatprep.subr.mxu0 0.0
        %5214 = vmatpush1.msra.mxu0 0.0
        %5215 = vmatprep.subr.mxu0 0.0
        %5216 = vmatpush1.msra.mxu0 0.0
        %5217 = vmatprep.subr.mxu0 0.0
        %5218 = vmatpush1.msra.mxu0 0.0
        %5219 = vmatprep.mubr.f32.mxu0 0.0
        %5220 = vmatmul.mubr.f32.gmra.mrb[0].mxu0 %v4230
        %v5221 = vpop.f32.mrb[0].mxu0
        %v5222 = vadd.f32 0.0, %v5221
        %v5223 = vpop.f32.mrb[0].mxu0
        %v5224 = vadd.f32 0.0, %v5223
        %5225 = vdwg.mxu0
        %5226 = vmatprep.subr.mxu0 %v2760
        %5227 = vmatpush1.msra.mxu0 %v2759
        %5228 = vmatprep.subr.mxu0 %v2792
        %5229 = vmatpush1.msra.mxu0 %v2791
        %5230 = vmatprep.subr.mxu0 %v2824
        %5231 = vmatpush1.msra.mxu0 %v2823
        %5232 = vmatprep.subr.mxu0 %v2856
        %5233 = vmatpush1.msra.mxu0 %v2855
        %5234 = vmatprep.subr.mxu0 %v2888
        %5235 = vmatpush1.msra.mxu0 %v2887
        %5236 = vmatprep.subr.mxu0 %v2920
        %5237 = vmatpush1.msra.mxu0 %v2919
        %5238 = vmatprep.subr.mxu0 %v2952
        %5239 = vmatpush1.msra.mxu0 %v2951
        %5240 = vmatprep.subr.mxu0 %v2984
        %5241 = vmatpush1.msra.mxu0 %v2983
        %5242 = vmatprep.subr.mxu0 0.0
        %5243 = vmatpush1.msra.mxu0 0.0
        %5244 = vmatprep.subr.mxu0 0.0
        %5245 = vmatpush1.msra.mxu0 0.0
        %5246 = vmatprep.subr.mxu0 0.0
        %5247 = vmatpush1.msra.mxu0 0.0
        %5248 = vmatprep.subr.mxu0 0.0
        %5249 = vmatpush1.msra.mxu0 0.0
        %5250 = vmatprep.subr.mxu0 0.0
        %5251 = vmatpush1.msra.mxu0 0.0
        %5252 = vmatprep.subr.mxu0 0.0
        %5253 = vmatpush1.msra.mxu0 0.0
        %5254 = vmatprep.subr.mxu0 0.0
        %5255 = vmatpush1.msra.mxu0 0.0
        %5256 = vmatprep.subr.mxu0 0.0
        %5257 = vmatpush1.msra.mxu0 0.0
        %5258 = vmatprep.subr.mxu0 0.0
        %5259 = vmatpush1.msra.mxu0 0.0
        %5260 = vmatprep.subr.mxu0 0.0
        %5261 = vmatpush1.msra.mxu0 0.0
        %5262 = vmatprep.subr.mxu0 0.0
        %5263 = vmatpush1.msra.mxu0 0.0
        %5264 = vmatprep.subr.mxu0 0.0
        %5265 = vmatpush1.msra.mxu0 0.0
        %5266 = vmatprep.subr.mxu0 0.0
        %5267 = vmatpush1.msra.mxu0 0.0
        %5268 = vmatprep.subr.mxu0 0.0
        %5269 = vmatpush1.msra.mxu0 0.0
        %5270 = vmatprep.subr.mxu0 0.0
        %5271 = vmatpush1.msra.mxu0 0.0
        %5272 = vmatprep.subr.mxu0 0.0
        %5273 = vmatpush1.msra.mxu0 0.0
        %5274 = vmatprep.subr.mxu0 0.0
        %5275 = vmatpush1.msra.mxu0 0.0
        %5276 = vmatprep.subr.mxu0 0.0
        %5277 = vmatpush1.msra.mxu0 0.0
        %5278 = vmatprep.subr.mxu0 0.0
        %5279 = vmatpush1.msra.mxu0 0.0
        %5280 = vmatprep.subr.mxu0 0.0
        %5281 = vmatpush1.msra.mxu0 0.0
        %5282 = vmatprep.subr.mxu0 0.0
        %5283 = vmatpush1.msra.mxu0 0.0
        %5284 = vmatprep.subr.mxu0 0.0
        %5285 = vmatpush1.msra.mxu0 0.0
        %5286 = vmatprep.subr.mxu0 0.0
        %5287 = vmatpush1.msra.mxu0 0.0
        %5288 = vmatprep.subr.mxu0 0.0
        %5289 = vmatpush1.msra.mxu0 0.0
        %5290 = vmatprep.mubr.f32.mxu0 0.0
        %5291 = vmatmul.mubr.f32.gmra.mrb[0].mxu0 %v4230
        %v5292 = vpop.f32.mrb[0].mxu0
        %v5293 = vadd.f32 0.0, %v5292
        %v5294 = vpop.f32.mrb[0].mxu0
        %v5295 = vadd.f32 0.0, %v5294
        %5296 = vdwg.mxu0
        %5297 = vmatprep.subr.mxu0 %v2762
        %5298 = vmatpush1.msra.mxu0 %v2761
        %5299 = vmatprep.subr.mxu0 %v2794
        %5300 = vmatpush1.msra.mxu0 %v2793
        %5301 = vmatprep.subr.mxu0 %v2826
        %5302 = vmatpush1.msra.mxu0 %v2825
        %5303 = vmatprep.subr.mxu0 %v2858
        %5304 = vmatpush1.msra.mxu0 %v2857
        %5305 = vmatprep.subr.mxu0 %v2890
        %5306 = vmatpush1.msra.mxu0 %v2889
        %5307 = vmatprep.subr.mxu0 %v2922
        %5308 = vmatpush1.msra.mxu0 %v2921
        %5309 = vmatprep.subr.mxu0 %v2954
        %5310 = vmatpush1.msra.mxu0 %v2953
        %5311 = vmatprep.subr.mxu0 %v2986
        %5312 = vmatpush1.msra.mxu0 %v2985
        %5313 = vmatprep.subr.mxu0 0.0
        %5314 = vmatpush1.msra.mxu0 0.0
        %5315 = vmatprep.subr.mxu0 0.0
        %5316 = vmatpush1.msra.mxu0 0.0
        %5317 = vmatprep.subr.mxu0 0.0
        %5318 = vmatpush1.msra.mxu0 0.0
        %5319 = vmatprep.subr.mxu0 0.0
        %5320 = vmatpush1.msra.mxu0 0.0
        %5321 = vmatprep.subr.mxu0 0.0
        %5322 = vmatpush1.msra.mxu0 0.0
        %5323 = vmatprep.subr.mxu0 0.0
        %5324 = vmatpush1.msra.mxu0 0.0
        %5325 = vmatprep.subr.mxu0 0.0
        %5326 = vmatpush1.msra.mxu0 0.0
        %5327 = vmatprep.subr.mxu0 0.0
        %5328 = vmatpush1.msra.mxu0 0.0
        %5329 = vmatprep.subr.mxu0 0.0
        %5330 = vmatpush1.msra.mxu0 0.0
        %5331 = vmatprep.subr.mxu0 0.0
        %5332 = vmatpush1.msra.mxu0 0.0
        %5333 = vmatprep.subr.mxu0 0.0
        %5334 = vmatpush1.msra.mxu0 0.0
        %5335 = vmatprep.subr.mxu0 0.0
        %5336 = vmatpush1.msra.mxu0 0.0
        %5337 = vmatprep.subr.mxu0 0.0
        %5338 = vmatpush1.msra.mxu0 0.0
        %5339 = vmatprep.subr.mxu0 0.0
        %5340 = vmatpush1.msra.mxu0 0.0
        %5341 = vmatprep.subr.mxu0 0.0
        %5342 = vmatpush1.msra.mxu0 0.0
        %5343 = vmatprep.subr.mxu0 0.0
        %5344 = vmatpush1.msra.mxu0 0.0
        %5345 = vmatprep.subr.mxu0 0.0
        %5346 = vmatpush1.msra.mxu0 0.0
        %5347 = vmatprep.subr.mxu0 0.0
        %5348 = vmatpush1.msra.mxu0 0.0
        %5349 = vmatprep.subr.mxu0 0.0
        %5350 = vmatpush1.msra.mxu0 0.0
        %5351 = vmatprep.subr.mxu0 0.0
        %5352 = vmatpush1.msra.mxu0 0.0
        %5353 = vmatprep.subr.mxu0 0.0
        %5354 = vmatpush1.msra.mxu0 0.0
        %5355 = vmatprep.subr.mxu0 0.0
        %5356 = vmatpush1.msra.mxu0 0.0
        %5357 = vmatprep.subr.mxu0 0.0
        %5358 = vmatpush1.msra.mxu0 0.0
        %5359 = vmatprep.subr.mxu0 0.0
        %5360 = vmatpush1.msra.mxu0 0.0
        %5361 = vmatprep.mubr.f32.mxu0 0.0
        %5362 = vmatmul.mubr.f32.gmra.mrb[0].mxu0 %v4230
        %v5363 = vpop.f32.mrb[0].mxu0
        %v5364 = vadd.f32 0.0, %v5363
        %v5365 = vpop.f32.mrb[0].mxu0
        %v5366 = vadd.f32 0.0, %v5365
        %5367 = vdwg.mxu0
        %v5369 = vsel %vm1491, %v2730, 0
        %5371 = vmatprep.subr.mxu0 %v1362
        %5372 = vmatpush1.msra.mxu0 %v1361
        %5373 = vmatprep.subr.mxu0 %v1394
        %5374 = vmatpush1.msra.mxu0 %v1393
        %5375 = vmatprep.subr.mxu0 %v1426
        %5376 = vmatpush1.msra.mxu0 %v1425
        %5377 = vmatprep.subr.mxu0 %v1458
        %5378 = vmatpush1.msra.mxu0 %v1457
        %5379 = vmatprep.subr.mxu0 0.0
        %5380 = vmatpush1.msra.mxu0 0.0
        %5381 = vmatprep.subr.mxu0 0.0
        %5382 = vmatpush1.msra.mxu0 0.0
        %5383 = vmatprep.subr.mxu0 0.0
        %5384 = vmatpush1.msra.mxu0 0.0
        %5385 = vmatprep.subr.mxu0 0.0
        %5386 = vmatpush1.msra.mxu0 0.0
        %5387 = vmatprep.subr.mxu0 0.0
        %5388 = vmatpush1.msra.mxu0 0.0
        %5389 = vmatprep.subr.mxu0 0.0
        %5390 = vmatpush1.msra.mxu0 0.0
        %5391 = vmatprep.subr.mxu0 0.0
        %5392 = vmatpush1.msra.mxu0 0.0
        %5393 = vmatprep.subr.mxu0 0.0
        %5394 = vmatpush1.msra.mxu0 0.0
        %5395 = vmatprep.subr.mxu0 0.0
        %5396 = vmatpush1.msra.mxu0 0.0
        %5397 = vmatprep.subr.mxu0 0.0
        %5398 = vmatpush1.msra.mxu0 0.0
        %5399 = vmatprep.subr.mxu0 0.0
        %5400 = vmatpush1.msra.mxu0 0.0
        %5401 = vmatprep.subr.mxu0 0.0
        %5402 = vmatpush1.msra.mxu0 0.0
        %5403 = vmatprep.subr.mxu0 0.0
        %5404 = vmatpush1.msra.mxu0 0.0
        %5405 = vmatprep.subr.mxu0 0.0
        %5406 = vmatpush1.msra.mxu0 0.0
        %5407 = vmatprep.subr.mxu0 0.0
        %5408 = vmatpush1.msra.mxu0 0.0
        %5409 = vmatprep.subr.mxu0 0.0
        %5410 = vmatpush1.msra.mxu0 0.0
        %5411 = vmatprep.subr.mxu0 0.0
        %5412 = vmatpush1.msra.mxu0 0.0
        %5413 = vmatprep.subr.mxu0 0.0
        %5414 = vmatpush1.msra.mxu0 0.0
        %5415 = vmatprep.subr.mxu0 0.0
        %5416 = vmatpush1.msra.mxu0 0.0
        %5417 = vmatprep.subr.mxu0 0.0
        %5418 = vmatpush1.msra.mxu0 0.0
        %5419 = vmatprep.subr.mxu0 0.0
        %5420 = vmatpush1.msra.mxu0 0.0
        %5421 = vmatprep.subr.mxu0 0.0
        %5422 = vmatpush1.msra.mxu0 0.0
        %5423 = vmatprep.subr.mxu0 0.0
        %5424 = vmatpush1.msra.mxu0 0.0
        %5425 = vmatprep.subr.mxu0 0.0
        %5426 = vmatpush1.msra.mxu0 0.0
        %5427 = vmatprep.subr.mxu0 0.0
        %5428 = vmatpush1.msra.mxu0 0.0
        %5429 = vmatprep.subr.mxu0 0.0
        %5430 = vmatpush1.msra.mxu0 0.0
        %5431 = vmatprep.subr.mxu0 0.0
        %5432 = vmatpush1.msra.mxu0 0.0
        %5433 = vmatprep.subr.mxu0 0.0
        %5434 = vmatpush1.msra.mxu0 0.0
        %5435 = vmatprep.mubr.f32.mxu0 0.0
        %5436 = vmatmul.mubr.f32.gmra.mrb[0].mxu0 %v5369
        %v5437 = vpop.f32.mrb[0].mxu0
        %v5438 = vadd.f32 %v4299, %v5437
        %v5439 = vpop.f32.mrb[0].mxu0
        %v5440 = vadd.f32 %v4301, %v5439
        %5441 = vdwg.mxu0
        %5442 = vmatprep.subr.mxu0 %v1364
        %5443 = vmatpush1.msra.mxu0 %v1363
        %5444 = vmatprep.subr.mxu0 %v1396
        %5445 = vmatpush1.msra.mxu0 %v1395
        %5446 = vmatprep.subr.mxu0 %v1428
        %5447 = vmatpush1.msra.mxu0 %v1427
        %5448 = vmatprep.subr.mxu0 %v1460
        %5449 = vmatpush1.msra.mxu0 %v1459
        %5450 = vmatprep.subr.mxu0 0.0
        %5451 = vmatpush1.msra.mxu0 0.0
        %5452 = vmatprep.subr.mxu0 0.0
        %5453 = vmatpush1.msra.mxu0 0.0
        %5454 = vmatprep.subr.mxu0 0.0
        %5455 = vmatpush1.msra.mxu0 0.0
        %5456 = vmatprep.subr.mxu0 0.0
        %5457 = vmatpush1.msra.mxu0 0.0
        %5458 = vmatprep.subr.mxu0 0.0
        %5459 = vmatpush1.msra.mxu0 0.0
        %5460 = vmatprep.subr.mxu0 0.0
        %5461 = vmatpush1.msra.mxu0 0.0
        %5462 = vmatprep.subr.mxu0 0.0
        %5463 = vmatpush1.msra.mxu0 0.0
        %5464 = vmatprep.subr.mxu0 0.0
        %5465 = vmatpush1.msra.mxu0 0.0
        %5466 = vmatprep.subr.mxu0 0.0
        %5467 = vmatpush1.msra.mxu0 0.0
        %5468 = vmatprep.subr.mxu0 0.0
        %5469 = vmatpush1.msra.mxu0 0.0
        %5470 = vmatprep.subr.mxu0 0.0
        %5471 = vmatpush1.msra.mxu0 0.0
        %5472 = vmatprep.subr.mxu0 0.0
        %5473 = vmatpush1.msra.mxu0 0.0
        %5474 = vmatprep.subr.mxu0 0.0
        %5475 = vmatpush1.msra.mxu0 0.0
        %5476 = vmatprep.subr.mxu0 0.0
        %5477 = vmatpush1.msra.mxu0 0.0
        %5478 = vmatprep.subr.mxu0 0.0
        %5479 = vmatpush1.msra.mxu0 0.0
        %5480 = vmatprep.subr.mxu0 0.0
        %5481 = vmatpush1.msra.mxu0 0.0
        %5482 = vmatprep.subr.mxu0 0.0
        %5483 = vmatpush1.msra.mxu0 0.0
        %5484 = vmatprep.subr.mxu0 0.0
        %5485 = vmatpush1.msra.mxu0 0.0
        %5486 = vmatprep.subr.mxu0 0.0
        %5487 = vmatpush1.msra.mxu0 0.0
        %5488 = vmatprep.subr.mxu0 0.0
        %5489 = vmatpush1.msra.mxu0 0.0
        %5490 = vmatprep.subr.mxu0 0.0
        %5491 = vmatpush1.msra.mxu0 0.0
        %5492 = vmatprep.subr.mxu0 0.0
        %5493 = vmatpush1.msra.mxu0 0.0
        %5494 = vmatprep.subr.mxu0 0.0
        %5495 = vmatpush1.msra.mxu0 0.0
        %5496 = vmatprep.subr.mxu0 0.0
        %5497 = vmatpush1.msra.mxu0 0.0
        %5498 = vmatprep.subr.mxu0 0.0
        %5499 = vmatpush1.msra.mxu0 0.0
        %5500 = vmatprep.subr.mxu0 0.0
        %5501 = vmatpush1.msra.mxu0 0.0
        %5502 = vmatprep.subr.mxu0 0.0
        %5503 = vmatpush1.msra.mxu0 0.0
        %5504 = vmatprep.subr.mxu0 0.0
        %5505 = vmatpush1.msra.mxu0 0.0
        %5506 = vmatprep.mubr.f32.mxu0 0.0
        %5507 = vmatmul.mubr.f32.gmra.mrb[0].mxu0 %v5369
        %v5508 = vpop.f32.mrb[0].mxu0
        %v5509 = vadd.f32 %v4370, %v5508
        %v5510 = vpop.f32.mrb[0].mxu0
        %v5511 = vadd.f32 %v4372, %v5510
        %5512 = vdwg.mxu0
        %5513 = vmatprep.subr.mxu0 %v1366
        %5514 = vmatpush1.msra.mxu0 %v1365
        %5515 = vmatprep.subr.mxu0 %v1398
        %5516 = vmatpush1.msra.mxu0 %v1397
        %5517 = vmatprep.subr.mxu0 %v1430
        %5518 = vmatpush1.msra.mxu0 %v1429
        %5519 = vmatprep.subr.mxu0 %v1462
        %5520 = vmatpush1.msra.mxu0 %v1461
        %5521 = vmatprep.subr.mxu0 0.0
        %5522 = vmatpush1.msra.mxu0 0.0
        %5523 = vmatprep.subr.mxu0 0.0
        %5524 = vmatpush1.msra.mxu0 0.0
        %5525 = vmatprep.subr.mxu0 0.0
        %5526 = vmatpush1.msra.mxu0 0.0
        %5527 = vmatprep.subr.mxu0 0.0
        %5528 = vmatpush1.msra.mxu0 0.0
        %5529 = vmatprep.subr.mxu0 0.0
        %5530 = vmatpush1.msra.mxu0 0.0
        %5531 = vmatprep.subr.mxu0 0.0
        %5532 = vmatpush1.msra.mxu0 0.0
        %5533 = vmatprep.subr.mxu0 0.0
        %5534 = vmatpush1.msra.mxu0 0.0
        %5535 = vmatprep.subr.mxu0 0.0
        %5536 = vmatpush1.msra.mxu0 0.0
        %5537 = vmatprep.subr.mxu0 0.0
        %5538 = vmatpush1.msra.mxu0 0.0
        %5539 = vmatprep.subr.mxu0 0.0
        %5540 = vmatpush1.msra.mxu0 0.0
        %5541 = vmatprep.subr.mxu0 0.0
        %5542 = vmatpush1.msra.mxu0 0.0
        %5543 = vmatprep.subr.mxu0 0.0
        %5544 = vmatpush1.msra.mxu0 0.0
        %5545 = vmatprep.subr.mxu0 0.0
        %5546 = vmatpush1.msra.mxu0 0.0
        %5547 = vmatprep.subr.mxu0 0.0
        %5548 = vmatpush1.msra.mxu0 0.0
        %5549 = vmatprep.subr.mxu0 0.0
        %5550 = vmatpush1.msra.mxu0 0.0
        %5551 = vmatprep.subr.mxu0 0.0
        %5552 = vmatpush1.msra.mxu0 0.0
        %5553 = vmatprep.subr.mxu0 0.0
        %5554 = vmatpush1.msra.mxu0 0.0
        %5555 = vmatprep.subr.mxu0 0.0
        %5556 = vmatpush1.msra.mxu0 0.0
        %5557 = vmatprep.subr.mxu0 0.0
        %5558 = vmatpush1.msra.mxu0 0.0
        %5559 = vmatprep.subr.mxu0 0.0
        %5560 = vmatpush1.msra.mxu0 0.0
        %5561 = vmatprep.subr.mxu0 0.0
        %5562 = vmatpush1.msra.mxu0 0.0
        %5563 = vmatprep.subr.mxu0 0.0
        %5564 = vmatpush1.msra.mxu0 0.0
        %5565 = vmatprep.subr.mxu0 0.0
        %5566 = vmatpush1.msra.mxu0 0.0
        %5567 = vmatprep.subr.mxu0 0.0
        %5568 = vmatpush1.msra.mxu0 0.0
        %5569 = vmatprep.subr.mxu0 0.0
        %5570 = vmatpush1.msra.mxu0 0.0
        %5571 = vmatprep.subr.mxu0 0.0
        %5572 = vmatpush1.msra.mxu0 0.0
        %5573 = vmatprep.subr.mxu0 0.0
        %5574 = vmatpush1.msra.mxu0 0.0
        %5575 = vmatprep.subr.mxu0 0.0
        %5576 = vmatpush1.msra.mxu0 0.0
        %5577 = vmatprep.mubr.f32.mxu0 0.0
        %5578 = vmatmul.mubr.f32.gmra.mrb[0].mxu0 %v5369
        %v5579 = vpop.f32.mrb[0].mxu0
        %v5580 = vadd.f32 %v4441, %v5579
        %v5581 = vpop.f32.mrb[0].mxu0
        %v5582 = vadd.f32 %v4443, %v5581
        %5583 = vdwg.mxu0
        %5584 = vmatprep.subr.mxu0 %v1368
        %5585 = vmatpush1.msra.mxu0 %v1367
        %5586 = vmatprep.subr.mxu0 %v1400
        %5587 = vmatpush1.msra.mxu0 %v1399
        %5588 = vmatprep.subr.mxu0 %v1432
        %5589 = vmatpush1.msra.mxu0 %v1431
        %5590 = vmatprep.subr.mxu0 %v1464
        %5591 = vmatpush1.msra.mxu0 %v1463
        %5592 = vmatprep.subr.mxu0 0.0
        %5593 = vmatpush1.msra.mxu0 0.0
        %5594 = vmatprep.subr.mxu0 0.0
        %5595 = vmatpush1.msra.mxu0 0.0
        %5596 = vmatprep.subr.mxu0 0.0
        %5597 = vmatpush1.msra.mxu0 0.0
        %5598 = vmatprep.subr.mxu0 0.0
        %5599 = vmatpush1.msra.mxu0 0.0
        %5600 = vmatprep.subr.mxu0 0.0
        %5601 = vmatpush1.msra.mxu0 0.0
        %5602 = vmatprep.subr.mxu0 0.0
        %5603 = vmatpush1.msra.mxu0 0.0
        %5604 = vmatprep.subr.mxu0 0.0
        %5605 = vmatpush1.msra.mxu0 0.0
        %5606 = vmatprep.subr.mxu0 0.0
        %5607 = vmatpush1.msra.mxu0 0.0
        %5608 = vmatprep.subr.mxu0 0.0
        %5609 = vmatpush1.msra.mxu0 0.0
        %5610 = vmatprep.subr.mxu0 0.0
        %5611 = vmatpush1.msra.mxu0 0.0
        %5612 = vmatprep.subr.mxu0 0.0
        %5613 = vmatpush1.msra.mxu0 0.0
        %5614 = vmatprep.subr.mxu0 0.0
        %5615 = vmatpush1.msra.mxu0 0.0
        %5616 = vmatprep.subr.mxu0 0.0
        %5617 = vmatpush1.msra.mxu0 0.0
        %5618 = vmatprep.subr.mxu0 0.0
        %5619 = vmatpush1.msra.mxu0 0.0
        %5620 = vmatprep.subr.mxu0 0.0
        %5621 = vmatpush1.msra.mxu0 0.0
        %5622 = vmatprep.subr.mxu0 0.0
        %5623 = vmatpush1.msra.mxu0 0.0
        %5624 = vmatprep.subr.mxu0 0.0
        %5625 = vmatpush1.msra.mxu0 0.0
        %5626 = vmatprep.subr.mxu0 0.0
        %5627 = vmatpush1.msra.mxu0 0.0
        %5628 = vmatprep.subr.mxu0 0.0
        %5629 = vmatpush1.msra.mxu0 0.0
        %5630 = vmatprep.subr.mxu0 0.0
        %5631 = vmatpush1.msra.mxu0 0.0
        %5632 = vmatprep.subr.mxu0 0.0
        %5633 = vmatpush1.msra.mxu0 0.0
        %5634 = vmatprep.subr.mxu0 0.0
        %5635 = vmatpush1.msra.mxu0 0.0
        %5636 = vmatprep.subr.mxu0 0.0
        %5637 = vmatpush1.msra.mxu0 0.0
        %5638 = vmatprep.subr.mxu0 0.0
        %5639 = vmatpush1.msra.mxu0 0.0
        %5640 = vmatprep.subr.mxu0 0.0
        %5641 = vmatpush1.msra.mxu0 0.0
        %5642 = vmatprep.subr.mxu0 0.0
        %5643 = vmatpush1.msra.mxu0 0.0
        %5644 = vmatprep.subr.mxu0 0.0
        %5645 = vmatpush1.msra.mxu0 0.0
        %5646 = vmatprep.subr.mxu0 0.0
        %5647 = vmatpush1.msra.mxu0 0.0
        %5648 = vmatprep.mubr.f32.mxu0 0.0
        %5649 = vmatmul.mubr.f32.gmra.mrb[0].mxu0 %v5369
        %v5650 = vpop.f32.mrb[0].mxu0
        %v5651 = vadd.f32 %v4512, %v5650
        %v5652 = vpop.f32.mrb[0].mxu0
        %v5653 = vadd.f32 %v4514, %v5652
        %5654 = vdwg.mxu0
        %5655 = vmatprep.subr.mxu0 %v1370
        %5656 = vmatpush1.msra.mxu0 %v1369
        %5657 = vmatprep.subr.mxu0 %v1402
        %5658 = vmatpush1.msra.mxu0 %v1401
        %5659 = vmatprep.subr.mxu0 %v1434
        %5660 = vmatpush1.msra.mxu0 %v1433
        %5661 = vmatprep.subr.mxu0 %v1466
        %5662 = vmatpush1.msra.mxu0 %v1465
        %5663 = vmatprep.subr.mxu0 0.0
        %5664 = vmatpush1.msra.mxu0 0.0
        %5665 = vmatprep.subr.mxu0 0.0
        %5666 = vmatpush1.msra.mxu0 0.0
        %5667 = vmatprep.subr.mxu0 0.0
        %5668 = vmatpush1.msra.mxu0 0.0
        %5669 = vmatprep.subr.mxu0 0.0
        %5670 = vmatpush1.msra.mxu0 0.0
        %5671 = vmatprep.subr.mxu0 0.0
        %5672 = vmatpush1.msra.mxu0 0.0
        %5673 = vmatprep.subr.mxu0 0.0
        %5674 = vmatpush1.msra.mxu0 0.0
        %5675 = vmatprep.subr.mxu0 0.0
        %5676 = vmatpush1.msra.mxu0 0.0
        %5677 = vmatprep.subr.mxu0 0.0
        %5678 = vmatpush1.msra.mxu0 0.0
        %5679 = vmatprep.subr.mxu0 0.0
        %5680 = vmatpush1.msra.mxu0 0.0
        %5681 = vmatprep.subr.mxu0 0.0
        %5682 = vmatpush1.msra.mxu0 0.0
        %5683 = vmatprep.subr.mxu0 0.0
        %5684 = vmatpush1.msra.mxu0 0.0
        %5685 = vmatprep.subr.mxu0 0.0
        %5686 = vmatpush1.msra.mxu0 0.0
        %5687 = vmatprep.subr.mxu0 0.0
        %5688 = vmatpush1.msra.mxu0 0.0
        %5689 = vmatprep.subr.mxu0 0.0
        %5690 = vmatpush1.msra.mxu0 0.0
        %5691 = vmatprep.subr.mxu0 0.0
        %5692 = vmatpush1.msra.mxu0 0.0
        %5693 = vmatprep.subr.mxu0 0.0
        %5694 = vmatpush1.msra.mxu0 0.0
        %5695 = vmatprep.subr.mxu0 0.0
        %5696 = vmatpush1.msra.mxu0 0.0
        %5697 = vmatprep.subr.mxu0 0.0
        %5698 = vmatpush1.msra.mxu0 0.0
        %5699 = vmatprep.subr.mxu0 0.0
        %5700 = vmatpush1.msra.mxu0 0.0
        %5701 = vmatprep.subr.mxu0 0.0
        %5702 = vmatpush1.msra.mxu0 0.0
        %5703 = vmatprep.subr.mxu0 0.0
        %5704 = vmatpush1.msra.mxu0 0.0
        %5705 = vmatprep.subr.mxu0 0.0
        %5706 = vmatpush1.msra.mxu0 0.0
        %5707 = vmatprep.subr.mxu0 0.0
        %5708 = vmatpush1.msra.mxu0 0.0
        %5709 = vmatprep.subr.mxu0 0.0
        %5710 = vmatpush1.msra.mxu0 0.0
        %5711 = vmatprep.subr.mxu0 0.0
        %5712 = vmatpush1.msra.mxu0 0.0
        %5713 = vmatprep.subr.mxu0 0.0
        %5714 = vmatpush1.msra.mxu0 0.0
        %5715 = vmatprep.subr.mxu0 0.0
        %5716 = vmatpush1.msra.mxu0 0.0
        %5717 = vmatprep.subr.mxu0 0.0
        %5718 = vmatpush1.msra.mxu0 0.0
        %5719 = vmatprep.mubr.f32.mxu0 0.0
        %5720 = vmatmul.mubr.f32.gmra.mrb[0].mxu0 %v5369
        %v5721 = vpop.f32.mrb[0].mxu0
        %v5722 = vadd.f32 %v4583, %v5721
        %v5723 = vpop.f32.mrb[0].mxu0
        %v5724 = vadd.f32 %v4585, %v5723
        %5725 = vdwg.mxu0
        %5726 = vmatprep.subr.mxu0 %v1372
        %5727 = vmatpush1.msra.mxu0 %v1371
        %5728 = vmatprep.subr.mxu0 %v1404
        %5729 = vmatpush1.msra.mxu0 %v1403
        %5730 = vmatprep.subr.mxu0 %v1436
        %5731 = vmatpush1.msra.mxu0 %v1435
        %5732 = vmatprep.subr.mxu0 %v1468
        %5733 = vmatpush1.msra.mxu0 %v1467
        %5734 = vmatprep.subr.mxu0 0.0
        %5735 = vmatpush1.msra.mxu0 0.0
        %5736 = vmatprep.subr.mxu0 0.0
        %5737 = vmatpush1.msra.mxu0 0.0
        %5738 = vmatprep.subr.mxu0 0.0
        %5739 = vmatpush1.msra.mxu0 0.0
        %5740 = vmatprep.subr.mxu0 0.0
        %5741 = vmatpush1.msra.mxu0 0.0
        %5742 = vmatprep.subr.mxu0 0.0
        %5743 = vmatpush1.msra.mxu0 0.0
        %5744 = vmatprep.subr.mxu0 0.0
        %5745 = vmatpush1.msra.mxu0 0.0
        %5746 = vmatprep.subr.mxu0 0.0
        %5747 = vmatpush1.msra.mxu0 0.0
        %5748 = vmatprep.subr.mxu0 0.0
        %5749 = vmatpush1.msra.mxu0 0.0
        %5750 = vmatprep.subr.mxu0 0.0
        %5751 = vmatpush1.msra.mxu0 0.0
        %5752 = vmatprep.subr.mxu0 0.0
        %5753 = vmatpush1.msra.mxu0 0.0
        %5754 = vmatprep.subr.mxu0 0.0
        %5755 = vmatpush1.msra.mxu0 0.0
        %5756 = vmatprep.subr.mxu0 0.0
        %5757 = vmatpush1.msra.mxu0 0.0
        %5758 = vmatprep.subr.mxu0 0.0
        %5759 = vmatpush1.msra.mxu0 0.0
        %5760 = vmatprep.subr.mxu0 0.0
        %5761 = vmatpush1.msra.mxu0 0.0
        %5762 = vmatprep.subr.mxu0 0.0
        %5763 = vmatpush1.msra.mxu0 0.0
        %5764 = vmatprep.subr.mxu0 0.0
        %5765 = vmatpush1.msra.mxu0 0.0
        %5766 = vmatprep.subr.mxu0 0.0
        %5767 = vmatpush1.msra.mxu0 0.0
        %5768 = vmatprep.subr.mxu0 0.0
        %5769 = vmatpush1.msra.mxu0 0.0
        %5770 = vmatprep.subr.mxu0 0.0
        %5771 = vmatpush1.msra.mxu0 0.0
        %5772 = vmatprep.subr.mxu0 0.0
        %5773 = vmatpush1.msra.mxu0 0.0
        %5774 = vmatprep.subr.mxu0 0.0
        %5775 = vmatpush1.msra.mxu0 0.0
        %5776 = vmatprep.subr.mxu0 0.0
        %5777 = vmatpush1.msra.mxu0 0.0
        %5778 = vmatprep.subr.mxu0 0.0
        %5779 = vmatpush1.msra.mxu0 0.0
        %5780 = vmatprep.subr.mxu0 0.0
        %5781 = vmatpush1.msra.mxu0 0.0
        %5782 = vmatprep.subr.mxu0 0.0
        %5783 = vmatpush1.msra.mxu0 0.0
        %5784 = vmatprep.subr.mxu0 0.0
        %5785 = vmatpush1.msra.mxu0 0.0
        %5786 = vmatprep.subr.mxu0 0.0
        %5787 = vmatpush1.msra.mxu0 0.0
        %5788 = vmatprep.subr.mxu0 0.0
        %5789 = vmatpush1.msra.mxu0 0.0
        %5790 = vmatprep.mubr.f32.mxu0 0.0
        %5791 = vmatmul.mubr.f32.gmra.mrb[0].mxu0 %v5369
        %v5792 = vpop.f32.mrb[0].mxu0
        %v5793 = vadd.f32 %v4654, %v5792
        %v5794 = vpop.f32.mrb[0].mxu0
        %v5795 = vadd.f32 %v4656, %v5794
        %5796 = vdwg.mxu0
        %5797 = vmatprep.subr.mxu0 %v1374
        %5798 = vmatpush1.msra.mxu0 %v1373
        %5799 = vmatprep.subr.mxu0 %v1406
        %5800 = vmatpush1.msra.mxu0 %v1405
        %5801 = vmatprep.subr.mxu0 %v1438
        %5802 = vmatpush1.msra.mxu0 %v1437
        %5803 = vmatprep.subr.mxu0 %v1470
        %5804 = vmatpush1.msra.mxu0 %v1469
        %5805 = vmatprep.subr.mxu0 0.0
        %5806 = vmatpush1.msra.mxu0 0.0
        %5807 = vmatprep.subr.mxu0 0.0
        %5808 = vmatpush1.msra.mxu0 0.0
        %5809 = vmatprep.subr.mxu0 0.0
        %5810 = vmatpush1.msra.mxu0 0.0
        %5811 = vmatprep.subr.mxu0 0.0
        %5812 = vmatpush1.msra.mxu0 0.0
        %5813 = vmatprep.subr.mxu0 0.0
        %5814 = vmatpush1.msra.mxu0 0.0
        %5815 = vmatprep.subr.mxu0 0.0
        %5816 = vmatpush1.msra.mxu0 0.0
        %5817 = vmatprep.subr.mxu0 0.0
        %5818 = vmatpush1.msra.mxu0 0.0
        %5819 = vmatprep.subr.mxu0 0.0
        %5820 = vmatpush1.msra.mxu0 0.0
        %5821 = vmatprep.subr.mxu0 0.0
        %5822 = vmatpush1.msra.mxu0 0.0
        %5823 = vmatprep.subr.mxu0 0.0
        %5824 = vmatpush1.msra.mxu0 0.0
        %5825 = vmatprep.subr.mxu0 0.0
        %5826 = vmatpush1.msra.mxu0 0.0
        %5827 = vmatprep.subr.mxu0 0.0
        %5828 = vmatpush1.msra.mxu0 0.0
        %5829 = vmatprep.subr.mxu0 0.0
        %5830 = vmatpush1.msra.mxu0 0.0
        %5831 = vmatprep.subr.mxu0 0.0
        %5832 = vmatpush1.msra.mxu0 0.0
        %5833 = vmatprep.subr.mxu0 0.0
        %5834 = vmatpush1.msra.mxu0 0.0
        %5835 = vmatprep.subr.mxu0 0.0
        %5836 = vmatpush1.msra.mxu0 0.0
        %5837 = vmatprep.subr.mxu0 0.0
        %5838 = vmatpush1.msra.mxu0 0.0
        %5839 = vmatprep.subr.mxu0 0.0
        %5840 = vmatpush1.msra.mxu0 0.0
        %5841 = vmatprep.subr.mxu0 0.0
        %5842 = vmatpush1.msra.mxu0 0.0
        %5843 = vmatprep.subr.mxu0 0.0
        %5844 = vmatpush1.msra.mxu0 0.0
        %5845 = vmatprep.subr.mxu0 0.0
        %5846 = vmatpush1.msra.mxu0 0.0
        %5847 = vmatprep.subr.mxu0 0.0
        %5848 = vmatpush1.msra.mxu0 0.0
        %5849 = vmatprep.subr.mxu0 0.0
        %5850 = vmatpush1.msra.mxu0 0.0
        %5851 = vmatprep.subr.mxu0 0.0
        %5852 = vmatpush1.msra.mxu0 0.0
        %5853 = vmatprep.subr.mxu0 0.0
        %5854 = vmatpush1.msra.mxu0 0.0
        %5855 = vmatprep.subr.mxu0 0.0
        %5856 = vmatpush1.msra.mxu0 0.0
        %5857 = vmatprep.subr.mxu0 0.0
        %5858 = vmatpush1.msra.mxu0 0.0
        %5859 = vmatprep.subr.mxu0 0.0
        %5860 = vmatpush1.msra.mxu0 0.0
        %5861 = vmatprep.mubr.f32.mxu0 0.0
        %5862 = vmatmul.mubr.f32.gmra.mrb[0].mxu0 %v5369
        %v5863 = vpop.f32.mrb[0].mxu0
        %v5864 = vadd.f32 %v4725, %v5863
        %v5865 = vpop.f32.mrb[0].mxu0
        %v5866 = vadd.f32 %v4727, %v5865
        %5867 = vdwg.mxu0
        %5868 = vmatprep.subr.mxu0 %v1376
        %5869 = vmatpush1.msra.mxu0 %v1375
        %5870 = vmatprep.subr.mxu0 %v1408
        %5871 = vmatpush1.msra.mxu0 %v1407
        %5872 = vmatprep.subr.mxu0 %v1440
        %5873 = vmatpush1.msra.mxu0 %v1439
        %5874 = vmatprep.subr.mxu0 %v1472
        %5875 = vmatpush1.msra.mxu0 %v1471
        %5876 = vmatprep.subr.mxu0 0.0
        %5877 = vmatpush1.msra.mxu0 0.0
        %5878 = vmatprep.subr.mxu0 0.0
        %5879 = vmatpush1.msra.mxu0 0.0
        %5880 = vmatprep.subr.mxu0 0.0
        %5881 = vmatpush1.msra.mxu0 0.0
        %5882 = vmatprep.subr.mxu0 0.0
        %5883 = vmatpush1.msra.mxu0 0.0
        %5884 = vmatprep.subr.mxu0 0.0
        %5885 = vmatpush1.msra.mxu0 0.0
        %5886 = vmatprep.subr.mxu0 0.0
        %5887 = vmatpush1.msra.mxu0 0.0
        %5888 = vmatprep.subr.mxu0 0.0
        %5889 = vmatpush1.msra.mxu0 0.0
        %5890 = vmatprep.subr.mxu0 0.0
        %5891 = vmatpush1.msra.mxu0 0.0
        %5892 = vmatprep.subr.mxu0 0.0
        %5893 = vmatpush1.msra.mxu0 0.0
        %5894 = vmatprep.subr.mxu0 0.0
        %5895 = vmatpush1.msra.mxu0 0.0
        %5896 = vmatprep.subr.mxu0 0.0
        %5897 = vmatpush1.msra.mxu0 0.0
        %5898 = vmatprep.subr.mxu0 0.0
        %5899 = vmatpush1.msra.mxu0 0.0
        %5900 = vmatprep.subr.mxu0 0.0
        %5901 = vmatpush1.msra.mxu0 0.0
        %5902 = vmatprep.subr.mxu0 0.0
        %5903 = vmatpush1.msra.mxu0 0.0
        %5904 = vmatprep.subr.mxu0 0.0
        %5905 = vmatpush1.msra.mxu0 0.0
        %5906 = vmatprep.subr.mxu0 0.0
        %5907 = vmatpush1.msra.mxu0 0.0
        %5908 = vmatprep.subr.mxu0 0.0
        %5909 = vmatpush1.msra.mxu0 0.0
        %5910 = vmatprep.subr.mxu0 0.0
        %5911 = vmatpush1.msra.mxu0 0.0
        %5912 = vmatprep.subr.mxu0 0.0
        %5913 = vmatpush1.msra.mxu0 0.0
        %5914 = vmatprep.subr.mxu0 0.0
        %5915 = vmatpush1.msra.mxu0 0.0
        %5916 = vmatprep.subr.mxu0 0.0
        %5917 = vmatpush1.msra.mxu0 0.0
        %5918 = vmatprep.subr.mxu0 0.0
        %5919 = vmatpush1.msra.mxu0 0.0
        %5920 = vmatprep.subr.mxu0 0.0
        %5921 = vmatpush1.msra.mxu0 0.0
        %5922 = vmatprep.subr.mxu0 0.0
        %5923 = vmatpush1.msra.mxu0 0.0
        %5924 = vmatprep.subr.mxu0 0.0
        %5925 = vmatpush1.msra.mxu0 0.0
        %5926 = vmatprep.subr.mxu0 0.0
        %5927 = vmatpush1.msra.mxu0 0.0
        %5928 = vmatprep.subr.mxu0 0.0
        %5929 = vmatpush1.msra.mxu0 0.0
        %5930 = vmatprep.subr.mxu0 0.0
        %5931 = vmatpush1.msra.mxu0 0.0
        %5932 = vmatprep.mubr.f32.mxu0 0.0
        %5933 = vmatmul.mubr.f32.gmra.mrb[0].mxu0 %v5369
        %v5934 = vpop.f32.mrb[0].mxu0
        %v5935 = vadd.f32 %v4796, %v5934
        %v5936 = vpop.f32.mrb[0].mxu0
        %v5937 = vadd.f32 %v4798, %v5936
        %5938 = vdwg.mxu0
        %5939 = vmatprep.subr.mxu0 %v1378
        %5940 = vmatpush1.msra.mxu0 %v1377
        %5941 = vmatprep.subr.mxu0 %v1410
        %5942 = vmatpush1.msra.mxu0 %v1409
        %5943 = vmatprep.subr.mxu0 %v1442
        %5944 = vmatpush1.msra.mxu0 %v1441
        %5945 = vmatprep.subr.mxu0 %v1474
        %5946 = vmatpush1.msra.mxu0 %v1473
        %5947 = vmatprep.subr.mxu0 0.0
        %5948 = vmatpush1.msra.mxu0 0.0
        %5949 = vmatprep.subr.mxu0 0.0
        %5950 = vmatpush1.msra.mxu0 0.0
        %5951 = vmatprep.subr.mxu0 0.0
        %5952 = vmatpush1.msra.mxu0 0.0
        %5953 = vmatprep.subr.mxu0 0.0
        %5954 = vmatpush1.msra.mxu0 0.0
        %5955 = vmatprep.subr.mxu0 0.0
        %5956 = vmatpush1.msra.mxu0 0.0
        %5957 = vmatprep.subr.mxu0 0.0
        %5958 = vmatpush1.msra.mxu0 0.0
        %5959 = vmatprep.subr.mxu0 0.0
        %5960 = vmatpush1.msra.mxu0 0.0
        %5961 = vmatprep.subr.mxu0 0.0
        %5962 = vmatpush1.msra.mxu0 0.0
        %5963 = vmatprep.subr.mxu0 0.0
        %5964 = vmatpush1.msra.mxu0 0.0
        %5965 = vmatprep.subr.mxu0 0.0
        %5966 = vmatpush1.msra.mxu0 0.0
        %5967 = vmatprep.subr.mxu0 0.0
        %5968 = vmatpush1.msra.mxu0 0.0
        %5969 = vmatprep.subr.mxu0 0.0
        %5970 = vmatpush1.msra.mxu0 0.0
        %5971 = vmatprep.subr.mxu0 0.0
        %5972 = vmatpush1.msra.mxu0 0.0
        %5973 = vmatprep.subr.mxu0 0.0
        %5974 = vmatpush1.msra.mxu0 0.0
        %5975 = vmatprep.subr.mxu0 0.0
        %5976 = vmatpush1.msra.mxu0 0.0
        %5977 = vmatprep.subr.mxu0 0.0
        %5978 = vmatpush1.msra.mxu0 0.0
        %5979 = vmatprep.subr.mxu0 0.0
        %5980 = vmatpush1.msra.mxu0 0.0
        %5981 = vmatprep.subr.mxu0 0.0
        %5982 = vmatpush1.msra.mxu0 0.0
        %5983 = vmatprep.subr.mxu0 0.0
        %5984 = vmatpush1.msra.mxu0 0.0
        %5985 = vmatprep.subr.mxu0 0.0
        %5986 = vmatpush1.msra.mxu0 0.0
        %5987 = vmatprep.subr.mxu0 0.0
        %5988 = vmatpush1.msra.mxu0 0.0
        %5989 = vmatprep.subr.mxu0 0.0
        %5990 = vmatpush1.msra.mxu0 0.0
        %5991 = vmatprep.subr.mxu0 0.0
        %5992 = vmatpush1.msra.mxu0 0.0
        %5993 = vmatprep.subr.mxu0 0.0
        %5994 = vmatpush1.msra.mxu0 0.0
        %5995 = vmatprep.subr.mxu0 0.0
        %5996 = vmatpush1.msra.mxu0 0.0
        %5997 = vmatprep.subr.mxu0 0.0
        %5998 = vmatpush1.msra.mxu0 0.0
        %5999 = vmatprep.subr.mxu0 0.0
        %6000 = vmatpush1.msra.mxu0 0.0
        %6001 = vmatprep.subr.mxu0 0.0
        %6002 = vmatpush1.msra.mxu0 0.0
        %6003 = vmatprep.mubr.f32.mxu0 0.0
        %6004 = vmatmul.mubr.f32.gmra.mrb[0].mxu0 %v5369
        %v6005 = vpop.f32.mrb[0].mxu0
        %v6006 = vadd.f32 %v4867, %v6005
        %v6007 = vpop.f32.mrb[0].mxu0
        %v6008 = vadd.f32 %v4869, %v6007
        %6009 = vdwg.mxu0
        %6010 = vmatprep.subr.mxu0 %v1380
        %6011 = vmatpush1.msra.mxu0 %v1379
        %6012 = vmatprep.subr.mxu0 %v1412
        %6013 = vmatpush1.msra.mxu0 %v1411
        %6014 = vmatprep.subr.mxu0 %v1444
        %6015 = vmatpush1.msra.mxu0 %v1443
        %6016 = vmatprep.subr.mxu0 %v1476
        %6017 = vmatpush1.msra.mxu0 %v1475
        %6018 = vmatprep.subr.mxu0 0.0
        %6019 = vmatpush1.msra.mxu0 0.0
        %6020 = vmatprep.subr.mxu0 0.0
        %6021 = vmatpush1.msra.mxu0 0.0
        %6022 = vmatprep.subr.mxu0 0.0
        %6023 = vmatpush1.msra.mxu0 0.0
        %6024 = vmatprep.subr.mxu0 0.0
        %6025 = vmatpush1.msra.mxu0 0.0
        %6026 = vmatprep.subr.mxu0 0.0
        %6027 = vmatpush1.msra.mxu0 0.0
        %6028 = vmatprep.subr.mxu0 0.0
        %6029 = vmatpush1.msra.mxu0 0.0
        %6030 = vmatprep.subr.mxu0 0.0
        %6031 = vmatpush1.msra.mxu0 0.0
        %6032 = vmatprep.subr.mxu0 0.0
        %6033 = vmatpush1.msra.mxu0 0.0
        %6034 = vmatprep.subr.mxu0 0.0
        %6035 = vmatpush1.msra.mxu0 0.0
        %6036 = vmatprep.subr.mxu0 0.0
        %6037 = vmatpush1.msra.mxu0 0.0
        %6038 = vmatprep.subr.mxu0 0.0
        %6039 = vmatpush1.msra.mxu0 0.0
        %6040 = vmatprep.subr.mxu0 0.0
        %6041 = vmatpush1.msra.mxu0 0.0
        %6042 = vmatprep.subr.mxu0 0.0
        %6043 = vmatpush1.msra.mxu0 0.0
        %6044 = vmatprep.subr.mxu0 0.0
        %6045 = vmatpush1.msra.mxu0 0.0
        %6046 = vmatprep.subr.mxu0 0.0
        %6047 = vmatpush1.msra.mxu0 0.0
        %6048 = vmatprep.subr.mxu0 0.0
        %6049 = vmatpush1.msra.mxu0 0.0
        %6050 = vmatprep.subr.mxu0 0.0
        %6051 = vmatpush1.msra.mxu0 0.0
        %6052 = vmatprep.subr.mxu0 0.0
        %6053 = vmatpush1.msra.mxu0 0.0
        %6054 = vmatprep.subr.mxu0 0.0
        %6055 = vmatpush1.msra.mxu0 0.0
        %6056 = vmatprep.subr.mxu0 0.0
        %6057 = vmatpush1.msra.mxu0 0.0
        %6058 = vmatprep.subr.mxu0 0.0
        %6059 = vmatpush1.msra.mxu0 0.0
        %6060 = vmatprep.subr.mxu0 0.0
        %6061 = vmatpush1.msra.mxu0 0.0
        %6062 = vmatprep.subr.mxu0 0.0
        %6063 = vmatpush1.msra.mxu0 0.0
        %6064 = vmatprep.subr.mxu0 0.0
        %6065 = vmatpush1.msra.mxu0 0.0
        %6066 = vmatprep.subr.mxu0 0.0
        %6067 = vmatpush1.msra.mxu0 0.0
        %6068 = vmatprep.subr.mxu0 0.0
        %6069 = vmatpush1.msra.mxu0 0.0
        %6070 = vmatprep.subr.mxu0 0.0
        %6071 = vmatpush1.msra.mxu0 0.0
        %6072 = vmatprep.subr.mxu0 0.0
        %6073 = vmatpush1.msra.mxu0 0.0
        %6074 = vmatprep.mubr.f32.mxu0 0.0
        %6075 = vmatmul.mubr.f32.gmra.mrb[0].mxu0 %v5369
        %v6076 = vpop.f32.mrb[0].mxu0
        %v6077 = vadd.f32 %v4938, %v6076
        %v6078 = vpop.f32.mrb[0].mxu0
        %v6079 = vadd.f32 %v4940, %v6078
        %6080 = vdwg.mxu0
        %6081 = vmatprep.subr.mxu0 %v1382
        %6082 = vmatpush1.msra.mxu0 %v1381
        %6083 = vmatprep.subr.mxu0 %v1414
        %6084 = vmatpush1.msra.mxu0 %v1413
        %6085 = vmatprep.subr.mxu0 %v1446
        %6086 = vmatpush1.msra.mxu0 %v1445
        %6087 = vmatprep.subr.mxu0 %v1478
        %6088 = vmatpush1.msra.mxu0 %v1477
        %6089 = vmatprep.subr.mxu0 0.0
        %6090 = vmatpush1.msra.mxu0 0.0
        %6091 = vmatprep.subr.mxu0 0.0
        %6092 = vmatpush1.msra.mxu0 0.0
        %6093 = vmatprep.subr.mxu0 0.0
        %6094 = vmatpush1.msra.mxu0 0.0
        %6095 = vmatprep.subr.mxu0 0.0
        %6096 = vmatpush1.msra.mxu0 0.0
        %6097 = vmatprep.subr.mxu0 0.0
        %6098 = vmatpush1.msra.mxu0 0.0
        %6099 = vmatprep.subr.mxu0 0.0
        %6100 = vmatpush1.msra.mxu0 0.0
        %6101 = vmatprep.subr.mxu0 0.0
        %6102 = vmatpush1.msra.mxu0 0.0
        %6103 = vmatprep.subr.mxu0 0.0
        %6104 = vmatpush1.msra.mxu0 0.0
        %6105 = vmatprep.subr.mxu0 0.0
        %6106 = vmatpush1.msra.mxu0 0.0
        %6107 = vmatprep.subr.mxu0 0.0
        %6108 = vmatpush1.msra.mxu0 0.0
        %6109 = vmatprep.subr.mxu0 0.0
        %6110 = vmatpush1.msra.mxu0 0.0
        %6111 = vmatprep.subr.mxu0 0.0
        %6112 = vmatpush1.msra.mxu0 0.0
        %6113 = vmatprep.subr.mxu0 0.0
        %6114 = vmatpush1.msra.mxu0 0.0
        %6115 = vmatprep.subr.mxu0 0.0
        %6116 = vmatpush1.msra.mxu0 0.0
        %6117 = vmatprep.subr.mxu0 0.0
        %6118 = vmatpush1.msra.mxu0 0.0
        %6119 = vmatprep.subr.mxu0 0.0
        %6120 = vmatpush1.msra.mxu0 0.0
        %6121 = vmatprep.subr.mxu0 0.0
        %6122 = vmatpush1.msra.mxu0 0.0
        %6123 = vmatprep.subr.mxu0 0.0
        %6124 = vmatpush1.msra.mxu0 0.0
        %6125 = vmatprep.subr.mxu0 0.0
        %6126 = vmatpush1.msra.mxu0 0.0
        %6127 = vmatprep.subr.mxu0 0.0
        %6128 = vmatpush1.msra.mxu0 0.0
        %6129 = vmatprep.subr.mxu0 0.0
        %6130 = vmatpush1.msra.mxu0 0.0
        %6131 = vmatprep.subr.mxu0 0.0
        %6132 = vmatpush1.msra.mxu0 0.0
        %6133 = vmatprep.subr.mxu0 0.0
        %6134 = vmatpush1.msra.mxu0 0.0
        %6135 = vmatprep.subr.mxu0 0.0
        %6136 = vmatpush1.msra.mxu0 0.0
        %6137 = vmatprep.subr.mxu0 0.0
        %6138 = vmatpush1.msra.mxu0 0.0
        %6139 = vmatprep.subr.mxu0 0.0
        %6140 = vmatpush1.msra.mxu0 0.0
        %6141 = vmatprep.subr.mxu0 0.0
        %6142 = vmatpush1.msra.mxu0 0.0
        %6143 = vmatprep.subr.mxu0 0.0
        %6144 = vmatpush1.msra.mxu0 0.0
        %6145 = vmatprep.mubr.f32.mxu0 0.0
        %6146 = vmatmul.mubr.f32.gmra.mrb[0].mxu0 %v5369
        %v6147 = vpop.f32.mrb[0].mxu0
        %v6148 = vadd.f32 %v5009, %v6147
        %v6149 = vpop.f32.mrb[0].mxu0
        %v6150 = vadd.f32 %v5011, %v6149
        %6151 = vdwg.mxu0
        %6152 = vmatprep.subr.mxu0 %v1384
        %6153 = vmatpush1.msra.mxu0 %v1383
        %6154 = vmatprep.subr.mxu0 %v1416
        %6155 = vmatpush1.msra.mxu0 %v1415
        %6156 = vmatprep.subr.mxu0 %v1448
        %6157 = vmatpush1.msra.mxu0 %v1447
        %6158 = vmatprep.subr.mxu0 %v1480
        %6159 = vmatpush1.msra.mxu0 %v1479
        %6160 = vmatprep.subr.mxu0 0.0
        %6161 = vmatpush1.msra.mxu0 0.0
        %6162 = vmatprep.subr.mxu0 0.0
        %6163 = vmatpush1.msra.mxu0 0.0
        %6164 = vmatprep.subr.mxu0 0.0
        %6165 = vmatpush1.msra.mxu0 0.0
        %6166 = vmatprep.subr.mxu0 0.0
        %6167 = vmatpush1.msra.mxu0 0.0
        %6168 = vmatprep.subr.mxu0 0.0
        %6169 = vmatpush1.msra.mxu0 0.0
        %6170 = vmatprep.subr.mxu0 0.0
        %6171 = vmatpush1.msra.mxu0 0.0
        %6172 = vmatprep.subr.mxu0 0.0
        %6173 = vmatpush1.msra.mxu0 0.0
        %6174 = vmatprep.subr.mxu0 0.0
        %6175 = vmatpush1.msra.mxu0 0.0
        %6176 = vmatprep.subr.mxu0 0.0
        %6177 = vmatpush1.msra.mxu0 0.0
        %6178 = vmatprep.subr.mxu0 0.0
        %6179 = vmatpush1.msra.mxu0 0.0
        %6180 = vmatprep.subr.mxu0 0.0
        %6181 = vmatpush1.msra.mxu0 0.0
        %6182 = vmatprep.subr.mxu0 0.0
        %6183 = vmatpush1.msra.mxu0 0.0
        %6184 = vmatprep.subr.mxu0 0.0
        %6185 = vmatpush1.msra.mxu0 0.0
        %6186 = vmatprep.subr.mxu0 0.0
        %6187 = vmatpush1.msra.mxu0 0.0
        %6188 = vmatprep.subr.mxu0 0.0
        %6189 = vmatpush1.msra.mxu0 0.0
        %6190 = vmatprep.subr.mxu0 0.0
        %6191 = vmatpush1.msra.mxu0 0.0
        %6192 = vmatprep.subr.mxu0 0.0
        %6193 = vmatpush1.msra.mxu0 0.0
        %6194 = vmatprep.subr.mxu0 0.0
        %6195 = vmatpush1.msra.mxu0 0.0
        %6196 = vmatprep.subr.mxu0 0.0
        %6197 = vmatpush1.msra.mxu0 0.0
        %6198 = vmatprep.subr.mxu0 0.0
        %6199 = vmatpush1.msra.mxu0 0.0
        %6200 = vmatprep.subr.mxu0 0.0
        %6201 = vmatpush1.msra.mxu0 0.0
        %6202 = vmatprep.subr.mxu0 0.0
        %6203 = vmatpush1.msra.mxu0 0.0
        %6204 = vmatprep.subr.mxu0 0.0
        %6205 = vmatpush1.msra.mxu0 0.0
        %6206 = vmatprep.subr.mxu0 0.0
        %6207 = vmatpush1.msra.mxu0 0.0
        %6208 = vmatprep.subr.mxu0 0.0
        %6209 = vmatpush1.msra.mxu0 0.0
        %6210 = vmatprep.subr.mxu0 0.0
        %6211 = vmatpush1.msra.mxu0 0.0
        %6212 = vmatprep.subr.mxu0 0.0
        %6213 = vmatpush1.msra.mxu0 0.0
        %6214 = vmatprep.subr.mxu0 0.0
        %6215 = vmatpush1.msra.mxu0 0.0
        %6216 = vmatprep.mubr.f32.mxu0 0.0
        %6217 = vmatmul.mubr.f32.gmra.mrb[0].mxu0 %v5369
        %v6218 = vpop.f32.mrb[0].mxu0
        %v6219 = vadd.f32 %v5080, %v6218
        %v6220 = vpop.f32.mrb[0].mxu0
        %v6221 = vadd.f32 %v5082, %v6220
        %6222 = vdwg.mxu0
        %6223 = vmatprep.subr.mxu0 %v1386
        %6224 = vmatpush1.msra.mxu0 %v1385
        %6225 = vmatprep.subr.mxu0 %v1418
        %6226 = vmatpush1.msra.mxu0 %v1417
        %6227 = vmatprep.subr.mxu0 %v1450
        %6228 = vmatpush1.msra.mxu0 %v1449
        %6229 = vmatprep.subr.mxu0 %v1482
        %6230 = vmatpush1.msra.mxu0 %v1481
        %6231 = vmatprep.subr.mxu0 0.0
        %6232 = vmatpush1.msra.mxu0 0.0
        %6233 = vmatprep.subr.mxu0 0.0
        %6234 = vmatpush1.msra.mxu0 0.0
        %6235 = vmatprep.subr.mxu0 0.0
        %6236 = vmatpush1.msra.mxu0 0.0
        %6237 = vmatprep.subr.mxu0 0.0
        %6238 = vmatpush1.msra.mxu0 0.0
        %6239 = vmatprep.subr.mxu0 0.0
        %6240 = vmatpush1.msra.mxu0 0.0
        %6241 = vmatprep.subr.mxu0 0.0
        %6242 = vmatpush1.msra.mxu0 0.0
        %6243 = vmatprep.subr.mxu0 0.0
        %6244 = vmatpush1.msra.mxu0 0.0
        %6245 = vmatprep.subr.mxu0 0.0
        %6246 = vmatpush1.msra.mxu0 0.0
        %6247 = vmatprep.subr.mxu0 0.0
        %6248 = vmatpush1.msra.mxu0 0.0
        %6249 = vmatprep.subr.mxu0 0.0
        %6250 = vmatpush1.msra.mxu0 0.0
        %6251 = vmatprep.subr.mxu0 0.0
        %6252 = vmatpush1.msra.mxu0 0.0
        %6253 = vmatprep.subr.mxu0 0.0
        %6254 = vmatpush1.msra.mxu0 0.0
        %6255 = vmatprep.subr.mxu0 0.0
        %6256 = vmatpush1.msra.mxu0 0.0
        %6257 = vmatprep.subr.mxu0 0.0
        %6258 = vmatpush1.msra.mxu0 0.0
        %6259 = vmatprep.subr.mxu0 0.0
        %6260 = vmatpush1.msra.mxu0 0.0
        %6261 = vmatprep.subr.mxu0 0.0
        %6262 = vmatpush1.msra.mxu0 0.0
        %6263 = vmatprep.subr.mxu0 0.0
        %6264 = vmatpush1.msra.mxu0 0.0
        %6265 = vmatprep.subr.mxu0 0.0
        %6266 = vmatpush1.msra.mxu0 0.0
        %6267 = vmatprep.subr.mxu0 0.0
        %6268 = vmatpush1.msra.mxu0 0.0
        %6269 = vmatprep.subr.mxu0 0.0
        %6270 = vmatpush1.msra.mxu0 0.0
        %6271 = vmatprep.subr.mxu0 0.0
        %6272 = vmatpush1.msra.mxu0 0.0
        %6273 = vmatprep.subr.mxu0 0.0
        %6274 = vmatpush1.msra.mxu0 0.0
        %6275 = vmatprep.subr.mxu0 0.0
        %6276 = vmatpush1.msra.mxu0 0.0
        %6277 = vmatprep.subr.mxu0 0.0
        %6278 = vmatpush1.msra.mxu0 0.0
        %6279 = vmatprep.subr.mxu0 0.0
        %6280 = vmatpush1.msra.mxu0 0.0
        %6281 = vmatprep.subr.mxu0 0.0
        %6282 = vmatpush1.msra.mxu0 0.0
        %6283 = vmatprep.subr.mxu0 0.0
        %6284 = vmatpush1.msra.mxu0 0.0
        %6285 = vmatprep.subr.mxu0 0.0
        %6286 = vmatpush1.msra.mxu0 0.0
        %6287 = vmatprep.mubr.f32.mxu0 0.0
        %6288 = vmatmul.mubr.f32.gmra.mrb[0].mxu0 %v5369
        %v6289 = vpop.f32.mrb[0].mxu0
        %v6290 = vadd.f32 %v5151, %v6289
        %v6291 = vpop.f32.mrb[0].mxu0
        %v6292 = vadd.f32 %v5153, %v6291
        %6293 = vdwg.mxu0
        %6294 = vmatprep.subr.mxu0 %v1388
        %6295 = vmatpush1.msra.mxu0 %v1387
        %6296 = vmatprep.subr.mxu0 %v1420
        %6297 = vmatpush1.msra.mxu0 %v1419
        %6298 = vmatprep.subr.mxu0 %v1452
        %6299 = vmatpush1.msra.mxu0 %v1451
        %6300 = vmatprep.subr.mxu0 %v1484
        %6301 = vmatpush1.msra.mxu0 %v1483
        %6302 = vmatprep.subr.mxu0 0.0
        %6303 = vmatpush1.msra.mxu0 0.0
        %6304 = vmatprep.subr.mxu0 0.0
        %6305 = vmatpush1.msra.mxu0 0.0
        %6306 = vmatprep.subr.mxu0 0.0
        %6307 = vmatpush1.msra.mxu0 0.0
        %6308 = vmatprep.subr.mxu0 0.0
        %6309 = vmatpush1.msra.mxu0 0.0
        %6310 = vmatprep.subr.mxu0 0.0
        %6311 = vmatpush1.msra.mxu0 0.0
        %6312 = vmatprep.subr.mxu0 0.0
        %6313 = vmatpush1.msra.mxu0 0.0
        %6314 = vmatprep.subr.mxu0 0.0
        %6315 = vmatpush1.msra.mxu0 0.0
        %6316 = vmatprep.subr.mxu0 0.0
        %6317 = vmatpush1.msra.mxu0 0.0
        %6318 = vmatprep.subr.mxu0 0.0
        %6319 = vmatpush1.msra.mxu0 0.0
        %6320 = vmatprep.subr.mxu0 0.0
        %6321 = vmatpush1.msra.mxu0 0.0
        %6322 = vmatprep.subr.mxu0 0.0
        %6323 = vmatpush1.msra.mxu0 0.0
        %6324 = vmatprep.subr.mxu0 0.0
        %6325 = vmatpush1.msra.mxu0 0.0
        %6326 = vmatprep.subr.mxu0 0.0
        %6327 = vmatpush1.msra.mxu0 0.0
        %6328 = vmatprep.subr.mxu0 0.0
        %6329 = vmatpush1.msra.mxu0 0.0
        %6330 = vmatprep.subr.mxu0 0.0
        %6331 = vmatpush1.msra.mxu0 0.0
        %6332 = vmatprep.subr.mxu0 0.0
        %6333 = vmatpush1.msra.mxu0 0.0
        %6334 = vmatprep.subr.mxu0 0.0
        %6335 = vmatpush1.msra.mxu0 0.0
        %6336 = vmatprep.subr.mxu0 0.0
        %6337 = vmatpush1.msra.mxu0 0.0
        %6338 = vmatprep.subr.mxu0 0.0
        %6339 = vmatpush1.msra.mxu0 0.0
        %6340 = vmatprep.subr.mxu0 0.0
        %6341 = vmatpush1.msra.mxu0 0.0
        %6342 = vmatprep.subr.mxu0 0.0
        %6343 = vmatpush1.msra.mxu0 0.0
        %6344 = vmatprep.subr.mxu0 0.0
        %6345 = vmatpush1.msra.mxu0 0.0
        %6346 = vmatprep.subr.mxu0 0.0
        %6347 = vmatpush1.msra.mxu0 0.0
        %6348 = vmatprep.subr.mxu0 0.0
        %6349 = vmatpush1.msra.mxu0 0.0
        %6350 = vmatprep.subr.mxu0 0.0
        %6351 = vmatpush1.msra.mxu0 0.0
        %6352 = vmatprep.subr.mxu0 0.0
        %6353 = vmatpush1.msra.mxu0 0.0
        %6354 = vmatprep.subr.mxu0 0.0
        %6355 = vmatpush1.msra.mxu0 0.0
        %6356 = vmatprep.subr.mxu0 0.0
        %6357 = vmatpush1.msra.mxu0 0.0
        %6358 = vmatprep.mubr.f32.mxu0 0.0
        %6359 = vmatmul.mubr.f32.gmra.mrb[0].mxu0 %v5369
        %v6360 = vpop.f32.mrb[0].mxu0
        %v6361 = vadd.f32 %v5222, %v6360
        %v6362 = vpop.f32.mrb[0].mxu0
        %v6363 = vadd.f32 %v5224, %v6362
        %6364 = vdwg.mxu0
        %6365 = vmatprep.subr.mxu0 %v1390
        %6366 = vmatpush1.msra.mxu0 %v1389
        %6367 = vmatprep.subr.mxu0 %v1422
        %6368 = vmatpush1.msra.mxu0 %v1421
        %6369 = vmatprep.subr.mxu0 %v1454
        %6370 = vmatpush1.msra.mxu0 %v1453
        %6371 = vmatprep.subr.mxu0 %v1486
        %6372 = vmatpush1.msra.mxu0 %v1485
        %6373 = vmatprep.subr.mxu0 0.0
        %6374 = vmatpush1.msra.mxu0 0.0
        %6375 = vmatprep.subr.mxu0 0.0
        %6376 = vmatpush1.msra.mxu0 0.0
        %6377 = vmatprep.subr.mxu0 0.0
        %6378 = vmatpush1.msra.mxu0 0.0
        %6379 = vmatprep.subr.mxu0 0.0
        %6380 = vmatpush1.msra.mxu0 0.0
        %6381 = vmatprep.subr.mxu0 0.0
        %6382 = vmatpush1.msra.mxu0 0.0
        %6383 = vmatprep.subr.mxu0 0.0
        %6384 = vmatpush1.msra.mxu0 0.0
        %6385 = vmatprep.subr.mxu0 0.0
        %6386 = vmatpush1.msra.mxu0 0.0
        %6387 = vmatprep.subr.mxu0 0.0
        %6388 = vmatpush1.msra.mxu0 0.0
        %6389 = vmatprep.subr.mxu0 0.0
        %6390 = vmatpush1.msra.mxu0 0.0
        %6391 = vmatprep.subr.mxu0 0.0
        %6392 = vmatpush1.msra.mxu0 0.0
        %6393 = vmatprep.subr.mxu0 0.0
        %6394 = vmatpush1.msra.mxu0 0.0
        %6395 = vmatprep.subr.mxu0 0.0
        %6396 = vmatpush1.msra.mxu0 0.0
        %6397 = vmatprep.subr.mxu0 0.0
        %6398 = vmatpush1.msra.mxu0 0.0
        %6399 = vmatprep.subr.mxu0 0.0
        %6400 = vmatpush1.msra.mxu0 0.0
        %6401 = vmatprep.subr.mxu0 0.0
        %6402 = vmatpush1.msra.mxu0 0.0
        %6403 = vmatprep.subr.mxu0 0.0
        %6404 = vmatpush1.msra.mxu0 0.0
        %6405 = vmatprep.subr.mxu0 0.0
        %6406 = vmatpush1.msra.mxu0 0.0
        %6407 = vmatprep.subr.mxu0 0.0
        %6408 = vmatpush1.msra.mxu0 0.0
        %6409 = vmatprep.subr.mxu0 0.0
        %6410 = vmatpush1.msra.mxu0 0.0
        %6411 = vmatprep.subr.mxu0 0.0
        %6412 = vmatpush1.msra.mxu0 0.0
        %6413 = vmatprep.subr.mxu0 0.0
        %6414 = vmatpush1.msra.mxu0 0.0
        %6415 = vmatprep.subr.mxu0 0.0
        %6416 = vmatpush1.msra.mxu0 0.0
        %6417 = vmatprep.subr.mxu0 0.0
        %6418 = vmatpush1.msra.mxu0 0.0
        %6419 = vmatprep.subr.mxu0 0.0
        %6420 = vmatpush1.msra.mxu0 0.0
        %6421 = vmatprep.subr.mxu0 0.0
        %6422 = vmatpush1.msra.mxu0 0.0
        %6423 = vmatprep.subr.mxu0 0.0
        %6424 = vmatpush1.msra.mxu0 0.0
        %6425 = vmatprep.subr.mxu0 0.0
        %6426 = vmatpush1.msra.mxu0 0.0
        %6427 = vmatprep.subr.mxu0 0.0
        %6428 = vmatpush1.msra.mxu0 0.0
        %6429 = vmatprep.mubr.f32.mxu0 0.0
        %6430 = vmatmul.mubr.f32.gmra.mrb[0].mxu0 %v5369
        %v6431 = vpop.f32.mrb[0].mxu0
        %v6432 = vadd.f32 %v5293, %v6431
        %v6433 = vpop.f32.mrb[0].mxu0
        %v6434 = vadd.f32 %v5295, %v6433
        %6435 = vdwg.mxu0
        %6436 = vmatprep.subr.mxu0 %v1392
        %6437 = vmatpush1.msra.mxu0 %v1391
        %6438 = vmatprep.subr.mxu0 %v1424
        %6439 = vmatpush1.msra.mxu0 %v1423
        %6440 = vmatprep.subr.mxu0 %v1456
        %6441 = vmatpush1.msra.mxu0 %v1455
        %6442 = vmatprep.subr.mxu0 %v1488
        %6443 = vmatpush1.msra.mxu0 %v1487
        %6444 = vmatprep.subr.mxu0 0.0
        %6445 = vmatpush1.msra.mxu0 0.0
        %6446 = vmatprep.subr.mxu0 0.0
        %6447 = vmatpush1.msra.mxu0 0.0
        %6448 = vmatprep.subr.mxu0 0.0
        %6449 = vmatpush1.msra.mxu0 0.0
        %6450 = vmatprep.subr.mxu0 0.0
        %6451 = vmatpush1.msra.mxu0 0.0
        %6452 = vmatprep.subr.mxu0 0.0
        %6453 = vmatpush1.msra.mxu0 0.0
        %6454 = vmatprep.subr.mxu0 0.0
        %6455 = vmatpush1.msra.mxu0 0.0
        %6456 = vmatprep.subr.mxu0 0.0
        %6457 = vmatpush1.msra.mxu0 0.0
        %6458 = vmatprep.subr.mxu0 0.0
        %6459 = vmatpush1.msra.mxu0 0.0
        %6460 = vmatprep.subr.mxu0 0.0
        %6461 = vmatpush1.msra.mxu0 0.0
        %6462 = vmatprep.subr.mxu0 0.0
        %6463 = vmatpush1.msra.mxu0 0.0
        %6464 = vmatprep.subr.mxu0 0.0
        %6465 = vmatpush1.msra.mxu0 0.0
        %6466 = vmatprep.subr.mxu0 0.0
        %6467 = vmatpush1.msra.mxu0 0.0
        %6468 = vmatprep.subr.mxu0 0.0
        %6469 = vmatpush1.msra.mxu0 0.0
        %6470 = vmatprep.subr.mxu0 0.0
        %6471 = vmatpush1.msra.mxu0 0.0
        %6472 = vmatprep.subr.mxu0 0.0
        %6473 = vmatpush1.msra.mxu0 0.0
        %6474 = vmatprep.subr.mxu0 0.0
        %6475 = vmatpush1.msra.mxu0 0.0
        %6476 = vmatprep.subr.mxu0 0.0
        %6477 = vmatpush1.msra.mxu0 0.0
        %6478 = vmatprep.subr.mxu0 0.0
        %6479 = vmatpush1.msra.mxu0 0.0
        %6480 = vmatprep.subr.mxu0 0.0
        %6481 = vmatpush1.msra.mxu0 0.0
        %6482 = vmatprep.subr.mxu0 0.0
        %6483 = vmatpush1.msra.mxu0 0.0
        %6484 = vmatprep.subr.mxu0 0.0
        %6485 = vmatpush1.msra.mxu0 0.0
        %6486 = vmatprep.subr.mxu0 0.0
        %6487 = vmatpush1.msra.mxu0 0.0
        %6488 = vmatprep.subr.mxu0 0.0
        %6489 = vmatpush1.msra.mxu0 0.0
        %6490 = vmatprep.subr.mxu0 0.0
        %6491 = vmatpush1.msra.mxu0 0.0
        %6492 = vmatprep.subr.mxu0 0.0
        %6493 = vmatpush1.msra.mxu0 0.0
        %6494 = vmatprep.subr.mxu0 0.0
        %6495 = vmatpush1.msra.mxu0 0.0
        %6496 = vmatprep.subr.mxu0 0.0
        %6497 = vmatpush1.msra.mxu0 0.0
        %6498 = vmatprep.subr.mxu0 0.0
        %6499 = vmatpush1.msra.mxu0 0.0
        %6500 = vmatprep.mubr.f32.mxu0 0.0
        %6501 = vmatmul.mubr.f32.gmra.mrb[0].mxu0 %v5369
        %v6502 = vpop.f32.mrb[0].mxu0
        %v6503 = vadd.f32 %v5364, %v6502
        %v6504 = vpop.f32.mrb[0].mxu0
        %v6505 = vadd.f32 %v5366, %v6504
        %6506 = vdwg.mxu0
        %v6507 = vmul.f32 %v724, %v3063
        %v6508 = vmul.f32 %v728, %v3065
        %v6509 = vmul.f32 %v732, %v3140
        %v6510 = vmul.f32 %v736, %v3142
        %v6511 = vmul.f32 %v740, %v3217
        %v6512 = vmul.f32 %v744, %v3219
        %v6513 = vmul.f32 %v748, %v3294
        %v6514 = vmul.f32 %v752, %v3296
        %v6515 = vmul.f32 %v756, %v3371
        %v6516 = vmul.f32 %v760, %v3373
        %v6517 = vmul.f32 %v764, %v3448
        %v6518 = vmul.f32 %v768, %v3450
        %v6519 = vmul.f32 %v772, %v3525
        %v6520 = vmul.f32 %v776, %v3527
        %v6521 = vmul.f32 %v780, %v3602
        %v6522 = vmul.f32 %v784, %v3604
        %v6523 = vmul.f32 %v788, %v3679
        %v6524 = vmul.f32 %v792, %v3681
        %v6525 = vmul.f32 %v796, %v3756
        %v6526 = vmul.f32 %v800, %v3758
        %v6527 = vmul.f32 %v804, %v3833
        %v6528 = vmul.f32 %v808, %v3835
        %v6529 = vmul.f32 %v812, %v3910
        %v6530 = vmul.f32 %v816, %v3912
        %v6531 = vmul.f32 %v820, %v3987
        %v6532 = vmul.f32 %v824, %v3989
        %v6533 = vmul.f32 %v828, %v4064
        %v6534 = vmul.f32 %v832, %v4066
        %v6535 = vmul.f32 %v836, %v4141
        %v6536 = vmul.f32 %v840, %v4143
        %v6537 = vmul.f32 %v844, %v4218
        %v6538 = vmul.f32 %v848, %v4220
        %v6539 = vmul.f32 %v724, %v3069
        %v6540 = vmul.f32 %v728, %v3071
        %v6541 = vmul.f32 %v732, %v3146
        %v6542 = vmul.f32 %v736, %v3148
        %v6543 = vmul.f32 %v740, %v3223
        %v6544 = vmul.f32 %v744, %v3225
        %v6545 = vmul.f32 %v748, %v3300
        %v6546 = vmul.f32 %v752, %v3302
        %v6547 = vmul.f32 %v756, %v3377
        %v6548 = vmul.f32 %v760, %v3379
        %v6549 = vmul.f32 %v764, %v3454
        %v6550 = vmul.f32 %v768, %v3456
        %v6551 = vmul.f32 %v772, %v3531
        %v6552 = vmul.f32 %v776, %v3533
        %v6553 = vmul.f32 %v780, %v3608
        %v6554 = vmul.f32 %v784, %v3610
        %v6555 = vmul.f32 %v788, %v3685
        %v6556 = vmul.f32 %v792, %v3687
        %v6557 = vmul.f32 %v796, %v3762
        %v6558 = vmul.f32 %v800, %v3764
        %v6559 = vmul.f32 %v804, %v3839
        %v6560 = vmul.f32 %v808, %v3841
        %v6561 = vmul.f32 %v812, %v3916
        %v6562 = vmul.f32 %v816, %v3918
        %v6563 = vmul.f32 %v820, %v3993
        %v6564 = vmul.f32 %v824, %v3995
        %v6565 = vmul.f32 %v828, %v4070
        %v6566 = vmul.f32 %v832, %v4072
        %v6567 = vmul.f32 %v836, %v4147
        %v6568 = vmul.f32 %v840, %v4149
        %v6569 = vmul.f32 %v844, %v4224
        %v6570 = vmul.f32 %v848, %v4226
        %v6571 = vmul.f32 %v852, %v3063
        %v6572 = vmul.f32 %v856, %v3065
        %v6573 = vmul.f32 %v860, %v3140
        %v6574 = vmul.f32 %v864, %v3142
        %v6575 = vmul.f32 %v868, %v3217
        %v6576 = vmul.f32 %v872, %v3219
        %v6577 = vmul.f32 %v876, %v3294
        %v6578 = vmul.f32 %v880, %v3296
        %v6579 = vmul.f32 %v884, %v3371
        %v6580 = vmul.f32 %v888, %v3373
        %v6581 = vmul.f32 %v892, %v3448
        %v6582 = vmul.f32 %v896, %v3450
        %v6583 = vmul.f32 %v900, %v3525
        %v6584 = vmul.f32 %v904, %v3527
        %v6585 = vmul.f32 %v908, %v3602
        %v6586 = vmul.f32 %v912, %v3604
        %v6587 = vmul.f32 %v916, %v3679
        %v6588 = vmul.f32 %v920, %v3681
        %v6589 = vmul.f32 %v924, %v3756
        %v6590 = vmul.f32 %v928, %v3758
        %v6591 = vmul.f32 %v932, %v3833
        %v6592 = vmul.f32 %v936, %v3835
        %v6593 = vmul.f32 %v940, %v3910
        %v6594 = vmul.f32 %v944, %v3912
        %v6595 = vmul.f32 %v948, %v3987
        %v6596 = vmul.f32 %v952, %v3989
        %v6597 = vmul.f32 %v956, %v4064
        %v6598 = vmul.f32 %v960, %v4066
        %v6599 = vmul.f32 %v964, %v4141
        %v6600 = vmul.f32 %v968, %v4143
        %v6601 = vmul.f32 %v972, %v4218
        %v6602 = vmul.f32 %v976, %v4220
        %v6603 = vmul.f32 %v852, %v3069
        %v6604 = vmul.f32 %v856, %v3071
        %v6605 = vmul.f32 %v860, %v3146
        %v6606 = vmul.f32 %v864, %v3148
        %v6607 = vmul.f32 %v868, %v3223
        %v6608 = vmul.f32 %v872, %v3225
        %v6609 = vmul.f32 %v876, %v3300
        %v6610 = vmul.f32 %v880, %v3302
        %v6611 = vmul.f32 %v884, %v3377
        %v6612 = vmul.f32 %v888, %v3379
        %v6613 = vmul.f32 %v892, %v3454
        %v6614 = vmul.f32 %v896, %v3456
        %v6615 = vmul.f32 %v900, %v3531
        %v6616 = vmul.f32 %v904, %v3533
        %v6617 = vmul.f32 %v908, %v3608
        %v6618 = vmul.f32 %v912, %v3610
        %v6619 = vmul.f32 %v916, %v3685
        %v6620 = vmul.f32 %v920, %v3687
        %v6621 = vmul.f32 %v924, %v3762
        %v6622 = vmul.f32 %v928, %v3764
        %v6623 = vmul.f32 %v932, %v3839
        %v6624 = vmul.f32 %v936, %v3841
        %v6625 = vmul.f32 %v940, %v3916
        %v6626 = vmul.f32 %v944, %v3918
        %v6627 = vmul.f32 %v948, %v3993
        %v6628 = vmul.f32 %v952, %v3995
        %v6629 = vmul.f32 %v956, %v4070
        %v6630 = vmul.f32 %v960, %v4072
        %v6631 = vmul.f32 %v964, %v4147
        %v6632 = vmul.f32 %v968, %v4149
        %v6633 = vmul.f32 %v972, %v4224
        %v6634 = vmul.f32 %v976, %v4226
        %v6635 = vmul.f32 %v980, %v3063
        %v6636 = vmul.f32 %v984, %v3065
        %v6637 = vmul.f32 %v988, %v3140
        %v6638 = vmul.f32 %v992, %v3142
        %v6639 = vmul.f32 %v996, %v3217
        %v6640 = vmul.f32 %v1000, %v3219
        %v6641 = vmul.f32 %v1004, %v3294
        %v6642 = vmul.f32 %v1008, %v3296
        %v6643 = vmul.f32 %v1012, %v3371
        %v6644 = vmul.f32 %v1016, %v3373
        %v6645 = vmul.f32 %v1020, %v3448
        %v6646 = vmul.f32 %v1024, %v3450
        %v6647 = vmul.f32 %v1028, %v3525
        %v6648 = vmul.f32 %v1032, %v3527
        %v6649 = vmul.f32 %v1036, %v3602
        %v6650 = vmul.f32 %v1040, %v3604
        %v6651 = vmul.f32 %v1044, %v3679
        %v6652 = vmul.f32 %v1048, %v3681
        %v6653 = vmul.f32 %v1052, %v3756
        %v6654 = vmul.f32 %v1056, %v3758
        %v6655 = vmul.f32 %v1060, %v3833
        %v6656 = vmul.f32 %v1064, %v3835
        %v6657 = vmul.f32 %v1068, %v3910
        %v6658 = vmul.f32 %v1072, %v3912
        %v6659 = vmul.f32 %v1076, %v3987
        %v6660 = vmul.f32 %v1080, %v3989
        %v6661 = vmul.f32 %v1084, %v4064
        %v6662 = vmul.f32 %v1088, %v4066
        %v6663 = vmul.f32 %v1092, %v4141
        %v6664 = vmul.f32 %v1096, %v4143
        %v6665 = vmul.f32 %v1100, %v4218
        %v6666 = vmul.f32 %v1104, %v4220
        %v6667 = vmul.f32 %v980, %v3069
        %v6668 = vmul.f32 %v984, %v3071
        %v6669 = vmul.f32 %v988, %v3146
        %v6670 = vmul.f32 %v992, %v3148
        %v6671 = vmul.f32 %v996, %v3223
        %v6672 = vmul.f32 %v1000, %v3225
        %v6673 = vmul.f32 %v1004, %v3300
        %v6674 = vmul.f32 %v1008, %v3302
        %v6675 = vmul.f32 %v1012, %v3377
        %v6676 = vmul.f32 %v1016, %v3379
        %v6677 = vmul.f32 %v1020, %v3454
        %v6678 = vmul.f32 %v1024, %v3456
        %v6679 = vmul.f32 %v1028, %v3531
        %v6680 = vmul.f32 %v1032, %v3533
        %v6681 = vmul.f32 %v1036, %v3608
        %v6682 = vmul.f32 %v1040, %v3610
        %v6683 = vmul.f32 %v1044, %v3685
        %v6684 = vmul.f32 %v1048, %v3687
        %v6685 = vmul.f32 %v1052, %v3762
        %v6686 = vmul.f32 %v1056, %v3764
        %v6687 = vmul.f32 %v1060, %v3839
        %v6688 = vmul.f32 %v1064, %v3841
        %v6689 = vmul.f32 %v1068, %v3916
        %v6690 = vmul.f32 %v1072, %v3918
        %v6691 = vmul.f32 %v1076, %v3993
        %v6692 = vmul.f32 %v1080, %v3995
        %v6693 = vmul.f32 %v1084, %v4070
        %v6694 = vmul.f32 %v1088, %v4072
        %v6695 = vmul.f32 %v1092, %v4147
        %v6696 = vmul.f32 %v1096, %v4149
        %v6697 = vmul.f32 %v1100, %v4224
        %v6698 = vmul.f32 %v1104, %v4226
        %v6699 = vmul.f32 %v1108, %v3063
        %v6700 = vmul.f32 %v1112, %v3065
        %v6701 = vmul.f32 %v1116, %v3140
        %v6702 = vmul.f32 %v1120, %v3142
        %v6703 = vmul.f32 %v1124, %v3217
        %v6704 = vmul.f32 %v1128, %v3219
        %v6705 = vmul.f32 %v1132, %v3294
        %v6706 = vmul.f32 %v1136, %v3296
        %v6707 = vmul.f32 %v1140, %v3371
        %v6708 = vmul.f32 %v1144, %v3373
        %v6709 = vmul.f32 %v1148, %v3448
        %v6710 = vmul.f32 %v1152, %v3450
        %v6711 = vmul.f32 %v1156, %v3525
        %v6712 = vmul.f32 %v1160, %v3527
        %v6713 = vmul.f32 %v1164, %v3602
        %v6714 = vmul.f32 %v1168, %v3604
        %v6715 = vmul.f32 %v1172, %v3679
        %v6716 = vmul.f32 %v1176, %v3681
        %v6717 = vmul.f32 %v1180, %v3756
        %v6718 = vmul.f32 %v1184, %v3758
        %v6719 = vmul.f32 %v1188, %v3833
        %v6720 = vmul.f32 %v1192, %v3835
        %v6721 = vmul.f32 %v1196, %v3910
        %v6722 = vmul.f32 %v1200, %v3912
        %v6723 = vmul.f32 %v1204, %v3987
        %v6724 = vmul.f32 %v1208, %v3989
        %v6725 = vmul.f32 %v1212, %v4064
        %v6726 = vmul.f32 %v1216, %v4066
        %v6727 = vmul.f32 %v1220, %v4141
        %v6728 = vmul.f32 %v1224, %v4143
        %v6729 = vmul.f32 %v1228, %v4218
        %v6730 = vmul.f32 %v1232, %v4220
        %v6731 = vmul.f32 %v1108, %v3069
        %v6732 = vmul.f32 %v1112, %v3071
        %v6733 = vmul.f32 %v1116, %v3146
        %v6734 = vmul.f32 %v1120, %v3148
        %v6735 = vmul.f32 %v1124, %v3223
        %v6736 = vmul.f32 %v1128, %v3225
        %v6737 = vmul.f32 %v1132, %v3300
        %v6738 = vmul.f32 %v1136, %v3302
        %v6739 = vmul.f32 %v1140, %v3377
        %v6740 = vmul.f32 %v1144, %v3379
        %v6741 = vmul.f32 %v1148, %v3454
        %v6742 = vmul.f32 %v1152, %v3456
        %v6743 = vmul.f32 %v1156, %v3531
        %v6744 = vmul.f32 %v1160, %v3533
        %v6745 = vmul.f32 %v1164, %v3608
        %v6746 = vmul.f32 %v1168, %v3610
        %v6747 = vmul.f32 %v1172, %v3685
        %v6748 = vmul.f32 %v1176, %v3687
        %v6749 = vmul.f32 %v1180, %v3762
        %v6750 = vmul.f32 %v1184, %v3764
        %v6751 = vmul.f32 %v1188, %v3839
        %v6752 = vmul.f32 %v1192, %v3841
        %v6753 = vmul.f32 %v1196, %v3916
        %v6754 = vmul.f32 %v1200, %v3918
        %v6755 = vmul.f32 %v1204, %v3993
        %v6756 = vmul.f32 %v1208, %v3995
        %v6757 = vmul.f32 %v1212, %v4070
        %v6758 = vmul.f32 %v1216, %v4072
        %v6759 = vmul.f32 %v1220, %v4147
        %v6760 = vmul.f32 %v1224, %v4149
        %v6761 = vmul.f32 %v1228, %v4224
        %v6762 = vmul.f32 %v1232, %v4226
        %v6763 = vld [vmem:[%s6] sm:$0x1]
        %v6765 = vsel %vm2989, %v6763, 0
        %6767 = vmatprep.subr.mxu0 %v6508
        %6768 = vmatpush1.msra.mxu0 %v6507
        %6769 = vmatprep.subr.mxu0 %v6540
        %6770 = vmatpush1.msra.mxu0 %v6539
        %6771 = vmatprep.subr.mxu0 %v6572
        %6772 = vmatpush1.msra.mxu0 %v6571
        %6773 = vmatprep.subr.mxu0 %v6604
        %6774 = vmatpush1.msra.mxu0 %v6603
        %6775 = vmatprep.subr.mxu0 %v6636
        %6776 = vmatpush1.msra.mxu0 %v6635
        %6777 = vmatprep.subr.mxu0 %v6668
        %6778 = vmatpush1.msra.mxu0 %v6667
        %6779 = vmatprep.subr.mxu0 %v6700
        %6780 = vmatpush1.msra.mxu0 %v6699
        %6781 = vmatprep.subr.mxu0 %v6732
        %6782 = vmatpush1.msra.mxu0 %v6731
        %6783 = vmatprep.subr.mxu0 0.0
        %6784 = vmatpush1.msra.mxu0 0.0
        %6785 = vmatprep.subr.mxu0 0.0
        %6786 = vmatpush1.msra.mxu0 0.0
        %6787 = vmatprep.subr.mxu0 0.0
        %6788 = vmatpush1.msra.mxu0 0.0
        %6789 = vmatprep.subr.mxu0 0.0
        %6790 = vmatpush1.msra.mxu0 0.0
        %6791 = vmatprep.subr.mxu0 0.0
        %6792 = vmatpush1.msra.mxu0 0.0
        %6793 = vmatprep.subr.mxu0 0.0
        %6794 = vmatpush1.msra.mxu0 0.0
        %6795 = vmatprep.subr.mxu0 0.0
        %6796 = vmatpush1.msra.mxu0 0.0
        %6797 = vmatprep.subr.mxu0 0.0
        %6798 = vmatpush1.msra.mxu0 0.0
        %6799 = vmatprep.subr.mxu0 0.0
        %6800 = vmatpush1.msra.mxu0 0.0
        %6801 = vmatprep.subr.mxu0 0.0
        %6802 = vmatpush1.msra.mxu0 0.0
        %6803 = vmatprep.subr.mxu0 0.0
        %6804 = vmatpush1.msra.mxu0 0.0
        %6805 = vmatprep.subr.mxu0 0.0
        %6806 = vmatpush1.msra.mxu0 0.0
        %6807 = vmatprep.subr.mxu0 0.0
        %6808 = vmatpush1.msra.mxu0 0.0
        %6809 = vmatprep.subr.mxu0 0.0
        %6810 = vmatpush1.msra.mxu0 0.0
        %6811 = vmatprep.subr.mxu0 0.0
        %6812 = vmatpush1.msra.mxu0 0.0
        %6813 = vmatprep.subr.mxu0 0.0
        %6814 = vmatpush1.msra.mxu0 0.0
        %6815 = vmatprep.subr.mxu0 0.0
        %6816 = vmatpush1.msra.mxu0 0.0
        %6817 = vmatprep.subr.mxu0 0.0
        %6818 = vmatpush1.msra.mxu0 0.0
        %6819 = vmatprep.subr.mxu0 0.0
        %6820 = vmatpush1.msra.mxu0 0.0
        %6821 = vmatprep.subr.mxu0 0.0
        %6822 = vmatpush1.msra.mxu0 0.0
        %6823 = vmatprep.subr.mxu0 0.0
        %6824 = vmatpush1.msra.mxu0 0.0
        %6825 = vmatprep.subr.mxu0 0.0
        %6826 = vmatpush1.msra.mxu0 0.0
        %6827 = vmatprep.subr.mxu0 0.0
        %6828 = vmatpush1.msra.mxu0 0.0
        %6829 = vmatprep.subr.mxu0 0.0
        %6830 = vmatpush1.msra.mxu0 0.0
        %6831 = vmatprep.mubr.f32.mxu0 0.0
        %6832 = vmatmul.mubr.f32.gmra.mrb[0].mxu0 %v6765
        %v6833 = vpop.f32.mrb[0].mxu0
        %v6834 = vadd.f32 0.0, %v6833
        %v6835 = vpop.f32.mrb[0].mxu0
        %v6836 = vadd.f32 0.0, %v6835
        %6837 = vdwg.mxu0
        %6838 = vmatprep.subr.mxu0 %v6510
        %6839 = vmatpush1.msra.mxu0 %v6509
        %6840 = vmatprep.subr.mxu0 %v6542
        %6841 = vmatpush1.msra.mxu0 %v6541
        %6842 = vmatprep.subr.mxu0 %v6574
        %6843 = vmatpush1.msra.mxu0 %v6573
        %6844 = vmatprep.subr.mxu0 %v6606
        %6845 = vmatpush1.msra.mxu0 %v6605
        %6846 = vmatprep.subr.mxu0 %v6638
        %6847 = vmatpush1.msra.mxu0 %v6637
        %6848 = vmatprep.subr.mxu0 %v6670
        %6849 = vmatpush1.msra.mxu0 %v6669
        %6850 = vmatprep.subr.mxu0 %v6702
        %6851 = vmatpush1.msra.mxu0 %v6701
        %6852 = vmatprep.subr.mxu0 %v6734
        %6853 = vmatpush1.msra.mxu0 %v6733
        %6854 = vmatprep.subr.mxu0 0.0
        %6855 = vmatpush1.msra.mxu0 0.0
        %6856 = vmatprep.subr.mxu0 0.0
        %6857 = vmatpush1.msra.mxu0 0.0
        %6858 = vmatprep.subr.mxu0 0.0
        %6859 = vmatpush1.msra.mxu0 0.0
        %6860 = vmatprep.subr.mxu0 0.0
        %6861 = vmatpush1.msra.mxu0 0.0
        %6862 = vmatprep.subr.mxu0 0.0
        %6863 = vmatpush1.msra.mxu0 0.0
        %6864 = vmatprep.subr.mxu0 0.0
        %6865 = vmatpush1.msra.mxu0 0.0
        %6866 = vmatprep.subr.mxu0 0.0
        %6867 = vmatpush1.msra.mxu0 0.0
        %6868 = vmatprep.subr.mxu0 0.0
        %6869 = vmatpush1.msra.mxu0 0.0
        %6870 = vmatprep.subr.mxu0 0.0
        %6871 = vmatpush1.msra.mxu0 0.0
        %6872 = vmatprep.subr.mxu0 0.0
        %6873 = vmatpush1.msra.mxu0 0.0
        %6874 = vmatprep.subr.mxu0 0.0
        %6875 = vmatpush1.msra.mxu0 0.0
        %6876 = vmatprep.subr.mxu0 0.0
        %6877 = vmatpush1.msra.mxu0 0.0
        %6878 = vmatprep.subr.mxu0 0.0
        %6879 = vmatpush1.msra.mxu0 0.0
        %6880 = vmatprep.subr.mxu0 0.0
        %6881 = vmatpush1.msra.mxu0 0.0
        %6882 = vmatprep.subr.mxu0 0.0
        %6883 = vmatpush1.msra.mxu0 0.0
        %6884 = vmatprep.subr.mxu0 0.0
        %6885 = vmatpush1.msra.mxu0 0.0
        %6886 = vmatprep.subr.mxu0 0.0
        %6887 = vmatpush1.msra.mxu0 0.0
        %6888 = vmatprep.subr.mxu0 0.0
        %6889 = vmatpush1.msra.mxu0 0.0
        %6890 = vmatprep.subr.mxu0 0.0
        %6891 = vmatpush1.msra.mxu0 0.0
        %6892 = vmatprep.subr.mxu0 0.0
        %6893 = vmatpush1.msra.mxu0 0.0
        %6894 = vmatprep.subr.mxu0 0.0
        %6895 = vmatpush1.msra.mxu0 0.0
        %6896 = vmatprep.subr.mxu0 0.0
        %6897 = vmatpush1.msra.mxu0 0.0
        %6898 = vmatprep.subr.mxu0 0.0
        %6899 = vmatpush1.msra.mxu0 0.0
        %6900 = vmatprep.subr.mxu0 0.0
        %6901 = vmatpush1.msra.mxu0 0.0
        %6902 = vmatprep.mubr.f32.mxu0 0.0
        %6903 = vmatmul.mubr.f32.gmra.mrb[0].mxu0 %v6765
        %v6904 = vpop.f32.mrb[0].mxu0
        %v6905 = vadd.f32 0.0, %v6904
        %v6906 = vpop.f32.mrb[0].mxu0
        %v6907 = vadd.f32 0.0, %v6906
        %6908 = vdwg.mxu0
        %6909 = vmatprep.subr.mxu0 %v6512
        %6910 = vmatpush1.msra.mxu0 %v6511
        %6911 = vmatprep.subr.mxu0 %v6544
        %6912 = vmatpush1.msra.mxu0 %v6543
        %6913 = vmatprep.subr.mxu0 %v6576
        %6914 = vmatpush1.msra.mxu0 %v6575
        %6915 = vmatprep.subr.mxu0 %v6608
        %6916 = vmatpush1.msra.mxu0 %v6607
        %6917 = vmatprep.subr.mxu0 %v6640
        %6918 = vmatpush1.msra.mxu0 %v6639
        %6919 = vmatprep.subr.mxu0 %v6672
        %6920 = vmatpush1.msra.mxu0 %v6671
        %6921 = vmatprep.subr.mxu0 %v6704
        %6922 = vmatpush1.msra.mxu0 %v6703
        %6923 = vmatprep.subr.mxu0 %v6736
        %6924 = vmatpush1.msra.mxu0 %v6735
        %6925 = vmatprep.subr.mxu0 0.0
        %6926 = vmatpush1.msra.mxu0 0.0
        %6927 = vmatprep.subr.mxu0 0.0
        %6928 = vmatpush1.msra.mxu0 0.0
        %6929 = vmatprep.subr.mxu0 0.0
        %6930 = vmatpush1.msra.mxu0 0.0
        %6931 = vmatprep.subr.mxu0 0.0
        %6932 = vmatpush1.msra.mxu0 0.0
        %6933 = vmatprep.subr.mxu0 0.0
        %6934 = vmatpush1.msra.mxu0 0.0
        %6935 = vmatprep.subr.mxu0 0.0
        %6936 = vmatpush1.msra.mxu0 0.0
        %6937 = vmatprep.subr.mxu0 0.0
        %6938 = vmatpush1.msra.mxu0 0.0
        %6939 = vmatprep.subr.mxu0 0.0
        %6940 = vmatpush1.msra.mxu0 0.0
        %6941 = vmatprep.subr.mxu0 0.0
        %6942 = vmatpush1.msra.mxu0 0.0
        %6943 = vmatprep.subr.mxu0 0.0
        %6944 = vmatpush1.msra.mxu0 0.0
        %6945 = vmatprep.subr.mxu0 0.0
        %6946 = vmatpush1.msra.mxu0 0.0
        %6947 = vmatprep.subr.mxu0 0.0
        %6948 = vmatpush1.msra.mxu0 0.0
        %6949 = vmatprep.subr.mxu0 0.0
        %6950 = vmatpush1.msra.mxu0 0.0
        %6951 = vmatprep.subr.mxu0 0.0
        %6952 = vmatpush1.msra.mxu0 0.0
        %6953 = vmatprep.subr.mxu0 0.0
        %6954 = vmatpush1.msra.mxu0 0.0
        %6955 = vmatprep.subr.mxu0 0.0
        %6956 = vmatpush1.msra.mxu0 0.0
        %6957 = vmatprep.subr.mxu0 0.0
        %6958 = vmatpush1.msra.mxu0 0.0
        %6959 = vmatprep.subr.mxu0 0.0
        %6960 = vmatpush1.msra.mxu0 0.0
        %6961 = vmatprep.subr.mxu0 0.0
        %6962 = vmatpush1.msra.mxu0 0.0
        %6963 = vmatprep.subr.mxu0 0.0
        %6964 = vmatpush1.msra.mxu0 0.0
        %6965 = vmatprep.subr.mxu0 0.0
        %6966 = vmatpush1.msra.mxu0 0.0
        %6967 = vmatprep.subr.mxu0 0.0
        %6968 = vmatpush1.msra.mxu0 0.0
        %6969 = vmatprep.subr.mxu0 0.0
        %6970 = vmatpush1.msra.mxu0 0.0
        %6971 = vmatprep.subr.mxu0 0.0
        %6972 = vmatpush1.msra.mxu0 0.0
        %6973 = vmatprep.mubr.f32.mxu0 0.0
        %6974 = vmatmul.mubr.f32.gmra.mrb[0].mxu0 %v6765
        %v6975 = vpop.f32.mrb[0].mxu0
        %v6976 = vadd.f32 0.0, %v6975
        %v6977 = vpop.f32.mrb[0].mxu0
        %v6978 = vadd.f32 0.0, %v6977
        %6979 = vdwg.mxu0
        %6980 = vmatprep.subr.mxu0 %v6514
        %6981 = vmatpush1.msra.mxu0 %v6513
        %6982 = vmatprep.subr.mxu0 %v6546
        %6983 = vmatpush1.msra.mxu0 %v6545
        %6984 = vmatprep.subr.mxu0 %v6578
        %6985 = vmatpush1.msra.mxu0 %v6577
        %6986 = vmatprep.subr.mxu0 %v6610
        %6987 = vmatpush1.msra.mxu0 %v6609
        %6988 = vmatprep.subr.mxu0 %v6642
        %6989 = vmatpush1.msra.mxu0 %v6641
        %6990 = vmatprep.subr.mxu0 %v6674
        %6991 = vmatpush1.msra.mxu0 %v6673
        %6992 = vmatprep.subr.mxu0 %v6706
        %6993 = vmatpush1.msra.mxu0 %v6705
        %6994 = vmatprep.subr.mxu0 %v6738
        %6995 = vmatpush1.msra.mxu0 %v6737
        %6996 = vmatprep.subr.mxu0 0.0
        %6997 = vmatpush1.msra.mxu0 0.0
        %6998 = vmatprep.subr.mxu0 0.0
        %6999 = vmatpush1.msra.mxu0 0.0
        %7000 = vmatprep.subr.mxu0 0.0
        %7001 = vmatpush1.msra.mxu0 0.0
        %7002 = vmatprep.subr.mxu0 0.0
        %7003 = vmatpush1.msra.mxu0 0.0
        %7004 = vmatprep.subr.mxu0 0.0
        %7005 = vmatpush1.msra.mxu0 0.0
        %7006 = vmatprep.subr.mxu0 0.0
        %7007 = vmatpush1.msra.mxu0 0.0
        %7008 = vmatprep.subr.mxu0 0.0
        %7009 = vmatpush1.msra.mxu0 0.0
        %7010 = vmatprep.subr.mxu0 0.0
        %7011 = vmatpush1.msra.mxu0 0.0
        %7012 = vmatprep.subr.mxu0 0.0
        %7013 = vmatpush1.msra.mxu0 0.0
        %7014 = vmatprep.subr.mxu0 0.0
        %7015 = vmatpush1.msra.mxu0 0.0
        %7016 = vmatprep.subr.mxu0 0.0
        %7017 = vmatpush1.msra.mxu0 0.0
        %7018 = vmatprep.subr.mxu0 0.0
        %7019 = vmatpush1.msra.mxu0 0.0
        %7020 = vmatprep.subr.mxu0 0.0
        %7021 = vmatpush1.msra.mxu0 0.0
        %7022 = vmatprep.subr.mxu0 0.0
        %7023 = vmatpush1.msra.mxu0 0.0
        %7024 = vmatprep.subr.mxu0 0.0
        %7025 = vmatpush1.msra.mxu0 0.0
        %7026 = vmatprep.subr.mxu0 0.0
        %7027 = vmatpush1.msra.mxu0 0.0
        %7028 = vmatprep.subr.mxu0 0.0
        %7029 = vmatpush1.msra.mxu0 0.0
        %7030 = vmatprep.subr.mxu0 0.0
        %7031 = vmatpush1.msra.mxu0 0.0
        %7032 = vmatprep.subr.mxu0 0.0
        %7033 = vmatpush1.msra.mxu0 0.0
        %7034 = vmatprep.subr.mxu0 0.0
        %7035 = vmatpush1.msra.mxu0 0.0
        %7036 = vmatprep.subr.mxu0 0.0
        %7037 = vmatpush1.msra.mxu0 0.0
        %7038 = vmatprep.subr.mxu0 0.0
        %7039 = vmatpush1.msra.mxu0 0.0
        %7040 = vmatprep.subr.mxu0 0.0
        %7041 = vmatpush1.msra.mxu0 0.0
        %7042 = vmatprep.subr.mxu0 0.0
        %7043 = vmatpush1.msra.mxu0 0.0
        %7044 = vmatprep.mubr.f32.mxu0 0.0
        %7045 = vmatmul.mubr.f32.gmra.mrb[0].mxu0 %v6765
        %v7046 = vpop.f32.mrb[0].mxu0
        %v7047 = vadd.f32 0.0, %v7046
        %v7048 = vpop.f32.mrb[0].mxu0
        %v7049 = vadd.f32 0.0, %v7048
        %7050 = vdwg.mxu0
        %7051 = vmatprep.subr.mxu0 %v6516
        %7052 = vmatpush1.msra.mxu0 %v6515
        %7053 = vmatprep.subr.mxu0 %v6548
        %7054 = vmatpush1.msra.mxu0 %v6547
        %7055 = vmatprep.subr.mxu0 %v6580
        %7056 = vmatpush1.msra.mxu0 %v6579
        %7057 = vmatprep.subr.mxu0 %v6612
        %7058 = vmatpush1.msra.mxu0 %v6611
        %7059 = vmatprep.subr.mxu0 %v6644
        %7060 = vmatpush1.msra.mxu0 %v6643
        %7061 = vmatprep.subr.mxu0 %v6676
        %7062 = vmatpush1.msra.mxu0 %v6675
        %7063 = vmatprep.subr.mxu0 %v6708
        %7064 = vmatpush1.msra.mxu0 %v6707
        %7065 = vmatprep.subr.mxu0 %v6740
        %7066 = vmatpush1.msra.mxu0 %v6739
        %7067 = vmatprep.subr.mxu0 0.0
        %7068 = vmatpush1.msra.mxu0 0.0
        %7069 = vmatprep.subr.mxu0 0.0
        %7070 = vmatpush1.msra.mxu0 0.0
        %7071 = vmatprep.subr.mxu0 0.0
        %7072 = vmatpush1.msra.mxu0 0.0
        %7073 = vmatprep.subr.mxu0 0.0
        %7074 = vmatpush1.msra.mxu0 0.0
        %7075 = vmatprep.subr.mxu0 0.0
        %7076 = vmatpush1.msra.mxu0 0.0
        %7077 = vmatprep.subr.mxu0 0.0
        %7078 = vmatpush1.msra.mxu0 0.0
        %7079 = vmatprep.subr.mxu0 0.0
        %7080 = vmatpush1.msra.mxu0 0.0
        %7081 = vmatprep.subr.mxu0 0.0
        %7082 = vmatpush1.msra.mxu0 0.0
        %7083 = vmatprep.subr.mxu0 0.0
        %7084 = vmatpush1.msra.mxu0 0.0
        %7085 = vmatprep.subr.mxu0 0.0
        %7086 = vmatpush1.msra.mxu0 0.0
        %7087 = vmatprep.subr.mxu0 0.0
        %7088 = vmatpush1.msra.mxu0 0.0
        %7089 = vmatprep.subr.mxu0 0.0
        %7090 = vmatpush1.msra.mxu0 0.0
        %7091 = vmatprep.subr.mxu0 0.0
        %7092 = vmatpush1.msra.mxu0 0.0
        %7093 = vmatprep.subr.mxu0 0.0
        %7094 = vmatpush1.msra.mxu0 0.0
        %7095 = vmatprep.subr.mxu0 0.0
        %7096 = vmatpush1.msra.mxu0 0.0
        %7097 = vmatprep.subr.mxu0 0.0
        %7098 = vmatpush1.msra.mxu0 0.0
        %7099 = vmatprep.subr.mxu0 0.0
        %7100 = vmatpush1.msra.mxu0 0.0
        %7101 = vmatprep.subr.mxu0 0.0
        %7102 = vmatpush1.msra.mxu0 0.0
        %7103 = vmatprep.subr.mxu0 0.0
        %7104 = vmatpush1.msra.mxu0 0.0
        %7105 = vmatprep.subr.mxu0 0.0
        %7106 = vmatpush1.msra.mxu0 0.0
        %7107 = vmatprep.subr.mxu0 0.0
        %7108 = vmatpush1.msra.mxu0 0.0
        %7109 = vmatprep.subr.mxu0 0.0
        %7110 = vmatpush1.msra.mxu0 0.0
        %7111 = vmatprep.subr.mxu0 0.0
        %7112 = vmatpush1.msra.mxu0 0.0
        %7113 = vmatprep.subr.mxu0 0.0
        %7114 = vmatpush1.msra.mxu0 0.0
        %7115 = vmatprep.mubr.f32.mxu0 0.0
        %7116 = vmatmul.mubr.f32.gmra.mrb[0].mxu0 %v6765
        %v7117 = vpop.f32.mrb[0].mxu0
        %v7118 = vadd.f32 0.0, %v7117
        %v7119 = vpop.f32.mrb[0].mxu0
        %v7120 = vadd.f32 0.0, %v7119
        %7121 = vdwg.mxu0
        %7122 = vmatprep.subr.mxu0 %v6518
        %7123 = vmatpush1.msra.mxu0 %v6517
        %7124 = vmatprep.subr.mxu0 %v6550
        %7125 = vmatpush1.msra.mxu0 %v6549
        %7126 = vmatprep.subr.mxu0 %v6582
        %7127 = vmatpush1.msra.mxu0 %v6581
        %7128 = vmatprep.subr.mxu0 %v6614
        %7129 = vmatpush1.msra.mxu0 %v6613
        %7130 = vmatprep.subr.mxu0 %v6646
        %7131 = vmatpush1.msra.mxu0 %v6645
        %7132 = vmatprep.subr.mxu0 %v6678
        %7133 = vmatpush1.msra.mxu0 %v6677
        %7134 = vmatprep.subr.mxu0 %v6710
        %7135 = vmatpush1.msra.mxu0 %v6709
        %7136 = vmatprep.subr.mxu0 %v6742
        %7137 = vmatpush1.msra.mxu0 %v6741
        %7138 = vmatprep.subr.mxu0 0.0
        %7139 = vmatpush1.msra.mxu0 0.0
        %7140 = vmatprep.subr.mxu0 0.0
        %7141 = vmatpush1.msra.mxu0 0.0
        %7142 = vmatprep.subr.mxu0 0.0
        %7143 = vmatpush1.msra.mxu0 0.0
        %7144 = vmatprep.subr.mxu0 0.0
        %7145 = vmatpush1.msra.mxu0 0.0
        %7146 = vmatprep.subr.mxu0 0.0
        %7147 = vmatpush1.msra.mxu0 0.0
        %7148 = vmatprep.subr.mxu0 0.0
        %7149 = vmatpush1.msra.mxu0 0.0
        %7150 = vmatprep.subr.mxu0 0.0
        %7151 = vmatpush1.msra.mxu0 0.0
        %7152 = vmatprep.subr.mxu0 0.0
        %7153 = vmatpush1.msra.mxu0 0.0
        %7154 = vmatprep.subr.mxu0 0.0
        %7155 = vmatpush1.msra.mxu0 0.0
        %7156 = vmatprep.subr.mxu0 0.0
        %7157 = vmatpush1.msra.mxu0 0.0
        %7158 = vmatprep.subr.mxu0 0.0
        %7159 = vmatpush1.msra.mxu0 0.0
        %7160 = vmatprep.subr.mxu0 0.0
        %7161 = vmatpush1.msra.mxu0 0.0
        %7162 = vmatprep.subr.mxu0 0.0
        %7163 = vmatpush1.msra.mxu0 0.0
        %7164 = vmatprep.subr.mxu0 0.0
        %7165 = vmatpush1.msra.mxu0 0.0
        %7166 = vmatprep.subr.mxu0 0.0
        %7167 = vmatpush1.msra.mxu0 0.0
        %7168 = vmatprep.subr.mxu0 0.0
        %7169 = vmatpush1.msra.mxu0 0.0
        %7170 = vmatprep.subr.mxu0 0.0
        %7171 = vmatpush1.msra.mxu0 0.0
        %7172 = vmatprep.subr.mxu0 0.0
        %7173 = vmatpush1.msra.mxu0 0.0
        %7174 = vmatprep.subr.mxu0 0.0
        %7175 = vmatpush1.msra.mxu0 0.0
        %7176 = vmatprep.subr.mxu0 0.0
        %7177 = vmatpush1.msra.mxu0 0.0
        %7178 = vmatprep.subr.mxu0 0.0
        %7179 = vmatpush1.msra.mxu0 0.0
        %7180 = vmatprep.subr.mxu0 0.0
        %7181 = vmatpush1.msra.mxu0 0.0
        %7182 = vmatprep.subr.mxu0 0.0
        %7183 = vmatpush1.msra.mxu0 0.0
        %7184 = vmatprep.subr.mxu0 0.0
        %7185 = vmatpush1.msra.mxu0 0.0
        %7186 = vmatprep.mubr.f32.mxu0 0.0
        %7187 = vmatmul.mubr.f32.gmra.mrb[0].mxu0 %v6765
        %v7188 = vpop.f32.mrb[0].mxu0
        %v7189 = vadd.f32 0.0, %v7188
        %v7190 = vpop.f32.mrb[0].mxu0
        %v7191 = vadd.f32 0.0, %v7190
        %7192 = vdwg.mxu0
        %7193 = vmatprep.subr.mxu0 %v6520
        %7194 = vmatpush1.msra.mxu0 %v6519
        %7195 = vmatprep.subr.mxu0 %v6552
        %7196 = vmatpush1.msra.mxu0 %v6551
        %7197 = vmatprep.subr.mxu0 %v6584
        %7198 = vmatpush1.msra.mxu0 %v6583
        %7199 = vmatprep.subr.mxu0 %v6616
        %7200 = vmatpush1.msra.mxu0 %v6615
        %7201 = vmatprep.subr.mxu0 %v6648
        %7202 = vmatpush1.msra.mxu0 %v6647
        %7203 = vmatprep.subr.mxu0 %v6680
        %7204 = vmatpush1.msra.mxu0 %v6679
        %7205 = vmatprep.subr.mxu0 %v6712
        %7206 = vmatpush1.msra.mxu0 %v6711
        %7207 = vmatprep.subr.mxu0 %v6744
        %7208 = vmatpush1.msra.mxu0 %v6743
        %7209 = vmatprep.subr.mxu0 0.0
        %7210 = vmatpush1.msra.mxu0 0.0
        %7211 = vmatprep.subr.mxu0 0.0
        %7212 = vmatpush1.msra.mxu0 0.0
        %7213 = vmatprep.subr.mxu0 0.0
        %7214 = vmatpush1.msra.mxu0 0.0
        %7215 = vmatprep.subr.mxu0 0.0
        %7216 = vmatpush1.msra.mxu0 0.0
        %7217 = vmatprep.subr.mxu0 0.0
        %7218 = vmatpush1.msra.mxu0 0.0
        %7219 = vmatprep.subr.mxu0 0.0
        %7220 = vmatpush1.msra.mxu0 0.0
        %7221 = vmatprep.subr.mxu0 0.0
        %7222 = vmatpush1.msra.mxu0 0.0
        %7223 = vmatprep.subr.mxu0 0.0
        %7224 = vmatpush1.msra.mxu0 0.0
        %7225 = vmatprep.subr.mxu0 0.0
        %7226 = vmatpush1.msra.mxu0 0.0
        %7227 = vmatprep.subr.mxu0 0.0
        %7228 = vmatpush1.msra.mxu0 0.0
        %7229 = vmatprep.subr.mxu0 0.0
        %7230 = vmatpush1.msra.mxu0 0.0
        %7231 = vmatprep.subr.mxu0 0.0
        %7232 = vmatpush1.msra.mxu0 0.0
        %7233 = vmatprep.subr.mxu0 0.0
        %7234 = vmatpush1.msra.mxu0 0.0
        %7235 = vmatprep.subr.mxu0 0.0
        %7236 = vmatpush1.msra.mxu0 0.0
        %7237 = vmatprep.subr.mxu0 0.0
        %7238 = vmatpush1.msra.mxu0 0.0
        %7239 = vmatprep.subr.mxu0 0.0
        %7240 = vmatpush1.msra.mxu0 0.0
        %7241 = vmatprep.subr.mxu0 0.0
        %7242 = vmatpush1.msra.mxu0 0.0
        %7243 = vmatprep.subr.mxu0 0.0
        %7244 = vmatpush1.msra.mxu0 0.0
        %7245 = vmatprep.subr.mxu0 0.0
        %7246 = vmatpush1.msra.mxu0 0.0
        %7247 = vmatprep.subr.mxu0 0.0
        %7248 = vmatpush1.msra.mxu0 0.0
        %7249 = vmatprep.subr.mxu0 0.0
        %7250 = vmatpush1.msra.mxu0 0.0
        %7251 = vmatprep.subr.mxu0 0.0
        %7252 = vmatpush1.msra.mxu0 0.0
        %7253 = vmatprep.subr.mxu0 0.0
        %7254 = vmatpush1.msra.mxu0 0.0
        %7255 = vmatprep.subr.mxu0 0.0
        %7256 = vmatpush1.msra.mxu0 0.0
        %7257 = vmatprep.mubr.f32.mxu0 0.0
        %7258 = vmatmul.mubr.f32.gmra.mrb[0].mxu0 %v6765
        %v7259 = vpop.f32.mrb[0].mxu0
        %v7260 = vadd.f32 0.0, %v7259
        %v7261 = vpop.f32.mrb[0].mxu0
        %v7262 = vadd.f32 0.0, %v7261
        %7263 = vdwg.mxu0
        %7264 = vmatprep.subr.mxu0 %v6522
        %7265 = vmatpush1.msra.mxu0 %v6521
        %7266 = vmatprep.subr.mxu0 %v6554
        %7267 = vmatpush1.msra.mxu0 %v6553
        %7268 = vmatprep.subr.mxu0 %v6586
        %7269 = vmatpush1.msra.mxu0 %v6585
        %7270 = vmatprep.subr.mxu0 %v6618
        %7271 = vmatpush1.msra.mxu0 %v6617
        %7272 = vmatprep.subr.mxu0 %v6650
        %7273 = vmatpush1.msra.mxu0 %v6649
        %7274 = vmatprep.subr.mxu0 %v6682
        %7275 = vmatpush1.msra.mxu0 %v6681
        %7276 = vmatprep.subr.mxu0 %v6714
        %7277 = vmatpush1.msra.mxu0 %v6713
        %7278 = vmatprep.subr.mxu0 %v6746
        %7279 = vmatpush1.msra.mxu0 %v6745
        %7280 = vmatprep.subr.mxu0 0.0
        %7281 = vmatpush1.msra.mxu0 0.0
        %7282 = vmatprep.subr.mxu0 0.0
        %7283 = vmatpush1.msra.mxu0 0.0
        %7284 = vmatprep.subr.mxu0 0.0
        %7285 = vmatpush1.msra.mxu0 0.0
        %7286 = vmatprep.subr.mxu0 0.0
        %7287 = vmatpush1.msra.mxu0 0.0
        %7288 = vmatprep.subr.mxu0 0.0
        %7289 = vmatpush1.msra.mxu0 0.0
        %7290 = vmatprep.subr.mxu0 0.0
        %7291 = vmatpush1.msra.mxu0 0.0
        %7292 = vmatprep.subr.mxu0 0.0
        %7293 = vmatpush1.msra.mxu0 0.0
        %7294 = vmatprep.subr.mxu0 0.0
        %7295 = vmatpush1.msra.mxu0 0.0
        %7296 = vmatprep.subr.mxu0 0.0
        %7297 = vmatpush1.msra.mxu0 0.0
        %7298 = vmatprep.subr.mxu0 0.0
        %7299 = vmatpush1.msra.mxu0 0.0
        %7300 = vmatprep.subr.mxu0 0.0
        %7301 = vmatpush1.msra.mxu0 0.0
        %7302 = vmatprep.subr.mxu0 0.0
        %7303 = vmatpush1.msra.mxu0 0.0
        %7304 = vmatprep.subr.mxu0 0.0
        %7305 = vmatpush1.msra.mxu0 0.0
        %7306 = vmatprep.subr.mxu0 0.0
        %7307 = vmatpush1.msra.mxu0 0.0
        %7308 = vmatprep.subr.mxu0 0.0
        %7309 = vmatpush1.msra.mxu0 0.0
        %7310 = vmatprep.subr.mxu0 0.0
        %7311 = vmatpush1.msra.mxu0 0.0
        %7312 = vmatprep.subr.mxu0 0.0
        %7313 = vmatpush1.msra.mxu0 0.0
        %7314 = vmatprep.subr.mxu0 0.0
        %7315 = vmatpush1.msra.mxu0 0.0
        %7316 = vmatprep.subr.mxu0 0.0
        %7317 = vmatpush1.msra.mxu0 0.0
        %7318 = vmatprep.subr.mxu0 0.0
        %7319 = vmatpush1.msra.mxu0 0.0
        %7320 = vmatprep.subr.mxu0 0.0
        %7321 = vmatpush1.msra.mxu0 0.0
        %7322 = vmatprep.subr.mxu0 0.0
        %7323 = vmatpush1.msra.mxu0 0.0
        %7324 = vmatprep.subr.mxu0 0.0
        %7325 = vmatpush1.msra.mxu0 0.0
        %7326 = vmatprep.subr.mxu0 0.0
        %7327 = vmatpush1.msra.mxu0 0.0
        %7328 = vmatprep.mubr.f32.mxu0 0.0
        %7329 = vmatmul.mubr.f32.gmra.mrb[0].mxu0 %v6765
        %v7330 = vpop.f32.mrb[0].mxu0
        %v7331 = vadd.f32 0.0, %v7330
        %v7332 = vpop.f32.mrb[0].mxu0
        %v7333 = vadd.f32 0.0, %v7332
        %7334 = vdwg.mxu0
        %7335 = vmatprep.subr.mxu0 %v6524
        %7336 = vmatpush1.msra.mxu0 %v6523
        %7337 = vmatprep.subr.mxu0 %v6556
        %7338 = vmatpush1.msra.mxu0 %v6555
        %7339 = vmatprep.subr.mxu0 %v6588
        %7340 = vmatpush1.msra.mxu0 %v6587
        %7341 = vmatprep.subr.mxu0 %v6620
        %7342 = vmatpush1.msra.mxu0 %v6619
        %7343 = vmatprep.subr.mxu0 %v6652
        %7344 = vmatpush1.msra.mxu0 %v6651
        %7345 = vmatprep.subr.mxu0 %v6684
        %7346 = vmatpush1.msra.mxu0 %v6683
        %7347 = vmatprep.subr.mxu0 %v6716
        %7348 = vmatpush1.msra.mxu0 %v6715
        %7349 = vmatprep.subr.mxu0 %v6748
        %7350 = vmatpush1.msra.mxu0 %v6747
        %7351 = vmatprep.subr.mxu0 0.0
        %7352 = vmatpush1.msra.mxu0 0.0
        %7353 = vmatprep.subr.mxu0 0.0
        %7354 = vmatpush1.msra.mxu0 0.0
        %7355 = vmatprep.subr.mxu0 0.0
        %7356 = vmatpush1.msra.mxu0 0.0
        %7357 = vmatprep.subr.mxu0 0.0
        %7358 = vmatpush1.msra.mxu0 0.0
        %7359 = vmatprep.subr.mxu0 0.0
        %7360 = vmatpush1.msra.mxu0 0.0
        %7361 = vmatprep.subr.mxu0 0.0
        %7362 = vmatpush1.msra.mxu0 0.0
        %7363 = vmatprep.subr.mxu0 0.0
        %7364 = vmatpush1.msra.mxu0 0.0
        %7365 = vmatprep.subr.mxu0 0.0
        %7366 = vmatpush1.msra.mxu0 0.0
        %7367 = vmatprep.subr.mxu0 0.0
        %7368 = vmatpush1.msra.mxu0 0.0
        %7369 = vmatprep.subr.mxu0 0.0
        %7370 = vmatpush1.msra.mxu0 0.0
        %7371 = vmatprep.subr.mxu0 0.0
        %7372 = vmatpush1.msra.mxu0 0.0
        %7373 = vmatprep.subr.mxu0 0.0
        %7374 = vmatpush1.msra.mxu0 0.0
        %7375 = vmatprep.subr.mxu0 0.0
        %7376 = vmatpush1.msra.mxu0 0.0
        %7377 = vmatprep.subr.mxu0 0.0
        %7378 = vmatpush1.msra.mxu0 0.0
        %7379 = vmatprep.subr.mxu0 0.0
        %7380 = vmatpush1.msra.mxu0 0.0
        %7381 = vmatprep.subr.mxu0 0.0
        %7382 = vmatpush1.msra.mxu0 0.0
        %7383 = vmatprep.subr.mxu0 0.0
        %7384 = vmatpush1.msra.mxu0 0.0
        %7385 = vmatprep.subr.mxu0 0.0
        %7386 = vmatpush1.msra.mxu0 0.0
        %7387 = vmatprep.subr.mxu0 0.0
        %7388 = vmatpush1.msra.mxu0 0.0
        %7389 = vmatprep.subr.mxu0 0.0
        %7390 = vmatpush1.msra.mxu0 0.0
        %7391 = vmatprep.subr.mxu0 0.0
        %7392 = vmatpush1.msra.mxu0 0.0
        %7393 = vmatprep.subr.mxu0 0.0
        %7394 = vmatpush1.msra.mxu0 0.0
        %7395 = vmatprep.subr.mxu0 0.0
        %7396 = vmatpush1.msra.mxu0 0.0
        %7397 = vmatprep.subr.mxu0 0.0
        %7398 = vmatpush1.msra.mxu0 0.0
        %7399 = vmatprep.mubr.f32.mxu0 0.0
        %7400 = vmatmul.mubr.f32.gmra.mrb[0].mxu0 %v6765
        %v7401 = vpop.f32.mrb[0].mxu0
        %v7402 = vadd.f32 0.0, %v7401
        %v7403 = vpop.f32.mrb[0].mxu0
        %v7404 = vadd.f32 0.0, %v7403
        %7405 = vdwg.mxu0
        %7406 = vmatprep.subr.mxu0 %v6526
        %7407 = vmatpush1.msra.mxu0 %v6525
        %7408 = vmatprep.subr.mxu0 %v6558
        %7409 = vmatpush1.msra.mxu0 %v6557
        %7410 = vmatprep.subr.mxu0 %v6590
        %7411 = vmatpush1.msra.mxu0 %v6589
        %7412 = vmatprep.subr.mxu0 %v6622
        %7413 = vmatpush1.msra.mxu0 %v6621
        %7414 = vmatprep.subr.mxu0 %v6654
        %7415 = vmatpush1.msra.mxu0 %v6653
        %7416 = vmatprep.subr.mxu0 %v6686
        %7417 = vmatpush1.msra.mxu0 %v6685
        %7418 = vmatprep.subr.mxu0 %v6718
        %7419 = vmatpush1.msra.mxu0 %v6717
        %7420 = vmatprep.subr.mxu0 %v6750
        %7421 = vmatpush1.msra.mxu0 %v6749
        %7422 = vmatprep.subr.mxu0 0.0
        %7423 = vmatpush1.msra.mxu0 0.0
        %7424 = vmatprep.subr.mxu0 0.0
        %7425 = vmatpush1.msra.mxu0 0.0
        %7426 = vmatprep.subr.mxu0 0.0
        %7427 = vmatpush1.msra.mxu0 0.0
        %7428 = vmatprep.subr.mxu0 0.0
        %7429 = vmatpush1.msra.mxu0 0.0
        %7430 = vmatprep.subr.mxu0 0.0
        %7431 = vmatpush1.msra.mxu0 0.0
        %7432 = vmatprep.subr.mxu0 0.0
        %7433 = vmatpush1.msra.mxu0 0.0
        %7434 = vmatprep.subr.mxu0 0.0
        %7435 = vmatpush1.msra.mxu0 0.0
        %7436 = vmatprep.subr.mxu0 0.0
        %7437 = vmatpush1.msra.mxu0 0.0
        %7438 = vmatprep.subr.mxu0 0.0
        %7439 = vmatpush1.msra.mxu0 0.0
        %7440 = vmatprep.subr.mxu0 0.0
        %7441 = vmatpush1.msra.mxu0 0.0
        %7442 = vmatprep.subr.mxu0 0.0
        %7443 = vmatpush1.msra.mxu0 0.0
        %7444 = vmatprep.subr.mxu0 0.0
        %7445 = vmatpush1.msra.mxu0 0.0
        %7446 = vmatprep.subr.mxu0 0.0
        %7447 = vmatpush1.msra.mxu0 0.0
        %7448 = vmatprep.subr.mxu0 0.0
        %7449 = vmatpush1.msra.mxu0 0.0
        %7450 = vmatprep.subr.mxu0 0.0
        %7451 = vmatpush1.msra.mxu0 0.0
        %7452 = vmatprep.subr.mxu0 0.0
        %7453 = vmatpush1.msra.mxu0 0.0
        %7454 = vmatprep.subr.mxu0 0.0
        %7455 = vmatpush1.msra.mxu0 0.0
        %7456 = vmatprep.subr.mxu0 0.0
        %7457 = vmatpush1.msra.mxu0 0.0
        %7458 = vmatprep.subr.mxu0 0.0
        %7459 = vmatpush1.msra.mxu0 0.0
        %7460 = vmatprep.subr.mxu0 0.0
        %7461 = vmatpush1.msra.mxu0 0.0
        %7462 = vmatprep.subr.mxu0 0.0
        %7463 = vmatpush1.msra.mxu0 0.0
        %7464 = vmatprep.subr.mxu0 0.0
        %7465 = vmatpush1.msra.mxu0 0.0
        %7466 = vmatprep.subr.mxu0 0.0
        %7467 = vmatpush1.msra.mxu0 0.0
        %7468 = vmatprep.subr.mxu0 0.0
        %7469 = vmatpush1.msra.mxu0 0.0
        %7470 = vmatprep.mubr.f32.mxu0 0.0
        %7471 = vmatmul.mubr.f32.gmra.mrb[0].mxu0 %v6765
        %v7472 = vpop.f32.mrb[0].mxu0
        %v7473 = vadd.f32 0.0, %v7472
        %v7474 = vpop.f32.mrb[0].mxu0
        %v7475 = vadd.f32 0.0, %v7474
        %7476 = vdwg.mxu0
        %7477 = vmatprep.subr.mxu0 %v6528
        %7478 = vmatpush1.msra.mxu0 %v6527
        %7479 = vmatprep.subr.mxu0 %v6560
        %7480 = vmatpush1.msra.mxu0 %v6559
        %7481 = vmatprep.subr.mxu0 %v6592
        %7482 = vmatpush1.msra.mxu0 %v6591
        %7483 = vmatprep.subr.mxu0 %v6624
        %7484 = vmatpush1.msra.mxu0 %v6623
        %7485 = vmatprep.subr.mxu0 %v6656
        %7486 = vmatpush1.msra.mxu0 %v6655
        %7487 = vmatprep.subr.mxu0 %v6688
        %7488 = vmatpush1.msra.mxu0 %v6687
        %7489 = vmatprep.subr.mxu0 %v6720
        %7490 = vmatpush1.msra.mxu0 %v6719
        %7491 = vmatprep.subr.mxu0 %v6752
        %7492 = vmatpush1.msra.mxu0 %v6751
        %7493 = vmatprep.subr.mxu0 0.0
        %7494 = vmatpush1.msra.mxu0 0.0
        %7495 = vmatprep.subr.mxu0 0.0
        %7496 = vmatpush1.msra.mxu0 0.0
        %7497 = vmatprep.subr.mxu0 0.0
        %7498 = vmatpush1.msra.mxu0 0.0
        %7499 = vmatprep.subr.mxu0 0.0
        %7500 = vmatpush1.msra.mxu0 0.0
        %7501 = vmatprep.subr.mxu0 0.0
        %7502 = vmatpush1.msra.mxu0 0.0
        %7503 = vmatprep.subr.mxu0 0.0
        %7504 = vmatpush1.msra.mxu0 0.0
        %7505 = vmatprep.subr.mxu0 0.0
        %7506 = vmatpush1.msra.mxu0 0.0
        %7507 = vmatprep.subr.mxu0 0.0
        %7508 = vmatpush1.msra.mxu0 0.0
        %7509 = vmatprep.subr.mxu0 0.0
        %7510 = vmatpush1.msra.mxu0 0.0
        %7511 = vmatprep.subr.mxu0 0.0
        %7512 = vmatpush1.msra.mxu0 0.0
        %7513 = vmatprep.subr.mxu0 0.0
        %7514 = vmatpush1.msra.mxu0 0.0
        %7515 = vmatprep.subr.mxu0 0.0
        %7516 = vmatpush1.msra.mxu0 0.0
        %7517 = vmatprep.subr.mxu0 0.0
        %7518 = vmatpush1.msra.mxu0 0.0
        %7519 = vmatprep.subr.mxu0 0.0
        %7520 = vmatpush1.msra.mxu0 0.0
        %7521 = vmatprep.subr.mxu0 0.0
        %7522 = vmatpush1.msra.mxu0 0.0
        %7523 = vmatprep.subr.mxu0 0.0
        %7524 = vmatpush1.msra.mxu0 0.0
        %7525 = vmatprep.subr.mxu0 0.0
        %7526 = vmatpush1.msra.mxu0 0.0
        %7527 = vmatprep.subr.mxu0 0.0
        %7528 = vmatpush1.msra.mxu0 0.0
        %7529 = vmatprep.subr.mxu0 0.0
        %7530 = vmatpush1.msra.mxu0 0.0
        %7531 = vmatprep.subr.mxu0 0.0
        %7532 = vmatpush1.msra.mxu0 0.0
        %7533 = vmatprep.subr.mxu0 0.0
        %7534 = vmatpush1.msra.mxu0 0.0
        %7535 = vmatprep.subr.mxu0 0.0
        %7536 = vmatpush1.msra.mxu0 0.0
        %7537 = vmatprep.subr.mxu0 0.0
        %7538 = vmatpush1.msra.mxu0 0.0
        %7539 = vmatprep.subr.mxu0 0.0
        %7540 = vmatpush1.msra.mxu0 0.0
        %7541 = vmatprep.mubr.f32.mxu0 0.0
        %7542 = vmatmul.mubr.f32.gmra.mrb[0].mxu0 %v6765
        %v7543 = vpop.f32.mrb[0].mxu0
        %v7544 = vadd.f32 0.0, %v7543
        %v7545 = vpop.f32.mrb[0].mxu0
        %v7546 = vadd.f32 0.0, %v7545
        %7547 = vdwg.mxu0
        %7548 = vmatprep.subr.mxu0 %v6530
        %7549 = vmatpush1.msra.mxu0 %v6529
        %7550 = vmatprep.subr.mxu0 %v6562
        %7551 = vmatpush1.msra.mxu0 %v6561
        %7552 = vmatprep.subr.mxu0 %v6594
        %7553 = vmatpush1.msra.mxu0 %v6593
        %7554 = vmatprep.subr.mxu0 %v6626
        %7555 = vmatpush1.msra.mxu0 %v6625
        %7556 = vmatprep.subr.mxu0 %v6658
        %7557 = vmatpush1.msra.mxu0 %v6657
        %7558 = vmatprep.subr.mxu0 %v6690
        %7559 = vmatpush1.msra.mxu0 %v6689
        %7560 = vmatprep.subr.mxu0 %v6722
        %7561 = vmatpush1.msra.mxu0 %v6721
        %7562 = vmatprep.subr.mxu0 %v6754
        %7563 = vmatpush1.msra.mxu0 %v6753
        %7564 = vmatprep.subr.mxu0 0.0
        %7565 = vmatpush1.msra.mxu0 0.0
        %7566 = vmatprep.subr.mxu0 0.0
        %7567 = vmatpush1.msra.mxu0 0.0
        %7568 = vmatprep.subr.mxu0 0.0
        %7569 = vmatpush1.msra.mxu0 0.0
        %7570 = vmatprep.subr.mxu0 0.0
        %7571 = vmatpush1.msra.mxu0 0.0
        %7572 = vmatprep.subr.mxu0 0.0
        %7573 = vmatpush1.msra.mxu0 0.0
        %7574 = vmatprep.subr.mxu0 0.0
        %7575 = vmatpush1.msra.mxu0 0.0
        %7576 = vmatprep.subr.mxu0 0.0
        %7577 = vmatpush1.msra.mxu0 0.0
        %7578 = vmatprep.subr.mxu0 0.0
        %7579 = vmatpush1.msra.mxu0 0.0
        %7580 = vmatprep.subr.mxu0 0.0
        %7581 = vmatpush1.msra.mxu0 0.0
        %7582 = vmatprep.subr.mxu0 0.0
        %7583 = vmatpush1.msra.mxu0 0.0
        %7584 = vmatprep.subr.mxu0 0.0
        %7585 = vmatpush1.msra.mxu0 0.0
        %7586 = vmatprep.subr.mxu0 0.0
        %7587 = vmatpush1.msra.mxu0 0.0
        %7588 = vmatprep.subr.mxu0 0.0
        %7589 = vmatpush1.msra.mxu0 0.0
        %7590 = vmatprep.subr.mxu0 0.0
        %7591 = vmatpush1.msra.mxu0 0.0
        %7592 = vmatprep.subr.mxu0 0.0
        %7593 = vmatpush1.msra.mxu0 0.0
        %7594 = vmatprep.subr.mxu0 0.0
        %7595 = vmatpush1.msra.mxu0 0.0
        %7596 = vmatprep.subr.mxu0 0.0
        %7597 = vmatpush1.msra.mxu0 0.0
        %7598 = vmatprep.subr.mxu0 0.0
        %7599 = vmatpush1.msra.mxu0 0.0
        %7600 = vmatprep.subr.mxu0 0.0
        %7601 = vmatpush1.msra.mxu0 0.0
        %7602 = vmatprep.subr.mxu0 0.0
        %7603 = vmatpush1.msra.mxu0 0.0
        %7604 = vmatprep.subr.mxu0 0.0
        %7605 = vmatpush1.msra.mxu0 0.0
        %7606 = vmatprep.subr.mxu0 0.0
        %7607 = vmatpush1.msra.mxu0 0.0
        %7608 = vmatprep.subr.mxu0 0.0
        %7609 = vmatpush1.msra.mxu0 0.0
        %7610 = vmatprep.subr.mxu0 0.0
        %7611 = vmatpush1.msra.mxu0 0.0
        %7612 = vmatprep.mubr.f32.mxu0 0.0
        %7613 = vmatmul.mubr.f32.gmra.mrb[0].mxu0 %v6765
        %v7614 = vpop.f32.mrb[0].mxu0
        %v7615 = vadd.f32 0.0, %v7614
        %v7616 = vpop.f32.mrb[0].mxu0
        %v7617 = vadd.f32 0.0, %v7616
        %7618 = vdwg.mxu0
        %7619 = vmatprep.subr.mxu0 %v6532
        %7620 = vmatpush1.msra.mxu0 %v6531
        %7621 = vmatprep.subr.mxu0 %v6564
        %7622 = vmatpush1.msra.mxu0 %v6563
        %7623 = vmatprep.subr.mxu0 %v6596
        %7624 = vmatpush1.msra.mxu0 %v6595
        %7625 = vmatprep.subr.mxu0 %v6628
        %7626 = vmatpush1.msra.mxu0 %v6627
        %7627 = vmatprep.subr.mxu0 %v6660
        %7628 = vmatpush1.msra.mxu0 %v6659
        %7629 = vmatprep.subr.mxu0 %v6692
        %7630 = vmatpush1.msra.mxu0 %v6691
        %7631 = vmatprep.subr.mxu0 %v6724
        %7632 = vmatpush1.msra.mxu0 %v6723
        %7633 = vmatprep.subr.mxu0 %v6756
        %7634 = vmatpush1.msra.mxu0 %v6755
        %7635 = vmatprep.subr.mxu0 0.0
        %7636 = vmatpush1.msra.mxu0 0.0
        %7637 = vmatprep.subr.mxu0 0.0
        %7638 = vmatpush1.msra.mxu0 0.0
        %7639 = vmatprep.subr.mxu0 0.0
        %7640 = vmatpush1.msra.mxu0 0.0
        %7641 = vmatprep.subr.mxu0 0.0
        %7642 = vmatpush1.msra.mxu0 0.0
        %7643 = vmatprep.subr.mxu0 0.0
        %7644 = vmatpush1.msra.mxu0 0.0
        %7645 = vmatprep.subr.mxu0 0.0
        %7646 = vmatpush1.msra.mxu0 0.0
        %7647 = vmatprep.subr.mxu0 0.0
        %7648 = vmatpush1.msra.mxu0 0.0
        %7649 = vmatprep.subr.mxu0 0.0
        %7650 = vmatpush1.msra.mxu0 0.0
        %7651 = vmatprep.subr.mxu0 0.0
        %7652 = vmatpush1.msra.mxu0 0.0
        %7653 = vmatprep.subr.mxu0 0.0
        %7654 = vmatpush1.msra.mxu0 0.0
        %7655 = vmatprep.subr.mxu0 0.0
        %7656 = vmatpush1.msra.mxu0 0.0
        %7657 = vmatprep.subr.mxu0 0.0
        %7658 = vmatpush1.msra.mxu0 0.0
        %7659 = vmatprep.subr.mxu0 0.0
        %7660 = vmatpush1.msra.mxu0 0.0
        %7661 = vmatprep.subr.mxu0 0.0
        %7662 = vmatpush1.msra.mxu0 0.0
        %7663 = vmatprep.subr.mxu0 0.0
        %7664 = vmatpush1.msra.mxu0 0.0
        %7665 = vmatprep.subr.mxu0 0.0
        %7666 = vmatpush1.msra.mxu0 0.0
        %7667 = vmatprep.subr.mxu0 0.0
        %7668 = vmatpush1.msra.mxu0 0.0
        %7669 = vmatprep.subr.mxu0 0.0
        %7670 = vmatpush1.msra.mxu0 0.0
        %7671 = vmatprep.subr.mxu0 0.0
        %7672 = vmatpush1.msra.mxu0 0.0
        %7673 = vmatprep.subr.mxu0 0.0
        %7674 = vmatpush1.msra.mxu0 0.0
        %7675 = vmatprep.subr.mxu0 0.0
        %7676 = vmatpush1.msra.mxu0 0.0
        %7677 = vmatprep.subr.mxu0 0.0
        %7678 = vmatpush1.msra.mxu0 0.0
        %7679 = vmatprep.subr.mxu0 0.0
        %7680 = vmatpush1.msra.mxu0 0.0
        %7681 = vmatprep.subr.mxu0 0.0
        %7682 = vmatpush1.msra.mxu0 0.0
        %7683 = vmatprep.mubr.f32.mxu0 0.0
        %7684 = vmatmul.mubr.f32.gmra.mrb[0].mxu0 %v6765
        %v7685 = vpop.f32.mrb[0].mxu0
        %v7686 = vadd.f32 0.0, %v7685
        %v7687 = vpop.f32.mrb[0].mxu0
        %v7688 = vadd.f32 0.0, %v7687
        %7689 = vdwg.mxu0
        %7690 = vmatprep.subr.mxu0 %v6534
        %7691 = vmatpush1.msra.mxu0 %v6533
        %7692 = vmatprep.subr.mxu0 %v6566
        %7693 = vmatpush1.msra.mxu0 %v6565
        %7694 = vmatprep.subr.mxu0 %v6598
        %7695 = vmatpush1.msra.mxu0 %v6597
        %7696 = vmatprep.subr.mxu0 %v6630
        %7697 = vmatpush1.msra.mxu0 %v6629
        %7698 = vmatprep.subr.mxu0 %v6662
        %7699 = vmatpush1.msra.mxu0 %v6661
        %7700 = vmatprep.subr.mxu0 %v6694
        %7701 = vmatpush1.msra.mxu0 %v6693
        %7702 = vmatprep.subr.mxu0 %v6726
        %7703 = vmatpush1.msra.mxu0 %v6725
        %7704 = vmatprep.subr.mxu0 %v6758
        %7705 = vmatpush1.msra.mxu0 %v6757
        %7706 = vmatprep.subr.mxu0 0.0
        %7707 = vmatpush1.msra.mxu0 0.0
        %7708 = vmatprep.subr.mxu0 0.0
        %7709 = vmatpush1.msra.mxu0 0.0
        %7710 = vmatprep.subr.mxu0 0.0
        %7711 = vmatpush1.msra.mxu0 0.0
        %7712 = vmatprep.subr.mxu0 0.0
        %7713 = vmatpush1.msra.mxu0 0.0
        %7714 = vmatprep.subr.mxu0 0.0
        %7715 = vmatpush1.msra.mxu0 0.0
        %7716 = vmatprep.subr.mxu0 0.0
        %7717 = vmatpush1.msra.mxu0 0.0
        %7718 = vmatprep.subr.mxu0 0.0
        %7719 = vmatpush1.msra.mxu0 0.0
        %7720 = vmatprep.subr.mxu0 0.0
        %7721 = vmatpush1.msra.mxu0 0.0
        %7722 = vmatprep.subr.mxu0 0.0
        %7723 = vmatpush1.msra.mxu0 0.0
        %7724 = vmatprep.subr.mxu0 0.0
        %7725 = vmatpush1.msra.mxu0 0.0
        %7726 = vmatprep.subr.mxu0 0.0
        %7727 = vmatpush1.msra.mxu0 0.0
        %7728 = vmatprep.subr.mxu0 0.0
        %7729 = vmatpush1.msra.mxu0 0.0
        %7730 = vmatprep.subr.mxu0 0.0
        %7731 = vmatpush1.msra.mxu0 0.0
        %7732 = vmatprep.subr.mxu0 0.0
        %7733 = vmatpush1.msra.mxu0 0.0
        %7734 = vmatprep.subr.mxu0 0.0
        %7735 = vmatpush1.msra.mxu0 0.0
        %7736 = vmatprep.subr.mxu0 0.0
        %7737 = vmatpush1.msra.mxu0 0.0
        %7738 = vmatprep.subr.mxu0 0.0
        %7739 = vmatpush1.msra.mxu0 0.0
        %7740 = vmatprep.subr.mxu0 0.0
        %7741 = vmatpush1.msra.mxu0 0.0
        %7742 = vmatprep.subr.mxu0 0.0
        %7743 = vmatpush1.msra.mxu0 0.0
        %7744 = vmatprep.subr.mxu0 0.0
        %7745 = vmatpush1.msra.mxu0 0.0
        %7746 = vmatprep.subr.mxu0 0.0
        %7747 = vmatpush1.msra.mxu0 0.0
        %7748 = vmatprep.subr.mxu0 0.0
        %7749 = vmatpush1.msra.mxu0 0.0
        %7750 = vmatprep.subr.mxu0 0.0
        %7751 = vmatpush1.msra.mxu0 0.0
        %7752 = vmatprep.subr.mxu0 0.0
        %7753 = vmatpush1.msra.mxu0 0.0
        %7754 = vmatprep.mubr.f32.mxu0 0.0
        %7755 = vmatmul.mubr.f32.gmra.mrb[0].mxu0 %v6765
        %v7756 = vpop.f32.mrb[0].mxu0
        %v7757 = vadd.f32 0.0, %v7756
        %v7758 = vpop.f32.mrb[0].mxu0
        %v7759 = vadd.f32 0.0, %v7758
        %7760 = vdwg.mxu0
        %7761 = vmatprep.subr.mxu0 %v6536
        %7762 = vmatpush1.msra.mxu0 %v6535
        %7763 = vmatprep.subr.mxu0 %v6568
        %7764 = vmatpush1.msra.mxu0 %v6567
        %7765 = vmatprep.subr.mxu0 %v6600
        %7766 = vmatpush1.msra.mxu0 %v6599
        %7767 = vmatprep.subr.mxu0 %v6632
        %7768 = vmatpush1.msra.mxu0 %v6631
        %7769 = vmatprep.subr.mxu0 %v6664
        %7770 = vmatpush1.msra.mxu0 %v6663
        %7771 = vmatprep.subr.mxu0 %v6696
        %7772 = vmatpush1.msra.mxu0 %v6695
        %7773 = vmatprep.subr.mxu0 %v6728
        %7774 = vmatpush1.msra.mxu0 %v6727
        %7775 = vmatprep.subr.mxu0 %v6760
        %7776 = vmatpush1.msra.mxu0 %v6759
        %7777 = vmatprep.subr.mxu0 0.0
        %7778 = vmatpush1.msra.mxu0 0.0
        %7779 = vmatprep.subr.mxu0 0.0
        %7780 = vmatpush1.msra.mxu0 0.0
        %7781 = vmatprep.subr.mxu0 0.0
        %7782 = vmatpush1.msra.mxu0 0.0
        %7783 = vmatprep.subr.mxu0 0.0
        %7784 = vmatpush1.msra.mxu0 0.0
        %7785 = vmatprep.subr.mxu0 0.0
        %7786 = vmatpush1.msra.mxu0 0.0
        %7787 = vmatprep.subr.mxu0 0.0
        %7788 = vmatpush1.msra.mxu0 0.0
        %7789 = vmatprep.subr.mxu0 0.0
        %7790 = vmatpush1.msra.mxu0 0.0
        %7791 = vmatprep.subr.mxu0 0.0
        %7792 = vmatpush1.msra.mxu0 0.0
        %7793 = vmatprep.subr.mxu0 0.0
        %7794 = vmatpush1.msra.mxu0 0.0
        %7795 = vmatprep.subr.mxu0 0.0
        %7796 = vmatpush1.msra.mxu0 0.0
        %7797 = vmatprep.subr.mxu0 0.0
        %7798 = vmatpush1.msra.mxu0 0.0
        %7799 = vmatprep.subr.mxu0 0.0
        %7800 = vmatpush1.msra.mxu0 0.0
        %7801 = vmatprep.subr.mxu0 0.0
        %7802 = vmatpush1.msra.mxu0 0.0
        %7803 = vmatprep.subr.mxu0 0.0
        %7804 = vmatpush1.msra.mxu0 0.0
        %7805 = vmatprep.subr.mxu0 0.0
        %7806 = vmatpush1.msra.mxu0 0.0
        %7807 = vmatprep.subr.mxu0 0.0
        %7808 = vmatpush1.msra.mxu0 0.0
        %7809 = vmatprep.subr.mxu0 0.0
        %7810 = vmatpush1.msra.mxu0 0.0
        %7811 = vmatprep.subr.mxu0 0.0
        %7812 = vmatpush1.msra.mxu0 0.0
        %7813 = vmatprep.subr.mxu0 0.0
        %7814 = vmatpush1.msra.mxu0 0.0
        %7815 = vmatprep.subr.mxu0 0.0
        %7816 = vmatpush1.msra.mxu0 0.0
        %7817 = vmatprep.subr.mxu0 0.0
        %7818 = vmatpush1.msra.mxu0 0.0
        %7819 = vmatprep.subr.mxu0 0.0
        %7820 = vmatpush1.msra.mxu0 0.0
        %7821 = vmatprep.subr.mxu0 0.0
        %7822 = vmatpush1.msra.mxu0 0.0
        %7823 = vmatprep.subr.mxu0 0.0
        %7824 = vmatpush1.msra.mxu0 0.0
        %7825 = vmatprep.mubr.f32.mxu0 0.0
        %7826 = vmatmul.mubr.f32.gmra.mrb[0].mxu0 %v6765
        %v7827 = vpop.f32.mrb[0].mxu0
        %v7828 = vadd.f32 0.0, %v7827
        %v7829 = vpop.f32.mrb[0].mxu0
        %v7830 = vadd.f32 0.0, %v7829
        %7831 = vdwg.mxu0
        %7832 = vmatprep.subr.mxu0 %v6538
        %7833 = vmatpush1.msra.mxu0 %v6537
        %7834 = vmatprep.subr.mxu0 %v6570
        %7835 = vmatpush1.msra.mxu0 %v6569
        %7836 = vmatprep.subr.mxu0 %v6602
        %7837 = vmatpush1.msra.mxu0 %v6601
        %7838 = vmatprep.subr.mxu0 %v6634
        %7839 = vmatpush1.msra.mxu0 %v6633
        %7840 = vmatprep.subr.mxu0 %v6666
        %7841 = vmatpush1.msra.mxu0 %v6665
        %7842 = vmatprep.subr.mxu0 %v6698
        %7843 = vmatpush1.msra.mxu0 %v6697
        %7844 = vmatprep.subr.mxu0 %v6730
        %7845 = vmatpush1.msra.mxu0 %v6729
        %7846 = vmatprep.subr.mxu0 %v6762
        %7847 = vmatpush1.msra.mxu0 %v6761
        %7848 = vmatprep.subr.mxu0 0.0
        %7849 = vmatpush1.msra.mxu0 0.0
        %7850 = vmatprep.subr.mxu0 0.0
        %7851 = vmatpush1.msra.mxu0 0.0
        %7852 = vmatprep.subr.mxu0 0.0
        %7853 = vmatpush1.msra.mxu0 0.0
        %7854 = vmatprep.subr.mxu0 0.0
        %7855 = vmatpush1.msra.mxu0 0.0
        %7856 = vmatprep.subr.mxu0 0.0
        %7857 = vmatpush1.msra.mxu0 0.0
        %7858 = vmatprep.subr.mxu0 0.0
        %7859 = vmatpush1.msra.mxu0 0.0
        %7860 = vmatprep.subr.mxu0 0.0
        %7861 = vmatpush1.msra.mxu0 0.0
        %7862 = vmatprep.subr.mxu0 0.0
        %7863 = vmatpush1.msra.mxu0 0.0
        %7864 = vmatprep.subr.mxu0 0.0
        %7865 = vmatpush1.msra.mxu0 0.0
        %7866 = vmatprep.subr.mxu0 0.0
        %7867 = vmatpush1.msra.mxu0 0.0
        %7868 = vmatprep.subr.mxu0 0.0
        %7869 = vmatpush1.msra.mxu0 0.0
        %7870 = vmatprep.subr.mxu0 0.0
        %7871 = vmatpush1.msra.mxu0 0.0
        %7872 = vmatprep.subr.mxu0 0.0
        %7873 = vmatpush1.msra.mxu0 0.0
        %7874 = vmatprep.subr.mxu0 0.0
        %7875 = vmatpush1.msra.mxu0 0.0
        %7876 = vmatprep.subr.mxu0 0.0
        %7877 = vmatpush1.msra.mxu0 0.0
        %7878 = vmatprep.subr.mxu0 0.0
        %7879 = vmatpush1.msra.mxu0 0.0
        %7880 = vmatprep.subr.mxu0 0.0
        %7881 = vmatpush1.msra.mxu0 0.0
        %7882 = vmatprep.subr.mxu0 0.0
        %7883 = vmatpush1.msra.mxu0 0.0
        %7884 = vmatprep.subr.mxu0 0.0
        %7885 = vmatpush1.msra.mxu0 0.0
        %7886 = vmatprep.subr.mxu0 0.0
        %7887 = vmatpush1.msra.mxu0 0.0
        %7888 = vmatprep.subr.mxu0 0.0
        %7889 = vmatpush1.msra.mxu0 0.0
        %7890 = vmatprep.subr.mxu0 0.0
        %7891 = vmatpush1.msra.mxu0 0.0
        %7892 = vmatprep.subr.mxu0 0.0
        %7893 = vmatpush1.msra.mxu0 0.0
        %7894 = vmatprep.subr.mxu0 0.0
        %7895 = vmatpush1.msra.mxu0 0.0
        %7896 = vmatprep.mubr.f32.mxu0 0.0
        %7897 = vmatmul.mubr.f32.gmra.mrb[0].mxu0 %v6765
        %v7898 = vpop.f32.mrb[0].mxu0
        %v7899 = vadd.f32 0.0, %v7898
        %v7900 = vpop.f32.mrb[0].mxu0
        %v7901 = vadd.f32 0.0, %v7900
        %7902 = vdwg.mxu0
        %v7903 = vadd.f32 %v5438, %v6834
        %v7904 = vadd.f32 %v5440, %v6836
        %v7905 = vadd.f32 %v5509, %v6905
        %v7906 = vadd.f32 %v5511, %v6907
        %v7907 = vadd.f32 %v5580, %v6976
        %v7908 = vadd.f32 %v5582, %v6978
        %v7909 = vadd.f32 %v5651, %v7047
        %v7910 = vadd.f32 %v5653, %v7049
        %v7911 = vadd.f32 %v5722, %v7118
        %v7912 = vadd.f32 %v5724, %v7120
        %v7913 = vadd.f32 %v5793, %v7189
        %v7914 = vadd.f32 %v5795, %v7191
        %v7915 = vadd.f32 %v5864, %v7260
        %v7916 = vadd.f32 %v5866, %v7262
        %v7917 = vadd.f32 %v5935, %v7331
        %v7918 = vadd.f32 %v5937, %v7333
        %v7919 = vadd.f32 %v6006, %v7402
        %v7920 = vadd.f32 %v6008, %v7404
        %v7921 = vadd.f32 %v6077, %v7473
        %v7922 = vadd.f32 %v6079, %v7475
        %v7923 = vadd.f32 %v6148, %v7544
        %v7924 = vadd.f32 %v6150, %v7546
        %v7925 = vadd.f32 %v6219, %v7615
        %v7926 = vadd.f32 %v6221, %v7617
        %v7927 = vadd.f32 %v6290, %v7686
        %v7928 = vadd.f32 %v6292, %v7688
        %v7929 = vadd.f32 %v6361, %v7757
        %v7930 = vadd.f32 %v6363, %v7759
        %v7931 = vadd.f32 %v6432, %v7828
        %v7932 = vadd.f32 %v6434, %v7830
        %v7933 = vadd.f32 %v6503, %v7899
        %v7934 = vadd.f32 %v6505, %v7901
        %v7935 = vadd.f32 %v7903, 0.0
        %v7936 = vadd.f32 %v7904, 0.0
        %v7937 = vadd.f32 %v7935, %v7905
        %v7938 = vadd.f32 %v7936, %v7906
        %v7939 = vadd.f32 %v7937, %v7907
        %v7940 = vadd.f32 %v7938, %v7908
        %v7941 = vadd.f32 %v7939, %v7909
        %v7942 = vadd.f32 %v7940, %v7910
        %v7943 = vadd.f32 %v7941, %v7911
        %v7944 = vadd.f32 %v7942, %v7912
        %v7945 = vadd.f32 %v7943, %v7913
        %v7946 = vadd.f32 %v7944, %v7914
        %v7947 = vadd.f32 %v7945, %v7915
        %v7948 = vadd.f32 %v7946, %v7916
        %v7949 = vadd.f32 %v7947, %v7917
        %v7950 = vadd.f32 %v7948, %v7918
        %v7951 = vadd.f32 %v7949, %v7919
        %v7952 = vadd.f32 %v7950, %v7920
        %v7953 = vadd.f32 %v7951, %v7921
        %v7954 = vadd.f32 %v7952, %v7922
        %v7955 = vadd.f32 %v7953, %v7923
        %v7956 = vadd.f32 %v7954, %v7924
        %v7957 = vadd.f32 %v7955, %v7925
        %v7958 = vadd.f32 %v7956, %v7926
        %v7959 = vadd.f32 %v7957, %v7927
        %v7960 = vadd.f32 %v7958, %v7928
        %v7961 = vadd.f32 %v7959, %v7929
        %v7962 = vadd.f32 %v7960, %v7930
        %v7963 = vadd.f32 %v7961, %v7931
        %v7964 = vadd.f32 %v7962, %v7932
        %v7965 = vadd.f32 %v7963, %v7933
        %v7966 = vadd.f32 %v7964, %v7934
        %s7967 = sld [smem:[#allocation2]]
        %v7968 = vstv %s7967
        %v7969 = vadd.f32 %v7965, %v7968
        %v7970 = vadd.f32 %v7966, %v7968
        %v7973 = vcombine.low %v7969, %v7970
        %v7975 = vunpack.c.l.s4 1966171168
        %v7976 = vunpack.c.0.s8 %v7975
        %v7977 = vlaneseq
        %v7978 = vshrl.u32 %v7977, 7
        %v7979 = vsub.s32 %v7976, %v7978
        %v7980 = vrot.slane %v7973, %v7979
        %v7982 = vunpack.c.l.s4 1966171168
        %v7983 = vunpack.c.0.s8 %v7982
        %v7984 = vlaneseq
        %v7985 = vshrl.u32 %v7984, 7
        %v7986 = vsub.s32 %v7983, %v7985
        %v7987 = vrot.slane %v7980, %v7986
        %v7989 = vlaneseq
        %vm7990 = vcmp.ge.s32.totalorder %v7989, 0
        %vm7991 = vcmp.lt.s32.totalorder %v7989, 256
        %vm7992 = vmand %vm7990, %vm7991
        %7993 = vst.msk [vmem:[%s366] sm:$0x3] %vm7992, %v7987
        %s7994 = sand.u32 %s209, 1
        %s7995 = scalar_lea.sflag [#allocation5], %s7994
        %s7996 = sand.u32 %s209, 1
        %s7997 = smul.addr %s7996, 2
        %s7998 = scalar_lea.vmem [#allocation11], %s7997
        // Predicated region
        $region69: #{tpu_custom_call.1} parent=51 // pred_check
          %p7999 = pneg %p219
        $region70: #{tpu_custom_call.1} parent=51 // pred_check_branch
          %8001 = sbr.rel (%p7999) target = $region72
        $region71: #{tpu_custom_call.1} parent=51 // pred_region
          %s8002 = smul.u32 2, %s28
          %s8004 = ssub.s32 32, 32
          %8005 = vsyncadd %s7995, %s8004
          %s8006 = smul.addr %s8002, 16
          %s8007 = scalar_lea.hbm %s8, %s8006
          %s8009 = sshll.u32 %s7998, 4
          %s8010 = int_to_ptr.vmem [resolvable:$true] %s8009
          %8012 = dma.vmem_to_hbm [thread:$0]  %s8010, 32, %s8007, %s7995
        $region72: #{tpu_custom_call.1} parent=51 // pred_fallthru
          _
      $region52: #{tpu_custom_call.1} parent=5 // pred_fallthru
        _
      %p8013 = scmp.le.s32.totalorder 2, %s23
      // Predicated region
      $region73: #{tpu_custom_call.1} parent=5 // pred_check
        %p8014 = pneg %p8013
      $region74: #{tpu_custom_call.1} parent=5 // pred_check_branch
        %8016 = sbr.rel (%p8014) target = $region76
      $region75: #{tpu_custom_call.1} parent=5 // pred_region
        %s8017 = ssub.s32 %s23, 2
        // Predicated region
        $region77: #{tpu_custom_call.1} parent=75 // pred_check
          %p8018 = pneg %p225
        $region78: #{tpu_custom_call.1} parent=75 // pred_check_branch
          %8020 = sbr.rel (%p8018) target = $region80
        $region79: #{tpu_custom_call.1} parent=75 // pred_region
          %s8021 = sand.u32 %s210, 1
          %s8022 = scalar_lea.sflag [#allocation5], %s8021
          %s8023 = sand.u32 %s210, 1
          %s8024 = smul.addr %s8023, 2
          %s8025 = scalar_lea.vmem [#allocation11], %s8024
          %8026 = dma.done %s8022, 32
        $region80: #{tpu_custom_call.1} parent=75 // pred_fallthru
          _
      $region76: #{tpu_custom_call.1} parent=5 // pred_fallthru
        _
    $region6: #{tpu_custom_call.1} parent=1 // loop_footer
      %s27 = sadd.s32 1, %s23
    $region7: #{tpu_custom_call.1} parent=1 // loop_footer_branch
      %22 = sbr.rel target = $region3
    $region8: #{tpu_custom_call.1} parent=1 // loop_exit
      _
    %8027 = vsyncpa [#allocation4], 1
    %s8028 = scalar_lea.sflag [#allocation4], 1
    %8029 = vsyncpa %s8028, 1
    %8030 = vsyncpa [#allocation7], 1
    %8031 = vsyncpa [#allocation10], 1
    %8032 = vsyncpa [#allocation5], 1
    %s8033 = scalar_lea.sflag [#allocation5], 1
    %8034 = vsyncpa %s8033, 1

</llo_original>
